<compile_context>
chip_gen: v6e
topology: v6e:2x2x1
jax: 0.10.0
libtpu: 0.0.40
codegen_flags: <defaults>
</compile_context>

<pallas_src>
import functools

import jax
import jax.numpy as jnp
from jax.experimental import pallas as pl
from jax.experimental.pallas import tpu as pltpu


COMPUTE_DTYPE = jnp.bfloat16    # MXU operand dtype (accumulation stays f32)
ACT_DTYPE = jnp.bfloat16        # intermediate activation storage dtype

_VMEM_LIMIT_CACHE = [None]


def _get_vmem_limit():
    """Per-generation scoped-VMEM budget (v7x: 64 MiB physical; v5e/v6e: 128 MiB)."""
    if _VMEM_LIMIT_CACHE[0] is None:
        try:
            cap = int(pltpu.get_tpu_info().vmem_capacity_bytes)
        except Exception:
            cap = 64 * 1024 * 1024
        _VMEM_LIMIT_CACHE[0] = min(int(cap * 0.7), 96 * 1024 * 1024)
    return _VMEM_LIMIT_CACHE[0]


# -----------------------------------------------------------------------------
# Pallas kernels
# -----------------------------------------------------------------------------
def _matmul_bias_act_kernel(x_ref, w_ref, b_ref, o_ref, acc_ref, *, apply_relu):
    """Tiled (tm, tk) x (tk, tn) matmul accumulated over the K grid axis."""
    @pl.when(pl.program_id(2) == 0)
    def _():
        acc_ref[...] = jnp.zeros_like(acc_ref)

    acc_ref[...] += jnp.dot(x_ref[...], w_ref[...],
                            preferred_element_type=jnp.float32)

    @pl.when(pl.program_id(2) == pl.num_programs(2) - 1)
    def _():
        acc = acc_ref[...] + b_ref[...]            # (1, tn) broadcasts over (tm, tn)
        if apply_relu:
            acc = jnp.maximum(acc, 0.0)
        o_ref[...] = acc.astype(o_ref.dtype)


def _dual_matmul_bias_act_kernel(x1_ref, w1_ref, x2_ref, w2_ref, b_ref, o_ref,
                                 acc_ref, *, apply_relu):
    """out = relu?(x1 @ w1 + x2 @ w2 + b) — fused skip-connection concat.

    Uses an f32 VMEM scratch accumulator and a shared K grid axis (both K
    operands are tiled with the same number of steps), so the accumulator
    never lives in vregs and K does not have to be fully VMEM-resident.
    """
    @pl.when(pl.program_id(2) == 0)
    def _():
        acc_ref[...] = jnp.zeros_like(acc_ref)

    acc_ref[...] += jnp.dot(x1_ref[...], w1_ref[...],
                            preferred_element_type=jnp.float32)
    acc_ref[...] += jnp.dot(x2_ref[...], w2_ref[...],
                            preferred_element_type=jnp.float32)

    @pl.when(pl.program_id(2) == pl.num_programs(2) - 1)
    def _():
        acc = acc_ref[...] + b_ref[...]
        if apply_relu:
            acc = jnp.maximum(acc, 0.0)
        o_ref[...] = acc.astype(o_ref.dtype)


# -----------------------------------------------------------------------------
# Tiling helpers + kernel wrappers
# -----------------------------------------------------------------------------
def _pick_tile(dim, candidates):
    for c in candidates:
        if dim % c == 0:
            return c
    return None


def _m_tiling(M):
    """M padded to a multiple of 16 (bf16 sublane packing); prefer large tiles."""
    m_pad = ((M + 15) // 16) * 16
    tm = _pick_tile(m_pad, (512, 256, 128, 64, 32, 16))
    return m_pad, tm


def _n_tiling(n_pad):
    """n_pad is always a multiple of 128; prefer 256 (fills v6e/v7x 256x256 MXU)."""
    return _pick_tile(n_pad, (256, 128))


def _k_tiling(K):
    """Tile K only when large; prefer 256-multiples. Small K stays resident."""
    if K >= 1024:
        for c in (2048, 1024, 512, 256, 128):
            if K % c == 0:
                return c
    return K


def _pad_cols(a, n_pad):
    n = a.shape[-1]
    if n_pad == n:
        return a
    pad = [(0, 0)] * (a.ndim - 1) + [(0, n_pad - n)]
    return jnp.pad(a, pad)


def matmul_bias_act(x, w, b, *, apply_relu=False, out_dtype=ACT_DTYPE):
    """out = relu?(x @ w + b);  x:(M,K) w:(K,N) b:(N,). bf16 MXU, f32 accum.

    Output-channel axis is zero-padded to a multiple of 128 for lane-dense
    stores and a full MXU N dimension; the pad is sliced off by the caller path.
    """
    M, K = x.shape
    K2, N = w.shape
    assert K == K2 and b.shape == (N,)

    n_pad = ((N + 127) // 128) * 128
    m_pad, tm = _m_tiling(M)
    tn = _n_tiling(n_pad)
    tk = _k_tiling(K)

    x_c = x.astype(COMPUTE_DTYPE)
    if m_pad != M:
        x_c = jnp.pad(x_c, ((0, m_pad - M), (0, 0)))
    w_c = _pad_cols(w.astype(COMPUTE_DTYPE), n_pad)
    b2 = _pad_cols(b.astype(jnp.float32), n_pad).reshape(1, n_pad)

    grid = (m_pad // tm, n_pad // tn, K // tk)
    out_itemsize = jnp.dtype(out_dtype).itemsize
    flops = 2 * m_pad * K * n_pad
    bytes_accessed = (x_c.size * x_c.dtype.itemsize * grid[1]   # x re-read per N tile
                      + w_c.size * w_c.dtype.itemsize * grid[0]  # w re-read per M tile
                      + b2.size * 4 * grid[0]
                      + m_pad * n_pad * out_itemsize)

    out = pl.pallas_call(
        functools.partial(_matmul_bias_act_kernel, apply_relu=apply_relu),
        out_shape=jax.ShapeDtypeStruct((m_pad, n_pad), out_dtype),
        grid=grid,
        in_specs=[
            pl.BlockSpec((tm, tk), lambda i, j, k: (i, k)),   # activation row tile
            pl.BlockSpec((tk, tn), lambda i, j, k: (k, j)),   # weight K/N tile
            pl.BlockSpec((1, tn), lambda i, j, k: (0, j)),    # bias row tile
        ],
        out_specs=pl.BlockSpec((tm, tn), lambda i, j, k: (i, j)),
        scratch_shapes=[pltpu.VMEM((tm, tn), jnp.float32)],   # f32 accumulator
        compiler_params=pltpu.CompilerParams(
            dimension_semantics=("parallel", "parallel", "arbitrary"),
            vmem_limit_bytes=_get_vmem_limit(),
        ),
        cost_estimate=pl.CostEstimate(flops=flops, transcendentals=0,
                                      bytes_accessed=bytes_accessed),
    )(x_c, w_c, b2)
    if m_pad != M or n_pad != N:
        out = out[:M, :N]
    return out


def dual_matmul_bias_act(x1, w1, x2, w2, b, *, apply_relu=False,
                         out_dtype=ACT_DTYPE):
    """out = relu?(x1 @ w1 + x2 @ w2 + b) — used for the fused skip concat."""
    M, K1 = x1.shape
    M2, K2 = x2.shape
    N = w1.shape[1]
    assert M == M2 and w1.shape == (K1, N) and w2.shape == (K2, N) and b.shape == (N,)

    n_pad = ((N + 127) // 128) * 128
    m_pad, tm = _m_tiling(M)
    tn = _n_tiling(n_pad)
    # Joint K tiling (K1 == K2 by UNet construction: skip channels == upconv out).
    if K1 == K2:
        tk1 = tk2 = _k_tiling(K1)
        kt = K1 // tk1
    else:
        tk1, tk2, kt = K1, K2, 1

    def prep(x):
        xc = x.astype(COMPUTE_DTYPE)
        if m_pad != M:
            xc = jnp.pad(xc, ((0, m_pad - M), (0, 0)))
        return xc

    x1c, x2c = prep(x1), prep(x2)
    w1c = _pad_cols(w1.astype(COMPUTE_DTYPE), n_pad)
    w2c = _pad_cols(w2.astype(COMPUTE_DTYPE), n_pad)
    b2 = _pad_cols(b.astype(jnp.float32), n_pad).reshape(1, n_pad)

    grid = (m_pad // tm, n_pad // tn, kt)
    out_itemsize = jnp.dtype(out_dtype).itemsize
    flops = 2 * m_pad * (K1 + K2) * n_pad
    bytes_accessed = ((x1c.size + x2c.size) * 2 * grid[1]
                      + (w1c.size + w2c.size) * 2 * grid[0]
                      + b2.size * 4 * grid[0]
                      + m_pad * n_pad * out_itemsize)

    out = pl.pallas_call(
        functools.partial(_dual_matmul_bias_act_kernel, apply_relu=apply_relu),
        out_shape=jax.ShapeDtypeStruct((m_pad, n_pad), out_dtype),
        grid=grid,
        in_specs=[
            pl.BlockSpec((tm, tk1), lambda i, j, k: (i, k)),
            pl.BlockSpec((tk1, tn), lambda i, j, k: (k, j)),
            pl.BlockSpec((tm, tk2), lambda i, j, k: (i, k)),
            pl.BlockSpec((tk2, tn), lambda i, j, k: (k, j)),
            pl.BlockSpec((1, tn), lambda i, j, k: (0, j)),
        ],
        out_specs=pl.BlockSpec((tm, tn), lambda i, j, k: (i, j)),
        scratch_shapes=[pltpu.VMEM((tm, tn), jnp.float32)],   # f32 accumulator
        compiler_params=pltpu.CompilerParams(
            dimension_semantics=("parallel", "parallel", "arbitrary"),
            vmem_limit_bytes=_get_vmem_limit(),
        ),
        cost_estimate=pl.CostEstimate(flops=flops, transcendentals=0,
                                      bytes_accessed=bytes_accessed),
    )(x1c, w1c, x2c, w2c, b2)
    if m_pad != M or n_pad != N:
        out = out[:M, :N]
    return out


# -----------------------------------------------------------------------------
# Conv ops expressed as im2col + Pallas matmul (NHWC)
# -----------------------------------------------------------------------------
def _im2col_3x3(x_nhwc):
    # x is cast to bf16 by callers BEFORE this, so the 9x-wide im2col tensor
    # (the dominant HBM pass) is materialized at half width.
    # TODO(synk): fuse im2col into the matmul kernel (halo'd row tiles).
    N, H, W, C = x_nhwc.shape
    xp = jnp.pad(x_nhwc, ((0, 0), (1, 1), (1, 1), (0, 0)))
    patches = [xp[:, dy:dy + H, dx:dx + W, :] for dy in range(3) for dx in range(3)]
    return jnp.concatenate(patches, axis=-1).reshape(N * H * W, 9 * C)


def _w3x3_to_mat(w_oihw):
    # weight matrix rows ordered (dy, dx, c) to match the im2col patch layout
    out_ch = w_oihw.shape[0]
    return jnp.transpose(w_oihw, (2, 3, 1, 0)).reshape(-1, out_ch)


def conv3x3_same(x_nhwc, w_oihw, bias, *, apply_relu, out_dtype=ACT_DTYPE):
    """nn.Conv2d(in, out, 3, padding=1).  w_oihw: (out, in, 3, 3)."""
    N, H, W, C = x_nhwc.shape
    out_ch = w_oihw.shape[0]
    x_c = x_nhwc.astype(COMPUTE_DTYPE)          # cast BEFORE im2col
    out = matmul_bias_act(_im2col_3x3(x_c), _w3x3_to_mat(w_oihw), bias,
                          apply_relu=apply_relu, out_dtype=out_dtype)
    return out.reshape(N, H, W, out_ch)


def conv3x3_same_concat(x_nhwc, enc_nhwc, w_oihw, bias, *, apply_relu,
                        out_dtype=ACT_DTYPE):
    """Fused torch.cat([x, enc], dim=1) -> Conv2d(in, out, 3, padding=1).

    The conv1 weight is split along its input-channel axis and the two partial
    K-sums are accumulated inside one Pallas kernel (two MXU dots per tile), so
    the concatenated activation tensor is never materialized in HBM.
    """
    N, H, W, Cx = x_nhwc.shape
    out_ch = w_oihw.shape[0]
    w_x = w_oihw[:, :Cx]          # (out, Cx, 3, 3)  -> x part
    w_e = w_oihw[:, Cx:]          # (out, Ce, 3, 3)  -> skip part
    x_c = x_nhwc.astype(COMPUTE_DTYPE)
    e_c = enc_nhwc.astype(COMPUTE_DTYPE)
    out = dual_matmul_bias_act(
        _im2col_3x3(x_c), _w3x3_to_mat(w_x),
        _im2col_3x3(e_c), _w3x3_to_mat(w_e),
        bias, apply_relu=apply_relu, out_dtype=out_dtype)
    return out.reshape(N, H, W, out_ch)


def conv_transpose_2x2_s2(x_nhwc, w_iohw, bias):
    """nn.ConvTranspose2d(in, out, 2, 2).  w_iohw: (in, out, 2, 2).

    With kernel==stride==2 there is no overlap:
      y[n, 2i+dy, 2j+dx, o] = sum_c x[n, i, j, c] * W[c, o, dy, dx] + b[o]
    """
    N, H, W, C = x_nhwc.shape
    out_ch = w_iohw.shape[1]
    x_flat = x_nhwc.astype(COMPUTE_DTYPE).reshape(N * H * W, C)
    # columns ordered as (dy, dx, o)
    w_mat = jnp.transpose(w_iohw, (0, 2, 3, 1)).reshape(C, 4 * out_ch)
    b_rep = jnp.tile(bias, 4)
    out = matmul_bias_act(x_flat, w_mat, b_rep, apply_relu=False,
                          out_dtype=ACT_DTYPE)
    out = out.reshape(N, H, W, 2, 2, out_ch)
    # TODO(synk): fold this interleave into the output BlockSpec (row scatter)
    # to save one full pass over the upsampled tensor at production sizes.
    out = jnp.transpose(out, (0, 1, 3, 2, 4, 5)).reshape(N, 2 * H, 2 * W, out_ch)
    return out


def conv1x1(x_nhwc, w_oi11, bias):
    """nn.Conv2d(in, out, 1) — the UNet head (f32 output)."""
    N, H, W, C = x_nhwc.shape
    out_ch = w_oi11.shape[0]
    w_mat = w_oi11.reshape(out_ch, C).T                   # (C, out_ch)
    x_flat = x_nhwc.astype(COMPUTE_DTYPE).reshape(N * H * W, C)
    out = matmul_bias_act(x_flat, w_mat, bias, apply_relu=False,
                          out_dtype=jnp.float32)
    return out.reshape(N, H, W, out_ch)


def maxpool2x2(x_nhwc):
    """nn.MaxPool2d(2)."""
    # TODO(synk): fuse into the encoder conv2 epilogue (second kernel output).
    N, H, W, C = x_nhwc.shape
    return jnp.max(x_nhwc.reshape(N, H // 2, 2, W // 2, 2, C), axis=(2, 4))


def center_crop_nhwc(x_nhwc, H, W):
    """torchvision.transforms.CenterCrop([H, W]) semantics (crop-only case)."""
    _, He, We, _ = x_nhwc.shape
    top = int(round((He - H) / 2.0))
    left = int(round((We - W) / 2.0))
    return x_nhwc[:, top:top + H, left:left + W, :]


# -----------------------------------------------------------------------------
# UNet parameters + forward
# -----------------------------------------------------------------------------
def init_unet_params(key, enc_chs, dec_chs, num_class):
    params = {}
    n_enc = len(enc_chs) - 1
    n_dec = len(dec_chs) - 1
    keys = iter(jax.random.split(key, 4 * n_enc + 6 * n_dec + 2))

    def wgt(k, shape, fan_in):
        return jax.random.normal(k, shape, jnp.float32) / jnp.sqrt(float(fan_in))

    def bias(k, n):
        return 0.1 * jax.random.normal(k, (n,), jnp.float32)

    for i in range(n_enc):
        cin, cout = enc_chs[i], enc_chs[i + 1]
        params[f"enc{i}_c1_w"] = wgt(next(keys), (cout, cin, 3, 3), 9 * cin)
        params[f"enc{i}_c1_b"] = bias(next(keys), cout)
        params[f"enc{i}_c2_w"] = wgt(next(keys), (cout, cout, 3, 3), 9 * cout)
        params[f"enc{i}_c2_b"] = bias(next(keys), cout)

    for i in range(n_dec):
        cin, cout = dec_chs[i], dec_chs[i + 1]
        # ConvTranspose2d(cin, cout, 2, 2): weight (cin, cout, 2, 2)
        params[f"up{i}_w"] = wgt(next(keys), (cin, cout, 2, 2), cin)
        params[f"up{i}_b"] = bias(next(keys), cout)
        # Block(cin, cout): conv1 (cout, cin, 3, 3), conv2 (cout, cout, 3, 3)
        params[f"dec{i}_c1_w"] = wgt(next(keys), (cout, cin, 3, 3), 9 * cin)
        params[f"dec{i}_c1_b"] = bias(next(keys), cout)
        params[f"dec{i}_c2_w"] = wgt(next(keys), (cout, cout, 3, 3), 9 * cout)
        params[f"dec{i}_c2_b"] = bias(next(keys), cout)

    params["head_w"] = wgt(next(keys), (num_class, dec_chs[-1], 1, 1), dec_chs[-1])
    params["head_b"] = bias(next(keys), num_class)
    return params


def unet_forward(params, x_nchw, enc_chs, dec_chs):
    """Mirrors UNet.forward (retain_dim=False): NCHW in / NCHW out.

    NOTE: MXU operands/intermediates are bf16, so results match the f32
    PyTorch reference at ~1e-2 relative tolerance (inference-grade).
    """
    x = jnp.transpose(x_nchw, (0, 2, 3, 1))                 # -> NHWC
    n_enc = len(enc_chs) - 1

    # ---- Encoder: Block -> store feature -> MaxPool2d(2) ----
    ftrs = []
    for i in range(n_enc):
        x = conv3x3_same(x, params[f"enc{i}_c1_w"], params[f"enc{i}_c1_b"],
                         apply_relu=True)
        x = conv3x3_same(x, params[f"enc{i}_c2_w"], params[f"enc{i}_c2_b"],
                         apply_relu=False)
        ftrs.append(x)
        if i < n_enc - 1:          # pool after the last block is never consumed
            x = maxpool2x2(x)

    # ---- Decoder: upconv -> crop skip -> (fused concat + conv1 + ReLU) -> conv2 ----
    x = ftrs[-1]                                            # enc_ftrs[::-1][0]
    skips = ftrs[::-1][1:]                                  # enc_ftrs[::-1][1:]
    for i in range(len(dec_chs) - 1):
        x = conv_transpose_2x2_s2(x, params[f"up{i}_w"], params[f"up{i}_b"])
        enc = center_crop_nhwc(skips[i], x.shape[1], x.shape[2])
        x = conv3x3_same_concat(x, enc,
                                params[f"dec{i}_c1_w"], params[f"dec{i}_c1_b"],
                                apply_relu=True)
        x = conv3x3_same(x, params[f"dec{i}_c2_w"], params[f"dec{i}_c2_b"],
                         apply_relu=False)

    # ---- Head: 1x1 conv (f32 output) ----
    x = conv1x1(x, params["head_w"], params["head_b"])
    return jnp.transpose(x, (0, 3, 1, 2))                   # -> NCHW


# -----------------------------------------------------------------------------
# Main
# -----------------------------------------------------------------------------
if __name__ == "__main__":
    # Matches the module: n1=16, n2=32, n3=64
    enc_chs = (1, 16, 32, 64)
    dec_chs = (64, 32, 16)
    num_class = 1
    batch, H, W = 2, 16, 16

    key = jax.random.PRNGKey(0)
    k_par, k_x = jax.random.split(key)

    params = init_unet_params(k_par, enc_chs, dec_chs, num_class)
    x = jax.random.normal(k_x, (batch, enc_chs[0], H, W), jnp.float32)

    fwd = jax.jit(functools.partial(unet_forward, enc_chs=enc_chs, dec_chs=dec_chs))
    out = jax.block_until_ready(fwd(params, x))

    expected_shape = (batch, num_class, H, W)
    assert out.shape == expected_shape, (out.shape, expected_shape)
    assert out.dtype == jnp.float32, out.dtype
    assert bool(jnp.all(jnp.isfinite(out))), "non-finite output"

    print("KERNEL_OK")
</pallas_src>

<mosaic_0001>
module attributes {stable_mosaic.version = 11 : i64} {
  func.func @_matmul_bias_act_kernel(%arg0: i32, %arg1: i32, %arg2: i32, %arg3: memref<512x9xbf16, #tpu.memory_space<vmem>>, %arg4: memref<9x128xbf16, #tpu.memory_space<vmem>>, %arg5: memref<1x128xf32, #tpu.memory_space<vmem>>, %arg6: memref<512x128xbf16, #tpu.memory_space<vmem>>, %arg7: memref<512x128xf32, #tpu.memory_space<vmem>>) attributes {dimension_semantics = [#tpu.dimension_semantics<parallel>, #tpu.dimension_semantics<parallel>, #tpu.dimension_semantics<arbitrary>], iteration_bounds = array<i64: 1, 1, 1>, scalar_prefetch = 0 : i64, scratch_operands = 1 : i64, tpu.core_type = #tpu.core_type<tc>, window_params = [{transform_indices = @transform_0, window_bounds = array<i64: 512, 9>}, {transform_indices = @transform_1, window_bounds = array<i64: 9, 128>}, {transform_indices = @transform_2, window_bounds = array<i64: 1, 128>}, {transform_indices = @transform_3, window_bounds = array<i64: 512, 128>}]} {
    %c0_i32 = arith.constant 0 : i32
    %0 = arith.cmpi eq, %arg2, %c0_i32 : i32
    %1 = arith.extui %0 : i1 to i32
    %c0_i32_0 = arith.constant 0 : i32
    %2 = arith.cmpi ne, %1, %c0_i32_0 : i32
    scf.if %2 {
      %cst_10 = arith.constant 0.000000e+00 : f32
      %12 = vector.broadcast %cst_10 : f32 to vector<512x128xf32>
      %c0_11 = arith.constant 0 : index
      %c0_12 = arith.constant 0 : index
      %13 = vector.load %arg7[%c0_11, %c0_12] : memref<512x128xf32, #tpu.memory_space<vmem>>, vector<512x128xf32>
      tpu.vector_store %arg7[%c0_11, %c0_12], %12 {strides = array<i32>} : memref<512x128xf32, #tpu.memory_space<vmem>>, vector<512x128xf32>,
    } else {
    }
    %c0 = arith.constant 0 : index
    %c0_1 = arith.constant 0 : index
    %3 = vector.load %arg7[%c0, %c0_1] : memref<512x128xf32, #tpu.memory_space<vmem>>, vector<512x128xf32>
    %c0_2 = arith.constant 0 : index
    %c0_3 = arith.constant 0 : index
    %4 = vector.load %arg3[%c0_2, %c0_3] : memref<512x9xbf16, #tpu.memory_space<vmem>>, vector<512x9xbf16>
    %c0_4 = arith.constant 0 : index
    %c0_5 = arith.constant 0 : index
    %5 = vector.load %arg4[%c0_4, %c0_5] : memref<9x128xbf16, #tpu.memory_space<vmem>>, vector<9x128xbf16>
    %cst = arith.constant dense<0.000000e+00> : vector<512x128xf32>
    %6 = tpu.matmul %4, %5, %cst {dimension_numbers = #tpu.dot_dimension_numbers<[1], [0], [0], [1], [0, 0, 1, 1], [], []>} : vector<512x9xbf16>, vector<9x128xbf16>, vector<512x128xf32> -> vector<512x128xf32>
    %7 = arith.addf %3, %6 : vector<512x128xf32>
    %c0_6 = arith.constant 0 : index
    %c0_7 = arith.constant 0 : index
    %8 = vector.load %arg7[%c0_6, %c0_7] : memref<512x128xf32, #tpu.memory_space<vmem>>, vector<512x128xf32>
    tpu.vector_store %arg7[%c0_6, %c0_7], %7 {strides = array<i32>} : memref<512x128xf32, #tpu.memory_space<vmem>>, vector<512x128xf32>,
    %c0_i32_8 = arith.constant 0 : i32
    %9 = arith.cmpi eq, %arg2, %c0_i32_8 : i32
    %10 = arith.extui %9 : i1 to i32
    %c0_i32_9 = arith.constant 0 : i32
    %11 = arith.cmpi ne, %10, %c0_i32_9 : i32
    scf.if %11 {
      %c0_10 = arith.constant 0 : index
      %c0_11 = arith.constant 0 : index
      %12 = vector.load %arg7[%c0_10, %c0_11] : memref<512x128xf32, #tpu.memory_space<vmem>>, vector<512x128xf32>
      %c0_12 = arith.constant 0 : index
      %c0_13 = arith.constant 0 : index
      %13 = vector.load %arg5[%c0_12, %c0_13] : memref<1x128xf32, #tpu.memory_space<vmem>>, vector<1x128xf32>
      %14 = vector.broadcast %13 : vector<1x128xf32> to vector<512x128xf32>
      %15 = arith.addf %12, %14 : vector<512x128xf32>
      %cst_14 = arith.constant 0.000000e+00 : f32
      %16 = vector.broadcast %cst_14 : f32 to vector<512x128xf32>
      %17 = arith.maximumf %15, %16 : vector<512x128xf32>
      %18 = arith.truncf %17 : vector<512x128xf32> to vector<512x128xbf16>
      %c0_15 = arith.constant 0 : index
      %c0_16 = arith.constant 0 : index
      %19 = vector.load %arg6[%c0_15, %c0_16] : memref<512x128xbf16, #tpu.memory_space<vmem>>, vector<512x128xbf16>
      tpu.vector_store %arg6[%c0_15, %c0_16], %18 {strides = array<i32>} : memref<512x128xbf16, #tpu.memory_space<vmem>>, vector<512x128xbf16>,
    } else {
    }
    return
  }
  func.func @transform_0(%arg0: i32, %arg1: i32, %arg2: i32) -> (i32, i32) {
    %c0_i32 = arith.constant 0 : i32
    return %arg0, %arg2 : i32, i32
  }
  func.func @transform_1(%arg0: i32, %arg1: i32, %arg2: i32) -> (i32, i32) {
    %c0_i32 = arith.constant 0 : i32
    return %arg2, %arg1 : i32, i32
  }
  func.func @transform_2(%arg0: i32, %arg1: i32, %arg2: i32) -> (i32, i32) {
    %c0_i32 = arith.constant 0 : i32
    %c0_i32_0 = arith.constant 0 : i32
    return %c0_i32, %arg1 : i32, i32
  }
  func.func @transform_3(%arg0: i32, %arg1: i32, %arg2: i32) -> (i32, i32) {
    %c0_i32 = arith.constant 0 : i32
    return %arg0, %arg1 : i32, i32
  }
}

module attributes {stable_mosaic.version = 11 : i64} {
  func.func @_matmul_bias_act_kernel(%arg0: i32, %arg1: i32, %arg2: i32, %arg3: memref<512x144xbf16, #tpu.memory_space<vmem>>, %arg4: memref<144x128xbf16, #tpu.memory_space<vmem>>, %arg5: memref<1x128xf32, #tpu.memory_space<vmem>>, %arg6: memref<512x128xbf16, #tpu.memory_space<vmem>>, %arg7: memref<512x128xf32, #tpu.memory_space<vmem>>) attributes {dimension_semantics = [#tpu.dimension_semantics<parallel>, #tpu.dimension_semantics<parallel>, #tpu.dimension_semantics<arbitrary>], iteration_bounds = array<i64: 1, 1, 1>, scalar_prefetch = 0 : i64, scratch_operands = 1 : i64, tpu.core_type = #tpu.core_type<tc>, window_params = [{transform_indices = @transform_0, window_bounds = array<i64: 512, 144>}, {transform_indices = @transform_1, window_bounds = array<i64: 144, 128>}, {transform_indices = @transform_2, window_bounds = array<i64: 1, 128>}, {transform_indices = @transform_3, window_bounds = array<i64: 512, 128>}]} {
    %c0_i32 = arith.constant 0 : i32
    %0 = arith.cmpi eq, %arg2, %c0_i32 : i32
    %1 = arith.extui %0 : i1 to i32
    %c0_i32_0 = arith.constant 0 : i32
    %2 = arith.cmpi ne, %1, %c0_i32_0 : i32
    scf.if %2 {
      %cst_10 = arith.constant 0.000000e+00 : f32
      %12 = vector.broadcast %cst_10 : f32 to vector<512x128xf32>
      %c0_11 = arith.constant 0 : index
      %c0_12 = arith.constant 0 : index
      %13 = vector.load %arg7[%c0_11, %c0_12] : memref<512x128xf32, #tpu.memory_space<vmem>>, vector<512x128xf32>
      tpu.vector_store %arg7[%c0_11, %c0_12], %12 {strides = array<i32>} : memref<512x128xf32, #tpu.memory_space<vmem>>, vector<512x128xf32>,
    } else {
    }
    %c0 = arith.constant 0 : index
    %c0_1 = arith.constant 0 : index
    %3 = vector.load %arg7[%c0, %c0_1] : memref<512x128xf32, #tpu.memory_space<vmem>>, vector<512x128xf32>
    %c0_2 = arith.constant 0 : index
    %c0_3 = arith.constant 0 : index
    %4 = vector.load %arg3[%c0_2, %c0_3] : memref<512x144xbf16, #tpu.memory_space<vmem>>, vector<512x144xbf16>
    %c0_4 = arith.constant 0 : index
    %c0_5 = arith.constant 0 : index
    %5 = vector.load %arg4[%c0_4, %c0_5] : memref<144x128xbf16, #tpu.memory_space<vmem>>, vector<144x128xbf16>
    %cst = arith.constant dense<0.000000e+00> : vector<512x128xf32>
    %6 = tpu.matmul %4, %5, %cst {dimension_numbers = #tpu.dot_dimension_numbers<[1], [0], [0], [1], [0, 0, 1, 1], [], []>} : vector<512x144xbf16>, vector<144x128xbf16>, vector<512x128xf32> -> vector<512x128xf32>
    %7 = arith.addf %3, %6 : vector<512x128xf32>
    %c0_6 = arith.constant 0 : index
    %c0_7 = arith.constant 0 : index
    %8 = vector.load %arg7[%c0_6, %c0_7] : memref<512x128xf32, #tpu.memory_space<vmem>>, vector<512x128xf32>
    tpu.vector_store %arg7[%c0_6, %c0_7], %7 {strides = array<i32>} : memref<512x128xf32, #tpu.memory_space<vmem>>, vector<512x128xf32>,
    %c0_i32_8 = arith.constant 0 : i32
    %9 = arith.cmpi eq, %arg2, %c0_i32_8 : i32
    %10 = arith.extui %9 : i1 to i32
    %c0_i32_9 = arith.constant 0 : i32
    %11 = arith.cmpi ne, %10, %c0_i32_9 : i32
    scf.if %11 {
      %c0_10 = arith.constant 0 : index
      %c0_11 = arith.constant 0 : index
      %12 = vector.load %arg7[%c0_10, %c0_11] : memref<512x128xf32, #tpu.memory_space<vmem>>, vector<512x128xf32>
      %c0_12 = arith.constant 0 : index
      %c0_13 = arith.constant 0 : index
      %13 = vector.load %arg5[%c0_12, %c0_13] : memref<1x128xf32, #tpu.memory_space<vmem>>, vector<1x128xf32>
      %14 = vector.broadcast %13 : vector<1x128xf32> to vector<512x128xf32>
      %15 = arith.addf %12, %14 : vector<512x128xf32>
      %16 = arith.truncf %15 : vector<512x128xf32> to vector<512x128xbf16>
      %c0_14 = arith.constant 0 : index
      %c0_15 = arith.constant 0 : index
      %17 = vector.load %arg6[%c0_14, %c0_15] : memref<512x128xbf16, #tpu.memory_space<vmem>>, vector<512x128xbf16>
      tpu.vector_store %arg6[%c0_14, %c0_15], %16 {strides = array<i32>} : memref<512x128xbf16, #tpu.memory_space<vmem>>, vector<512x128xbf16>,
    } else {
    }
    return
  }
  func.func @transform_0(%arg0: i32, %arg1: i32, %arg2: i32) -> (i32, i32) {
    %c0_i32 = arith.constant 0 : i32
    return %arg0, %arg2 : i32, i32
  }
  func.func @transform_1(%arg0: i32, %arg1: i32, %arg2: i32) -> (i32, i32) {
    %c0_i32 = arith.constant 0 : i32
    return %arg2, %arg1 : i32, i32
  }
  func.func @transform_2(%arg0: i32, %arg1: i32, %arg2: i32) -> (i32, i32) {
    %c0_i32 = arith.constant 0 : i32
    %c0_i32_0 = arith.constant 0 : i32
    return %c0_i32, %arg1 : i32, i32
  }
  func.func @transform_3(%arg0: i32, %arg1: i32, %arg2: i32) -> (i32, i32) {
    %c0_i32 = arith.constant 0 : i32
    return %arg0, %arg1 : i32, i32
  }
}

module attributes {stable_mosaic.version = 11 : i64} {
  func.func @_matmul_bias_act_kernel(%arg0: i32, %arg1: i32, %arg2: i32, %arg3: memref<128x144xbf16, #tpu.memory_space<vmem>>, %arg4: memref<144x128xbf16, #tpu.memory_space<vmem>>, %arg5: memref<1x128xf32, #tpu.memory_space<vmem>>, %arg6: memref<128x128xbf16, #tpu.memory_space<vmem>>, %arg7: memref<128x128xf32, #tpu.memory_space<vmem>>) attributes {dimension_semantics = [#tpu.dimension_semantics<parallel>, #tpu.dimension_semantics<parallel>, #tpu.dimension_semantics<arbitrary>], iteration_bounds = array<i64: 1, 1, 1>, scalar_prefetch = 0 : i64, scratch_operands = 1 : i64, tpu.core_type = #tpu.core_type<tc>, window_params = [{transform_indices = @transform_0, window_bounds = array<i64: 128, 144>}, {transform_indices = @transform_1, window_bounds = array<i64: 144, 128>}, {transform_indices = @transform_2, window_bounds = array<i64: 1, 128>}, {transform_indices = @transform_3, window_bounds = array<i64: 128, 128>}]} {
    %c0_i32 = arith.constant 0 : i32
    %0 = arith.cmpi eq, %arg2, %c0_i32 : i32
    %1 = arith.extui %0 : i1 to i32
    %c0_i32_0 = arith.constant 0 : i32
    %2 = arith.cmpi ne, %1, %c0_i32_0 : i32
    scf.if %2 {
      %cst_10 = arith.constant 0.000000e+00 : f32
      %12 = vector.broadcast %cst_10 : f32 to vector<128x128xf32>
      %c0_11 = arith.constant 0 : index
      %c0_12 = arith.constant 0 : index
      %13 = vector.load %arg7[%c0_11, %c0_12] : memref<128x128xf32, #tpu.memory_space<vmem>>, vector<128x128xf32>
      tpu.vector_store %arg7[%c0_11, %c0_12], %12 {strides = array<i32>} : memref<128x128xf32, #tpu.memory_space<vmem>>, vector<128x128xf32>,
    } else {
    }
    %c0 = arith.constant 0 : index
    %c0_1 = arith.constant 0 : index
    %3 = vector.load %arg7[%c0, %c0_1] : memref<128x128xf32, #tpu.memory_space<vmem>>, vector<128x128xf32>
    %c0_2 = arith.constant 0 : index
    %c0_3 = arith.constant 0 : index
    %4 = vector.load %arg3[%c0_2, %c0_3] : memref<128x144xbf16, #tpu.memory_space<vmem>>, vector<128x144xbf16>
    %c0_4 = arith.constant 0 : index
    %c0_5 = arith.constant 0 : index
    %5 = vector.load %arg4[%c0_4, %c0_5] : memref<144x128xbf16, #tpu.memory_space<vmem>>, vector<144x128xbf16>
    %cst = arith.constant dense<0.000000e+00> : vector<128x128xf32>
    %6 = tpu.matmul %4, %5, %cst {dimension_numbers = #tpu.dot_dimension_numbers<[1], [0], [0], [1], [0, 0, 1, 1], [], []>} : vector<128x144xbf16>, vector<144x128xbf16>, vector<128x128xf32> -> vector<128x128xf32>
    %7 = arith.addf %3, %6 : vector<128x128xf32>
    %c0_6 = arith.constant 0 : index
    %c0_7 = arith.constant 0 : index
    %8 = vector.load %arg7[%c0_6, %c0_7] : memref<128x128xf32, #tpu.memory_space<vmem>>, vector<128x128xf32>
    tpu.vector_store %arg7[%c0_6, %c0_7], %7 {strides = array<i32>} : memref<128x128xf32, #tpu.memory_space<vmem>>, vector<128x128xf32>,
    %c0_i32_8 = arith.constant 0 : i32
    %9 = arith.cmpi eq, %arg2, %c0_i32_8 : i32
    %10 = arith.extui %9 : i1 to i32
    %c0_i32_9 = arith.constant 0 : i32
    %11 = arith.cmpi ne, %10, %c0_i32_9 : i32
    scf.if %11 {
      %c0_10 = arith.constant 0 : index
      %c0_11 = arith.constant 0 : index
      %12 = vector.load %arg7[%c0_10, %c0_11] : memref<128x128xf32, #tpu.memory_space<vmem>>, vector<128x128xf32>
      %c0_12 = arith.constant 0 : index
      %c0_13 = arith.constant 0 : index
      %13 = vector.load %arg5[%c0_12, %c0_13] : memref<1x128xf32, #tpu.memory_space<vmem>>, vector<1x128xf32>
      %14 = vector.broadcast %13 : vector<1x128xf32> to vector<128x128xf32>
      %15 = arith.addf %12, %14 : vector<128x128xf32>
      %cst_14 = arith.constant 0.000000e+00 : f32
      %16 = vector.broadcast %cst_14 : f32 to vector<128x128xf32>
      %17 = arith.maximumf %15, %16 : vector<128x128xf32>
      %18 = arith.truncf %17 : vector<128x128xf32> to vector<128x128xbf16>
      %c0_15 = arith.constant 0 : index
      %c0_16 = arith.constant 0 : index
      %19 = vector.load %arg6[%c0_15, %c0_16] : memref<128x128xbf16, #tpu.memory_space<vmem>>, vector<128x128xbf16>
      tpu.vector_store %arg6[%c0_15, %c0_16], %18 {strides = array<i32>} : memref<128x128xbf16, #tpu.memory_space<vmem>>, vector<128x128xbf16>,
    } else {
    }
    return
  }
  func.func @transform_0(%arg0: i32, %arg1: i32, %arg2: i32) -> (i32, i32) {
    %c0_i32 = arith.constant 0 : i32
    return %arg0, %arg2 : i32, i32
  }
  func.func @transform_1(%arg0: i32, %arg1: i32, %arg2: i32) -> (i32, i32) {
    %c0_i32 = arith.constant 0 : i32
    return %arg2, %arg1 : i32, i32
  }
  func.func @transform_2(%arg0: i32, %arg1: i32, %arg2: i32) -> (i32, i32) {
    %c0_i32 = arith.constant 0 : i32
    %c0_i32_0 = arith.constant 0 : i32
    return %c0_i32, %arg1 : i32, i32
  }
  func.func @transform_3(%arg0: i32, %arg1: i32, %arg2: i32) -> (i32, i32) {
    %c0_i32 = arith.constant 0 : i32
    return %arg0, %arg1 : i32, i32
  }
}

module attributes {stable_mosaic.version = 11 : i64} {
  func.func @_matmul_bias_act_kernel(%arg0: i32, %arg1: i32, %arg2: i32, %arg3: memref<128x288xbf16, #tpu.memory_space<vmem>>, %arg4: memref<288x128xbf16, #tpu.memory_space<vmem>>, %arg5: memref<1x128xf32, #tpu.memory_space<vmem>>, %arg6: memref<128x128xbf16, #tpu.memory_space<vmem>>, %arg7: memref<128x128xf32, #tpu.memory_space<vmem>>) attributes {dimension_semantics = [#tpu.dimension_semantics<parallel>, #tpu.dimension_semantics<parallel>, #tpu.dimension_semantics<arbitrary>], iteration_bounds = array<i64: 1, 1, 1>, scalar_prefetch = 0 : i64, scratch_operands = 1 : i64, tpu.core_type = #tpu.core_type<tc>, window_params = [{transform_indices = @transform_0, window_bounds = array<i64: 128, 288>}, {transform_indices = @transform_1, window_bounds = array<i64: 288, 128>}, {transform_indices = @transform_2, window_bounds = array<i64: 1, 128>}, {transform_indices = @transform_3, window_bounds = array<i64: 128, 128>}]} {
    %c0_i32 = arith.constant 0 : i32
    %0 = arith.cmpi eq, %arg2, %c0_i32 : i32
    %1 = arith.extui %0 : i1 to i32
    %c0_i32_0 = arith.constant 0 : i32
    %2 = arith.cmpi ne, %1, %c0_i32_0 : i32
    scf.if %2 {
      %cst_10 = arith.constant 0.000000e+00 : f32
      %12 = vector.broadcast %cst_10 : f32 to vector<128x128xf32>
      %c0_11 = arith.constant 0 : index
      %c0_12 = arith.constant 0 : index
      %13 = vector.load %arg7[%c0_11, %c0_12] : memref<128x128xf32, #tpu.memory_space<vmem>>, vector<128x128xf32>
      tpu.vector_store %arg7[%c0_11, %c0_12], %12 {strides = array<i32>} : memref<128x128xf32, #tpu.memory_space<vmem>>, vector<128x128xf32>,
    } else {
    }
    %c0 = arith.constant 0 : index
    %c0_1 = arith.constant 0 : index
    %3 = vector.load %arg7[%c0, %c0_1] : memref<128x128xf32, #tpu.memory_space<vmem>>, vector<128x128xf32>
    %c0_2 = arith.constant 0 : index
    %c0_3 = arith.constant 0 : index
    %4 = vector.load %arg3[%c0_2, %c0_3] : memref<128x288xbf16, #tpu.memory_space<vmem>>, vector<128x288xbf16>
    %c0_4 = arith.constant 0 : index
    %c0_5 = arith.constant 0 : index
    %5 = vector.load %arg4[%c0_4, %c0_5] : memref<288x128xbf16, #tpu.memory_space<vmem>>, vector<288x128xbf16>
    %cst = arith.constant dense<0.000000e+00> : vector<128x128xf32>
    %6 = tpu.matmul %4, %5, %cst {dimension_numbers = #tpu.dot_dimension_numbers<[1], [0], [0], [1], [0, 0, 1, 1], [], []>} : vector<128x288xbf16>, vector<288x128xbf16>, vector<128x128xf32> -> vector<128x128xf32>
    %7 = arith.addf %3, %6 : vector<128x128xf32>
    %c0_6 = arith.constant 0 : index
    %c0_7 = arith.constant 0 : index
    %8 = vector.load %arg7[%c0_6, %c0_7] : memref<128x128xf32, #tpu.memory_space<vmem>>, vector<128x128xf32>
    tpu.vector_store %arg7[%c0_6, %c0_7], %7 {strides = array<i32>} : memref<128x128xf32, #tpu.memory_space<vmem>>, vector<128x128xf32>,
    %c0_i32_8 = arith.constant 0 : i32
    %9 = arith.cmpi eq, %arg2, %c0_i32_8 : i32
    %10 = arith.extui %9 : i1 to i32
    %c0_i32_9 = arith.constant 0 : i32
    %11 = arith.cmpi ne, %10, %c0_i32_9 : i32
    scf.if %11 {
      %c0_10 = arith.constant 0 : index
      %c0_11 = arith.constant 0 : index
      %12 = vector.load %arg7[%c0_10, %c0_11] : memref<128x128xf32, #tpu.memory_space<vmem>>, vector<128x128xf32>
      %c0_12 = arith.constant 0 : index
      %c0_13 = arith.constant 0 : index
      %13 = vector.load %arg5[%c0_12, %c0_13] : memref<1x128xf32, #tpu.memory_space<vmem>>, vector<1x128xf32>
      %14 = vector.broadcast %13 : vector<1x128xf32> to vector<128x128xf32>
      %15 = arith.addf %12, %14 : vector<128x128xf32>
      %16 = arith.truncf %15 : vector<128x128xf32> to vector<128x128xbf16>
      %c0_14 = arith.constant 0 : index
      %c0_15 = arith.constant 0 : index
      %17 = vector.load %arg6[%c0_14, %c0_15] : memref<128x128xbf16, #tpu.memory_space<vmem>>, vector<128x128xbf16>
      tpu.vector_store %arg6[%c0_14, %c0_15], %16 {strides = array<i32>} : memref<128x128xbf16, #tpu.memory_space<vmem>>, vector<128x128xbf16>,
    } else {
    }
    return
  }
  func.func @transform_0(%arg0: i32, %arg1: i32, %arg2: i32) -> (i32, i32) {
    %c0_i32 = arith.constant 0 : i32
    return %arg0, %arg2 : i32, i32
  }
  func.func @transform_1(%arg0: i32, %arg1: i32, %arg2: i32) -> (i32, i32) {
    %c0_i32 = arith.constant 0 : i32
    return %arg2, %arg1 : i32, i32
  }
  func.func @transform_2(%arg0: i32, %arg1: i32, %arg2: i32) -> (i32, i32) {
    %c0_i32 = arith.constant 0 : i32
    %c0_i32_0 = arith.constant 0 : i32
    return %c0_i32, %arg1 : i32, i32
  }
  func.func @transform_3(%arg0: i32, %arg1: i32, %arg2: i32) -> (i32, i32) {
    %c0_i32 = arith.constant 0 : i32
    return %arg0, %arg1 : i32, i32
  }
}

module attributes {stable_mosaic.version = 11 : i64} {
  func.func @_matmul_bias_act_kernel(%arg0: i32, %arg1: i32, %arg2: i32, %arg3: memref<32x288xbf16, #tpu.memory_space<vmem>>, %arg4: memref<288x128xbf16, #tpu.memory_space<vmem>>, %arg5: memref<1x128xf32, #tpu.memory_space<vmem>>, %arg6: memref<32x128xbf16, #tpu.memory_space<vmem>>, %arg7: memref<32x128xf32, #tpu.memory_space<vmem>>) attributes {dimension_semantics = [#tpu.dimension_semantics<parallel>, #tpu.dimension_semantics<parallel>, #tpu.dimension_semantics<arbitrary>], iteration_bounds = array<i64: 1, 1, 1>, scalar_prefetch = 0 : i64, scratch_operands = 1 : i64, tpu.core_type = #tpu.core_type<tc>, window_params = [{transform_indices = @transform_0, window_bounds = array<i64: 32, 288>}, {transform_indices = @transform_1, window_bounds = array<i64: 288, 128>}, {transform_indices = @transform_2, window_bounds = array<i64: 1, 128>}, {transform_indices = @transform_3, window_bounds = array<i64: 32, 128>}]} {
    %c0_i32 = arith.constant 0 : i32
    %0 = arith.cmpi eq, %arg2, %c0_i32 : i32
    %1 = arith.extui %0 : i1 to i32
    %c0_i32_0 = arith.constant 0 : i32
    %2 = arith.cmpi ne, %1, %c0_i32_0 : i32
    scf.if %2 {
      %cst_10 = arith.constant 0.000000e+00 : f32
      %12 = vector.broadcast %cst_10 : f32 to vector<32x128xf32>
      %c0_11 = arith.constant 0 : index
      %c0_12 = arith.constant 0 : index
      %13 = vector.load %arg7[%c0_11, %c0_12] : memref<32x128xf32, #tpu.memory_space<vmem>>, vector<32x128xf32>
      tpu.vector_store %arg7[%c0_11, %c0_12], %12 {strides = array<i32>} : memref<32x128xf32, #tpu.memory_space<vmem>>, vector<32x128xf32>,
    } else {
    }
    %c0 = arith.constant 0 : index
    %c0_1 = arith.constant 0 : index
    %3 = vector.load %arg7[%c0, %c0_1] : memref<32x128xf32, #tpu.memory_space<vmem>>, vector<32x128xf32>
    %c0_2 = arith.constant 0 : index
    %c0_3 = arith.constant 0 : index
    %4 = vector.load %arg3[%c0_2, %c0_3] : memref<32x288xbf16, #tpu.memory_space<vmem>>, vector<32x288xbf16>
    %c0_4 = arith.constant 0 : index
    %c0_5 = arith.constant 0 : index
    %5 = vector.load %arg4[%c0_4, %c0_5] : memref<288x128xbf16, #tpu.memory_space<vmem>>, vector<288x128xbf16>
    %cst = arith.constant dense<0.000000e+00> : vector<32x128xf32>
    %6 = tpu.matmul %4, %5, %cst {dimension_numbers = #tpu.dot_dimension_numbers<[1], [0], [0], [1], [0, 0, 1, 1], [], []>} : vector<32x288xbf16>, vector<288x128xbf16>, vector<32x128xf32> -> vector<32x128xf32>
    %7 = arith.addf %3, %6 : vector<32x128xf32>
    %c0_6 = arith.constant 0 : index
    %c0_7 = arith.constant 0 : index
    %8 = vector.load %arg7[%c0_6, %c0_7] : memref<32x128xf32, #tpu.memory_space<vmem>>, vector<32x128xf32>
    tpu.vector_store %arg7[%c0_6, %c0_7], %7 {strides = array<i32>} : memref<32x128xf32, #tpu.memory_space<vmem>>, vector<32x128xf32>,
    %c0_i32_8 = arith.constant 0 : i32
    %9 = arith.cmpi eq, %arg2, %c0_i32_8 : i32
    %10 = arith.extui %9 : i1 to i32
    %c0_i32_9 = arith.constant 0 : i32
    %11 = arith.cmpi ne, %10, %c0_i32_9 : i32
    scf.if %11 {
      %c0_10 = arith.constant 0 : index
      %c0_11 = arith.constant 0 : index
      %12 = vector.load %arg7[%c0_10, %c0_11] : memref<32x128xf32, #tpu.memory_space<vmem>>, vector<32x128xf32>
      %c0_12 = arith.constant 0 : index
      %c0_13 = arith.constant 0 : index
      %13 = vector.load %arg5[%c0_12, %c0_13] : memref<1x128xf32, #tpu.memory_space<vmem>>, vector<1x128xf32>
      %14 = vector.broadcast %13 : vector<1x128xf32> to vector<32x128xf32>
      %15 = arith.addf %12, %14 : vector<32x128xf32>
      %cst_14 = arith.constant 0.000000e+00 : f32
      %16 = vector.broadcast %cst_14 : f32 to vector<32x128xf32>
      %17 = arith.maximumf %15, %16 : vector<32x128xf32>
      %18 = arith.truncf %17 : vector<32x128xf32> to vector<32x128xbf16>
      %c0_15 = arith.constant 0 : index
      %c0_16 = arith.constant 0 : index
      %19 = vector.load %arg6[%c0_15, %c0_16] : memref<32x128xbf16, #tpu.memory_space<vmem>>, vector<32x128xbf16>
      tpu.vector_store %arg6[%c0_15, %c0_16], %18 {strides = array<i32>} : memref<32x128xbf16, #tpu.memory_space<vmem>>, vector<32x128xbf16>,
    } else {
    }
    return
  }
  func.func @transform_0(%arg0: i32, %arg1: i32, %arg2: i32) -> (i32, i32) {
    %c0_i32 = arith.constant 0 : i32
    return %arg0, %arg2 : i32, i32
  }
  func.func @transform_1(%arg0: i32, %arg1: i32, %arg2: i32) -> (i32, i32) {
    %c0_i32 = arith.constant 0 : i32
    return %arg2, %arg1 : i32, i32
  }
  func.func @transform_2(%arg0: i32, %arg1: i32, %arg2: i32) -> (i32, i32) {
    %c0_i32 = arith.constant 0 : i32
    %c0_i32_0 = arith.constant 0 : i32
    return %c0_i32, %arg1 : i32, i32
  }
  func.func @transform_3(%arg0: i32, %arg1: i32, %arg2: i32) -> (i32, i32) {
    %c0_i32 = arith.constant 0 : i32
    return %arg0, %arg1 : i32, i32
  }
}

module attributes {stable_mosaic.version = 11 : i64} {
  func.func @_matmul_bias_act_kernel(%arg0: i32, %arg1: i32, %arg2: i32, %arg3: memref<32x576xbf16, #tpu.memory_space<vmem>>, %arg4: memref<576x128xbf16, #tpu.memory_space<vmem>>, %arg5: memref<1x128xf32, #tpu.memory_space<vmem>>, %arg6: memref<32x128xbf16, #tpu.memory_space<vmem>>, %arg7: memref<32x128xf32, #tpu.memory_space<vmem>>) attributes {dimension_semantics = [#tpu.dimension_semantics<parallel>, #tpu.dimension_semantics<parallel>, #tpu.dimension_semantics<arbitrary>], iteration_bounds = array<i64: 1, 1, 1>, scalar_prefetch = 0 : i64, scratch_operands = 1 : i64, tpu.core_type = #tpu.core_type<tc>, window_params = [{transform_indices = @transform_0, window_bounds = array<i64: 32, 576>}, {transform_indices = @transform_1, window_bounds = array<i64: 576, 128>}, {transform_indices = @transform_2, window_bounds = array<i64: 1, 128>}, {transform_indices = @transform_3, window_bounds = array<i64: 32, 128>}]} {
    %c0_i32 = arith.constant 0 : i32
    %0 = arith.cmpi eq, %arg2, %c0_i32 : i32
    %1 = arith.extui %0 : i1 to i32
    %c0_i32_0 = arith.constant 0 : i32
    %2 = arith.cmpi ne, %1, %c0_i32_0 : i32
    scf.if %2 {
      %cst_10 = arith.constant 0.000000e+00 : f32
      %12 = vector.broadcast %cst_10 : f32 to vector<32x128xf32>
      %c0_11 = arith.constant 0 : index
      %c0_12 = arith.constant 0 : index
      %13 = vector.load %arg7[%c0_11, %c0_12] : memref<32x128xf32, #tpu.memory_space<vmem>>, vector<32x128xf32>
      tpu.vector_store %arg7[%c0_11, %c0_12], %12 {strides = array<i32>} : memref<32x128xf32, #tpu.memory_space<vmem>>, vector<32x128xf32>,
    } else {
    }
    %c0 = arith.constant 0 : index
    %c0_1 = arith.constant 0 : index
    %3 = vector.load %arg7[%c0, %c0_1] : memref<32x128xf32, #tpu.memory_space<vmem>>, vector<32x128xf32>
    %c0_2 = arith.constant 0 : index
    %c0_3 = arith.constant 0 : index
    %4 = vector.load %arg3[%c0_2, %c0_3] : memref<32x576xbf16, #tpu.memory_space<vmem>>, vector<32x576xbf16>
    %c0_4 = arith.constant 0 : index
    %c0_5 = arith.constant 0 : index
    %5 = vector.load %arg4[%c0_4, %c0_5] : memref<576x128xbf16, #tpu.memory_space<vmem>>, vector<576x128xbf16>
    %cst = arith.constant dense<0.000000e+00> : vector<32x128xf32>
    %6 = tpu.matmul %4, %5, %cst {dimension_numbers = #tpu.dot_dimension_numbers<[1], [0], [0], [1], [0, 0, 1, 1], [], []>} : vector<32x576xbf16>, vector<576x128xbf16>, vector<32x128xf32> -> vector<32x128xf32>
    %7 = arith.addf %3, %6 : vector<32x128xf32>
    %c0_6 = arith.constant 0 : index
    %c0_7 = arith.constant 0 : index
    %8 = vector.load %arg7[%c0_6, %c0_7] : memref<32x128xf32, #tpu.memory_space<vmem>>, vector<32x128xf32>
    tpu.vector_store %arg7[%c0_6, %c0_7], %7 {strides = array<i32>} : memref<32x128xf32, #tpu.memory_space<vmem>>, vector<32x128xf32>,
    %c0_i32_8 = arith.constant 0 : i32
    %9 = arith.cmpi eq, %arg2, %c0_i32_8 : i32
    %10 = arith.extui %9 : i1 to i32
    %c0_i32_9 = arith.constant 0 : i32
    %11 = arith.cmpi ne, %10, %c0_i32_9 : i32
    scf.if %11 {
      %c0_10 = arith.constant 0 : index
      %c0_11 = arith.constant 0 : index
      %12 = vector.load %arg7[%c0_10, %c0_11] : memref<32x128xf32, #tpu.memory_space<vmem>>, vector<32x128xf32>
      %c0_12 = arith.constant 0 : index
      %c0_13 = arith.constant 0 : index
      %13 = vector.load %arg5[%c0_12, %c0_13] : memref<1x128xf32, #tpu.memory_space<vmem>>, vector<1x128xf32>
      %14 = vector.broadcast %13 : vector<1x128xf32> to vector<32x128xf32>
      %15 = arith.addf %12, %14 : vector<32x128xf32>
      %16 = arith.truncf %15 : vector<32x128xf32> to vector<32x128xbf16>
      %c0_14 = arith.constant 0 : index
      %c0_15 = arith.constant 0 : index
      %17 = vector.load %arg6[%c0_14, %c0_15] : memref<32x128xbf16, #tpu.memory_space<vmem>>, vector<32x128xbf16>
      tpu.vector_store %arg6[%c0_14, %c0_15], %16 {strides = array<i32>} : memref<32x128xbf16, #tpu.memory_space<vmem>>, vector<32x128xbf16>,
    } else {
    }
    return
  }
  func.func @transform_0(%arg0: i32, %arg1: i32, %arg2: i32) -> (i32, i32) {
    %c0_i32 = arith.constant 0 : i32
    return %arg0, %arg2 : i32, i32
  }
  func.func @transform_1(%arg0: i32, %arg1: i32, %arg2: i32) -> (i32, i32) {
    %c0_i32 = arith.constant 0 : i32
    return %arg2, %arg1 : i32, i32
  }
  func.func @transform_2(%arg0: i32, %arg1: i32, %arg2: i32) -> (i32, i32) {
    %c0_i32 = arith.constant 0 : i32
    %c0_i32_0 = arith.constant 0 : i32
    return %c0_i32, %arg1 : i32, i32
  }
  func.func @transform_3(%arg0: i32, %arg1: i32, %arg2: i32) -> (i32, i32) {
    %c0_i32 = arith.constant 0 : i32
    return %arg0, %arg1 : i32, i32
  }
}

module attributes {stable_mosaic.version = 11 : i64} {
  func.func @_matmul_bias_act_kernel(%arg0: i32, %arg1: i32, %arg2: i32, %arg3: memref<32x64xbf16, #tpu.memory_space<vmem>>, %arg4: memref<64x128xbf16, #tpu.memory_space<vmem>>, %arg5: memref<1x128xf32, #tpu.memory_space<vmem>>, %arg6: memref<32x128xbf16, #tpu.memory_space<vmem>>, %arg7: memref<32x128xf32, #tpu.memory_space<vmem>>) attributes {dimension_semantics = [#tpu.dimension_semantics<parallel>, #tpu.dimension_semantics<parallel>, #tpu.dimension_semantics<arbitrary>], iteration_bounds = array<i64: 1, 1, 1>, scalar_prefetch = 0 : i64, scratch_operands = 1 : i64, tpu.core_type = #tpu.core_type<tc>, window_params = [{transform_indices = @transform_0, window_bounds = array<i64: 32, 64>}, {transform_indices = @transform_1, window_bounds = array<i64: 64, 128>}, {transform_indices = @transform_2, window_bounds = array<i64: 1, 128>}, {transform_indices = @transform_3, window_bounds = array<i64: 32, 128>}]} {
    %c0_i32 = arith.constant 0 : i32
    %0 = arith.cmpi eq, %arg2, %c0_i32 : i32
    %1 = arith.extui %0 : i1 to i32
    %c0_i32_0 = arith.constant 0 : i32
    %2 = arith.cmpi ne, %1, %c0_i32_0 : i32
    scf.if %2 {
      %cst_10 = arith.constant 0.000000e+00 : f32
      %12 = vector.broadcast %cst_10 : f32 to vector<32x128xf32>
      %c0_11 = arith.constant 0 : index
      %c0_12 = arith.constant 0 : index
      %13 = vector.load %arg7[%c0_11, %c0_12] : memref<32x128xf32, #tpu.memory_space<vmem>>, vector<32x128xf32>
      tpu.vector_store %arg7[%c0_11, %c0_12], %12 {strides = array<i32>} : memref<32x128xf32, #tpu.memory_space<vmem>>, vector<32x128xf32>,
    } else {
    }
    %c0 = arith.constant 0 : index
    %c0_1 = arith.constant 0 : index
    %3 = vector.load %arg7[%c0, %c0_1] : memref<32x128xf32, #tpu.memory_space<vmem>>, vector<32x128xf32>
    %c0_2 = arith.constant 0 : index
    %c0_3 = arith.constant 0 : index
    %4 = vector.load %arg3[%c0_2, %c0_3] : memref<32x64xbf16, #tpu.memory_space<vmem>>, vector<32x64xbf16>
    %c0_4 = arith.constant 0 : index
    %c0_5 = arith.constant 0 : index
    %5 = vector.load %arg4[%c0_4, %c0_5] : memref<64x128xbf16, #tpu.memory_space<vmem>>, vector<64x128xbf16>
    %cst = arith.constant dense<0.000000e+00> : vector<32x128xf32>
    %6 = tpu.matmul %4, %5, %cst {dimension_numbers = #tpu.dot_dimension_numbers<[1], [0], [0], [1], [0, 0, 1, 1], [], []>} : vector<32x64xbf16>, vector<64x128xbf16>, vector<32x128xf32> -> vector<32x128xf32>
    %7 = arith.addf %3, %6 : vector<32x128xf32>
    %c0_6 = arith.constant 0 : index
    %c0_7 = arith.constant 0 : index
    %8 = vector.load %arg7[%c0_6, %c0_7] : memref<32x128xf32, #tpu.memory_space<vmem>>, vector<32x128xf32>
    tpu.vector_store %arg7[%c0_6, %c0_7], %7 {strides = array<i32>} : memref<32x128xf32, #tpu.memory_space<vmem>>, vector<32x128xf32>,
    %c0_i32_8 = arith.constant 0 : i32
    %9 = arith.cmpi eq, %arg2, %c0_i32_8 : i32
    %10 = arith.extui %9 : i1 to i32
    %c0_i32_9 = arith.constant 0 : i32
    %11 = arith.cmpi ne, %10, %c0_i32_9 : i32
    scf.if %11 {
      %c0_10 = arith.constant 0 : index
      %c0_11 = arith.constant 0 : index
      %12 = vector.load %arg7[%c0_10, %c0_11] : memref<32x128xf32, #tpu.memory_space<vmem>>, vector<32x128xf32>
      %c0_12 = arith.constant 0 : index
      %c0_13 = arith.constant 0 : index
      %13 = vector.load %arg5[%c0_12, %c0_13] : memref<1x128xf32, #tpu.memory_space<vmem>>, vector<1x128xf32>
      %14 = vector.broadcast %13 : vector<1x128xf32> to vector<32x128xf32>
      %15 = arith.addf %12, %14 : vector<32x128xf32>
      %16 = arith.truncf %15 : vector<32x128xf32> to vector<32x128xbf16>
      %c0_14 = arith.constant 0 : index
      %c0_15 = arith.constant 0 : index
      %17 = vector.load %arg6[%c0_14, %c0_15] : memref<32x128xbf16, #tpu.memory_space<vmem>>, vector<32x128xbf16>
      tpu.vector_store %arg6[%c0_14, %c0_15], %16 {strides = array<i32>} : memref<32x128xbf16, #tpu.memory_space<vmem>>, vector<32x128xbf16>,
    } else {
    }
    return
  }
  func.func @transform_0(%arg0: i32, %arg1: i32, %arg2: i32) -> (i32, i32) {
    %c0_i32 = arith.constant 0 : i32
    return %arg0, %arg2 : i32, i32
  }
  func.func @transform_1(%arg0: i32, %arg1: i32, %arg2: i32) -> (i32, i32) {
    %c0_i32 = arith.constant 0 : i32
    return %arg2, %arg1 : i32, i32
  }
  func.func @transform_2(%arg0: i32, %arg1: i32, %arg2: i32) -> (i32, i32) {
    %c0_i32 = arith.constant 0 : i32
    %c0_i32_0 = arith.constant 0 : i32
    return %c0_i32, %arg1 : i32, i32
  }
  func.func @transform_3(%arg0: i32, %arg1: i32, %arg2: i32) -> (i32, i32) {
    %c0_i32 = arith.constant 0 : i32
    return %arg0, %arg1 : i32, i32
  }
}

module attributes {stable_mosaic.version = 11 : i64} {
  func.func @_dual_matmul_bias_act_kernel(%arg0: i32, %arg1: i32, %arg2: i32, %arg3: memref<128x288xbf16, #tpu.memory_space<vmem>>, %arg4: memref<288x128xbf16, #tpu.memory_space<vmem>>, %arg5: memref<128x288xbf16, #tpu.memory_space<vmem>>, %arg6: memref<288x128xbf16, #tpu.memory_space<vmem>>, %arg7: memref<1x128xf32, #tpu.memory_space<vmem>>, %arg8: memref<128x128xbf16, #tpu.memory_space<vmem>>, %arg9: memref<128x128xf32, #tpu.memory_space<vmem>>) attributes {dimension_semantics = [#tpu.dimension_semantics<parallel>, #tpu.dimension_semantics<parallel>, #tpu.dimension_semantics<arbitrary>], iteration_bounds = array<i64: 1, 1, 1>, scalar_prefetch = 0 : i64, scratch_operands = 1 : i64, tpu.core_type = #tpu.core_type<tc>, window_params = [{transform_indices = @transform_0, window_bounds = array<i64: 128, 288>}, {transform_indices = @transform_1, window_bounds = array<i64: 288, 128>}, {transform_indices = @transform_2, window_bounds = array<i64: 128, 288>}, {transform_indices = @transform_3, window_bounds = array<i64: 288, 128>}, {transform_indices = @transform_4, window_bounds = array<i64: 1, 128>}, {transform_indices = @transform_5, window_bounds = array<i64: 128, 128>}]} {
    %c0_i32 = arith.constant 0 : i32
    %0 = arith.cmpi eq, %arg2, %c0_i32 : i32
    %1 = arith.extui %0 : i1 to i32
    %c0_i32_0 = arith.constant 0 : i32
    %2 = arith.cmpi ne, %1, %c0_i32_0 : i32
    scf.if %2 {
      %cst_19 = arith.constant 0.000000e+00 : f32
      %18 = vector.broadcast %cst_19 : f32 to vector<128x128xf32>
      %c0_20 = arith.constant 0 : index
      %c0_21 = arith.constant 0 : index
      %19 = vector.load %arg9[%c0_20, %c0_21] : memref<128x128xf32, #tpu.memory_space<vmem>>, vector<128x128xf32>
      tpu.vector_store %arg9[%c0_20, %c0_21], %18 {strides = array<i32>} : memref<128x128xf32, #tpu.memory_space<vmem>>, vector<128x128xf32>,
    } else {
    }
    %c0 = arith.constant 0 : index
    %c0_1 = arith.constant 0 : index
    %3 = vector.load %arg9[%c0, %c0_1] : memref<128x128xf32, #tpu.memory_space<vmem>>, vector<128x128xf32>
    %c0_2 = arith.constant 0 : index
    %c0_3 = arith.constant 0 : index
    %4 = vector.load %arg3[%c0_2, %c0_3] : memref<128x288xbf16, #tpu.memory_space<vmem>>, vector<128x288xbf16>
    %c0_4 = arith.constant 0 : index
    %c0_5 = arith.constant 0 : index
    %5 = vector.load %arg4[%c0_4, %c0_5] : memref<288x128xbf16, #tpu.memory_space<vmem>>, vector<288x128xbf16>
    %cst = arith.constant dense<0.000000e+00> : vector<128x128xf32>
    %6 = tpu.matmul %4, %5, %cst {dimension_numbers = #tpu.dot_dimension_numbers<[1], [0], [0], [1], [0, 0, 1, 1], [], []>} : vector<128x288xbf16>, vector<288x128xbf16>, vector<128x128xf32> -> vector<128x128xf32>
    %7 = arith.addf %3, %6 : vector<128x128xf32>
    %c0_6 = arith.constant 0 : index
    %c0_7 = arith.constant 0 : index
    %8 = vector.load %arg9[%c0_6, %c0_7] : memref<128x128xf32, #tpu.memory_space<vmem>>, vector<128x128xf32>
    tpu.vector_store %arg9[%c0_6, %c0_7], %7 {strides = array<i32>} : memref<128x128xf32, #tpu.memory_space<vmem>>, vector<128x128xf32>,
    %c0_8 = arith.constant 0 : index
    %c0_9 = arith.constant 0 : index
    %9 = vector.load %arg9[%c0_8, %c0_9] : memref<128x128xf32, #tpu.memory_space<vmem>>, vector<128x128xf32>
    %c0_10 = arith.constant 0 : index
    %c0_11 = arith.constant 0 : index
    %10 = vector.load %arg5[%c0_10, %c0_11] : memref<128x288xbf16, #tpu.memory_space<vmem>>, vector<128x288xbf16>
    %c0_12 = arith.constant 0 : index
    %c0_13 = arith.constant 0 : index
    %11 = vector.load %arg6[%c0_12, %c0_13] : memref<288x128xbf16, #tpu.memory_space<vmem>>, vector<288x128xbf16>
    %cst_14 = arith.constant dense<0.000000e+00> : vector<128x128xf32>
    %12 = tpu.matmul %10, %11, %cst_14 {dimension_numbers = #tpu.dot_dimension_numbers<[1], [0], [0], [1], [0, 0, 1, 1], [], []>} : vector<128x288xbf16>, vector<288x128xbf16>, vector<128x128xf32> -> vector<128x128xf32>
    %13 = arith.addf %9, %12 : vector<128x128xf32>
    %c0_15 = arith.constant 0 : index
    %c0_16 = arith.constant 0 : index
    %14 = vector.load %arg9[%c0_15, %c0_16] : memref<128x128xf32, #tpu.memory_space<vmem>>, vector<128x128xf32>
    tpu.vector_store %arg9[%c0_15, %c0_16], %13 {strides = array<i32>} : memref<128x128xf32, #tpu.memory_space<vmem>>, vector<128x128xf32>,
    %c0_i32_17 = arith.constant 0 : i32
    %15 = arith.cmpi eq, %arg2, %c0_i32_17 : i32
    %16 = arith.extui %15 : i1 to i32
    %c0_i32_18 = arith.constant 0 : i32
    %17 = arith.cmpi ne, %16, %c0_i32_18 : i32
    scf.if %17 {
      %c0_19 = arith.constant 0 : index
      %c0_20 = arith.constant 0 : index
      %18 = vector.load %arg9[%c0_19, %c0_20] : memref<128x128xf32, #tpu.memory_space<vmem>>, vector<128x128xf32>
      %c0_21 = arith.constant 0 : index
      %c0_22 = arith.constant 0 : index
      %19 = vector.load %arg7[%c0_21, %c0_22] : memref<1x128xf32, #tpu.memory_space<vmem>>, vector<1x128xf32>
      %20 = vector.broadcast %19 : vector<1x128xf32> to vector<128x128xf32>
      %21 = arith.addf %18, %20 : vector<128x128xf32>
      %cst_23 = arith.constant 0.000000e+00 : f32
      %22 = vector.broadcast %cst_23 : f32 to vector<128x128xf32>
      %23 = arith.maximumf %21, %22 : vector<128x128xf32>
      %24 = arith.truncf %23 : vector<128x128xf32> to vector<128x128xbf16>
      %c0_24 = arith.constant 0 : index
      %c0_25 = arith.constant 0 : index
      %25 = vector.load %arg8[%c0_24, %c0_25] : memref<128x128xbf16, #tpu.memory_space<vmem>>, vector<128x128xbf16>
      tpu.vector_store %arg8[%c0_24, %c0_25], %24 {strides = array<i32>} : memref<128x128xbf16, #tpu.memory_space<vmem>>, vector<128x128xbf16>,
    } else {
    }
    return
  }
  func.func @transform_0(%arg0: i32, %arg1: i32, %arg2: i32) -> (i32, i32) {
    %c0_i32 = arith.constant 0 : i32
    return %arg0, %arg2 : i32, i32
  }
  func.func @transform_1(%arg0: i32, %arg1: i32, %arg2: i32) -> (i32, i32) {
    %c0_i32 = arith.constant 0 : i32
    return %arg2, %arg1 : i32, i32
  }
  func.func @transform_2(%arg0: i32, %arg1: i32, %arg2: i32) -> (i32, i32) {
    %c0_i32 = arith.constant 0 : i32
    return %arg0, %arg2 : i32, i32
  }
  func.func @transform_3(%arg0: i32, %arg1: i32, %arg2: i32) -> (i32, i32) {
    %c0_i32 = arith.constant 0 : i32
    return %arg2, %arg1 : i32, i32
  }
  func.func @transform_4(%arg0: i32, %arg1: i32, %arg2: i32) -> (i32, i32) {
    %c0_i32 = arith.constant 0 : i32
    %c0_i32_0 = arith.constant 0 : i32
    return %c0_i32, %arg1 : i32, i32
  }
  func.func @transform_5(%arg0: i32, %arg1: i32, %arg2: i32) -> (i32, i32) {
    %c0_i32 = arith.constant 0 : i32
    return %arg0, %arg1 : i32, i32
  }
}

module attributes {stable_mosaic.version = 11 : i64} {
  func.func @_matmul_bias_act_kernel(%arg0: i32, %arg1: i32, %arg2: i32, %arg3: memref<128x32xbf16, #tpu.memory_space<vmem>>, %arg4: memref<32x128xbf16, #tpu.memory_space<vmem>>, %arg5: memref<1x128xf32, #tpu.memory_space<vmem>>, %arg6: memref<128x128xbf16, #tpu.memory_space<vmem>>, %arg7: memref<128x128xf32, #tpu.memory_space<vmem>>) attributes {dimension_semantics = [#tpu.dimension_semantics<parallel>, #tpu.dimension_semantics<parallel>, #tpu.dimension_semantics<arbitrary>], iteration_bounds = array<i64: 1, 1, 1>, scalar_prefetch = 0 : i64, scratch_operands = 1 : i64, tpu.core_type = #tpu.core_type<tc>, window_params = [{transform_indices = @transform_0, window_bounds = array<i64: 128, 32>}, {transform_indices = @transform_1, window_bounds = array<i64: 32, 128>}, {transform_indices = @transform_2, window_bounds = array<i64: 1, 128>}, {transform_indices = @transform_3, window_bounds = array<i64: 128, 128>}]} {
    %c0_i32 = arith.constant 0 : i32
    %0 = arith.cmpi eq, %arg2, %c0_i32 : i32
    %1 = arith.extui %0 : i1 to i32
    %c0_i32_0 = arith.constant 0 : i32
    %2 = arith.cmpi ne, %1, %c0_i32_0 : i32
    scf.if %2 {
      %cst_10 = arith.constant 0.000000e+00 : f32
      %12 = vector.broadcast %cst_10 : f32 to vector<128x128xf32>
      %c0_11 = arith.constant 0 : index
      %c0_12 = arith.constant 0 : index
      %13 = vector.load %arg7[%c0_11, %c0_12] : memref<128x128xf32, #tpu.memory_space<vmem>>, vector<128x128xf32>
      tpu.vector_store %arg7[%c0_11, %c0_12], %12 {strides = array<i32>} : memref<128x128xf32, #tpu.memory_space<vmem>>, vector<128x128xf32>,
    } else {
    }
    %c0 = arith.constant 0 : index
    %c0_1 = arith.constant 0 : index
    %3 = vector.load %arg7[%c0, %c0_1] : memref<128x128xf32, #tpu.memory_space<vmem>>, vector<128x128xf32>
    %c0_2 = arith.constant 0 : index
    %c0_3 = arith.constant 0 : index
    %4 = vector.load %arg3[%c0_2, %c0_3] : memref<128x32xbf16, #tpu.memory_space<vmem>>, vector<128x32xbf16>
    %c0_4 = arith.constant 0 : index
    %c0_5 = arith.constant 0 : index
    %5 = vector.load %arg4[%c0_4, %c0_5] : memref<32x128xbf16, #tpu.memory_space<vmem>>, vector<32x128xbf16>
    %cst = arith.constant dense<0.000000e+00> : vector<128x128xf32>
    %6 = tpu.matmul %4, %5, %cst {dimension_numbers = #tpu.dot_dimension_numbers<[1], [0], [0], [1], [0, 0, 1, 1], [], []>} : vector<128x32xbf16>, vector<32x128xbf16>, vector<128x128xf32> -> vector<128x128xf32>
    %7 = arith.addf %3, %6 : vector<128x128xf32>
    %c0_6 = arith.constant 0 : index
    %c0_7 = arith.constant 0 : index
    %8 = vector.load %arg7[%c0_6, %c0_7] : memref<128x128xf32, #tpu.memory_space<vmem>>, vector<128x128xf32>
    tpu.vector_store %arg7[%c0_6, %c0_7], %7 {strides = array<i32>} : memref<128x128xf32, #tpu.memory_space<vmem>>, vector<128x128xf32>,
    %c0_i32_8 = arith.constant 0 : i32
    %9 = arith.cmpi eq, %arg2, %c0_i32_8 : i32
    %10 = arith.extui %9 : i1 to i32
    %c0_i32_9 = arith.constant 0 : i32
    %11 = arith.cmpi ne, %10, %c0_i32_9 : i32
    scf.if %11 {
      %c0_10 = arith.constant 0 : index
      %c0_11 = arith.constant 0 : index
      %12 = vector.load %arg7[%c0_10, %c0_11] : memref<128x128xf32, #tpu.memory_space<vmem>>, vector<128x128xf32>
      %c0_12 = arith.constant 0 : index
      %c0_13 = arith.constant 0 : index
      %13 = vector.load %arg5[%c0_12, %c0_13] : memref<1x128xf32, #tpu.memory_space<vmem>>, vector<1x128xf32>
      %14 = vector.broadcast %13 : vector<1x128xf32> to vector<128x128xf32>
      %15 = arith.addf %12, %14 : vector<128x128xf32>
      %16 = arith.truncf %15 : vector<128x128xf32> to vector<128x128xbf16>
      %c0_14 = arith.constant 0 : index
      %c0_15 = arith.constant 0 : index
      %17 = vector.load %arg6[%c0_14, %c0_15] : memref<128x128xbf16, #tpu.memory_space<vmem>>, vector<128x128xbf16>
      tpu.vector_store %arg6[%c0_14, %c0_15], %16 {strides = array<i32>} : memref<128x128xbf16, #tpu.memory_space<vmem>>, vector<128x128xbf16>,
    } else {
    }
    return
  }
  func.func @transform_0(%arg0: i32, %arg1: i32, %arg2: i32) -> (i32, i32) {
    %c0_i32 = arith.constant 0 : i32
    return %arg0, %arg2 : i32, i32
  }
  func.func @transform_1(%arg0: i32, %arg1: i32, %arg2: i32) -> (i32, i32) {
    %c0_i32 = arith.constant 0 : i32
    return %arg2, %arg1 : i32, i32
  }
  func.func @transform_2(%arg0: i32, %arg1: i32, %arg2: i32) -> (i32, i32) {
    %c0_i32 = arith.constant 0 : i32
    %c0_i32_0 = arith.constant 0 : i32
    return %c0_i32, %arg1 : i32, i32
  }
  func.func @transform_3(%arg0: i32, %arg1: i32, %arg2: i32) -> (i32, i32) {
    %c0_i32 = arith.constant 0 : i32
    return %arg0, %arg1 : i32, i32
  }
}

module attributes {stable_mosaic.version = 11 : i64} {
  func.func @_dual_matmul_bias_act_kernel(%arg0: i32, %arg1: i32, %arg2: i32, %arg3: memref<512x144xbf16, #tpu.memory_space<vmem>>, %arg4: memref<144x128xbf16, #tpu.memory_space<vmem>>, %arg5: memref<512x144xbf16, #tpu.memory_space<vmem>>, %arg6: memref<144x128xbf16, #tpu.memory_space<vmem>>, %arg7: memref<1x128xf32, #tpu.memory_space<vmem>>, %arg8: memref<512x128xbf16, #tpu.memory_space<vmem>>, %arg9: memref<512x128xf32, #tpu.memory_space<vmem>>) attributes {dimension_semantics = [#tpu.dimension_semantics<parallel>, #tpu.dimension_semantics<parallel>, #tpu.dimension_semantics<arbitrary>], iteration_bounds = array<i64: 1, 1, 1>, scalar_prefetch = 0 : i64, scratch_operands = 1 : i64, tpu.core_type = #tpu.core_type<tc>, window_params = [{transform_indices = @transform_0, window_bounds = array<i64: 512, 144>}, {transform_indices = @transform_1, window_bounds = array<i64: 144, 128>}, {transform_indices = @transform_2, window_bounds = array<i64: 512, 144>}, {transform_indices = @transform_3, window_bounds = array<i64: 144, 128>}, {transform_indices = @transform_4, window_bounds = array<i64: 1, 128>}, {transform_indices = @transform_5, window_bounds = array<i64: 512, 128>}]} {
    %c0_i32 = arith.constant 0 : i32
    %0 = arith.cmpi eq, %arg2, %c0_i32 : i32
    %1 = arith.extui %0 : i1 to i32
    %c0_i32_0 = arith.constant 0 : i32
    %2 = arith.cmpi ne, %1, %c0_i32_0 : i32
    scf.if %2 {
      %cst_19 = arith.constant 0.000000e+00 : f32
      %18 = vector.broadcast %cst_19 : f32 to vector<512x128xf32>
      %c0_20 = arith.constant 0 : index
      %c0_21 = arith.constant 0 : index
      %19 = vector.load %arg9[%c0_20, %c0_21] : memref<512x128xf32, #tpu.memory_space<vmem>>, vector<512x128xf32>
      tpu.vector_store %arg9[%c0_20, %c0_21], %18 {strides = array<i32>} : memref<512x128xf32, #tpu.memory_space<vmem>>, vector<512x128xf32>,
    } else {
    }
    %c0 = arith.constant 0 : index
    %c0_1 = arith.constant 0 : index
    %3 = vector.load %arg9[%c0, %c0_1] : memref<512x128xf32, #tpu.memory_space<vmem>>, vector<512x128xf32>
    %c0_2 = arith.constant 0 : index
    %c0_3 = arith.constant 0 : index
    %4 = vector.load %arg3[%c0_2, %c0_3] : memref<512x144xbf16, #tpu.memory_space<vmem>>, vector<512x144xbf16>
    %c0_4 = arith.constant 0 : index
    %c0_5 = arith.constant 0 : index
    %5 = vector.load %arg4[%c0_4, %c0_5] : memref<144x128xbf16, #tpu.memory_space<vmem>>, vector<144x128xbf16>
    %cst = arith.constant dense<0.000000e+00> : vector<512x128xf32>
    %6 = tpu.matmul %4, %5, %cst {dimension_numbers = #tpu.dot_dimension_numbers<[1], [0], [0], [1], [0, 0, 1, 1], [], []>} : vector<512x144xbf16>, vector<144x128xbf16>, vector<512x128xf32> -> vector<512x128xf32>
    %7 = arith.addf %3, %6 : vector<512x128xf32>
    %c0_6 = arith.constant 0 : index
    %c0_7 = arith.constant 0 : index
    %8 = vector.load %arg9[%c0_6, %c0_7] : memref<512x128xf32, #tpu.memory_space<vmem>>, vector<512x128xf32>
    tpu.vector_store %arg9[%c0_6, %c0_7], %7 {strides = array<i32>} : memref<512x128xf32, #tpu.memory_space<vmem>>, vector<512x128xf32>,
    %c0_8 = arith.constant 0 : index
    %c0_9 = arith.constant 0 : index
    %9 = vector.load %arg9[%c0_8, %c0_9] : memref<512x128xf32, #tpu.memory_space<vmem>>, vector<512x128xf32>
    %c0_10 = arith.constant 0 : index
    %c0_11 = arith.constant 0 : index
    %10 = vector.load %arg5[%c0_10, %c0_11] : memref<512x144xbf16, #tpu.memory_space<vmem>>, vector<512x144xbf16>
    %c0_12 = arith.constant 0 : index
    %c0_13 = arith.constant 0 : index
    %11 = vector.load %arg6[%c0_12, %c0_13] : memref<144x128xbf16, #tpu.memory_space<vmem>>, vector<144x128xbf16>
    %cst_14 = arith.constant dense<0.000000e+00> : vector<512x128xf32>
    %12 = tpu.matmul %10, %11, %cst_14 {dimension_numbers = #tpu.dot_dimension_numbers<[1], [0], [0], [1], [0, 0, 1, 1], [], []>} : vector<512x144xbf16>, vector<144x128xbf16>, vector<512x128xf32> -> vector<512x128xf32>
    %13 = arith.addf %9, %12 : vector<512x128xf32>
    %c0_15 = arith.constant 0 : index
    %c0_16 = arith.constant 0 : index
    %14 = vector.load %arg9[%c0_15, %c0_16] : memref<512x128xf32, #tpu.memory_space<vmem>>, vector<512x128xf32>
    tpu.vector_store %arg9[%c0_15, %c0_16], %13 {strides = array<i32>} : memref<512x128xf32, #tpu.memory_space<vmem>>, vector<512x128xf32>,
    %c0_i32_17 = arith.constant 0 : i32
    %15 = arith.cmpi eq, %arg2, %c0_i32_17 : i32
    %16 = arith.extui %15 : i1 to i32
    %c0_i32_18 = arith.constant 0 : i32
    %17 = arith.cmpi ne, %16, %c0_i32_18 : i32
    scf.if %17 {
      %c0_19 = arith.constant 0 : index
      %c0_20 = arith.constant 0 : index
      %18 = vector.load %arg9[%c0_19, %c0_20] : memref<512x128xf32, #tpu.memory_space<vmem>>, vector<512x128xf32>
      %c0_21 = arith.constant 0 : index
      %c0_22 = arith.constant 0 : index
      %19 = vector.load %arg7[%c0_21, %c0_22] : memref<1x128xf32, #tpu.memory_space<vmem>>, vector<1x128xf32>
      %20 = vector.broadcast %19 : vector<1x128xf32> to vector<512x128xf32>
      %21 = arith.addf %18, %20 : vector<512x128xf32>
      %cst_23 = arith.constant 0.000000e+00 : f32
      %22 = vector.broadcast %cst_23 : f32 to vector<512x128xf32>
      %23 = arith.maximumf %21, %22 : vector<512x128xf32>
      %24 = arith.truncf %23 : vector<512x128xf32> to vector<512x128xbf16>
      %c0_24 = arith.constant 0 : index
      %c0_25 = arith.constant 0 : index
      %25 = vector.load %arg8[%c0_24, %c0_25] : memref<512x128xbf16, #tpu.memory_space<vmem>>, vector<512x128xbf16>
      tpu.vector_store %arg8[%c0_24, %c0_25], %24 {strides = array<i32>} : memref<512x128xbf16, #tpu.memory_space<vmem>>, vector<512x128xbf16>,
    } else {
    }
    return
  }
  func.func @transform_0(%arg0: i32, %arg1: i32, %arg2: i32) -> (i32, i32) {
    %c0_i32 = arith.constant 0 : i32
    return %arg0, %arg2 : i32, i32
  }
  func.func @transform_1(%arg0: i32, %arg1: i32, %arg2: i32) -> (i32, i32) {
    %c0_i32 = arith.constant 0 : i32
    return %arg2, %arg1 : i32, i32
  }
  func.func @transform_2(%arg0: i32, %arg1: i32, %arg2: i32) -> (i32, i32) {
    %c0_i32 = arith.constant 0 : i32
    return %arg0, %arg2 : i32, i32
  }
  func.func @transform_3(%arg0: i32, %arg1: i32, %arg2: i32) -> (i32, i32) {
    %c0_i32 = arith.constant 0 : i32
    return %arg2, %arg1 : i32, i32
  }
  func.func @transform_4(%arg0: i32, %arg1: i32, %arg2: i32) -> (i32, i32) {
    %c0_i32 = arith.constant 0 : i32
    %c0_i32_0 = arith.constant 0 : i32
    return %c0_i32, %arg1 : i32, i32
  }
  func.func @transform_5(%arg0: i32, %arg1: i32, %arg2: i32) -> (i32, i32) {
    %c0_i32 = arith.constant 0 : i32
    return %arg0, %arg1 : i32, i32
  }
}

module attributes {stable_mosaic.version = 11 : i64} {
  func.func @_matmul_bias_act_kernel(%arg0: i32, %arg1: i32, %arg2: i32, %arg3: memref<512x16xbf16, #tpu.memory_space<vmem>>, %arg4: memref<16x128xbf16, #tpu.memory_space<vmem>>, %arg5: memref<1x128xf32, #tpu.memory_space<vmem>>, %arg6: memref<512x128xf32, #tpu.memory_space<vmem>>, %arg7: memref<512x128xf32, #tpu.memory_space<vmem>>) attributes {dimension_semantics = [#tpu.dimension_semantics<parallel>, #tpu.dimension_semantics<parallel>, #tpu.dimension_semantics<arbitrary>], iteration_bounds = array<i64: 1, 1, 1>, scalar_prefetch = 0 : i64, scratch_operands = 1 : i64, tpu.core_type = #tpu.core_type<tc>, window_params = [{transform_indices = @transform_0, window_bounds = array<i64: 512, 16>}, {transform_indices = @transform_1, window_bounds = array<i64: 16, 128>}, {transform_indices = @transform_2, window_bounds = array<i64: 1, 128>}, {transform_indices = @transform_3, window_bounds = array<i64: 512, 128>}]} {
    %c0_i32 = arith.constant 0 : i32
    %0 = arith.cmpi eq, %arg2, %c0_i32 : i32
    %1 = arith.extui %0 : i1 to i32
    %c0_i32_0 = arith.constant 0 : i32
    %2 = arith.cmpi ne, %1, %c0_i32_0 : i32
    scf.if %2 {
      %cst_10 = arith.constant 0.000000e+00 : f32
      %12 = vector.broadcast %cst_10 : f32 to vector<512x128xf32>
      %c0_11 = arith.constant 0 : index
      %c0_12 = arith.constant 0 : index
      %13 = vector.load %arg7[%c0_11, %c0_12] : memref<512x128xf32, #tpu.memory_space<vmem>>, vector<512x128xf32>
      tpu.vector_store %arg7[%c0_11, %c0_12], %12 {strides = array<i32>} : memref<512x128xf32, #tpu.memory_space<vmem>>, vector<512x128xf32>,
    } else {
    }
    %c0 = arith.constant 0 : index
    %c0_1 = arith.constant 0 : index
    %3 = vector.load %arg7[%c0, %c0_1] : memref<512x128xf32, #tpu.memory_space<vmem>>, vector<512x128xf32>
    %c0_2 = arith.constant 0 : index
    %c0_3 = arith.constant 0 : index
    %4 = vector.load %arg3[%c0_2, %c0_3] : memref<512x16xbf16, #tpu.memory_space<vmem>>, vector<512x16xbf16>
    %c0_4 = arith.constant 0 : index
    %c0_5 = arith.constant 0 : index
    %5 = vector.load %arg4[%c0_4, %c0_5] : memref<16x128xbf16, #tpu.memory_space<vmem>>, vector<16x128xbf16>
    %cst = arith.constant dense<0.000000e+00> : vector<512x128xf32>
    %6 = tpu.matmul %4, %5, %cst {dimension_numbers = #tpu.dot_dimension_numbers<[1], [0], [0], [1], [0, 0, 1, 1], [], []>} : vector<512x16xbf16>, vector<16x128xbf16>, vector<512x128xf32> -> vector<512x128xf32>
    %7 = arith.addf %3, %6 : vector<512x128xf32>
    %c0_6 = arith.constant 0 : index
    %c0_7 = arith.constant 0 : index
    %8 = vector.load %arg7[%c0_6, %c0_7] : memref<512x128xf32, #tpu.memory_space<vmem>>, vector<512x128xf32>
    tpu.vector_store %arg7[%c0_6, %c0_7], %7 {strides = array<i32>} : memref<512x128xf32, #tpu.memory_space<vmem>>, vector<512x128xf32>,
    %c0_i32_8 = arith.constant 0 : i32
    %9 = arith.cmpi eq, %arg2, %c0_i32_8 : i32
    %10 = arith.extui %9 : i1 to i32
    %c0_i32_9 = arith.constant 0 : i32
    %11 = arith.cmpi ne, %10, %c0_i32_9 : i32
    scf.if %11 {
      %c0_10 = arith.constant 0 : index
      %c0_11 = arith.constant 0 : index
      %12 = vector.load %arg7[%c0_10, %c0_11] : memref<512x128xf32, #tpu.memory_space<vmem>>, vector<512x128xf32>
      %c0_12 = arith.constant 0 : index
      %c0_13 = arith.constant 0 : index
      %13 = vector.load %arg5[%c0_12, %c0_13] : memref<1x128xf32, #tpu.memory_space<vmem>>, vector<1x128xf32>
      %14 = vector.broadcast %13 : vector<1x128xf32> to vector<512x128xf32>
      %15 = arith.addf %12, %14 : vector<512x128xf32>
      %c0_14 = arith.constant 0 : index
      %c0_15 = arith.constant 0 : index
      %16 = vector.load %arg6[%c0_14, %c0_15] : memref<512x128xf32, #tpu.memory_space<vmem>>, vector<512x128xf32>
      tpu.vector_store %arg6[%c0_14, %c0_15], %15 {strides = array<i32>} : memref<512x128xf32, #tpu.memory_space<vmem>>, vector<512x128xf32>,
    } else {
    }
    return
  }
  func.func @transform_0(%arg0: i32, %arg1: i32, %arg2: i32) -> (i32, i32) {
    %c0_i32 = arith.constant 0 : i32
    return %arg0, %arg2 : i32, i32
  }
  func.func @transform_1(%arg0: i32, %arg1: i32, %arg2: i32) -> (i32, i32) {
    %c0_i32 = arith.constant 0 : i32
    return %arg2, %arg1 : i32, i32
  }
  func.func @transform_2(%arg0: i32, %arg1: i32, %arg2: i32) -> (i32, i32) {
    %c0_i32 = arith.constant 0 : i32
    %c0_i32_0 = arith.constant 0 : i32
    return %c0_i32, %arg1 : i32, i32
  }
  func.func @transform_3(%arg0: i32, %arg1: i32, %arg2: i32) -> (i32, i32) {
    %c0_i32 = arith.constant 0 : i32
    return %arg0, %arg1 : i32, i32
  }
}

</mosaic_0001>

<llo_original>
// kernel: unet_forward.13
$region0: #{unet_forward.13}
  #allocation0 [shape = 'u32[]', space=smem, size = 0x4, offset = 0x4, fixed_abs, tag = 'smem constant byte address 0x4 - core index']
  #allocation1 [shape = 'u32[144,128]{1,0:T(1,128)}', space=vmem, size = 0x12000, scoped, tag = 'internal scratch']
  #allocation2 [shape = 'f32[512,128]{1,0:T(8,128)}', space=vmem, size = 0x40000, scoped, tag = 'scratch operand']
  %s0 = inlined_call_operand.vmem [shape: bf16[512,9], index: 0, kind: input, shape index: {}]
  %s1 = inlined_call_operand.vmem [shape: bf16[9,128], index: 1, kind: input, shape index: {}]
  %s2 = inlined_call_operand.vmem [shape: f32[1,128], index: 2, kind: input, shape index: {}]
  %s3 = inlined_call_operand.vmem [shape: bf16[512,128], index: 3, kind: output, shape index: {}]
  %s4 = sld [smem:[#allocation0]]
  $region30: #{unet_forward.13} parent=0
    _
  %s6 = ssub.s32 1, %s4
  %s7 = scalar_select 0, %s6, %s4
  // Predicated region
  $region2: #{unet_forward.13} parent=0 // pred_check
    _
  $region3: #{unet_forward.13} parent=0 // pred_check_branch
    %9 = sbr.rel (0) target = $region5
  $region4: #{unet_forward.13} parent=0 // pred_region
    _
  $region5: #{unet_forward.13} parent=0 // pred_fallthru
    _
  // Predicated region
  $region6: #{unet_forward.13} parent=0 // pred_check
    _
  $region7: #{unet_forward.13} parent=0 // pred_check_branch
    %11 = sbr.rel (0) target = $region9
  $region8: #{unet_forward.13} parent=0 // pred_region
    _
  $region9: #{unet_forward.13} parent=0 // pred_fallthru
    _
  // Predicated region
  $region10: #{unet_forward.13} parent=0 // pred_check
    _
  $region11: #{unet_forward.13} parent=0 // pred_check_branch
    %13 = sbr.rel (0) target = $region13
  $region12: #{unet_forward.13} parent=0 // pred_region
    _
  $region13: #{unet_forward.13} parent=0 // pred_fallthru
    _
  %p15 = scmp.eq.s32.totalorder 0, 0
  // Predicated region
  $region14: #{unet_forward.13} parent=0 // pred_check
    %p16 = pneg %p15
  $region15: #{unet_forward.13} parent=0 // pred_check_branch
    %18 = sbr.rel (%p16) target = $region17
  $region16: #{unet_forward.13} parent=0 // pred_region
    %19 = vst [vmem:[#allocation2] sm:$0xff] 0.0
    %20 = vst [vmem:[#allocation2 + $0x8] sm:$0xff] 0.0
    %21 = vst [vmem:[#allocation2 + $0x10] sm:$0xff] 0.0
    %22 = vst [vmem:[#allocation2 + $0x18] sm:$0xff] 0.0
    %23 = vst [vmem:[#allocation2 + $0x20] sm:$0xff] 0.0
    %24 = vst [vmem:[#allocation2 + $0x28] sm:$0xff] 0.0
    %25 = vst [vmem:[#allocation2 + $0x30] sm:$0xff] 0.0
    %26 = vst [vmem:[#allocation2 + $0x38] sm:$0xff] 0.0
    %27 = vst [vmem:[#allocation2 + $0x40] sm:$0xff] 0.0
    %28 = vst [vmem:[#allocation2 + $0x48] sm:$0xff] 0.0
    %29 = vst [vmem:[#allocation2 + $0x50] sm:$0xff] 0.0
    %30 = vst [vmem:[#allocation2 + $0x58] sm:$0xff] 0.0
    %31 = vst [vmem:[#allocation2 + $0x60] sm:$0xff] 0.0
    %32 = vst [vmem:[#allocation2 + $0x68] sm:$0xff] 0.0
    %33 = vst [vmem:[#allocation2 + $0x70] sm:$0xff] 0.0
    %34 = vst [vmem:[#allocation2 + $0x78] sm:$0xff] 0.0
    %35 = vst [vmem:[#allocation2 + $0x80] sm:$0xff] 0.0
    %36 = vst [vmem:[#allocation2 + $0x88] sm:$0xff] 0.0
    %37 = vst [vmem:[#allocation2 + $0x90] sm:$0xff] 0.0
    %38 = vst [vmem:[#allocation2 + $0x98] sm:$0xff] 0.0
    %39 = vst [vmem:[#allocation2 + $0xa0] sm:$0xff] 0.0
    %40 = vst [vmem:[#allocation2 + $0xa8] sm:$0xff] 0.0
    %41 = vst [vmem:[#allocation2 + $0xb0] sm:$0xff] 0.0
    %42 = vst [vmem:[#allocation2 + $0xb8] sm:$0xff] 0.0
    %43 = vst [vmem:[#allocation2 + $0xc0] sm:$0xff] 0.0
    %44 = vst [vmem:[#allocation2 + $0xc8] sm:$0xff] 0.0
    %45 = vst [vmem:[#allocation2 + $0xd0] sm:$0xff] 0.0
    %46 = vst [vmem:[#allocation2 + $0xd8] sm:$0xff] 0.0
    %47 = vst [vmem:[#allocation2 + $0xe0] sm:$0xff] 0.0
    %48 = vst [vmem:[#allocation2 + $0xe8] sm:$0xff] 0.0
    %49 = vst [vmem:[#allocation2 + $0xf0] sm:$0xff] 0.0
    %50 = vst [vmem:[#allocation2 + $0xf8] sm:$0xff] 0.0
    %51 = vst [vmem:[#allocation2 + $0x100] sm:$0xff] 0.0
    %52 = vst [vmem:[#allocation2 + $0x108] sm:$0xff] 0.0
    %53 = vst [vmem:[#allocation2 + $0x110] sm:$0xff] 0.0
    %54 = vst [vmem:[#allocation2 + $0x118] sm:$0xff] 0.0
    %55 = vst [vmem:[#allocation2 + $0x120] sm:$0xff] 0.0
    %56 = vst [vmem:[#allocation2 + $0x128] sm:$0xff] 0.0
    %57 = vst [vmem:[#allocation2 + $0x130] sm:$0xff] 0.0
    %58 = vst [vmem:[#allocation2 + $0x138] sm:$0xff] 0.0
    %59 = vst [vmem:[#allocation2 + $0x140] sm:$0xff] 0.0
    %60 = vst [vmem:[#allocation2 + $0x148] sm:$0xff] 0.0
    %61 = vst [vmem:[#allocation2 + $0x150] sm:$0xff] 0.0
    %62 = vst [vmem:[#allocation2 + $0x158] sm:$0xff] 0.0
    %63 = vst [vmem:[#allocation2 + $0x160] sm:$0xff] 0.0
    %64 = vst [vmem:[#allocation2 + $0x168] sm:$0xff] 0.0
    %65 = vst [vmem:[#allocation2 + $0x170] sm:$0xff] 0.0
    %66 = vst [vmem:[#allocation2 + $0x178] sm:$0xff] 0.0
    %67 = vst [vmem:[#allocation2 + $0x180] sm:$0xff] 0.0
    %68 = vst [vmem:[#allocation2 + $0x188] sm:$0xff] 0.0
    %69 = vst [vmem:[#allocation2 + $0x190] sm:$0xff] 0.0
    %70 = vst [vmem:[#allocation2 + $0x198] sm:$0xff] 0.0
    %71 = vst [vmem:[#allocation2 + $0x1a0] sm:$0xff] 0.0
    %72 = vst [vmem:[#allocation2 + $0x1a8] sm:$0xff] 0.0
    %73 = vst [vmem:[#allocation2 + $0x1b0] sm:$0xff] 0.0
    %74 = vst [vmem:[#allocation2 + $0x1b8] sm:$0xff] 0.0
    %75 = vst [vmem:[#allocation2 + $0x1c0] sm:$0xff] 0.0
    %76 = vst [vmem:[#allocation2 + $0x1c8] sm:$0xff] 0.0
    %77 = vst [vmem:[#allocation2 + $0x1d0] sm:$0xff] 0.0
    %78 = vst [vmem:[#allocation2 + $0x1d8] sm:$0xff] 0.0
    %79 = vst [vmem:[#allocation2 + $0x1e0] sm:$0xff] 0.0
    %80 = vst [vmem:[#allocation2 + $0x1e8] sm:$0xff] 0.0
    %81 = vst [vmem:[#allocation2 + $0x1f0] sm:$0xff] 0.0
    %82 = vst [vmem:[#allocation2 + $0x1f8] sm:$0xff] 0.0
  $region17: #{unet_forward.13} parent=0 // pred_fallthru
    _
  %v83 = vld [vmem:[#allocation2] sm:$0xff]
  %v84 = vld [vmem:[#allocation2 + $0x8] sm:$0xff]
  %v85 = vld [vmem:[#allocation2 + $0x10] sm:$0xff]
  %v86 = vld [vmem:[#allocation2 + $0x18] sm:$0xff]
  %v87 = vld [vmem:[#allocation2 + $0x20] sm:$0xff]
  %v88 = vld [vmem:[#allocation2 + $0x28] sm:$0xff]
  %v89 = vld [vmem:[#allocation2 + $0x30] sm:$0xff]
  %v90 = vld [vmem:[#allocation2 + $0x38] sm:$0xff]
  %v91 = vld [vmem:[#allocation2 + $0x40] sm:$0xff]
  %v92 = vld [vmem:[#allocation2 + $0x48] sm:$0xff]
  %v93 = vld [vmem:[#allocation2 + $0x50] sm:$0xff]
  %v94 = vld [vmem:[#allocation2 + $0x58] sm:$0xff]
  %v95 = vld [vmem:[#allocation2 + $0x60] sm:$0xff]
  %v96 = vld [vmem:[#allocation2 + $0x68] sm:$0xff]
  %v97 = vld [vmem:[#allocation2 + $0x70] sm:$0xff]
  %v98 = vld [vmem:[#allocation2 + $0x78] sm:$0xff]
  %v99 = vld [vmem:[#allocation2 + $0x80] sm:$0xff]
  %v100 = vld [vmem:[#allocation2 + $0x88] sm:$0xff]
  %v101 = vld [vmem:[#allocation2 + $0x90] sm:$0xff]
  %v102 = vld [vmem:[#allocation2 + $0x98] sm:$0xff]
  %v103 = vld [vmem:[#allocation2 + $0xa0] sm:$0xff]
  %v104 = vld [vmem:[#allocation2 + $0xa8] sm:$0xff]
  %v105 = vld [vmem:[#allocation2 + $0xb0] sm:$0xff]
  %v106 = vld [vmem:[#allocation2 + $0xb8] sm:$0xff]
  %v107 = vld [vmem:[#allocation2 + $0xc0] sm:$0xff]
  %v108 = vld [vmem:[#allocation2 + $0xc8] sm:$0xff]
  %v109 = vld [vmem:[#allocation2 + $0xd0] sm:$0xff]
  %v110 = vld [vmem:[#allocation2 + $0xd8] sm:$0xff]
  %v111 = vld [vmem:[#allocation2 + $0xe0] sm:$0xff]
  %v112 = vld [vmem:[#allocation2 + $0xe8] sm:$0xff]
  %v113 = vld [vmem:[#allocation2 + $0xf0] sm:$0xff]
  %v114 = vld [vmem:[#allocation2 + $0xf8] sm:$0xff]
  %v115 = vld [vmem:[#allocation2 + $0x100] sm:$0xff]
  %v116 = vld [vmem:[#allocation2 + $0x108] sm:$0xff]
  %v117 = vld [vmem:[#allocation2 + $0x110] sm:$0xff]
  %v118 = vld [vmem:[#allocation2 + $0x118] sm:$0xff]
  %v119 = vld [vmem:[#allocation2 + $0x120] sm:$0xff]
  %v120 = vld [vmem:[#allocation2 + $0x128] sm:$0xff]
  %v121 = vld [vmem:[#allocation2 + $0x130] sm:$0xff]
  %v122 = vld [vmem:[#allocation2 + $0x138] sm:$0xff]
  %v123 = vld [vmem:[#allocation2 + $0x140] sm:$0xff]
  %v124 = vld [vmem:[#allocation2 + $0x148] sm:$0xff]
  %v125 = vld [vmem:[#allocation2 + $0x150] sm:$0xff]
  %v126 = vld [vmem:[#allocation2 + $0x158] sm:$0xff]
  %v127 = vld [vmem:[#allocation2 + $0x160] sm:$0xff]
  %v128 = vld [vmem:[#allocation2 + $0x168] sm:$0xff]
  %v129 = vld [vmem:[#allocation2 + $0x170] sm:$0xff]
  %v130 = vld [vmem:[#allocation2 + $0x178] sm:$0xff]
  %v131 = vld [vmem:[#allocation2 + $0x180] sm:$0xff]
  %v132 = vld [vmem:[#allocation2 + $0x188] sm:$0xff]
  %v133 = vld [vmem:[#allocation2 + $0x190] sm:$0xff]
  %v134 = vld [vmem:[#allocation2 + $0x198] sm:$0xff]
  %v135 = vld [vmem:[#allocation2 + $0x1a0] sm:$0xff]
  %v136 = vld [vmem:[#allocation2 + $0x1a8] sm:$0xff]
  %v137 = vld [vmem:[#allocation2 + $0x1b0] sm:$0xff]
  %v138 = vld [vmem:[#allocation2 + $0x1b8] sm:$0xff]
  %v139 = vld [vmem:[#allocation2 + $0x1c0] sm:$0xff]
  %v140 = vld [vmem:[#allocation2 + $0x1c8] sm:$0xff]
  %v141 = vld [vmem:[#allocation2 + $0x1d0] sm:$0xff]
  %v142 = vld [vmem:[#allocation2 + $0x1d8] sm:$0xff]
  %v143 = vld [vmem:[#allocation2 + $0x1e0] sm:$0xff]
  %v144 = vld [vmem:[#allocation2 + $0x1e8] sm:$0xff]
  %v145 = vld [vmem:[#allocation2 + $0x1f0] sm:$0xff]
  %v146 = vld [vmem:[#allocation2 + $0x1f8] sm:$0xff]
  %v147 = vld [vmem:[%s0] sm:$0xf]
  %v148 = vld [vmem:[%s0 + $0x4] sm:$0xf]
  %v149 = vld [vmem:[%s0 + $0x8] sm:$0xf]
  %v150 = vld [vmem:[%s0 + $0xc] sm:$0xf]
  %v151 = vld [vmem:[%s0 + $0x10] sm:$0xf]
  %v152 = vld [vmem:[%s0 + $0x14] sm:$0xf]
  %v153 = vld [vmem:[%s0 + $0x18] sm:$0xf]
  %v154 = vld [vmem:[%s0 + $0x1c] sm:$0xf]
  %v155 = vld [vmem:[%s0 + $0x20] sm:$0xf]
  %v156 = vld [vmem:[%s0 + $0x24] sm:$0xf]
  %v157 = vld [vmem:[%s0 + $0x28] sm:$0xf]
  %v158 = vld [vmem:[%s0 + $0x2c] sm:$0xf]
  %v159 = vld [vmem:[%s0 + $0x30] sm:$0xf]
  %v160 = vld [vmem:[%s0 + $0x34] sm:$0xf]
  %v161 = vld [vmem:[%s0 + $0x38] sm:$0xf]
  %v162 = vld [vmem:[%s0 + $0x3c] sm:$0xf]
  %v163 = vld [vmem:[%s0 + $0x40] sm:$0xf]
  %v164 = vld [vmem:[%s0 + $0x44] sm:$0xf]
  %v165 = vld [vmem:[%s0 + $0x48] sm:$0xf]
  %v166 = vld [vmem:[%s0 + $0x4c] sm:$0xf]
  %v167 = vld [vmem:[%s0 + $0x50] sm:$0xf]
  %v168 = vld [vmem:[%s0 + $0x54] sm:$0xf]
  %v169 = vld [vmem:[%s0 + $0x58] sm:$0xf]
  %v170 = vld [vmem:[%s0 + $0x5c] sm:$0xf]
  %v171 = vld [vmem:[%s0 + $0x60] sm:$0xf]
  %v172 = vld [vmem:[%s0 + $0x64] sm:$0xf]
  %v173 = vld [vmem:[%s0 + $0x68] sm:$0xf]
  %v174 = vld [vmem:[%s0 + $0x6c] sm:$0xf]
  %v175 = vld [vmem:[%s0 + $0x70] sm:$0xf]
  %v176 = vld [vmem:[%s0 + $0x74] sm:$0xf]
  %v177 = vld [vmem:[%s0 + $0x78] sm:$0xf]
  %v178 = vld [vmem:[%s0 + $0x7c] sm:$0xf]
  %v179 = vld [vmem:[%s0 + $0x80] sm:$0xf]
  %v180 = vld [vmem:[%s0 + $0x84] sm:$0xf]
  %v181 = vld [vmem:[%s0 + $0x88] sm:$0xf]
  %v182 = vld [vmem:[%s0 + $0x8c] sm:$0xf]
  %v183 = vld [vmem:[%s0 + $0x90] sm:$0xf]
  %v184 = vld [vmem:[%s0 + $0x94] sm:$0xf]
  %v185 = vld [vmem:[%s0 + $0x98] sm:$0xf]
  %v186 = vld [vmem:[%s0 + $0x9c] sm:$0xf]
  %v187 = vld [vmem:[%s0 + $0xa0] sm:$0xf]
  %v188 = vld [vmem:[%s0 + $0xa4] sm:$0xf]
  %v189 = vld [vmem:[%s0 + $0xa8] sm:$0xf]
  %v190 = vld [vmem:[%s0 + $0xac] sm:$0xf]
  %v191 = vld [vmem:[%s0 + $0xb0] sm:$0xf]
  %v192 = vld [vmem:[%s0 + $0xb4] sm:$0xf]
  %v193 = vld [vmem:[%s0 + $0xb8] sm:$0xf]
  %v194 = vld [vmem:[%s0 + $0xbc] sm:$0xf]
  %v195 = vld [vmem:[%s0 + $0xc0] sm:$0xf]
  %v196 = vld [vmem:[%s0 + $0xc4] sm:$0xf]
  %v197 = vld [vmem:[%s0 + $0xc8] sm:$0xf]
  %v198 = vld [vmem:[%s0 + $0xcc] sm:$0xf]
  %v199 = vld [vmem:[%s0 + $0xd0] sm:$0xf]
  %v200 = vld [vmem:[%s0 + $0xd4] sm:$0xf]
  %v201 = vld [vmem:[%s0 + $0xd8] sm:$0xf]
  %v202 = vld [vmem:[%s0 + $0xdc] sm:$0xf]
  %v203 = vld [vmem:[%s0 + $0xe0] sm:$0xf]
  %v204 = vld [vmem:[%s0 + $0xe4] sm:$0xf]
  %v205 = vld [vmem:[%s0 + $0xe8] sm:$0xf]
  %v206 = vld [vmem:[%s0 + $0xec] sm:$0xf]
  %v207 = vld [vmem:[%s0 + $0xf0] sm:$0xf]
  %v208 = vld [vmem:[%s0 + $0xf4] sm:$0xf]
  %v209 = vld [vmem:[%s0 + $0xf8] sm:$0xf]
  %v210 = vld [vmem:[%s0 + $0xfc] sm:$0xf]
  %v211 = vld [vmem:[%s1] sm:$0xf]
  %v212 = vld [vmem:[%s1 + $0x4] sm:$0x1]
  %v277 = vunpack.c.l.b16 %v147
  %v278 = vunpack.c.l.b16 %v148
  %v279 = vunpack.c.l.b16 %v149
  %v280 = vunpack.c.l.b16 %v150
  %v281 = vunpack.c.l.b16 %v151
  %v282 = vunpack.c.l.b16 %v152
  %v283 = vunpack.c.l.b16 %v153
  %v284 = vunpack.c.l.b16 %v154
  %v285 = vunpack.c.l.b16 %v155
  %v286 = vunpack.c.l.b16 %v156
  %v287 = vunpack.c.l.b16 %v157
  %v288 = vunpack.c.l.b16 %v158
  %v289 = vunpack.c.l.b16 %v159
  %v290 = vunpack.c.l.b16 %v160
  %v291 = vunpack.c.l.b16 %v161
  %v292 = vunpack.c.l.b16 %v162
  %v293 = vunpack.c.l.b16 %v163
  %v294 = vunpack.c.l.b16 %v164
  %v295 = vunpack.c.l.b16 %v165
  %v296 = vunpack.c.l.b16 %v166
  %v297 = vunpack.c.l.b16 %v167
  %v298 = vunpack.c.l.b16 %v168
  %v299 = vunpack.c.l.b16 %v169
  %v300 = vunpack.c.l.b16 %v170
  %v301 = vunpack.c.l.b16 %v171
  %v302 = vunpack.c.l.b16 %v172
  %v303 = vunpack.c.l.b16 %v173
  %v304 = vunpack.c.l.b16 %v174
  %v305 = vunpack.c.l.b16 %v175
  %v306 = vunpack.c.l.b16 %v176
  %v307 = vunpack.c.l.b16 %v177
  %v308 = vunpack.c.l.b16 %v178
  %v309 = vunpack.c.l.b16 %v179
  %v310 = vunpack.c.l.b16 %v180
  %v311 = vunpack.c.l.b16 %v181
  %v312 = vunpack.c.l.b16 %v182
  %v313 = vunpack.c.l.b16 %v183
  %v314 = vunpack.c.l.b16 %v184
  %v315 = vunpack.c.l.b16 %v185
  %v316 = vunpack.c.l.b16 %v186
  %v317 = vunpack.c.l.b16 %v187
  %v318 = vunpack.c.l.b16 %v188
  %v319 = vunpack.c.l.b16 %v189
  %v320 = vunpack.c.l.b16 %v190
  %v321 = vunpack.c.l.b16 %v191
  %v322 = vunpack.c.l.b16 %v192
  %v323 = vunpack.c.l.b16 %v193
  %v324 = vunpack.c.l.b16 %v194
  %v325 = vunpack.c.l.b16 %v195
  %v326 = vunpack.c.l.b16 %v196
  %v327 = vunpack.c.l.b16 %v197
  %v328 = vunpack.c.l.b16 %v198
  %v329 = vunpack.c.l.b16 %v199
  %v330 = vunpack.c.l.b16 %v200
  %v331 = vunpack.c.l.b16 %v201
  %v332 = vunpack.c.l.b16 %v202
  %v333 = vunpack.c.l.b16 %v203
  %v334 = vunpack.c.l.b16 %v204
  %v335 = vunpack.c.l.b16 %v205
  %v336 = vunpack.c.l.b16 %v206
  %v337 = vunpack.c.l.b16 %v207
  %v338 = vunpack.c.l.b16 %v208
  %v339 = vunpack.c.l.b16 %v209
  %v340 = vunpack.c.l.b16 %v210
  %v341 = vpack.c.b16 %v278, %v277
  %v342 = vpack.c.b16 %v280, %v279
  %v343 = vpack.c.b16 %v282, %v281
  %v344 = vpack.c.b16 %v284, %v283
  %v345 = vpack.c.b16 %v286, %v285
  %v346 = vpack.c.b16 %v288, %v287
  %v347 = vpack.c.b16 %v290, %v289
  %v348 = vpack.c.b16 %v292, %v291
  %v349 = vpack.c.b16 %v294, %v293
  %v350 = vpack.c.b16 %v296, %v295
  %v351 = vpack.c.b16 %v298, %v297
  %v352 = vpack.c.b16 %v300, %v299
  %v353 = vpack.c.b16 %v302, %v301
  %v354 = vpack.c.b16 %v304, %v303
  %v355 = vpack.c.b16 %v306, %v305
  %v356 = vpack.c.b16 %v308, %v307
  %v357 = vpack.c.b16 %v310, %v309
  %v358 = vpack.c.b16 %v312, %v311
  %v359 = vpack.c.b16 %v314, %v313
  %v360 = vpack.c.b16 %v316, %v315
  %v361 = vpack.c.b16 %v318, %v317
  %v362 = vpack.c.b16 %v320, %v319
  %v363 = vpack.c.b16 %v322, %v321
  %v364 = vpack.c.b16 %v324, %v323
  %v365 = vpack.c.b16 %v326, %v325
  %v366 = vpack.c.b16 %v328, %v327
  %v367 = vpack.c.b16 %v330, %v329
  %v368 = vpack.c.b16 %v332, %v331
  %v369 = vpack.c.b16 %v334, %v333
  %v370 = vpack.c.b16 %v336, %v335
  %v371 = vpack.c.b16 %v338, %v337
  %v372 = vpack.c.b16 %v340, %v339
  %v375 = vunpack.c.l.b16 %v211
  %v376 = vunpack.c.l.b16 %v212
  %v377 = vpack.c.b16 %v376, %v375
  %vm378 = vcmask 72704
  %v380 = vsel %vm378, %v341, 0
  %v383 = vsel %vm378, %v342, 0
  %v386 = vsel %vm378, %v343, 0
  %v389 = vsel %vm378, %v344, 0
  %v392 = vsel %vm378, %v345, 0
  %v395 = vsel %vm378, %v346, 0
  %v398 = vsel %vm378, %v347, 0
  %v401 = vsel %vm378, %v348, 0
  %v404 = vsel %vm378, %v349, 0
  %v407 = vsel %vm378, %v350, 0
  %v410 = vsel %vm378, %v351, 0
  %v413 = vsel %vm378, %v352, 0
  %v416 = vsel %vm378, %v353, 0
  %v419 = vsel %vm378, %v354, 0
  %v422 = vsel %vm378, %v355, 0
  %v425 = vsel %vm378, %v356, 0
  %v428 = vsel %vm378, %v357, 0
  %v431 = vsel %vm378, %v358, 0
  %v434 = vsel %vm378, %v359, 0
  %v437 = vsel %vm378, %v360, 0
  %v440 = vsel %vm378, %v361, 0
  %v443 = vsel %vm378, %v362, 0
  %v446 = vsel %vm378, %v363, 0
  %v449 = vsel %vm378, %v364, 0
  %v452 = vsel %vm378, %v365, 0
  %v455 = vsel %vm378, %v366, 0
  %v458 = vsel %vm378, %v367, 0
  %v461 = vsel %vm378, %v368, 0
  %v464 = vsel %vm378, %v369, 0
  %v467 = vsel %vm378, %v370, 0
  %v470 = vsel %vm378, %v371, 0
  %v473 = vsel %vm378, %v372, 0
  %vm475 = vcmask 1043456
  %vm476 = vcmask 1044480
  %v477 = vsel %vm475, 4294967295, 65535
  %v478 = vsel %vm476, %v477, 0
  %v480 = vand.u32 %v377, %v478
  %482 = vmatprep.subr.bf16.mxu0 0
  %483 = vmatpush1.bf16.msra.mxu0 0
  %484 = vmatprep.subr.bf16.mxu0 0
  %485 = vmatpush1.bf16.msra.mxu0 0
  %486 = vmatprep.subr.bf16.mxu0 0
  %487 = vmatpush1.bf16.msra.mxu0 0
  %488 = vmatprep.subr.bf16.mxu0 0
  %489 = vmatpush1.bf16.msra.mxu0 0
  %490 = vmatprep.subr.bf16.mxu0 0
  %491 = vmatpush1.bf16.msra.mxu0 0
  %492 = vmatprep.subr.bf16.mxu0 0
  %493 = vmatpush1.bf16.msra.mxu0 0
  %494 = vmatprep.subr.bf16.mxu0 0
  %495 = vmatpush1.bf16.msra.mxu0 0
  %496 = vmatprep.subr.bf16.mxu0 0
  %497 = vmatpush1.bf16.msra.mxu0 %v480
  %498 = vmatprep.subr.bf16.mxu0 0
  %499 = vmatpush2.bf16.msra.mxu0 0
  %500 = vmatprep.subr.bf16.mxu0 0
  %501 = vmatpush2.bf16.msra.mxu0 0
  %502 = vmatprep.subr.bf16.mxu0 0
  %503 = vmatpush2.bf16.msra.mxu0 0
  %504 = vmatprep.subr.bf16.mxu0 0
  %505 = vmatpush2.bf16.msra.mxu0 0
  %506 = vmatprep.subr.bf16.mxu0 0
  %507 = vmatpush2.bf16.msra.mxu0 0
  %508 = vmatprep.subr.bf16.mxu0 0
  %509 = vmatpush2.bf16.msra.mxu0 0
  %510 = vmatprep.subr.bf16.mxu0 0
  %511 = vmatpush2.bf16.msra.mxu0 0
  %512 = vmatprep.subr.bf16.mxu0 0
  %513 = vmatpush2.bf16.msra.mxu0 0
  %514 = vmatprep.mubr.bf16.mxu0 0
  %515 = vmatmul.mubr.bf16.gmra.mxu0 %v380
  %v516 = vpop.f32.mrf.mxu0
  %v517 = vadd.f32 0.0, %v516
  %v518 = vpop.f32.mrf.mxu0
  %v519 = vpop.f32.mrf.mxu0
  %v520 = vadd.f32 0.0, %v519
  %v521 = vpop.f32.mrf.mxu0
  %522 = vmatprep.mubr.bf16.mxu0 0
  %523 = vmatmul.mubr.bf16.gmra.mxu0 %v383
  %v524 = vpop.f32.mrf.mxu0
  %v525 = vadd.f32 0.0, %v524
  %v526 = vpop.f32.mrf.mxu0
  %v527 = vpop.f32.mrf.mxu0
  %v528 = vadd.f32 0.0, %v527
  %v529 = vpop.f32.mrf.mxu0
  %530 = vmatprep.mubr.bf16.mxu0 0
  %531 = vmatmul.mubr.bf16.gmra.mxu0 %v386
  %v532 = vpop.f32.mrf.mxu0
  %v533 = vadd.f32 0.0, %v532
  %v534 = vpop.f32.mrf.mxu0
  %v535 = vpop.f32.mrf.mxu0
  %v536 = vadd.f32 0.0, %v535
  %v537 = vpop.f32.mrf.mxu0
  %538 = vmatprep.mubr.bf16.mxu0 0
  %539 = vmatmul.mubr.bf16.gmra.mxu0 %v389
  %v540 = vpop.f32.mrf.mxu0
  %v541 = vadd.f32 0.0, %v540
  %v542 = vpop.f32.mrf.mxu0
  %v543 = vpop.f32.mrf.mxu0
  %v544 = vadd.f32 0.0, %v543
  %v545 = vpop.f32.mrf.mxu0
  %546 = vmatprep.mubr.bf16.mxu0 0
  %547 = vmatmul.mubr.bf16.gmra.mxu0 %v392
  %v548 = vpop.f32.mrf.mxu0
  %v549 = vadd.f32 0.0, %v548
  %v550 = vpop.f32.mrf.mxu0
  %v551 = vpop.f32.mrf.mxu0
  %v552 = vadd.f32 0.0, %v551
  %v553 = vpop.f32.mrf.mxu0
  %554 = vmatprep.mubr.bf16.mxu0 0
  %555 = vmatmul.mubr.bf16.gmra.mxu0 %v395
  %v556 = vpop.f32.mrf.mxu0
  %v557 = vadd.f32 0.0, %v556
  %v558 = vpop.f32.mrf.mxu0
  %v559 = vpop.f32.mrf.mxu0
  %v560 = vadd.f32 0.0, %v559
  %v561 = vpop.f32.mrf.mxu0
  %562 = vmatprep.mubr.bf16.mxu0 0
  %563 = vmatmul.mubr.bf16.gmra.mxu0 %v398
  %v564 = vpop.f32.mrf.mxu0
  %v565 = vadd.f32 0.0, %v564
  %v566 = vpop.f32.mrf.mxu0
  %v567 = vpop.f32.mrf.mxu0
  %v568 = vadd.f32 0.0, %v567
  %v569 = vpop.f32.mrf.mxu0
  %570 = vmatprep.mubr.bf16.mxu0 0
  %571 = vmatmul.mubr.bf16.gmra.mxu0 %v401
  %v572 = vpop.f32.mrf.mxu0
  %v573 = vadd.f32 0.0, %v572
  %v574 = vpop.f32.mrf.mxu0
  %v575 = vpop.f32.mrf.mxu0
  %v576 = vadd.f32 0.0, %v575
  %v577 = vpop.f32.mrf.mxu0
  %578 = vmatprep.mubr.bf16.mxu0 0
  %579 = vmatmul.mubr.bf16.gmra.mxu0 %v404
  %v580 = vpop.f32.mrf.mxu0
  %v581 = vadd.f32 0.0, %v580
  %v582 = vpop.f32.mrf.mxu0
  %v583 = vpop.f32.mrf.mxu0
  %v584 = vadd.f32 0.0, %v583
  %v585 = vpop.f32.mrf.mxu0
  %586 = vmatprep.mubr.bf16.mxu0 0
  %587 = vmatmul.mubr.bf16.gmra.mxu0 %v407
  %v588 = vpop.f32.mrf.mxu0
  %v589 = vadd.f32 0.0, %v588
  %v590 = vpop.f32.mrf.mxu0
  %v591 = vpop.f32.mrf.mxu0
  %v592 = vadd.f32 0.0, %v591
  %v593 = vpop.f32.mrf.mxu0
  %594 = vmatprep.mubr.bf16.mxu0 0
  %595 = vmatmul.mubr.bf16.gmra.mxu0 %v410
  %v596 = vpop.f32.mrf.mxu0
  %v597 = vadd.f32 0.0, %v596
  %v598 = vpop.f32.mrf.mxu0
  %v599 = vpop.f32.mrf.mxu0
  %v600 = vadd.f32 0.0, %v599
  %v601 = vpop.f32.mrf.mxu0
  %602 = vmatprep.mubr.bf16.mxu0 0
  %603 = vmatmul.mubr.bf16.gmra.mxu0 %v413
  %v604 = vpop.f32.mrf.mxu0
  %v605 = vadd.f32 0.0, %v604
  %v606 = vpop.f32.mrf.mxu0
  %v607 = vpop.f32.mrf.mxu0
  %v608 = vadd.f32 0.0, %v607
  %v609 = vpop.f32.mrf.mxu0
  %610 = vmatprep.mubr.bf16.mxu0 0
  %611 = vmatmul.mubr.bf16.gmra.mxu0 %v416
  %v612 = vpop.f32.mrf.mxu0
  %v613 = vadd.f32 0.0, %v612
  %v614 = vpop.f32.mrf.mxu0
  %v615 = vpop.f32.mrf.mxu0
  %v616 = vadd.f32 0.0, %v615
  %v617 = vpop.f32.mrf.mxu0
  %618 = vmatprep.mubr.bf16.mxu0 0
  %619 = vmatmul.mubr.bf16.gmra.mxu0 %v419
  %v620 = vpop.f32.mrf.mxu0
  %v621 = vadd.f32 0.0, %v620
  %v622 = vpop.f32.mrf.mxu0
  %v623 = vpop.f32.mrf.mxu0
  %v624 = vadd.f32 0.0, %v623
  %v625 = vpop.f32.mrf.mxu0
  %626 = vmatprep.mubr.bf16.mxu0 0
  %627 = vmatmul.mubr.bf16.gmra.mxu0 %v422
  %v628 = vpop.f32.mrf.mxu0
  %v629 = vadd.f32 0.0, %v628
  %v630 = vpop.f32.mrf.mxu0
  %v631 = vpop.f32.mrf.mxu0
  %v632 = vadd.f32 0.0, %v631
  %v633 = vpop.f32.mrf.mxu0
  %634 = vmatprep.mubr.bf16.mxu0 0
  %635 = vmatmul.mubr.bf16.gmra.mxu0 %v425
  %v636 = vpop.f32.mrf.mxu0
  %v637 = vadd.f32 0.0, %v636
  %v638 = vpop.f32.mrf.mxu0
  %v639 = vpop.f32.mrf.mxu0
  %v640 = vadd.f32 0.0, %v639
  %v641 = vpop.f32.mrf.mxu0
  %642 = vmatprep.mubr.bf16.mxu0 0
  %643 = vmatmul.mubr.bf16.gmra.mxu0 %v428
  %v644 = vpop.f32.mrf.mxu0
  %v645 = vadd.f32 0.0, %v644
  %v646 = vpop.f32.mrf.mxu0
  %v647 = vpop.f32.mrf.mxu0
  %v648 = vadd.f32 0.0, %v647
  %v649 = vpop.f32.mrf.mxu0
  %650 = vmatprep.mubr.bf16.mxu0 0
  %651 = vmatmul.mubr.bf16.gmra.mxu0 %v431
  %v652 = vpop.f32.mrf.mxu0
  %v653 = vadd.f32 0.0, %v652
  %v654 = vpop.f32.mrf.mxu0
  %v655 = vpop.f32.mrf.mxu0
  %v656 = vadd.f32 0.0, %v655
  %v657 = vpop.f32.mrf.mxu0
  %658 = vmatprep.mubr.bf16.mxu0 0
  %659 = vmatmul.mubr.bf16.gmra.mxu0 %v434
  %v660 = vpop.f32.mrf.mxu0
  %v661 = vadd.f32 0.0, %v660
  %v662 = vpop.f32.mrf.mxu0
  %v663 = vpop.f32.mrf.mxu0
  %v664 = vadd.f32 0.0, %v663
  %v665 = vpop.f32.mrf.mxu0
  %666 = vmatprep.mubr.bf16.mxu0 0
  %667 = vmatmul.mubr.bf16.gmra.mxu0 %v437
  %v668 = vpop.f32.mrf.mxu0
  %v669 = vadd.f32 0.0, %v668
  %v670 = vpop.f32.mrf.mxu0
  %v671 = vpop.f32.mrf.mxu0
  %v672 = vadd.f32 0.0, %v671
  %v673 = vpop.f32.mrf.mxu0
  %674 = vmatprep.mubr.bf16.mxu0 0
  %675 = vmatmul.mubr.bf16.gmra.mxu0 %v440
  %v676 = vpop.f32.mrf.mxu0
  %v677 = vadd.f32 0.0, %v676
  %v678 = vpop.f32.mrf.mxu0
  %v679 = vpop.f32.mrf.mxu0
  %v680 = vadd.f32 0.0, %v679
  %v681 = vpop.f32.mrf.mxu0
  %682 = vmatprep.mubr.bf16.mxu0 0
  %683 = vmatmul.mubr.bf16.gmra.mxu0 %v443
  %v684 = vpop.f32.mrf.mxu0
  %v685 = vadd.f32 0.0, %v684
  %v686 = vpop.f32.mrf.mxu0
  %v687 = vpop.f32.mrf.mxu0
  %v688 = vadd.f32 0.0, %v687
  %v689 = vpop.f32.mrf.mxu0
  %690 = vmatprep.mubr.bf16.mxu0 0
  %691 = vmatmul.mubr.bf16.gmra.mxu0 %v446
  %v692 = vpop.f32.mrf.mxu0
  %v693 = vadd.f32 0.0, %v692
  %v694 = vpop.f32.mrf.mxu0
  %v695 = vpop.f32.mrf.mxu0
  %v696 = vadd.f32 0.0, %v695
  %v697 = vpop.f32.mrf.mxu0
  %698 = vmatprep.mubr.bf16.mxu0 0
  %699 = vmatmul.mubr.bf16.gmra.mxu0 %v449
  %v700 = vpop.f32.mrf.mxu0
  %v701 = vadd.f32 0.0, %v700
  %v702 = vpop.f32.mrf.mxu0
  %v703 = vpop.f32.mrf.mxu0
  %v704 = vadd.f32 0.0, %v703
  %v705 = vpop.f32.mrf.mxu0
  %706 = vmatprep.mubr.bf16.mxu0 0
  %707 = vmatmul.mubr.bf16.gmra.mxu0 %v452
  %v708 = vpop.f32.mrf.mxu0
  %v709 = vadd.f32 0.0, %v708
  %v710 = vpop.f32.mrf.mxu0
  %v711 = vpop.f32.mrf.mxu0
  %v712 = vadd.f32 0.0, %v711
  %v713 = vpop.f32.mrf.mxu0
  %714 = vmatprep.mubr.bf16.mxu0 0
  %715 = vmatmul.mubr.bf16.gmra.mxu0 %v455
  %v716 = vpop.f32.mrf.mxu0
  %v717 = vadd.f32 0.0, %v716
  %v718 = vpop.f32.mrf.mxu0
  %v719 = vpop.f32.mrf.mxu0
  %v720 = vadd.f32 0.0, %v719
  %v721 = vpop.f32.mrf.mxu0
  %722 = vmatprep.mubr.bf16.mxu0 0
  %723 = vmatmul.mubr.bf16.gmra.mxu0 %v458
  %v724 = vpop.f32.mrf.mxu0
  %v725 = vadd.f32 0.0, %v724
  %v726 = vpop.f32.mrf.mxu0
  %v727 = vpop.f32.mrf.mxu0
  %v728 = vadd.f32 0.0, %v727
  %v729 = vpop.f32.mrf.mxu0
  %730 = vmatprep.mubr.bf16.mxu0 0
  %731 = vmatmul.mubr.bf16.gmra.mxu0 %v461
  %v732 = vpop.f32.mrf.mxu0
  %v733 = vadd.f32 0.0, %v732
  %v734 = vpop.f32.mrf.mxu0
  %v735 = vpop.f32.mrf.mxu0
  %v736 = vadd.f32 0.0, %v735
  %v737 = vpop.f32.mrf.mxu0
  %738 = vmatprep.mubr.bf16.mxu0 0
  %739 = vmatmul.mubr.bf16.gmra.mxu0 %v464
  %v740 = vpop.f32.mrf.mxu0
  %v741 = vadd.f32 0.0, %v740
  %v742 = vpop.f32.mrf.mxu0
  %v743 = vpop.f32.mrf.mxu0
  %v744 = vadd.f32 0.0, %v743
  %v745 = vpop.f32.mrf.mxu0
  %746 = vmatprep.mubr.bf16.mxu0 0
  %747 = vmatmul.mubr.bf16.gmra.mxu0 %v467
  %v748 = vpop.f32.mrf.mxu0
  %v749 = vadd.f32 0.0, %v748
  %v750 = vpop.f32.mrf.mxu0
  %v751 = vpop.f32.mrf.mxu0
  %v752 = vadd.f32 0.0, %v751
  %v753 = vpop.f32.mrf.mxu0
  %754 = vmatprep.mubr.bf16.mxu0 0
  %755 = vmatmul.mubr.bf16.gmra.mxu0 %v470
  %v756 = vpop.f32.mrf.mxu0
  %v757 = vadd.f32 0.0, %v756
  %v758 = vpop.f32.mrf.mxu0
  %v759 = vpop.f32.mrf.mxu0
  %v760 = vadd.f32 0.0, %v759
  %v761 = vpop.f32.mrf.mxu0
  %762 = vmatprep.mubr.bf16.mxu0 0
  %763 = vmatmul.mubr.bf16.gmra.mxu0 %v473
  %v764 = vpop.f32.mrf.mxu0
  %v765 = vadd.f32 0.0, %v764
  %v766 = vpop.f32.mrf.mxu0
  %v767 = vpop.f32.mrf.mxu0
  %v768 = vadd.f32 0.0, %v767
  %v769 = vpop.f32.mrf.mxu0
  %770 = vdwg.mxu0
  %v771 = vadd.f32 %v83, %v517
  %v772 = vadd.f32 %v84, %v520
  %v773 = vadd.f32 %v85, %v525
  %v774 = vadd.f32 %v86, %v528
  %v775 = vadd.f32 %v87, %v533
  %v776 = vadd.f32 %v88, %v536
  %v777 = vadd.f32 %v89, %v541
  %v778 = vadd.f32 %v90, %v544
  %v779 = vadd.f32 %v91, %v549
  %v780 = vadd.f32 %v92, %v552
  %v781 = vadd.f32 %v93, %v557
  %v782 = vadd.f32 %v94, %v560
  %v783 = vadd.f32 %v95, %v565
  %v784 = vadd.f32 %v96, %v568
  %v785 = vadd.f32 %v97, %v573
  %v786 = vadd.f32 %v98, %v576
  %v787 = vadd.f32 %v99, %v581
  %v788 = vadd.f32 %v100, %v584
  %v789 = vadd.f32 %v101, %v589
  %v790 = vadd.f32 %v102, %v592
  %v791 = vadd.f32 %v103, %v597
  %v792 = vadd.f32 %v104, %v600
  %v793 = vadd.f32 %v105, %v605
  %v794 = vadd.f32 %v106, %v608
  %v795 = vadd.f32 %v107, %v613
  %v796 = vadd.f32 %v108, %v616
  %v797 = vadd.f32 %v109, %v621
  %v798 = vadd.f32 %v110, %v624
  %v799 = vadd.f32 %v111, %v629
  %v800 = vadd.f32 %v112, %v632
  %v801 = vadd.f32 %v113, %v637
  %v802 = vadd.f32 %v114, %v640
  %v803 = vadd.f32 %v115, %v645
  %v804 = vadd.f32 %v116, %v648
  %v805 = vadd.f32 %v117, %v653
  %v806 = vadd.f32 %v118, %v656
  %v807 = vadd.f32 %v119, %v661
  %v808 = vadd.f32 %v120, %v664
  %v809 = vadd.f32 %v121, %v669
  %v810 = vadd.f32 %v122, %v672
  %v811 = vadd.f32 %v123, %v677
  %v812 = vadd.f32 %v124, %v680
  %v813 = vadd.f32 %v125, %v685
  %v814 = vadd.f32 %v126, %v688
  %v815 = vadd.f32 %v127, %v693
  %v816 = vadd.f32 %v128, %v696
  %v817 = vadd.f32 %v129, %v701
  %v818 = vadd.f32 %v130, %v704
  %v819 = vadd.f32 %v131, %v709
  %v820 = vadd.f32 %v132, %v712
  %v821 = vadd.f32 %v133, %v717
  %v822 = vadd.f32 %v134, %v720
  %v823 = vadd.f32 %v135, %v725
  %v824 = vadd.f32 %v136, %v728
  %v825 = vadd.f32 %v137, %v733
  %v826 = vadd.f32 %v138, %v736
  %v827 = vadd.f32 %v139, %v741
  %v828 = vadd.f32 %v140, %v744
  %v829 = vadd.f32 %v141, %v749
  %v830 = vadd.f32 %v142, %v752
  %v831 = vadd.f32 %v143, %v757
  %v832 = vadd.f32 %v144, %v760
  %v833 = vadd.f32 %v145, %v765
  %v834 = vadd.f32 %v146, %v768
  %835 = vst [vmem:[#allocation2] sm:$0xff] %v771
  %836 = vst [vmem:[#allocation2 + $0x8] sm:$0xff] %v772
  %837 = vst [vmem:[#allocation2 + $0x10] sm:$0xff] %v773
  %838 = vst [vmem:[#allocation2 + $0x18] sm:$0xff] %v774
  %839 = vst [vmem:[#allocation2 + $0x20] sm:$0xff] %v775
  %840 = vst [vmem:[#allocation2 + $0x28] sm:$0xff] %v776
  %841 = vst [vmem:[#allocation2 + $0x30] sm:$0xff] %v777
  %842 = vst [vmem:[#allocation2 + $0x38] sm:$0xff] %v778
  %843 = vst [vmem:[#allocation2 + $0x40] sm:$0xff] %v779
  %844 = vst [vmem:[#allocation2 + $0x48] sm:$0xff] %v780
  %845 = vst [vmem:[#allocation2 + $0x50] sm:$0xff] %v781
  %846 = vst [vmem:[#allocation2 + $0x58] sm:$0xff] %v782
  %847 = vst [vmem:[#allocation2 + $0x60] sm:$0xff] %v783
  %848 = vst [vmem:[#allocation2 + $0x68] sm:$0xff] %v784
  %849 = vst [vmem:[#allocation2 + $0x70] sm:$0xff] %v785
  %850 = vst [vmem:[#allocation2 + $0x78] sm:$0xff] %v786
  %851 = vst [vmem:[#allocation2 + $0x80] sm:$0xff] %v787
  %852 = vst [vmem:[#allocation2 + $0x88] sm:$0xff] %v788
  %853 = vst [vmem:[#allocation2 + $0x90] sm:$0xff] %v789
  %854 = vst [vmem:[#allocation2 + $0x98] sm:$0xff] %v790
  %855 = vst [vmem:[#allocation2 + $0xa0] sm:$0xff] %v791
  %856 = vst [vmem:[#allocation2 + $0xa8] sm:$0xff] %v792
  %857 = vst [vmem:[#allocation2 + $0xb0] sm:$0xff] %v793
  %858 = vst [vmem:[#allocation2 + $0xb8] sm:$0xff] %v794
  %859 = vst [vmem:[#allocation2 + $0xc0] sm:$0xff] %v795
  %860 = vst [vmem:[#allocation2 + $0xc8] sm:$0xff] %v796
  %861 = vst [vmem:[#allocation2 + $0xd0] sm:$0xff] %v797
  %862 = vst [vmem:[#allocation2 + $0xd8] sm:$0xff] %v798
  %863 = vst [vmem:[#allocation2 + $0xe0] sm:$0xff] %v799
  %864 = vst [vmem:[#allocation2 + $0xe8] sm:$0xff] %v800
  %865 = vst [vmem:[#allocation2 + $0xf0] sm:$0xff] %v801
  %866 = vst [vmem:[#allocation2 + $0xf8] sm:$0xff] %v802
  %867 = vst [vmem:[#allocation2 + $0x100] sm:$0xff] %v803
  %868 = vst [vmem:[#allocation2 + $0x108] sm:$0xff] %v804
  %869 = vst [vmem:[#allocation2 + $0x110] sm:$0xff] %v805
  %870 = vst [vmem:[#allocation2 + $0x118] sm:$0xff] %v806
  %871 = vst [vmem:[#allocation2 + $0x120] sm:$0xff] %v807
  %872 = vst [vmem:[#allocation2 + $0x128] sm:$0xff] %v808
  %873 = vst [vmem:[#allocation2 + $0x130] sm:$0xff] %v809
  %874 = vst [vmem:[#allocation2 + $0x138] sm:$0xff] %v810
  %875 = vst [vmem:[#allocation2 + $0x140] sm:$0xff] %v811
  %876 = vst [vmem:[#allocation2 + $0x148] sm:$0xff] %v812
  %877 = vst [vmem:[#allocation2 + $0x150] sm:$0xff] %v813
  %878 = vst [vmem:[#allocation2 + $0x158] sm:$0xff] %v814
  %879 = vst [vmem:[#allocation2 + $0x160] sm:$0xff] %v815
  %880 = vst [vmem:[#allocation2 + $0x168] sm:$0xff] %v816
  %881 = vst [vmem:[#allocation2 + $0x170] sm:$0xff] %v817
  %882 = vst [vmem:[#allocation2 + $0x178] sm:$0xff] %v818
  %883 = vst [vmem:[#allocation2 + $0x180] sm:$0xff] %v819
  %884 = vst [vmem:[#allocation2 + $0x188] sm:$0xff] %v820
  %885 = vst [vmem:[#allocation2 + $0x190] sm:$0xff] %v821
  %886 = vst [vmem:[#allocation2 + $0x198] sm:$0xff] %v822
  %887 = vst [vmem:[#allocation2 + $0x1a0] sm:$0xff] %v823
  %888 = vst [vmem:[#allocation2 + $0x1a8] sm:$0xff] %v824
  %889 = vst [vmem:[#allocation2 + $0x1b0] sm:$0xff] %v825
  %890 = vst [vmem:[#allocation2 + $0x1b8] sm:$0xff] %v826
  %891 = vst [vmem:[#allocation2 + $0x1c0] sm:$0xff] %v827
  %892 = vst [vmem:[#allocation2 + $0x1c8] sm:$0xff] %v828
  %893 = vst [vmem:[#allocation2 + $0x1d0] sm:$0xff] %v829
  %894 = vst [vmem:[#allocation2 + $0x1d8] sm:$0xff] %v830
  %895 = vst [vmem:[#allocation2 + $0x1e0] sm:$0xff] %v831
  %896 = vst [vmem:[#allocation2 + $0x1e8] sm:$0xff] %v832
  %897 = vst [vmem:[#allocation2 + $0x1f0] sm:$0xff] %v833
  %898 = vst [vmem:[#allocation2 + $0x1f8] sm:$0xff] %v834
  // Predicated region
  $region18: #{unet_forward.13} parent=0 // pred_check
    %p899 = pneg %p15
  $region19: #{unet_forward.13} parent=0 // pred_check_branch
    %901 = sbr.rel (%p899) target = $region21
  $region20: #{unet_forward.13} parent=0 // pred_region
    %v902 = vld [vmem:[#allocation2] sm:$0xff]
    %v903 = vld [vmem:[#allocation2 + $0x8] sm:$0xff]
    %v904 = vld [vmem:[#allocation2 + $0x10] sm:$0xff]
    %v905 = vld [vmem:[#allocation2 + $0x18] sm:$0xff]
    %v906 = vld [vmem:[#allocation2 + $0x20] sm:$0xff]
    %v907 = vld [vmem:[#allocation2 + $0x28] sm:$0xff]
    %v908 = vld [vmem:[#allocation2 + $0x30] sm:$0xff]
    %v909 = vld [vmem:[#allocation2 + $0x38] sm:$0xff]
    %v910 = vld [vmem:[#allocation2 + $0x40] sm:$0xff]
    %v911 = vld [vmem:[#allocation2 + $0x48] sm:$0xff]
    %v912 = vld [vmem:[#allocation2 + $0x50] sm:$0xff]
    %v913 = vld [vmem:[#allocation2 + $0x58] sm:$0xff]
    %v914 = vld [vmem:[#allocation2 + $0x60] sm:$0xff]
    %v915 = vld [vmem:[#allocation2 + $0x68] sm:$0xff]
    %v916 = vld [vmem:[#allocation2 + $0x70] sm:$0xff]
    %v917 = vld [vmem:[#allocation2 + $0x78] sm:$0xff]
    %v918 = vld [vmem:[#allocation2 + $0x80] sm:$0xff]
    %v919 = vld [vmem:[#allocation2 + $0x88] sm:$0xff]
    %v920 = vld [vmem:[#allocation2 + $0x90] sm:$0xff]
    %v921 = vld [vmem:[#allocation2 + $0x98] sm:$0xff]
    %v922 = vld [vmem:[#allocation2 + $0xa0] sm:$0xff]
    %v923 = vld [vmem:[#allocation2 + $0xa8] sm:$0xff]
    %v924 = vld [vmem:[#allocation2 + $0xb0] sm:$0xff]
    %v925 = vld [vmem:[#allocation2 + $0xb8] sm:$0xff]
    %v926 = vld [vmem:[#allocation2 + $0xc0] sm:$0xff]
    %v927 = vld [vmem:[#allocation2 + $0xc8] sm:$0xff]
    %v928 = vld [vmem:[#allocation2 + $0xd0] sm:$0xff]
    %v929 = vld [vmem:[#allocation2 + $0xd8] sm:$0xff]
    %v930 = vld [vmem:[#allocation2 + $0xe0] sm:$0xff]
    %v931 = vld [vmem:[#allocation2 + $0xe8] sm:$0xff]
    %v932 = vld [vmem:[#allocation2 + $0xf0] sm:$0xff]
    %v933 = vld [vmem:[#allocation2 + $0xf8] sm:$0xff]
    %v934 = vld [vmem:[#allocation2 + $0x100] sm:$0xff]
    %v935 = vld [vmem:[#allocation2 + $0x108] sm:$0xff]
    %v936 = vld [vmem:[#allocation2 + $0x110] sm:$0xff]
    %v937 = vld [vmem:[#allocation2 + $0x118] sm:$0xff]
    %v938 = vld [vmem:[#allocation2 + $0x120] sm:$0xff]
    %v939 = vld [vmem:[#allocation2 + $0x128] sm:$0xff]
    %v940 = vld [vmem:[#allocation2 + $0x130] sm:$0xff]
    %v941 = vld [vmem:[#allocation2 + $0x138] sm:$0xff]
    %v942 = vld [vmem:[#allocation2 + $0x140] sm:$0xff]
    %v943 = vld [vmem:[#allocation2 + $0x148] sm:$0xff]
    %v944 = vld [vmem:[#allocation2 + $0x150] sm:$0xff]
    %v945 = vld [vmem:[#allocation2 + $0x158] sm:$0xff]
    %v946 = vld [vmem:[#allocation2 + $0x160] sm:$0xff]
    %v947 = vld [vmem:[#allocation2 + $0x168] sm:$0xff]
    %v948 = vld [vmem:[#allocation2 + $0x170] sm:$0xff]
    %v949 = vld [vmem:[#allocation2 + $0x178] sm:$0xff]
    %v950 = vld [vmem:[#allocation2 + $0x180] sm:$0xff]
    %v951 = vld [vmem:[#allocation2 + $0x188] sm:$0xff]
    %v952 = vld [vmem:[#allocation2 + $0x190] sm:$0xff]
    %v953 = vld [vmem:[#allocation2 + $0x198] sm:$0xff]
    %v954 = vld [vmem:[#allocation2 + $0x1a0] sm:$0xff]
    %v955 = vld [vmem:[#allocation2 + $0x1a8] sm:$0xff]
    %v956 = vld [vmem:[#allocation2 + $0x1b0] sm:$0xff]
    %v957 = vld [vmem:[#allocation2 + $0x1b8] sm:$0xff]
    %v958 = vld [vmem:[#allocation2 + $0x1c0] sm:$0xff]
    %v959 = vld [vmem:[#allocation2 + $0x1c8] sm:$0xff]
    %v960 = vld [vmem:[#allocation2 + $0x1d0] sm:$0xff]
    %v961 = vld [vmem:[#allocation2 + $0x1d8] sm:$0xff]
    %v962 = vld [vmem:[#allocation2 + $0x1e0] sm:$0xff]
    %v963 = vld [vmem:[#allocation2 + $0x1e8] sm:$0xff]
    %v964 = vld [vmem:[#allocation2 + $0x1f0] sm:$0xff]
    %v965 = vld [vmem:[#allocation2 + $0x1f8] sm:$0xff]
    %v966 = vld [vmem:[%s2] sm:$0x1]
    %v968 = vlaneseq
    %v969 = vshrl.u32 %v968, 7
    %v970 = vsub.s32 0, %v969
    %v971 = vrot.slane %v966, %v970
    %v973 = vadd.f32 %v902, %v971
    %v974 = vadd.f32 %v903, %v971
    %v975 = vadd.f32 %v904, %v971
    %v976 = vadd.f32 %v905, %v971
    %v977 = vadd.f32 %v906, %v971
    %v978 = vadd.f32 %v907, %v971
    %v979 = vadd.f32 %v908, %v971
    %v980 = vadd.f32 %v909, %v971
    %v981 = vadd.f32 %v910, %v971
    %v982 = vadd.f32 %v911, %v971
    %v983 = vadd.f32 %v912, %v971
    %v984 = vadd.f32 %v913, %v971
    %v985 = vadd.f32 %v914, %v971
    %v986 = vadd.f32 %v915, %v971
    %v987 = vadd.f32 %v916, %v971
    %v988 = vadd.f32 %v917, %v971
    %v989 = vadd.f32 %v918, %v971
    %v990 = vadd.f32 %v919, %v971
    %v991 = vadd.f32 %v920, %v971
    %v992 = vadd.f32 %v921, %v971
    %v993 = vadd.f32 %v922, %v971
    %v994 = vadd.f32 %v923, %v971
    %v995 = vadd.f32 %v924, %v971
    %v996 = vadd.f32 %v925, %v971
    %v997 = vadd.f32 %v926, %v971
    %v998 = vadd.f32 %v927, %v971
    %v999 = vadd.f32 %v928, %v971
    %v1000 = vadd.f32 %v929, %v971
    %v1001 = vadd.f32 %v930, %v971
    %v1002 = vadd.f32 %v931, %v971
    %v1003 = vadd.f32 %v932, %v971
    %v1004 = vadd.f32 %v933, %v971
    %v1005 = vadd.f32 %v934, %v971
    %v1006 = vadd.f32 %v935, %v971
    %v1007 = vadd.f32 %v936, %v971
    %v1008 = vadd.f32 %v937, %v971
    %v1009 = vadd.f32 %v938, %v971
    %v1010 = vadd.f32 %v939, %v971
    %v1011 = vadd.f32 %v940, %v971
    %v1012 = vadd.f32 %v941, %v971
    %v1013 = vadd.f32 %v942, %v971
    %v1014 = vadd.f32 %v943, %v971
    %v1015 = vadd.f32 %v944, %v971
    %v1016 = vadd.f32 %v945, %v971
    %v1017 = vadd.f32 %v946, %v971
    %v1018 = vadd.f32 %v947, %v971
    %v1019 = vadd.f32 %v948, %v971
    %v1020 = vadd.f32 %v949, %v971
    %v1021 = vadd.f32 %v950, %v971
    %v1022 = vadd.f32 %v951, %v971
    %v1023 = vadd.f32 %v952, %v971
    %v1024 = vadd.f32 %v953, %v971
    %v1025 = vadd.f32 %v954, %v971
    %v1026 = vadd.f32 %v955, %v971
    %v1027 = vadd.f32 %v956, %v971
    %v1028 = vadd.f32 %v957, %v971
    %v1029 = vadd.f32 %v958, %v971
    %v1030 = vadd.f32 %v959, %v971
    %v1031 = vadd.f32 %v960, %v971
    %v1032 = vadd.f32 %v961, %v971
    %v1033 = vadd.f32 %v962, %v971
    %v1034 = vadd.f32 %v963, %v971
    %v1035 = vadd.f32 %v964, %v971
    %v1036 = vadd.f32 %v965, %v971
    %v1037 = vmax.f32 %v973, 0.0
    %v1038 = vmax.f32 %v974, 0.0
    %v1039 = vmax.f32 %v975, 0.0
    %v1040 = vmax.f32 %v976, 0.0
    %v1041 = vmax.f32 %v977, 0.0
    %v1042 = vmax.f32 %v978, 0.0
    %v1043 = vmax.f32 %v979, 0.0
    %v1044 = vmax.f32 %v980, 0.0
    %v1045 = vmax.f32 %v981, 0.0
    %v1046 = vmax.f32 %v982, 0.0
    %v1047 = vmax.f32 %v983, 0.0
    %v1048 = vmax.f32 %v984, 0.0
    %v1049 = vmax.f32 %v985, 0.0
    %v1050 = vmax.f32 %v986, 0.0
    %v1051 = vmax.f32 %v987, 0.0
    %v1052 = vmax.f32 %v988, 0.0
    %v1053 = vmax.f32 %v989, 0.0
    %v1054 = vmax.f32 %v990, 0.0
    %v1055 = vmax.f32 %v991, 0.0
    %v1056 = vmax.f32 %v992, 0.0
    %v1057 = vmax.f32 %v993, 0.0
    %v1058 = vmax.f32 %v994, 0.0
    %v1059 = vmax.f32 %v995, 0.0
    %v1060 = vmax.f32 %v996, 0.0
    %v1061 = vmax.f32 %v997, 0.0
    %v1062 = vmax.f32 %v998, 0.0
    %v1063 = vmax.f32 %v999, 0.0
    %v1064 = vmax.f32 %v1000, 0.0
    %v1065 = vmax.f32 %v1001, 0.0
    %v1066 = vmax.f32 %v1002, 0.0
    %v1067 = vmax.f32 %v1003, 0.0
    %v1068 = vmax.f32 %v1004, 0.0
    %v1069 = vmax.f32 %v1005, 0.0
    %v1070 = vmax.f32 %v1006, 0.0
    %v1071 = vmax.f32 %v1007, 0.0
    %v1072 = vmax.f32 %v1008, 0.0
    %v1073 = vmax.f32 %v1009, 0.0
    %v1074 = vmax.f32 %v1010, 0.0
    %v1075 = vmax.f32 %v1011, 0.0
    %v1076 = vmax.f32 %v1012, 0.0
    %v1077 = vmax.f32 %v1013, 0.0
    %v1078 = vmax.f32 %v1014, 0.0
    %v1079 = vmax.f32 %v1015, 0.0
    %v1080 = vmax.f32 %v1016, 0.0
    %v1081 = vmax.f32 %v1017, 0.0
    %v1082 = vmax.f32 %v1018, 0.0
    %v1083 = vmax.f32 %v1019, 0.0
    %v1084 = vmax.f32 %v1020, 0.0
    %v1085 = vmax.f32 %v1021, 0.0
    %v1086 = vmax.f32 %v1022, 0.0
    %v1087 = vmax.f32 %v1023, 0.0
    %v1088 = vmax.f32 %v1024, 0.0
    %v1089 = vmax.f32 %v1025, 0.0
    %v1090 = vmax.f32 %v1026, 0.0
    %v1091 = vmax.f32 %v1027, 0.0
    %v1092 = vmax.f32 %v1028, 0.0
    %v1093 = vmax.f32 %v1029, 0.0
    %v1094 = vmax.f32 %v1030, 0.0
    %v1095 = vmax.f32 %v1031, 0.0
    %v1096 = vmax.f32 %v1032, 0.0
    %v1097 = vmax.f32 %v1033, 0.0
    %v1098 = vmax.f32 %v1034, 0.0
    %v1099 = vmax.f32 %v1035, 0.0
    %v1100 = vmax.f32 %v1036, 0.0
    %v1101 = vpack.c.bf16 %v1038, %v1037
    %v1102 = vpack.c.bf16 %v1040, %v1039
    %v1103 = vpack.c.bf16 %v1042, %v1041
    %v1104 = vpack.c.bf16 %v1044, %v1043
    %v1105 = vpack.c.bf16 %v1046, %v1045
    %v1106 = vpack.c.bf16 %v1048, %v1047
    %v1107 = vpack.c.bf16 %v1050, %v1049
    %v1108 = vpack.c.bf16 %v1052, %v1051
    %v1109 = vpack.c.bf16 %v1054, %v1053
    %v1110 = vpack.c.bf16 %v1056, %v1055
    %v1111 = vpack.c.bf16 %v1058, %v1057
    %v1112 = vpack.c.bf16 %v1060, %v1059
    %v1113 = vpack.c.bf16 %v1062, %v1061
    %v1114 = vpack.c.bf16 %v1064, %v1063
    %v1115 = vpack.c.bf16 %v1066, %v1065
    %v1116 = vpack.c.bf16 %v1068, %v1067
    %v1117 = vpack.c.bf16 %v1070, %v1069
    %v1118 = vpack.c.bf16 %v1072, %v1071
    %v1119 = vpack.c.bf16 %v1074, %v1073
    %v1120 = vpack.c.bf16 %v1076, %v1075
    %v1121 = vpack.c.bf16 %v1078, %v1077
    %v1122 = vpack.c.bf16 %v1080, %v1079
    %v1123 = vpack.c.bf16 %v1082, %v1081
    %v1124 = vpack.c.bf16 %v1084, %v1083
    %v1125 = vpack.c.bf16 %v1086, %v1085
    %v1126 = vpack.c.bf16 %v1088, %v1087
    %v1127 = vpack.c.bf16 %v1090, %v1089
    %v1128 = vpack.c.bf16 %v1092, %v1091
    %v1129 = vpack.c.bf16 %v1094, %v1093
    %v1130 = vpack.c.bf16 %v1096, %v1095
    %v1131 = vpack.c.bf16 %v1098, %v1097
    %v1132 = vpack.c.bf16 %v1100, %v1099
    %v1165 = vunpack.c.l.b16 %v1101
    %v1166 = vunpack.c.h.b16 %v1101
    %v1167 = vunpack.c.l.b16 %v1102
    %v1168 = vunpack.c.h.b16 %v1102
    %v1169 = vunpack.c.l.b16 %v1103
    %v1170 = vunpack.c.h.b16 %v1103
    %v1171 = vunpack.c.l.b16 %v1104
    %v1172 = vunpack.c.h.b16 %v1104
    %v1173 = vunpack.c.l.b16 %v1105
    %v1174 = vunpack.c.h.b16 %v1105
    %v1175 = vunpack.c.l.b16 %v1106
    %v1176 = vunpack.c.h.b16 %v1106
    %v1177 = vunpack.c.l.b16 %v1107
    %v1178 = vunpack.c.h.b16 %v1107
    %v1179 = vunpack.c.l.b16 %v1108
    %v1180 = vunpack.c.h.b16 %v1108
    %v1181 = vunpack.c.l.b16 %v1109
    %v1182 = vunpack.c.h.b16 %v1109
    %v1183 = vunpack.c.l.b16 %v1110
    %v1184 = vunpack.c.h.b16 %v1110
    %v1185 = vunpack.c.l.b16 %v1111
    %v1186 = vunpack.c.h.b16 %v1111
    %v1187 = vunpack.c.l.b16 %v1112
    %v1188 = vunpack.c.h.b16 %v1112
    %v1189 = vunpack.c.l.b16 %v1113
    %v1190 = vunpack.c.h.b16 %v1113
    %v1191 = vunpack.c.l.b16 %v1114
    %v1192 = vunpack.c.h.b16 %v1114
    %v1193 = vunpack.c.l.b16 %v1115
    %v1194 = vunpack.c.h.b16 %v1115
    %v1195 = vunpack.c.l.b16 %v1116
    %v1196 = vunpack.c.h.b16 %v1116
    %v1197 = vunpack.c.l.b16 %v1117
    %v1198 = vunpack.c.h.b16 %v1117
    %v1199 = vunpack.c.l.b16 %v1118
    %v1200 = vunpack.c.h.b16 %v1118
    %v1201 = vunpack.c.l.b16 %v1119
    %v1202 = vunpack.c.h.b16 %v1119
    %v1203 = vunpack.c.l.b16 %v1120
    %v1204 = vunpack.c.h.b16 %v1120
    %v1205 = vunpack.c.l.b16 %v1121
    %v1206 = vunpack.c.h.b16 %v1121
    %v1207 = vunpack.c.l.b16 %v1122
    %v1208 = vunpack.c.h.b16 %v1122
    %v1209 = vunpack.c.l.b16 %v1123
    %v1210 = vunpack.c.h.b16 %v1123
    %v1211 = vunpack.c.l.b16 %v1124
    %v1212 = vunpack.c.h.b16 %v1124
    %v1213 = vunpack.c.l.b16 %v1125
    %v1214 = vunpack.c.h.b16 %v1125
    %v1215 = vunpack.c.l.b16 %v1126
    %v1216 = vunpack.c.h.b16 %v1126
    %v1217 = vunpack.c.l.b16 %v1127
    %v1218 = vunpack.c.h.b16 %v1127
    %v1219 = vunpack.c.l.b16 %v1128
    %v1220 = vunpack.c.h.b16 %v1128
    %v1221 = vunpack.c.l.b16 %v1129
    %v1222 = vunpack.c.h.b16 %v1129
    %v1223 = vunpack.c.l.b16 %v1130
    %v1224 = vunpack.c.h.b16 %v1130
    %v1225 = vunpack.c.l.b16 %v1131
    %v1226 = vunpack.c.h.b16 %v1131
    %v1227 = vunpack.c.l.b16 %v1132
    %v1228 = vunpack.c.h.b16 %v1132
    %v1229 = vpack.c.b16 %v1165, %v1165
    %v1230 = vpack.c.b16 %v1166, %v1166
    %v1231 = vpack.c.b16 %v1167, %v1167
    %v1232 = vpack.c.b16 %v1168, %v1168
    %v1233 = vpack.c.b16 %v1169, %v1169
    %v1234 = vpack.c.b16 %v1170, %v1170
    %v1235 = vpack.c.b16 %v1171, %v1171
    %v1236 = vpack.c.b16 %v1172, %v1172
    %v1237 = vpack.c.b16 %v1173, %v1173
    %v1238 = vpack.c.b16 %v1174, %v1174
    %v1239 = vpack.c.b16 %v1175, %v1175
    %v1240 = vpack.c.b16 %v1176, %v1176
    %v1241 = vpack.c.b16 %v1177, %v1177
    %v1242 = vpack.c.b16 %v1178, %v1178
    %v1243 = vpack.c.b16 %v1179, %v1179
    %v1244 = vpack.c.b16 %v1180, %v1180
    %v1245 = vpack.c.b16 %v1181, %v1181
    %v1246 = vpack.c.b16 %v1182, %v1182
    %v1247 = vpack.c.b16 %v1183, %v1183
    %v1248 = vpack.c.b16 %v1184, %v1184
    %v1249 = vpack.c.b16 %v1185, %v1185
    %v1250 = vpack.c.b16 %v1186, %v1186
    %v1251 = vpack.c.b16 %v1187, %v1187
    %v1252 = vpack.c.b16 %v1188, %v1188
    %v1253 = vpack.c.b16 %v1189, %v1189
    %v1254 = vpack.c.b16 %v1190, %v1190
    %v1255 = vpack.c.b16 %v1191, %v1191
    %v1256 = vpack.c.b16 %v1192, %v1192
    %v1257 = vpack.c.b16 %v1193, %v1193
    %v1258 = vpack.c.b16 %v1194, %v1194
    %v1259 = vpack.c.b16 %v1195, %v1195
    %v1260 = vpack.c.b16 %v1196, %v1196
    %v1261 = vpack.c.b16 %v1197, %v1197
    %v1262 = vpack.c.b16 %v1198, %v1198
    %v1263 = vpack.c.b16 %v1199, %v1199
    %v1264 = vpack.c.b16 %v1200, %v1200
    %v1265 = vpack.c.b16 %v1201, %v1201
    %v1266 = vpack.c.b16 %v1202, %v1202
    %v1267 = vpack.c.b16 %v1203, %v1203
    %v1268 = vpack.c.b16 %v1204, %v1204
    %v1269 = vpack.c.b16 %v1205, %v1205
    %v1270 = vpack.c.b16 %v1206, %v1206
    %v1271 = vpack.c.b16 %v1207, %v1207
    %v1272 = vpack.c.b16 %v1208, %v1208
    %v1273 = vpack.c.b16 %v1209, %v1209
    %v1274 = vpack.c.b16 %v1210, %v1210
    %v1275 = vpack.c.b16 %v1211, %v1211
    %v1276 = vpack.c.b16 %v1212, %v1212
    %v1277 = vpack.c.b16 %v1213, %v1213
    %v1278 = vpack.c.b16 %v1214, %v1214
    %v1279 = vpack.c.b16 %v1215, %v1215
    %v1280 = vpack.c.b16 %v1216, %v1216
    %v1281 = vpack.c.b16 %v1217, %v1217
    %v1282 = vpack.c.b16 %v1218, %v1218
    %v1283 = vpack.c.b16 %v1219, %v1219
    %v1284 = vpack.c.b16 %v1220, %v1220
    %v1285 = vpack.c.b16 %v1221, %v1221
    %v1286 = vpack.c.b16 %v1222, %v1222
    %v1287 = vpack.c.b16 %v1223, %v1223
    %v1288 = vpack.c.b16 %v1224, %v1224
    %v1289 = vpack.c.b16 %v1225, %v1225
    %v1290 = vpack.c.b16 %v1226, %v1226
    %v1291 = vpack.c.b16 %v1227, %v1227
    %v1292 = vpack.c.b16 %v1228, %v1228
    %1357 = vst [vmem:[%s3] sm:$0xf] %v1229
    %1358 = vst [vmem:[%s3 + $0x4] sm:$0xf] %v1230
    %1359 = vst [vmem:[%s3 + $0x8] sm:$0xf] %v1231
    %1360 = vst [vmem:[%s3 + $0xc] sm:$0xf] %v1232
    %1361 = vst [vmem:[%s3 + $0x10] sm:$0xf] %v1233
    %1362 = vst [vmem:[%s3 + $0x14] sm:$0xf] %v1234
    %1363 = vst [vmem:[%s3 + $0x18] sm:$0xf] %v1235
    %1364 = vst [vmem:[%s3 + $0x1c] sm:$0xf] %v1236
    %1365 = vst [vmem:[%s3 + $0x20] sm:$0xf] %v1237
    %1366 = vst [vmem:[%s3 + $0x24] sm:$0xf] %v1238
    %1367 = vst [vmem:[%s3 + $0x28] sm:$0xf] %v1239
    %1368 = vst [vmem:[%s3 + $0x2c] sm:$0xf] %v1240
    %1369 = vst [vmem:[%s3 + $0x30] sm:$0xf] %v1241
    %1370 = vst [vmem:[%s3 + $0x34] sm:$0xf] %v1242
    %1371 = vst [vmem:[%s3 + $0x38] sm:$0xf] %v1243
    %1372 = vst [vmem:[%s3 + $0x3c] sm:$0xf] %v1244
    %1373 = vst [vmem:[%s3 + $0x40] sm:$0xf] %v1245
    %1374 = vst [vmem:[%s3 + $0x44] sm:$0xf] %v1246
    %1375 = vst [vmem:[%s3 + $0x48] sm:$0xf] %v1247
    %1376 = vst [vmem:[%s3 + $0x4c] sm:$0xf] %v1248
    %1377 = vst [vmem:[%s3 + $0x50] sm:$0xf] %v1249
    %1378 = vst [vmem:[%s3 + $0x54] sm:$0xf] %v1250
    %1379 = vst [vmem:[%s3 + $0x58] sm:$0xf] %v1251
    %1380 = vst [vmem:[%s3 + $0x5c] sm:$0xf] %v1252
    %1381 = vst [vmem:[%s3 + $0x60] sm:$0xf] %v1253
    %1382 = vst [vmem:[%s3 + $0x64] sm:$0xf] %v1254
    %1383 = vst [vmem:[%s3 + $0x68] sm:$0xf] %v1255
    %1384 = vst [vmem:[%s3 + $0x6c] sm:$0xf] %v1256
    %1385 = vst [vmem:[%s3 + $0x70] sm:$0xf] %v1257
    %1386 = vst [vmem:[%s3 + $0x74] sm:$0xf] %v1258
    %1387 = vst [vmem:[%s3 + $0x78] sm:$0xf] %v1259
    %1388 = vst [vmem:[%s3 + $0x7c] sm:$0xf] %v1260
    %1389 = vst [vmem:[%s3 + $0x80] sm:$0xf] %v1261
    %1390 = vst [vmem:[%s3 + $0x84] sm:$0xf] %v1262
    %1391 = vst [vmem:[%s3 + $0x88] sm:$0xf] %v1263
    %1392 = vst [vmem:[%s3 + $0x8c] sm:$0xf] %v1264
    %1393 = vst [vmem:[%s3 + $0x90] sm:$0xf] %v1265
    %1394 = vst [vmem:[%s3 + $0x94] sm:$0xf] %v1266
    %1395 = vst [vmem:[%s3 + $0x98] sm:$0xf] %v1267
    %1396 = vst [vmem:[%s3 + $0x9c] sm:$0xf] %v1268
    %1397 = vst [vmem:[%s3 + $0xa0] sm:$0xf] %v1269
    %1398 = vst [vmem:[%s3 + $0xa4] sm:$0xf] %v1270
    %1399 = vst [vmem:[%s3 + $0xa8] sm:$0xf] %v1271
    %1400 = vst [vmem:[%s3 + $0xac] sm:$0xf] %v1272
    %1401 = vst [vmem:[%s3 + $0xb0] sm:$0xf] %v1273
    %1402 = vst [vmem:[%s3 + $0xb4] sm:$0xf] %v1274
    %1403 = vst [vmem:[%s3 + $0xb8] sm:$0xf] %v1275
    %1404 = vst [vmem:[%s3 + $0xbc] sm:$0xf] %v1276
    %1405 = vst [vmem:[%s3 + $0xc0] sm:$0xf] %v1277
    %1406 = vst [vmem:[%s3 + $0xc4] sm:$0xf] %v1278
    %1407 = vst [vmem:[%s3 + $0xc8] sm:$0xf] %v1279
    %1408 = vst [vmem:[%s3 + $0xcc] sm:$0xf] %v1280
    %1409 = vst [vmem:[%s3 + $0xd0] sm:$0xf] %v1281
    %1410 = vst [vmem:[%s3 + $0xd4] sm:$0xf] %v1282
    %1411 = vst [vmem:[%s3 + $0xd8] sm:$0xf] %v1283
    %1412 = vst [vmem:[%s3 + $0xdc] sm:$0xf] %v1284
    %1413 = vst [vmem:[%s3 + $0xe0] sm:$0xf] %v1285
    %1414 = vst [vmem:[%s3 + $0xe4] sm:$0xf] %v1286
    %1415 = vst [vmem:[%s3 + $0xe8] sm:$0xf] %v1287
    %1416 = vst [vmem:[%s3 + $0xec] sm:$0xf] %v1288
    %1417 = vst [vmem:[%s3 + $0xf0] sm:$0xf] %v1289
    %1418 = vst [vmem:[%s3 + $0xf4] sm:$0xf] %v1290
    %1419 = vst [vmem:[%s3 + $0xf8] sm:$0xf] %v1291
    %1420 = vst [vmem:[%s3 + $0xfc] sm:$0xf] %v1292
  $region21: #{unet_forward.13} parent=0 // pred_fallthru
    _
  // Predicated region
  $region22: #{unet_forward.13} parent=0 // pred_check
    _
  $region23: #{unet_forward.13} parent=0 // pred_check_branch
    %1422 = sbr.rel (0) target = $region25
  $region24: #{unet_forward.13} parent=0 // pred_region
    _
  $region25: #{unet_forward.13} parent=0 // pred_fallthru
    _
  // Predicated region
  $region26: #{unet_forward.13} parent=0 // pred_check
    _
  $region27: #{unet_forward.13} parent=0 // pred_check_branch
    %1424 = sbr.rel (0) target = $region29
  $region28: #{unet_forward.13} parent=0 // pred_region
    _
  $region29: #{unet_forward.13} parent=0 // pred_fallthru
    _

// kernel: unet_forward.14
$region0: #{unet_forward.14}
  #allocation0 [shape = 'u32[]', space=smem, size = 0x4, offset = 0x4, fixed_abs, tag = 'smem constant byte address 0x4 - core index']
  #allocation1 [shape = 'u32[144,128]{1,0:T(1,128)}', space=vmem, size = 0x12000, scoped, tag = 'internal scratch']
  #allocation2 [shape = 'f32[512,128]{1,0:T(8,128)}', space=vmem, size = 0x40000, scoped, tag = 'scratch operand']
  %s0 = inlined_call_operand.vmem [shape: bf16[512,144], index: 0, kind: input, shape index: {}]
  %s1 = inlined_call_operand.vmem [shape: bf16[144,128], index: 1, kind: input, shape index: {}]
  %s2 = inlined_call_operand.vmem [shape: f32[1,128], index: 2, kind: input, shape index: {}]
  %s3 = inlined_call_operand.vmem [shape: bf16[512,128], index: 3, kind: output, shape index: {}]
  %s4 = sld [smem:[#allocation0]]
  $region30: #{unet_forward.14} parent=0
    _
  %s6 = ssub.s32 1, %s4
  %s7 = scalar_select 0, %s6, %s4
  // Predicated region
  $region2: #{unet_forward.14} parent=0 // pred_check
    _
  $region3: #{unet_forward.14} parent=0 // pred_check_branch
    %9 = sbr.rel (0) target = $region5
  $region4: #{unet_forward.14} parent=0 // pred_region
    _
  $region5: #{unet_forward.14} parent=0 // pred_fallthru
    _
  // Predicated region
  $region6: #{unet_forward.14} parent=0 // pred_check
    _
  $region7: #{unet_forward.14} parent=0 // pred_check_branch
    %11 = sbr.rel (0) target = $region9
  $region8: #{unet_forward.14} parent=0 // pred_region
    _
  $region9: #{unet_forward.14} parent=0 // pred_fallthru
    _
  // Predicated region
  $region10: #{unet_forward.14} parent=0 // pred_check
    _
  $region11: #{unet_forward.14} parent=0 // pred_check_branch
    %13 = sbr.rel (0) target = $region13
  $region12: #{unet_forward.14} parent=0 // pred_region
    _
  $region13: #{unet_forward.14} parent=0 // pred_fallthru
    _
  %p15 = scmp.eq.s32.totalorder 0, 0
  // Predicated region
  $region14: #{unet_forward.14} parent=0 // pred_check
    %p16 = pneg %p15
  $region15: #{unet_forward.14} parent=0 // pred_check_branch
    %18 = sbr.rel (%p16) target = $region17
  $region16: #{unet_forward.14} parent=0 // pred_region
    %19 = vst [vmem:[#allocation2] sm:$0xff] 0.0
    %20 = vst [vmem:[#allocation2 + $0x8] sm:$0xff] 0.0
    %21 = vst [vmem:[#allocation2 + $0x10] sm:$0xff] 0.0
    %22 = vst [vmem:[#allocation2 + $0x18] sm:$0xff] 0.0
    %23 = vst [vmem:[#allocation2 + $0x20] sm:$0xff] 0.0
    %24 = vst [vmem:[#allocation2 + $0x28] sm:$0xff] 0.0
    %25 = vst [vmem:[#allocation2 + $0x30] sm:$0xff] 0.0
    %26 = vst [vmem:[#allocation2 + $0x38] sm:$0xff] 0.0
    %27 = vst [vmem:[#allocation2 + $0x40] sm:$0xff] 0.0
    %28 = vst [vmem:[#allocation2 + $0x48] sm:$0xff] 0.0
    %29 = vst [vmem:[#allocation2 + $0x50] sm:$0xff] 0.0
    %30 = vst [vmem:[#allocation2 + $0x58] sm:$0xff] 0.0
    %31 = vst [vmem:[#allocation2 + $0x60] sm:$0xff] 0.0
    %32 = vst [vmem:[#allocation2 + $0x68] sm:$0xff] 0.0
    %33 = vst [vmem:[#allocation2 + $0x70] sm:$0xff] 0.0
    %34 = vst [vmem:[#allocation2 + $0x78] sm:$0xff] 0.0
    %35 = vst [vmem:[#allocation2 + $0x80] sm:$0xff] 0.0
    %36 = vst [vmem:[#allocation2 + $0x88] sm:$0xff] 0.0
    %37 = vst [vmem:[#allocation2 + $0x90] sm:$0xff] 0.0
    %38 = vst [vmem:[#allocation2 + $0x98] sm:$0xff] 0.0
    %39 = vst [vmem:[#allocation2 + $0xa0] sm:$0xff] 0.0
    %40 = vst [vmem:[#allocation2 + $0xa8] sm:$0xff] 0.0
    %41 = vst [vmem:[#allocation2 + $0xb0] sm:$0xff] 0.0
    %42 = vst [vmem:[#allocation2 + $0xb8] sm:$0xff] 0.0
    %43 = vst [vmem:[#allocation2 + $0xc0] sm:$0xff] 0.0
    %44 = vst [vmem:[#allocation2 + $0xc8] sm:$0xff] 0.0
    %45 = vst [vmem:[#allocation2 + $0xd0] sm:$0xff] 0.0
    %46 = vst [vmem:[#allocation2 + $0xd8] sm:$0xff] 0.0
    %47 = vst [vmem:[#allocation2 + $0xe0] sm:$0xff] 0.0
    %48 = vst [vmem:[#allocation2 + $0xe8] sm:$0xff] 0.0
    %49 = vst [vmem:[#allocation2 + $0xf0] sm:$0xff] 0.0
    %50 = vst [vmem:[#allocation2 + $0xf8] sm:$0xff] 0.0
    %51 = vst [vmem:[#allocation2 + $0x100] sm:$0xff] 0.0
    %52 = vst [vmem:[#allocation2 + $0x108] sm:$0xff] 0.0
    %53 = vst [vmem:[#allocation2 + $0x110] sm:$0xff] 0.0
    %54 = vst [vmem:[#allocation2 + $0x118] sm:$0xff] 0.0
    %55 = vst [vmem:[#allocation2 + $0x120] sm:$0xff] 0.0
    %56 = vst [vmem:[#allocation2 + $0x128] sm:$0xff] 0.0
    %57 = vst [vmem:[#allocation2 + $0x130] sm:$0xff] 0.0
    %58 = vst [vmem:[#allocation2 + $0x138] sm:$0xff] 0.0
    %59 = vst [vmem:[#allocation2 + $0x140] sm:$0xff] 0.0
    %60 = vst [vmem:[#allocation2 + $0x148] sm:$0xff] 0.0
    %61 = vst [vmem:[#allocation2 + $0x150] sm:$0xff] 0.0
    %62 = vst [vmem:[#allocation2 + $0x158] sm:$0xff] 0.0
    %63 = vst [vmem:[#allocation2 + $0x160] sm:$0xff] 0.0
    %64 = vst [vmem:[#allocation2 + $0x168] sm:$0xff] 0.0
    %65 = vst [vmem:[#allocation2 + $0x170] sm:$0xff] 0.0
    %66 = vst [vmem:[#allocation2 + $0x178] sm:$0xff] 0.0
    %67 = vst [vmem:[#allocation2 + $0x180] sm:$0xff] 0.0
    %68 = vst [vmem:[#allocation2 + $0x188] sm:$0xff] 0.0
    %69 = vst [vmem:[#allocation2 + $0x190] sm:$0xff] 0.0
    %70 = vst [vmem:[#allocation2 + $0x198] sm:$0xff] 0.0
    %71 = vst [vmem:[#allocation2 + $0x1a0] sm:$0xff] 0.0
    %72 = vst [vmem:[#allocation2 + $0x1a8] sm:$0xff] 0.0
    %73 = vst [vmem:[#allocation2 + $0x1b0] sm:$0xff] 0.0
    %74 = vst [vmem:[#allocation2 + $0x1b8] sm:$0xff] 0.0
    %75 = vst [vmem:[#allocation2 + $0x1c0] sm:$0xff] 0.0
    %76 = vst [vmem:[#allocation2 + $0x1c8] sm:$0xff] 0.0
    %77 = vst [vmem:[#allocation2 + $0x1d0] sm:$0xff] 0.0
    %78 = vst [vmem:[#allocation2 + $0x1d8] sm:$0xff] 0.0
    %79 = vst [vmem:[#allocation2 + $0x1e0] sm:$0xff] 0.0
    %80 = vst [vmem:[#allocation2 + $0x1e8] sm:$0xff] 0.0
    %81 = vst [vmem:[#allocation2 + $0x1f0] sm:$0xff] 0.0
    %82 = vst [vmem:[#allocation2 + $0x1f8] sm:$0xff] 0.0
  $region17: #{unet_forward.14} parent=0 // pred_fallthru
    _
  %v83 = vld [vmem:[#allocation2] sm:$0xff]
  %v84 = vld [vmem:[#allocation2 + $0x8] sm:$0xff]
  %v85 = vld [vmem:[#allocation2 + $0x10] sm:$0xff]
  %v86 = vld [vmem:[#allocation2 + $0x18] sm:$0xff]
  %v87 = vld [vmem:[#allocation2 + $0x20] sm:$0xff]
  %v88 = vld [vmem:[#allocation2 + $0x28] sm:$0xff]
  %v89 = vld [vmem:[#allocation2 + $0x30] sm:$0xff]
  %v90 = vld [vmem:[#allocation2 + $0x38] sm:$0xff]
  %v91 = vld [vmem:[#allocation2 + $0x40] sm:$0xff]
  %v92 = vld [vmem:[#allocation2 + $0x48] sm:$0xff]
  %v93 = vld [vmem:[#allocation2 + $0x50] sm:$0xff]
  %v94 = vld [vmem:[#allocation2 + $0x58] sm:$0xff]
  %v95 = vld [vmem:[#allocation2 + $0x60] sm:$0xff]
  %v96 = vld [vmem:[#allocation2 + $0x68] sm:$0xff]
  %v97 = vld [vmem:[#allocation2 + $0x70] sm:$0xff]
  %v98 = vld [vmem:[#allocation2 + $0x78] sm:$0xff]
  %v99 = vld [vmem:[#allocation2 + $0x80] sm:$0xff]
  %v100 = vld [vmem:[#allocation2 + $0x88] sm:$0xff]
  %v101 = vld [vmem:[#allocation2 + $0x90] sm:$0xff]
  %v102 = vld [vmem:[#allocation2 + $0x98] sm:$0xff]
  %v103 = vld [vmem:[#allocation2 + $0xa0] sm:$0xff]
  %v104 = vld [vmem:[#allocation2 + $0xa8] sm:$0xff]
  %v105 = vld [vmem:[#allocation2 + $0xb0] sm:$0xff]
  %v106 = vld [vmem:[#allocation2 + $0xb8] sm:$0xff]
  %v107 = vld [vmem:[#allocation2 + $0xc0] sm:$0xff]
  %v108 = vld [vmem:[#allocation2 + $0xc8] sm:$0xff]
  %v109 = vld [vmem:[#allocation2 + $0xd0] sm:$0xff]
  %v110 = vld [vmem:[#allocation2 + $0xd8] sm:$0xff]
  %v111 = vld [vmem:[#allocation2 + $0xe0] sm:$0xff]
  %v112 = vld [vmem:[#allocation2 + $0xe8] sm:$0xff]
  %v113 = vld [vmem:[#allocation2 + $0xf0] sm:$0xff]
  %v114 = vld [vmem:[#allocation2 + $0xf8] sm:$0xff]
  %v115 = vld [vmem:[#allocation2 + $0x100] sm:$0xff]
  %v116 = vld [vmem:[#allocation2 + $0x108] sm:$0xff]
  %v117 = vld [vmem:[#allocation2 + $0x110] sm:$0xff]
  %v118 = vld [vmem:[#allocation2 + $0x118] sm:$0xff]
  %v119 = vld [vmem:[#allocation2 + $0x120] sm:$0xff]
  %v120 = vld [vmem:[#allocation2 + $0x128] sm:$0xff]
  %v121 = vld [vmem:[#allocation2 + $0x130] sm:$0xff]
  %v122 = vld [vmem:[#allocation2 + $0x138] sm:$0xff]
  %v123 = vld [vmem:[#allocation2 + $0x140] sm:$0xff]
  %v124 = vld [vmem:[#allocation2 + $0x148] sm:$0xff]
  %v125 = vld [vmem:[#allocation2 + $0x150] sm:$0xff]
  %v126 = vld [vmem:[#allocation2 + $0x158] sm:$0xff]
  %v127 = vld [vmem:[#allocation2 + $0x160] sm:$0xff]
  %v128 = vld [vmem:[#allocation2 + $0x168] sm:$0xff]
  %v129 = vld [vmem:[#allocation2 + $0x170] sm:$0xff]
  %v130 = vld [vmem:[#allocation2 + $0x178] sm:$0xff]
  %v131 = vld [vmem:[#allocation2 + $0x180] sm:$0xff]
  %v132 = vld [vmem:[#allocation2 + $0x188] sm:$0xff]
  %v133 = vld [vmem:[#allocation2 + $0x190] sm:$0xff]
  %v134 = vld [vmem:[#allocation2 + $0x198] sm:$0xff]
  %v135 = vld [vmem:[#allocation2 + $0x1a0] sm:$0xff]
  %v136 = vld [vmem:[#allocation2 + $0x1a8] sm:$0xff]
  %v137 = vld [vmem:[#allocation2 + $0x1b0] sm:$0xff]
  %v138 = vld [vmem:[#allocation2 + $0x1b8] sm:$0xff]
  %v139 = vld [vmem:[#allocation2 + $0x1c0] sm:$0xff]
  %v140 = vld [vmem:[#allocation2 + $0x1c8] sm:$0xff]
  %v141 = vld [vmem:[#allocation2 + $0x1d0] sm:$0xff]
  %v142 = vld [vmem:[#allocation2 + $0x1d8] sm:$0xff]
  %v143 = vld [vmem:[#allocation2 + $0x1e0] sm:$0xff]
  %v144 = vld [vmem:[#allocation2 + $0x1e8] sm:$0xff]
  %v145 = vld [vmem:[#allocation2 + $0x1f0] sm:$0xff]
  %v146 = vld [vmem:[#allocation2 + $0x1f8] sm:$0xff]
  %v147 = vld [vmem:[%s0] sm:$0xff]
  %v148 = vld [vmem:[%s0 + $0x8] sm:$0xff]
  %v149 = vld [vmem:[%s0 + $0x10] sm:$0xff]
  %v150 = vld [vmem:[%s0 + $0x18] sm:$0xff]
  %v151 = vld [vmem:[%s0 + $0x20] sm:$0xff]
  %v152 = vld [vmem:[%s0 + $0x28] sm:$0xff]
  %v153 = vld [vmem:[%s0 + $0x30] sm:$0xff]
  %v154 = vld [vmem:[%s0 + $0x38] sm:$0xff]
  %v155 = vld [vmem:[%s0 + $0x40] sm:$0xff]
  %v156 = vld [vmem:[%s0 + $0x48] sm:$0xff]
  %v157 = vld [vmem:[%s0 + $0x50] sm:$0xff]
  %v158 = vld [vmem:[%s0 + $0x58] sm:$0xff]
  %v159 = vld [vmem:[%s0 + $0x60] sm:$0xff]
  %v160 = vld [vmem:[%s0 + $0x68] sm:$0xff]
  %v161 = vld [vmem:[%s0 + $0x70] sm:$0xff]
  %v162 = vld [vmem:[%s0 + $0x78] sm:$0xff]
  %v163 = vld [vmem:[%s0 + $0x80] sm:$0xff]
  %v164 = vld [vmem:[%s0 + $0x88] sm:$0xff]
  %v165 = vld [vmem:[%s0 + $0x90] sm:$0xff]
  %v166 = vld [vmem:[%s0 + $0x98] sm:$0xff]
  %v167 = vld [vmem:[%s0 + $0xa0] sm:$0xff]
  %v168 = vld [vmem:[%s0 + $0xa8] sm:$0xff]
  %v169 = vld [vmem:[%s0 + $0xb0] sm:$0xff]
  %v170 = vld [vmem:[%s0 + $0xb8] sm:$0xff]
  %v171 = vld [vmem:[%s0 + $0xc0] sm:$0xff]
  %v172 = vld [vmem:[%s0 + $0xc8] sm:$0xff]
  %v173 = vld [vmem:[%s0 + $0xd0] sm:$0xff]
  %v174 = vld [vmem:[%s0 + $0xd8] sm:$0xff]
  %v175 = vld [vmem:[%s0 + $0xe0] sm:$0xff]
  %v176 = vld [vmem:[%s0 + $0xe8] sm:$0xff]
  %v177 = vld [vmem:[%s0 + $0xf0] sm:$0xff]
  %v178 = vld [vmem:[%s0 + $0xf8] sm:$0xff]
  %v179 = vld [vmem:[%s0 + $0x100] sm:$0xff]
  %v180 = vld [vmem:[%s0 + $0x108] sm:$0xff]
  %v181 = vld [vmem:[%s0 + $0x110] sm:$0xff]
  %v182 = vld [vmem:[%s0 + $0x118] sm:$0xff]
  %v183 = vld [vmem:[%s0 + $0x120] sm:$0xff]
  %v184 = vld [vmem:[%s0 + $0x128] sm:$0xff]
  %v185 = vld [vmem:[%s0 + $0x130] sm:$0xff]
  %v186 = vld [vmem:[%s0 + $0x138] sm:$0xff]
  %v187 = vld [vmem:[%s0 + $0x140] sm:$0xff]
  %v188 = vld [vmem:[%s0 + $0x148] sm:$0xff]
  %v189 = vld [vmem:[%s0 + $0x150] sm:$0xff]
  %v190 = vld [vmem:[%s0 + $0x158] sm:$0xff]
  %v191 = vld [vmem:[%s0 + $0x160] sm:$0xff]
  %v192 = vld [vmem:[%s0 + $0x168] sm:$0xff]
  %v193 = vld [vmem:[%s0 + $0x170] sm:$0xff]
  %v194 = vld [vmem:[%s0 + $0x178] sm:$0xff]
  %v195 = vld [vmem:[%s0 + $0x180] sm:$0xff]
  %v196 = vld [vmem:[%s0 + $0x188] sm:$0xff]
  %v197 = vld [vmem:[%s0 + $0x190] sm:$0xff]
  %v198 = vld [vmem:[%s0 + $0x198] sm:$0xff]
  %v199 = vld [vmem:[%s0 + $0x1a0] sm:$0xff]
  %v200 = vld [vmem:[%s0 + $0x1a8] sm:$0xff]
  %v201 = vld [vmem:[%s0 + $0x1b0] sm:$0xff]
  %v202 = vld [vmem:[%s0 + $0x1b8] sm:$0xff]
  %v203 = vld [vmem:[%s0 + $0x1c0] sm:$0xff]
  %v204 = vld [vmem:[%s0 + $0x1c8] sm:$0xff]
  %v205 = vld [vmem:[%s0 + $0x1d0] sm:$0xff]
  %v206 = vld [vmem:[%s0 + $0x1d8] sm:$0xff]
  %v207 = vld [vmem:[%s0 + $0x1e0] sm:$0xff]
  %v208 = vld [vmem:[%s0 + $0x1e8] sm:$0xff]
  %v209 = vld [vmem:[%s0 + $0x1f0] sm:$0xff]
  %v210 = vld [vmem:[%s0 + $0x1f8] sm:$0xff]
  %v211 = vld [vmem:[%s1] sm:$0xf]
  %v212 = vld [vmem:[%s1 + $0x4] sm:$0xf]
  %v213 = vld [vmem:[%s1 + $0x8] sm:$0xf]
  %v214 = vld [vmem:[%s1 + $0xc] sm:$0xf]
  %v215 = vld [vmem:[%s1 + $0x10] sm:$0xf]
  %v216 = vld [vmem:[%s1 + $0x14] sm:$0xf]
  %v217 = vld [vmem:[%s1 + $0x18] sm:$0xf]
  %v218 = vld [vmem:[%s1 + $0x1c] sm:$0xf]
  %v219 = vld [vmem:[%s1 + $0x20] sm:$0xf]
  %v220 = vld [vmem:[%s1 + $0x24] sm:$0xf]
  %v221 = vld [vmem:[%s1 + $0x28] sm:$0xf]
  %v222 = vld [vmem:[%s1 + $0x2c] sm:$0xf]
  %v223 = vld [vmem:[%s1 + $0x30] sm:$0xf]
  %v224 = vld [vmem:[%s1 + $0x34] sm:$0xf]
  %v225 = vld [vmem:[%s1 + $0x38] sm:$0xf]
  %v226 = vld [vmem:[%s1 + $0x3c] sm:$0xf]
  %v227 = vld [vmem:[%s1 + $0x40] sm:$0xf]
  %v228 = vld [vmem:[%s1 + $0x44] sm:$0xf]
  %v293 = vunpack.c.l.b16 %v147
  %v294 = vunpack.c.h.b16 %v147
  %v295 = vunpack.c.l.b16 %v148
  %v296 = vunpack.c.h.b16 %v148
  %v297 = vunpack.c.l.b16 %v149
  %v298 = vunpack.c.h.b16 %v149
  %v299 = vunpack.c.l.b16 %v150
  %v300 = vunpack.c.h.b16 %v150
  %v301 = vunpack.c.l.b16 %v151
  %v302 = vunpack.c.h.b16 %v151
  %v303 = vunpack.c.l.b16 %v152
  %v304 = vunpack.c.h.b16 %v152
  %v305 = vunpack.c.l.b16 %v153
  %v306 = vunpack.c.h.b16 %v153
  %v307 = vunpack.c.l.b16 %v154
  %v308 = vunpack.c.h.b16 %v154
  %v309 = vunpack.c.l.b16 %v155
  %v310 = vunpack.c.h.b16 %v155
  %v311 = vunpack.c.l.b16 %v156
  %v312 = vunpack.c.h.b16 %v156
  %v313 = vunpack.c.l.b16 %v157
  %v314 = vunpack.c.h.b16 %v157
  %v315 = vunpack.c.l.b16 %v158
  %v316 = vunpack.c.h.b16 %v158
  %v317 = vunpack.c.l.b16 %v159
  %v318 = vunpack.c.h.b16 %v159
  %v319 = vunpack.c.l.b16 %v160
  %v320 = vunpack.c.h.b16 %v160
  %v321 = vunpack.c.l.b16 %v161
  %v322 = vunpack.c.h.b16 %v161
  %v323 = vunpack.c.l.b16 %v162
  %v324 = vunpack.c.h.b16 %v162
  %v325 = vunpack.c.l.b16 %v163
  %v326 = vunpack.c.h.b16 %v163
  %v327 = vunpack.c.l.b16 %v164
  %v328 = vunpack.c.h.b16 %v164
  %v329 = vunpack.c.l.b16 %v165
  %v330 = vunpack.c.h.b16 %v165
  %v331 = vunpack.c.l.b16 %v166
  %v332 = vunpack.c.h.b16 %v166
  %v333 = vunpack.c.l.b16 %v167
  %v334 = vunpack.c.h.b16 %v167
  %v335 = vunpack.c.l.b16 %v168
  %v336 = vunpack.c.h.b16 %v168
  %v337 = vunpack.c.l.b16 %v169
  %v338 = vunpack.c.h.b16 %v169
  %v339 = vunpack.c.l.b16 %v170
  %v340 = vunpack.c.h.b16 %v170
  %v341 = vunpack.c.l.b16 %v171
  %v342 = vunpack.c.h.b16 %v171
  %v343 = vunpack.c.l.b16 %v172
  %v344 = vunpack.c.h.b16 %v172
  %v345 = vunpack.c.l.b16 %v173
  %v346 = vunpack.c.h.b16 %v173
  %v347 = vunpack.c.l.b16 %v174
  %v348 = vunpack.c.h.b16 %v174
  %v349 = vunpack.c.l.b16 %v175
  %v350 = vunpack.c.h.b16 %v175
  %v351 = vunpack.c.l.b16 %v176
  %v352 = vunpack.c.h.b16 %v176
  %v353 = vunpack.c.l.b16 %v177
  %v354 = vunpack.c.h.b16 %v177
  %v355 = vunpack.c.l.b16 %v178
  %v356 = vunpack.c.h.b16 %v178
  %v357 = vunpack.c.l.b16 %v179
  %v358 = vunpack.c.h.b16 %v179
  %v359 = vunpack.c.l.b16 %v180
  %v360 = vunpack.c.h.b16 %v180
  %v361 = vunpack.c.l.b16 %v181
  %v362 = vunpack.c.h.b16 %v181
  %v363 = vunpack.c.l.b16 %v182
  %v364 = vunpack.c.h.b16 %v182
  %v365 = vunpack.c.l.b16 %v183
  %v366 = vunpack.c.h.b16 %v183
  %v367 = vunpack.c.l.b16 %v184
  %v368 = vunpack.c.h.b16 %v184
  %v369 = vunpack.c.l.b16 %v185
  %v370 = vunpack.c.h.b16 %v185
  %v371 = vunpack.c.l.b16 %v186
  %v372 = vunpack.c.h.b16 %v186
  %v373 = vunpack.c.l.b16 %v187
  %v374 = vunpack.c.h.b16 %v187
  %v375 = vunpack.c.l.b16 %v188
  %v376 = vunpack.c.h.b16 %v188
  %v377 = vunpack.c.l.b16 %v189
  %v378 = vunpack.c.h.b16 %v189
  %v379 = vunpack.c.l.b16 %v190
  %v380 = vunpack.c.h.b16 %v190
  %v381 = vunpack.c.l.b16 %v191
  %v382 = vunpack.c.h.b16 %v191
  %v383 = vunpack.c.l.b16 %v192
  %v384 = vunpack.c.h.b16 %v192
  %v385 = vunpack.c.l.b16 %v193
  %v386 = vunpack.c.h.b16 %v193
  %v387 = vunpack.c.l.b16 %v194
  %v388 = vunpack.c.h.b16 %v194
  %v389 = vunpack.c.l.b16 %v195
  %v390 = vunpack.c.h.b16 %v195
  %v391 = vunpack.c.l.b16 %v196
  %v392 = vunpack.c.h.b16 %v196
  %v393 = vunpack.c.l.b16 %v197
  %v394 = vunpack.c.h.b16 %v197
  %v395 = vunpack.c.l.b16 %v198
  %v396 = vunpack.c.h.b16 %v198
  %v397 = vunpack.c.l.b16 %v199
  %v398 = vunpack.c.h.b16 %v199
  %v399 = vunpack.c.l.b16 %v200
  %v400 = vunpack.c.h.b16 %v200
  %v401 = vunpack.c.l.b16 %v201
  %v402 = vunpack.c.h.b16 %v201
  %v403 = vunpack.c.l.b16 %v202
  %v404 = vunpack.c.h.b16 %v202
  %v405 = vunpack.c.l.b16 %v203
  %v406 = vunpack.c.h.b16 %v203
  %v407 = vunpack.c.l.b16 %v204
  %v408 = vunpack.c.h.b16 %v204
  %v409 = vunpack.c.l.b16 %v205
  %v410 = vunpack.c.h.b16 %v205
  %v411 = vunpack.c.l.b16 %v206
  %v412 = vunpack.c.h.b16 %v206
  %v413 = vunpack.c.l.b16 %v207
  %v414 = vunpack.c.h.b16 %v207
  %v415 = vunpack.c.l.b16 %v208
  %v416 = vunpack.c.h.b16 %v208
  %v417 = vunpack.c.l.b16 %v209
  %v418 = vunpack.c.h.b16 %v209
  %v419 = vunpack.c.l.b16 %v210
  %v420 = vunpack.c.h.b16 %v210
  %v421 = vpack.c.b16 %v295, %v293
  %v422 = vpack.c.b16 %v296, %v294
  %v423 = vpack.c.b16 %v299, %v297
  %v424 = vpack.c.b16 %v300, %v298
  %v425 = vpack.c.b16 %v303, %v301
  %v426 = vpack.c.b16 %v304, %v302
  %v427 = vpack.c.b16 %v307, %v305
  %v428 = vpack.c.b16 %v308, %v306
  %v429 = vpack.c.b16 %v311, %v309
  %v430 = vpack.c.b16 %v312, %v310
  %v431 = vpack.c.b16 %v315, %v313
  %v432 = vpack.c.b16 %v316, %v314
  %v433 = vpack.c.b16 %v319, %v317
  %v434 = vpack.c.b16 %v320, %v318
  %v435 = vpack.c.b16 %v323, %v321
  %v436 = vpack.c.b16 %v324, %v322
  %v437 = vpack.c.b16 %v327, %v325
  %v438 = vpack.c.b16 %v328, %v326
  %v439 = vpack.c.b16 %v331, %v329
  %v440 = vpack.c.b16 %v332, %v330
  %v441 = vpack.c.b16 %v335, %v333
  %v442 = vpack.c.b16 %v336, %v334
  %v443 = vpack.c.b16 %v339, %v337
  %v444 = vpack.c.b16 %v340, %v338
  %v445 = vpack.c.b16 %v343, %v341
  %v446 = vpack.c.b16 %v344, %v342
  %v447 = vpack.c.b16 %v347, %v345
  %v448 = vpack.c.b16 %v348, %v346
  %v449 = vpack.c.b16 %v351, %v349
  %v450 = vpack.c.b16 %v352, %v350
  %v451 = vpack.c.b16 %v355, %v353
  %v452 = vpack.c.b16 %v356, %v354
  %v453 = vpack.c.b16 %v359, %v357
  %v454 = vpack.c.b16 %v360, %v358
  %v455 = vpack.c.b16 %v363, %v361
  %v456 = vpack.c.b16 %v364, %v362
  %v457 = vpack.c.b16 %v367, %v365
  %v458 = vpack.c.b16 %v368, %v366
  %v459 = vpack.c.b16 %v371, %v369
  %v460 = vpack.c.b16 %v372, %v370
  %v461 = vpack.c.b16 %v375, %v373
  %v462 = vpack.c.b16 %v376, %v374
  %v463 = vpack.c.b16 %v379, %v377
  %v464 = vpack.c.b16 %v380, %v378
  %v465 = vpack.c.b16 %v383, %v381
  %v466 = vpack.c.b16 %v384, %v382
  %v467 = vpack.c.b16 %v387, %v385
  %v468 = vpack.c.b16 %v388, %v386
  %v469 = vpack.c.b16 %v391, %v389
  %v470 = vpack.c.b16 %v392, %v390
  %v471 = vpack.c.b16 %v395, %v393
  %v472 = vpack.c.b16 %v396, %v394
  %v473 = vpack.c.b16 %v399, %v397
  %v474 = vpack.c.b16 %v400, %v398
  %v475 = vpack.c.b16 %v403, %v401
  %v476 = vpack.c.b16 %v404, %v402
  %v477 = vpack.c.b16 %v407, %v405
  %v478 = vpack.c.b16 %v408, %v406
  %v479 = vpack.c.b16 %v411, %v409
  %v480 = vpack.c.b16 %v412, %v410
  %v481 = vpack.c.b16 %v415, %v413
  %v482 = vpack.c.b16 %v416, %v414
  %v483 = vpack.c.b16 %v419, %v417
  %v484 = vpack.c.b16 %v420, %v418
  %v535 = vunpack.c.l.b16 %v211
  %v536 = vunpack.c.l.b16 %v212
  %v537 = vunpack.c.l.b16 %v213
  %v538 = vunpack.c.l.b16 %v214
  %v539 = vunpack.c.l.b16 %v215
  %v540 = vunpack.c.l.b16 %v216
  %v541 = vunpack.c.l.b16 %v217
  %v542 = vunpack.c.l.b16 %v218
  %v543 = vunpack.c.l.b16 %v219
  %v544 = vunpack.c.l.b16 %v220
  %v545 = vunpack.c.l.b16 %v221
  %v546 = vunpack.c.l.b16 %v222
  %v547 = vunpack.c.l.b16 %v223
  %v548 = vunpack.c.l.b16 %v224
  %v549 = vunpack.c.l.b16 %v225
  %v550 = vunpack.c.l.b16 %v226
  %v551 = vunpack.c.l.b16 %v227
  %v552 = vunpack.c.l.b16 %v228
  %v553 = vpack.c.b16 %v536, %v535
  %v554 = vpack.c.b16 %v538, %v537
  %v555 = vpack.c.b16 %v540, %v539
  %v556 = vpack.c.b16 %v542, %v541
  %v557 = vpack.c.b16 %v544, %v543
  %v558 = vpack.c.b16 %v546, %v545
  %v559 = vpack.c.b16 %v548, %v547
  %v560 = vpack.c.b16 %v550, %v549
  %v561 = vpack.c.b16 %v552, %v551
  %vm571 = vcmask 130048
  %v573 = vsel %vm571, %v422, 0
  %v576 = vsel %vm571, %v424, 0
  %v579 = vsel %vm571, %v426, 0
  %v582 = vsel %vm571, %v428, 0
  %v585 = vsel %vm571, %v430, 0
  %v588 = vsel %vm571, %v432, 0
  %v591 = vsel %vm571, %v434, 0
  %v594 = vsel %vm571, %v436, 0
  %v597 = vsel %vm571, %v438, 0
  %v600 = vsel %vm571, %v440, 0
  %v603 = vsel %vm571, %v442, 0
  %v606 = vsel %vm571, %v444, 0
  %v609 = vsel %vm571, %v446, 0
  %v612 = vsel %vm571, %v448, 0
  %v615 = vsel %vm571, %v450, 0
  %v618 = vsel %vm571, %v452, 0
  %v621 = vsel %vm571, %v454, 0
  %v624 = vsel %vm571, %v456, 0
  %v627 = vsel %vm571, %v458, 0
  %v630 = vsel %vm571, %v460, 0
  %v633 = vsel %vm571, %v462, 0
  %v636 = vsel %vm571, %v464, 0
  %v639 = vsel %vm571, %v466, 0
  %v642 = vsel %vm571, %v468, 0
  %v645 = vsel %vm571, %v470, 0
  %v648 = vsel %vm571, %v472, 0
  %v651 = vsel %vm571, %v474, 0
  %v654 = vsel %vm571, %v476, 0
  %v657 = vsel %vm571, %v478, 0
  %v660 = vsel %vm571, %v480, 0
  %v663 = vsel %vm571, %v482, 0
  %v666 = vsel %vm571, %v484, 0
  %668 = vmatprep.subr.bf16.mxu0 0
  %669 = vmatpush1.bf16.msra.mxu0 %v560
  %670 = vmatprep.subr.bf16.mxu0 0
  %671 = vmatpush1.bf16.msra.mxu0 %v559
  %672 = vmatprep.subr.bf16.mxu0 0
  %673 = vmatpush1.bf16.msra.mxu0 %v558
  %674 = vmatprep.subr.bf16.mxu0 0
  %675 = vmatpush1.bf16.msra.mxu0 %v557
  %676 = vmatprep.subr.bf16.mxu0 0
  %677 = vmatpush1.bf16.msra.mxu0 %v556
  %678 = vmatprep.subr.bf16.mxu0 0
  %679 = vmatpush1.bf16.msra.mxu0 %v555
  %680 = vmatprep.subr.bf16.mxu0 0
  %681 = vmatpush1.bf16.msra.mxu0 %v554
  %682 = vmatprep.subr.bf16.mxu0 0
  %683 = vmatpush1.bf16.msra.mxu0 %v553
  %684 = vmatprep.subr.bf16.mxu0 0
  %685 = vmatpush2.bf16.msra.mxu0 0
  %686 = vmatprep.subr.bf16.mxu0 0
  %687 = vmatpush2.bf16.msra.mxu0 0
  %688 = vmatprep.subr.bf16.mxu0 0
  %689 = vmatpush2.bf16.msra.mxu0 0
  %690 = vmatprep.subr.bf16.mxu0 0
  %691 = vmatpush2.bf16.msra.mxu0 0
  %692 = vmatprep.subr.bf16.mxu0 0
  %693 = vmatpush2.bf16.msra.mxu0 0
  %694 = vmatprep.subr.bf16.mxu0 0
  %695 = vmatpush2.bf16.msra.mxu0 0
  %696 = vmatprep.subr.bf16.mxu0 0
  %697 = vmatpush2.bf16.msra.mxu0 0
  %698 = vmatprep.subr.bf16.mxu0 0
  %699 = vmatpush2.bf16.msra.mxu0 %v561
  %700 = vmatprep.mubr.bf16.mxu0 %v573
  %701 = vmatmul.mubr.bf16.gmra.mxu0 %v421
  %v702 = vpop.f32.mrf.mxu0
  %v703 = vadd.f32 0.0, %v702
  %v704 = vpop.f32.mrf.mxu0
  %v705 = vpop.f32.mrf.mxu0
  %v706 = vadd.f32 0.0, %v705
  %v707 = vpop.f32.mrf.mxu0
  %708 = vmatprep.mubr.bf16.mxu0 %v576
  %709 = vmatmul.mubr.bf16.gmra.mxu0 %v423
  %v710 = vpop.f32.mrf.mxu0
  %v711 = vadd.f32 0.0, %v710
  %v712 = vpop.f32.mrf.mxu0
  %v713 = vpop.f32.mrf.mxu0
  %v714 = vadd.f32 0.0, %v713
  %v715 = vpop.f32.mrf.mxu0
  %716 = vmatprep.mubr.bf16.mxu0 %v579
  %717 = vmatmul.mubr.bf16.gmra.mxu0 %v425
  %v718 = vpop.f32.mrf.mxu0
  %v719 = vadd.f32 0.0, %v718
  %v720 = vpop.f32.mrf.mxu0
  %v721 = vpop.f32.mrf.mxu0
  %v722 = vadd.f32 0.0, %v721
  %v723 = vpop.f32.mrf.mxu0
  %724 = vmatprep.mubr.bf16.mxu0 %v582
  %725 = vmatmul.mubr.bf16.gmra.mxu0 %v427
  %v726 = vpop.f32.mrf.mxu0
  %v727 = vadd.f32 0.0, %v726
  %v728 = vpop.f32.mrf.mxu0
  %v729 = vpop.f32.mrf.mxu0
  %v730 = vadd.f32 0.0, %v729
  %v731 = vpop.f32.mrf.mxu0
  %732 = vmatprep.mubr.bf16.mxu0 %v585
  %733 = vmatmul.mubr.bf16.gmra.mxu0 %v429
  %v734 = vpop.f32.mrf.mxu0
  %v735 = vadd.f32 0.0, %v734
  %v736 = vpop.f32.mrf.mxu0
  %v737 = vpop.f32.mrf.mxu0
  %v738 = vadd.f32 0.0, %v737
  %v739 = vpop.f32.mrf.mxu0
  %740 = vmatprep.mubr.bf16.mxu0 %v588
  %741 = vmatmul.mubr.bf16.gmra.mxu0 %v431
  %v742 = vpop.f32.mrf.mxu0
  %v743 = vadd.f32 0.0, %v742
  %v744 = vpop.f32.mrf.mxu0
  %v745 = vpop.f32.mrf.mxu0
  %v746 = vadd.f32 0.0, %v745
  %v747 = vpop.f32.mrf.mxu0
  %748 = vmatprep.mubr.bf16.mxu0 %v591
  %749 = vmatmul.mubr.bf16.gmra.mxu0 %v433
  %v750 = vpop.f32.mrf.mxu0
  %v751 = vadd.f32 0.0, %v750
  %v752 = vpop.f32.mrf.mxu0
  %v753 = vpop.f32.mrf.mxu0
  %v754 = vadd.f32 0.0, %v753
  %v755 = vpop.f32.mrf.mxu0
  %756 = vmatprep.mubr.bf16.mxu0 %v594
  %757 = vmatmul.mubr.bf16.gmra.mxu0 %v435
  %v758 = vpop.f32.mrf.mxu0
  %v759 = vadd.f32 0.0, %v758
  %v760 = vpop.f32.mrf.mxu0
  %v761 = vpop.f32.mrf.mxu0
  %v762 = vadd.f32 0.0, %v761
  %v763 = vpop.f32.mrf.mxu0
  %764 = vmatprep.mubr.bf16.mxu0 %v597
  %765 = vmatmul.mubr.bf16.gmra.mxu0 %v437
  %v766 = vpop.f32.mrf.mxu0
  %v767 = vadd.f32 0.0, %v766
  %v768 = vpop.f32.mrf.mxu0
  %v769 = vpop.f32.mrf.mxu0
  %v770 = vadd.f32 0.0, %v769
  %v771 = vpop.f32.mrf.mxu0
  %772 = vmatprep.mubr.bf16.mxu0 %v600
  %773 = vmatmul.mubr.bf16.gmra.mxu0 %v439
  %v774 = vpop.f32.mrf.mxu0
  %v775 = vadd.f32 0.0, %v774
  %v776 = vpop.f32.mrf.mxu0
  %v777 = vpop.f32.mrf.mxu0
  %v778 = vadd.f32 0.0, %v777
  %v779 = vpop.f32.mrf.mxu0
  %780 = vmatprep.mubr.bf16.mxu0 %v603
  %781 = vmatmul.mubr.bf16.gmra.mxu0 %v441
  %v782 = vpop.f32.mrf.mxu0
  %v783 = vadd.f32 0.0, %v782
  %v784 = vpop.f32.mrf.mxu0
  %v785 = vpop.f32.mrf.mxu0
  %v786 = vadd.f32 0.0, %v785
  %v787 = vpop.f32.mrf.mxu0
  %788 = vmatprep.mubr.bf16.mxu0 %v606
  %789 = vmatmul.mubr.bf16.gmra.mxu0 %v443
  %v790 = vpop.f32.mrf.mxu0
  %v791 = vadd.f32 0.0, %v790
  %v792 = vpop.f32.mrf.mxu0
  %v793 = vpop.f32.mrf.mxu0
  %v794 = vadd.f32 0.0, %v793
  %v795 = vpop.f32.mrf.mxu0
  %796 = vmatprep.mubr.bf16.mxu0 %v609
  %797 = vmatmul.mubr.bf16.gmra.mxu0 %v445
  %v798 = vpop.f32.mrf.mxu0
  %v799 = vadd.f32 0.0, %v798
  %v800 = vpop.f32.mrf.mxu0
  %v801 = vpop.f32.mrf.mxu0
  %v802 = vadd.f32 0.0, %v801
  %v803 = vpop.f32.mrf.mxu0
  %804 = vmatprep.mubr.bf16.mxu0 %v612
  %805 = vmatmul.mubr.bf16.gmra.mxu0 %v447
  %v806 = vpop.f32.mrf.mxu0
  %v807 = vadd.f32 0.0, %v806
  %v808 = vpop.f32.mrf.mxu0
  %v809 = vpop.f32.mrf.mxu0
  %v810 = vadd.f32 0.0, %v809
  %v811 = vpop.f32.mrf.mxu0
  %812 = vmatprep.mubr.bf16.mxu0 %v615
  %813 = vmatmul.mubr.bf16.gmra.mxu0 %v449
  %v814 = vpop.f32.mrf.mxu0
  %v815 = vadd.f32 0.0, %v814
  %v816 = vpop.f32.mrf.mxu0
  %v817 = vpop.f32.mrf.mxu0
  %v818 = vadd.f32 0.0, %v817
  %v819 = vpop.f32.mrf.mxu0
  %820 = vmatprep.mubr.bf16.mxu0 %v618
  %821 = vmatmul.mubr.bf16.gmra.mxu0 %v451
  %v822 = vpop.f32.mrf.mxu0
  %v823 = vadd.f32 0.0, %v822
  %v824 = vpop.f32.mrf.mxu0
  %v825 = vpop.f32.mrf.mxu0
  %v826 = vadd.f32 0.0, %v825
  %v827 = vpop.f32.mrf.mxu0
  %828 = vmatprep.mubr.bf16.mxu0 %v621
  %829 = vmatmul.mubr.bf16.gmra.mxu0 %v453
  %v830 = vpop.f32.mrf.mxu0
  %v831 = vadd.f32 0.0, %v830
  %v832 = vpop.f32.mrf.mxu0
  %v833 = vpop.f32.mrf.mxu0
  %v834 = vadd.f32 0.0, %v833
  %v835 = vpop.f32.mrf.mxu0
  %836 = vmatprep.mubr.bf16.mxu0 %v624
  %837 = vmatmul.mubr.bf16.gmra.mxu0 %v455
  %v838 = vpop.f32.mrf.mxu0
  %v839 = vadd.f32 0.0, %v838
  %v840 = vpop.f32.mrf.mxu0
  %v841 = vpop.f32.mrf.mxu0
  %v842 = vadd.f32 0.0, %v841
  %v843 = vpop.f32.mrf.mxu0
  %844 = vmatprep.mubr.bf16.mxu0 %v627
  %845 = vmatmul.mubr.bf16.gmra.mxu0 %v457
  %v846 = vpop.f32.mrf.mxu0
  %v847 = vadd.f32 0.0, %v846
  %v848 = vpop.f32.mrf.mxu0
  %v849 = vpop.f32.mrf.mxu0
  %v850 = vadd.f32 0.0, %v849
  %v851 = vpop.f32.mrf.mxu0
  %852 = vmatprep.mubr.bf16.mxu0 %v630
  %853 = vmatmul.mubr.bf16.gmra.mxu0 %v459
  %v854 = vpop.f32.mrf.mxu0
  %v855 = vadd.f32 0.0, %v854
  %v856 = vpop.f32.mrf.mxu0
  %v857 = vpop.f32.mrf.mxu0
  %v858 = vadd.f32 0.0, %v857
  %v859 = vpop.f32.mrf.mxu0
  %860 = vmatprep.mubr.bf16.mxu0 %v633
  %861 = vmatmul.mubr.bf16.gmra.mxu0 %v461
  %v862 = vpop.f32.mrf.mxu0
  %v863 = vadd.f32 0.0, %v862
  %v864 = vpop.f32.mrf.mxu0
  %v865 = vpop.f32.mrf.mxu0
  %v866 = vadd.f32 0.0, %v865
  %v867 = vpop.f32.mrf.mxu0
  %868 = vmatprep.mubr.bf16.mxu0 %v636
  %869 = vmatmul.mubr.bf16.gmra.mxu0 %v463
  %v870 = vpop.f32.mrf.mxu0
  %v871 = vadd.f32 0.0, %v870
  %v872 = vpop.f32.mrf.mxu0
  %v873 = vpop.f32.mrf.mxu0
  %v874 = vadd.f32 0.0, %v873
  %v875 = vpop.f32.mrf.mxu0
  %876 = vmatprep.mubr.bf16.mxu0 %v639
  %877 = vmatmul.mubr.bf16.gmra.mxu0 %v465
  %v878 = vpop.f32.mrf.mxu0
  %v879 = vadd.f32 0.0, %v878
  %v880 = vpop.f32.mrf.mxu0
  %v881 = vpop.f32.mrf.mxu0
  %v882 = vadd.f32 0.0, %v881
  %v883 = vpop.f32.mrf.mxu0
  %884 = vmatprep.mubr.bf16.mxu0 %v642
  %885 = vmatmul.mubr.bf16.gmra.mxu0 %v467
  %v886 = vpop.f32.mrf.mxu0
  %v887 = vadd.f32 0.0, %v886
  %v888 = vpop.f32.mrf.mxu0
  %v889 = vpop.f32.mrf.mxu0
  %v890 = vadd.f32 0.0, %v889
  %v891 = vpop.f32.mrf.mxu0
  %892 = vmatprep.mubr.bf16.mxu0 %v645
  %893 = vmatmul.mubr.bf16.gmra.mxu0 %v469
  %v894 = vpop.f32.mrf.mxu0
  %v895 = vadd.f32 0.0, %v894
  %v896 = vpop.f32.mrf.mxu0
  %v897 = vpop.f32.mrf.mxu0
  %v898 = vadd.f32 0.0, %v897
  %v899 = vpop.f32.mrf.mxu0
  %900 = vmatprep.mubr.bf16.mxu0 %v648
  %901 = vmatmul.mubr.bf16.gmra.mxu0 %v471
  %v902 = vpop.f32.mrf.mxu0
  %v903 = vadd.f32 0.0, %v902
  %v904 = vpop.f32.mrf.mxu0
  %v905 = vpop.f32.mrf.mxu0
  %v906 = vadd.f32 0.0, %v905
  %v907 = vpop.f32.mrf.mxu0
  %908 = vmatprep.mubr.bf16.mxu0 %v651
  %909 = vmatmul.mubr.bf16.gmra.mxu0 %v473
  %v910 = vpop.f32.mrf.mxu0
  %v911 = vadd.f32 0.0, %v910
  %v912 = vpop.f32.mrf.mxu0
  %v913 = vpop.f32.mrf.mxu0
  %v914 = vadd.f32 0.0, %v913
  %v915 = vpop.f32.mrf.mxu0
  %916 = vmatprep.mubr.bf16.mxu0 %v654
  %917 = vmatmul.mubr.bf16.gmra.mxu0 %v475
  %v918 = vpop.f32.mrf.mxu0
  %v919 = vadd.f32 0.0, %v918
  %v920 = vpop.f32.mrf.mxu0
  %v921 = vpop.f32.mrf.mxu0
  %v922 = vadd.f32 0.0, %v921
  %v923 = vpop.f32.mrf.mxu0
  %924 = vmatprep.mubr.bf16.mxu0 %v657
  %925 = vmatmul.mubr.bf16.gmra.mxu0 %v477
  %v926 = vpop.f32.mrf.mxu0
  %v927 = vadd.f32 0.0, %v926
  %v928 = vpop.f32.mrf.mxu0
  %v929 = vpop.f32.mrf.mxu0
  %v930 = vadd.f32 0.0, %v929
  %v931 = vpop.f32.mrf.mxu0
  %932 = vmatprep.mubr.bf16.mxu0 %v660
  %933 = vmatmul.mubr.bf16.gmra.mxu0 %v479
  %v934 = vpop.f32.mrf.mxu0
  %v935 = vadd.f32 0.0, %v934
  %v936 = vpop.f32.mrf.mxu0
  %v937 = vpop.f32.mrf.mxu0
  %v938 = vadd.f32 0.0, %v937
  %v939 = vpop.f32.mrf.mxu0
  %940 = vmatprep.mubr.bf16.mxu0 %v663
  %941 = vmatmul.mubr.bf16.gmra.mxu0 %v481
  %v942 = vpop.f32.mrf.mxu0
  %v943 = vadd.f32 0.0, %v942
  %v944 = vpop.f32.mrf.mxu0
  %v945 = vpop.f32.mrf.mxu0
  %v946 = vadd.f32 0.0, %v945
  %v947 = vpop.f32.mrf.mxu0
  %948 = vmatprep.mubr.bf16.mxu0 %v666
  %949 = vmatmul.mubr.bf16.gmra.mxu0 %v483
  %v950 = vpop.f32.mrf.mxu0
  %v951 = vadd.f32 0.0, %v950
  %v952 = vpop.f32.mrf.mxu0
  %v953 = vpop.f32.mrf.mxu0
  %v954 = vadd.f32 0.0, %v953
  %v955 = vpop.f32.mrf.mxu0
  %956 = vdwg.mxu0
  %v957 = vadd.f32 %v83, %v703
  %v958 = vadd.f32 %v84, %v706
  %v959 = vadd.f32 %v85, %v711
  %v960 = vadd.f32 %v86, %v714
  %v961 = vadd.f32 %v87, %v719
  %v962 = vadd.f32 %v88, %v722
  %v963 = vadd.f32 %v89, %v727
  %v964 = vadd.f32 %v90, %v730
  %v965 = vadd.f32 %v91, %v735
  %v966 = vadd.f32 %v92, %v738
  %v967 = vadd.f32 %v93, %v743
  %v968 = vadd.f32 %v94, %v746
  %v969 = vadd.f32 %v95, %v751
  %v970 = vadd.f32 %v96, %v754
  %v971 = vadd.f32 %v97, %v759
  %v972 = vadd.f32 %v98, %v762
  %v973 = vadd.f32 %v99, %v767
  %v974 = vadd.f32 %v100, %v770
  %v975 = vadd.f32 %v101, %v775
  %v976 = vadd.f32 %v102, %v778
  %v977 = vadd.f32 %v103, %v783
  %v978 = vadd.f32 %v104, %v786
  %v979 = vadd.f32 %v105, %v791
  %v980 = vadd.f32 %v106, %v794
  %v981 = vadd.f32 %v107, %v799
  %v982 = vadd.f32 %v108, %v802
  %v983 = vadd.f32 %v109, %v807
  %v984 = vadd.f32 %v110, %v810
  %v985 = vadd.f32 %v111, %v815
  %v986 = vadd.f32 %v112, %v818
  %v987 = vadd.f32 %v113, %v823
  %v988 = vadd.f32 %v114, %v826
  %v989 = vadd.f32 %v115, %v831
  %v990 = vadd.f32 %v116, %v834
  %v991 = vadd.f32 %v117, %v839
  %v992 = vadd.f32 %v118, %v842
  %v993 = vadd.f32 %v119, %v847
  %v994 = vadd.f32 %v120, %v850
  %v995 = vadd.f32 %v121, %v855
  %v996 = vadd.f32 %v122, %v858
  %v997 = vadd.f32 %v123, %v863
  %v998 = vadd.f32 %v124, %v866
  %v999 = vadd.f32 %v125, %v871
  %v1000 = vadd.f32 %v126, %v874
  %v1001 = vadd.f32 %v127, %v879
  %v1002 = vadd.f32 %v128, %v882
  %v1003 = vadd.f32 %v129, %v887
  %v1004 = vadd.f32 %v130, %v890
  %v1005 = vadd.f32 %v131, %v895
  %v1006 = vadd.f32 %v132, %v898
  %v1007 = vadd.f32 %v133, %v903
  %v1008 = vadd.f32 %v134, %v906
  %v1009 = vadd.f32 %v135, %v911
  %v1010 = vadd.f32 %v136, %v914
  %v1011 = vadd.f32 %v137, %v919
  %v1012 = vadd.f32 %v138, %v922
  %v1013 = vadd.f32 %v139, %v927
  %v1014 = vadd.f32 %v140, %v930
  %v1015 = vadd.f32 %v141, %v935
  %v1016 = vadd.f32 %v142, %v938
  %v1017 = vadd.f32 %v143, %v943
  %v1018 = vadd.f32 %v144, %v946
  %v1019 = vadd.f32 %v145, %v951
  %v1020 = vadd.f32 %v146, %v954
  %1021 = vst [vmem:[#allocation2] sm:$0xff] %v957
  %1022 = vst [vmem:[#allocation2 + $0x8] sm:$0xff] %v958
  %1023 = vst [vmem:[#allocation2 + $0x10] sm:$0xff] %v959
  %1024 = vst [vmem:[#allocation2 + $0x18] sm:$0xff] %v960
  %1025 = vst [vmem:[#allocation2 + $0x20] sm:$0xff] %v961
  %1026 = vst [vmem:[#allocation2 + $0x28] sm:$0xff] %v962
  %1027 = vst [vmem:[#allocation2 + $0x30] sm:$0xff] %v963
  %1028 = vst [vmem:[#allocation2 + $0x38] sm:$0xff] %v964
  %1029 = vst [vmem:[#allocation2 + $0x40] sm:$0xff] %v965
  %1030 = vst [vmem:[#allocation2 + $0x48] sm:$0xff] %v966
  %1031 = vst [vmem:[#allocation2 + $0x50] sm:$0xff] %v967
  %1032 = vst [vmem:[#allocation2 + $0x58] sm:$0xff] %v968
  %1033 = vst [vmem:[#allocation2 + $0x60] sm:$0xff] %v969
  %1034 = vst [vmem:[#allocation2 + $0x68] sm:$0xff] %v970
  %1035 = vst [vmem:[#allocation2 + $0x70] sm:$0xff] %v971
  %1036 = vst [vmem:[#allocation2 + $0x78] sm:$0xff] %v972
  %1037 = vst [vmem:[#allocation2 + $0x80] sm:$0xff] %v973
  %1038 = vst [vmem:[#allocation2 + $0x88] sm:$0xff] %v974
  %1039 = vst [vmem:[#allocation2 + $0x90] sm:$0xff] %v975
  %1040 = vst [vmem:[#allocation2 + $0x98] sm:$0xff] %v976
  %1041 = vst [vmem:[#allocation2 + $0xa0] sm:$0xff] %v977
  %1042 = vst [vmem:[#allocation2 + $0xa8] sm:$0xff] %v978
  %1043 = vst [vmem:[#allocation2 + $0xb0] sm:$0xff] %v979
  %1044 = vst [vmem:[#allocation2 + $0xb8] sm:$0xff] %v980
  %1045 = vst [vmem:[#allocation2 + $0xc0] sm:$0xff] %v981
  %1046 = vst [vmem:[#allocation2 + $0xc8] sm:$0xff] %v982
  %1047 = vst [vmem:[#allocation2 + $0xd0] sm:$0xff] %v983
  %1048 = vst [vmem:[#allocation2 + $0xd8] sm:$0xff] %v984
  %1049 = vst [vmem:[#allocation2 + $0xe0] sm:$0xff] %v985
  %1050 = vst [vmem:[#allocation2 + $0xe8] sm:$0xff] %v986
  %1051 = vst [vmem:[#allocation2 + $0xf0] sm:$0xff] %v987
  %1052 = vst [vmem:[#allocation2 + $0xf8] sm:$0xff] %v988
  %1053 = vst [vmem:[#allocation2 + $0x100] sm:$0xff] %v989
  %1054 = vst [vmem:[#allocation2 + $0x108] sm:$0xff] %v990
  %1055 = vst [vmem:[#allocation2 + $0x110] sm:$0xff] %v991
  %1056 = vst [vmem:[#allocation2 + $0x118] sm:$0xff] %v992
  %1057 = vst [vmem:[#allocation2 + $0x120] sm:$0xff] %v993
  %1058 = vst [vmem:[#allocation2 + $0x128] sm:$0xff] %v994
  %1059 = vst [vmem:[#allocation2 + $0x130] sm:$0xff] %v995
  %1060 = vst [vmem:[#allocation2 + $0x138] sm:$0xff] %v996
  %1061 = vst [vmem:[#allocation2 + $0x140] sm:$0xff] %v997
  %1062 = vst [vmem:[#allocation2 + $0x148] sm:$0xff] %v998
  %1063 = vst [vmem:[#allocation2 + $0x150] sm:$0xff] %v999
  %1064 = vst [vmem:[#allocation2 + $0x158] sm:$0xff] %v1000
  %1065 = vst [vmem:[#allocation2 + $0x160] sm:$0xff] %v1001
  %1066 = vst [vmem:[#allocation2 + $0x168] sm:$0xff] %v1002
  %1067 = vst [vmem:[#allocation2 + $0x170] sm:$0xff] %v1003
  %1068 = vst [vmem:[#allocation2 + $0x178] sm:$0xff] %v1004
  %1069 = vst [vmem:[#allocation2 + $0x180] sm:$0xff] %v1005
  %1070 = vst [vmem:[#allocation2 + $0x188] sm:$0xff] %v1006
  %1071 = vst [vmem:[#allocation2 + $0x190] sm:$0xff] %v1007
  %1072 = vst [vmem:[#allocation2 + $0x198] sm:$0xff] %v1008
  %1073 = vst [vmem:[#allocation2 + $0x1a0] sm:$0xff] %v1009
  %1074 = vst [vmem:[#allocation2 + $0x1a8] sm:$0xff] %v1010
  %1075 = vst [vmem:[#allocation2 + $0x1b0] sm:$0xff] %v1011
  %1076 = vst [vmem:[#allocation2 + $0x1b8] sm:$0xff] %v1012
  %1077 = vst [vmem:[#allocation2 + $0x1c0] sm:$0xff] %v1013
  %1078 = vst [vmem:[#allocation2 + $0x1c8] sm:$0xff] %v1014
  %1079 = vst [vmem:[#allocation2 + $0x1d0] sm:$0xff] %v1015
  %1080 = vst [vmem:[#allocation2 + $0x1d8] sm:$0xff] %v1016
  %1081 = vst [vmem:[#allocation2 + $0x1e0] sm:$0xff] %v1017
  %1082 = vst [vmem:[#allocation2 + $0x1e8] sm:$0xff] %v1018
  %1083 = vst [vmem:[#allocation2 + $0x1f0] sm:$0xff] %v1019
  %1084 = vst [vmem:[#allocation2 + $0x1f8] sm:$0xff] %v1020
  // Predicated region
  $region18: #{unet_forward.14} parent=0 // pred_check
    %p1085 = pneg %p15
  $region19: #{unet_forward.14} parent=0 // pred_check_branch
    %1087 = sbr.rel (%p1085) target = $region21
  $region20: #{unet_forward.14} parent=0 // pred_region
    %v1088 = vld [vmem:[#allocation2] sm:$0xff]
    %v1089 = vld [vmem:[#allocation2 + $0x8] sm:$0xff]
    %v1090 = vld [vmem:[#allocation2 + $0x10] sm:$0xff]
    %v1091 = vld [vmem:[#allocation2 + $0x18] sm:$0xff]
    %v1092 = vld [vmem:[#allocation2 + $0x20] sm:$0xff]
    %v1093 = vld [vmem:[#allocation2 + $0x28] sm:$0xff]
    %v1094 = vld [vmem:[#allocation2 + $0x30] sm:$0xff]
    %v1095 = vld [vmem:[#allocation2 + $0x38] sm:$0xff]
    %v1096 = vld [vmem:[#allocation2 + $0x40] sm:$0xff]
    %v1097 = vld [vmem:[#allocation2 + $0x48] sm:$0xff]
    %v1098 = vld [vmem:[#allocation2 + $0x50] sm:$0xff]
    %v1099 = vld [vmem:[#allocation2 + $0x58] sm:$0xff]
    %v1100 = vld [vmem:[#allocation2 + $0x60] sm:$0xff]
    %v1101 = vld [vmem:[#allocation2 + $0x68] sm:$0xff]
    %v1102 = vld [vmem:[#allocation2 + $0x70] sm:$0xff]
    %v1103 = vld [vmem:[#allocation2 + $0x78] sm:$0xff]
    %v1104 = vld [vmem:[#allocation2 + $0x80] sm:$0xff]
    %v1105 = vld [vmem:[#allocation2 + $0x88] sm:$0xff]
    %v1106 = vld [vmem:[#allocation2 + $0x90] sm:$0xff]
    %v1107 = vld [vmem:[#allocation2 + $0x98] sm:$0xff]
    %v1108 = vld [vmem:[#allocation2 + $0xa0] sm:$0xff]
    %v1109 = vld [vmem:[#allocation2 + $0xa8] sm:$0xff]
    %v1110 = vld [vmem:[#allocation2 + $0xb0] sm:$0xff]
    %v1111 = vld [vmem:[#allocation2 + $0xb8] sm:$0xff]
    %v1112 = vld [vmem:[#allocation2 + $0xc0] sm:$0xff]
    %v1113 = vld [vmem:[#allocation2 + $0xc8] sm:$0xff]
    %v1114 = vld [vmem:[#allocation2 + $0xd0] sm:$0xff]
    %v1115 = vld [vmem:[#allocation2 + $0xd8] sm:$0xff]
    %v1116 = vld [vmem:[#allocation2 + $0xe0] sm:$0xff]
    %v1117 = vld [vmem:[#allocation2 + $0xe8] sm:$0xff]
    %v1118 = vld [vmem:[#allocation2 + $0xf0] sm:$0xff]
    %v1119 = vld [vmem:[#allocation2 + $0xf8] sm:$0xff]
    %v1120 = vld [vmem:[#allocation2 + $0x100] sm:$0xff]
    %v1121 = vld [vmem:[#allocation2 + $0x108] sm:$0xff]
    %v1122 = vld [vmem:[#allocation2 + $0x110] sm:$0xff]
    %v1123 = vld [vmem:[#allocation2 + $0x118] sm:$0xff]
    %v1124 = vld [vmem:[#allocation2 + $0x120] sm:$0xff]
    %v1125 = vld [vmem:[#allocation2 + $0x128] sm:$0xff]
    %v1126 = vld [vmem:[#allocation2 + $0x130] sm:$0xff]
    %v1127 = vld [vmem:[#allocation2 + $0x138] sm:$0xff]
    %v1128 = vld [vmem:[#allocation2 + $0x140] sm:$0xff]
    %v1129 = vld [vmem:[#allocation2 + $0x148] sm:$0xff]
    %v1130 = vld [vmem:[#allocation2 + $0x150] sm:$0xff]
    %v1131 = vld [vmem:[#allocation2 + $0x158] sm:$0xff]
    %v1132 = vld [vmem:[#allocation2 + $0x160] sm:$0xff]
    %v1133 = vld [vmem:[#allocation2 + $0x168] sm:$0xff]
    %v1134 = vld [vmem:[#allocation2 + $0x170] sm:$0xff]
    %v1135 = vld [vmem:[#allocation2 + $0x178] sm:$0xff]
    %v1136 = vld [vmem:[#allocation2 + $0x180] sm:$0xff]
    %v1137 = vld [vmem:[#allocation2 + $0x188] sm:$0xff]
    %v1138 = vld [vmem:[#allocation2 + $0x190] sm:$0xff]
    %v1139 = vld [vmem:[#allocation2 + $0x198] sm:$0xff]
    %v1140 = vld [vmem:[#allocation2 + $0x1a0] sm:$0xff]
    %v1141 = vld [vmem:[#allocation2 + $0x1a8] sm:$0xff]
    %v1142 = vld [vmem:[#allocation2 + $0x1b0] sm:$0xff]
    %v1143 = vld [vmem:[#allocation2 + $0x1b8] sm:$0xff]
    %v1144 = vld [vmem:[#allocation2 + $0x1c0] sm:$0xff]
    %v1145 = vld [vmem:[#allocation2 + $0x1c8] sm:$0xff]
    %v1146 = vld [vmem:[#allocation2 + $0x1d0] sm:$0xff]
    %v1147 = vld [vmem:[#allocation2 + $0x1d8] sm:$0xff]
    %v1148 = vld [vmem:[#allocation2 + $0x1e0] sm:$0xff]
    %v1149 = vld [vmem:[#allocation2 + $0x1e8] sm:$0xff]
    %v1150 = vld [vmem:[#allocation2 + $0x1f0] sm:$0xff]
    %v1151 = vld [vmem:[#allocation2 + $0x1f8] sm:$0xff]
    %v1152 = vld [vmem:[%s2] sm:$0x1]
    %v1154 = vlaneseq
    %v1155 = vshrl.u32 %v1154, 7
    %v1156 = vsub.s32 0, %v1155
    %v1157 = vrot.slane %v1152, %v1156
    %v1159 = vadd.f32 %v1088, %v1157
    %v1160 = vadd.f32 %v1089, %v1157
    %v1161 = vadd.f32 %v1090, %v1157
    %v1162 = vadd.f32 %v1091, %v1157
    %v1163 = vadd.f32 %v1092, %v1157
    %v1164 = vadd.f32 %v1093, %v1157
    %v1165 = vadd.f32 %v1094, %v1157
    %v1166 = vadd.f32 %v1095, %v1157
    %v1167 = vadd.f32 %v1096, %v1157
    %v1168 = vadd.f32 %v1097, %v1157
    %v1169 = vadd.f32 %v1098, %v1157
    %v1170 = vadd.f32 %v1099, %v1157
    %v1171 = vadd.f32 %v1100, %v1157
    %v1172 = vadd.f32 %v1101, %v1157
    %v1173 = vadd.f32 %v1102, %v1157
    %v1174 = vadd.f32 %v1103, %v1157
    %v1175 = vadd.f32 %v1104, %v1157
    %v1176 = vadd.f32 %v1105, %v1157
    %v1177 = vadd.f32 %v1106, %v1157
    %v1178 = vadd.f32 %v1107, %v1157
    %v1179 = vadd.f32 %v1108, %v1157
    %v1180 = vadd.f32 %v1109, %v1157
    %v1181 = vadd.f32 %v1110, %v1157
    %v1182 = vadd.f32 %v1111, %v1157
    %v1183 = vadd.f32 %v1112, %v1157
    %v1184 = vadd.f32 %v1113, %v1157
    %v1185 = vadd.f32 %v1114, %v1157
    %v1186 = vadd.f32 %v1115, %v1157
    %v1187 = vadd.f32 %v1116, %v1157
    %v1188 = vadd.f32 %v1117, %v1157
    %v1189 = vadd.f32 %v1118, %v1157
    %v1190 = vadd.f32 %v1119, %v1157
    %v1191 = vadd.f32 %v1120, %v1157
    %v1192 = vadd.f32 %v1121, %v1157
    %v1193 = vadd.f32 %v1122, %v1157
    %v1194 = vadd.f32 %v1123, %v1157
    %v1195 = vadd.f32 %v1124, %v1157
    %v1196 = vadd.f32 %v1125, %v1157
    %v1197 = vadd.f32 %v1126, %v1157
    %v1198 = vadd.f32 %v1127, %v1157
    %v1199 = vadd.f32 %v1128, %v1157
    %v1200 = vadd.f32 %v1129, %v1157
    %v1201 = vadd.f32 %v1130, %v1157
    %v1202 = vadd.f32 %v1131, %v1157
    %v1203 = vadd.f32 %v1132, %v1157
    %v1204 = vadd.f32 %v1133, %v1157
    %v1205 = vadd.f32 %v1134, %v1157
    %v1206 = vadd.f32 %v1135, %v1157
    %v1207 = vadd.f32 %v1136, %v1157
    %v1208 = vadd.f32 %v1137, %v1157
    %v1209 = vadd.f32 %v1138, %v1157
    %v1210 = vadd.f32 %v1139, %v1157
    %v1211 = vadd.f32 %v1140, %v1157
    %v1212 = vadd.f32 %v1141, %v1157
    %v1213 = vadd.f32 %v1142, %v1157
    %v1214 = vadd.f32 %v1143, %v1157
    %v1215 = vadd.f32 %v1144, %v1157
    %v1216 = vadd.f32 %v1145, %v1157
    %v1217 = vadd.f32 %v1146, %v1157
    %v1218 = vadd.f32 %v1147, %v1157
    %v1219 = vadd.f32 %v1148, %v1157
    %v1220 = vadd.f32 %v1149, %v1157
    %v1221 = vadd.f32 %v1150, %v1157
    %v1222 = vadd.f32 %v1151, %v1157
    %v1223 = vpack.c.bf16 %v1160, %v1159
    %v1224 = vpack.c.bf16 %v1162, %v1161
    %v1225 = vpack.c.bf16 %v1164, %v1163
    %v1226 = vpack.c.bf16 %v1166, %v1165
    %v1227 = vpack.c.bf16 %v1168, %v1167
    %v1228 = vpack.c.bf16 %v1170, %v1169
    %v1229 = vpack.c.bf16 %v1172, %v1171
    %v1230 = vpack.c.bf16 %v1174, %v1173
    %v1231 = vpack.c.bf16 %v1176, %v1175
    %v1232 = vpack.c.bf16 %v1178, %v1177
    %v1233 = vpack.c.bf16 %v1180, %v1179
    %v1234 = vpack.c.bf16 %v1182, %v1181
    %v1235 = vpack.c.bf16 %v1184, %v1183
    %v1236 = vpack.c.bf16 %v1186, %v1185
    %v1237 = vpack.c.bf16 %v1188, %v1187
    %v1238 = vpack.c.bf16 %v1190, %v1189
    %v1239 = vpack.c.bf16 %v1192, %v1191
    %v1240 = vpack.c.bf16 %v1194, %v1193
    %v1241 = vpack.c.bf16 %v1196, %v1195
    %v1242 = vpack.c.bf16 %v1198, %v1197
    %v1243 = vpack.c.bf16 %v1200, %v1199
    %v1244 = vpack.c.bf16 %v1202, %v1201
    %v1245 = vpack.c.bf16 %v1204, %v1203
    %v1246 = vpack.c.bf16 %v1206, %v1205
    %v1247 = vpack.c.bf16 %v1208, %v1207
    %v1248 = vpack.c.bf16 %v1210, %v1209
    %v1249 = vpack.c.bf16 %v1212, %v1211
    %v1250 = vpack.c.bf16 %v1214, %v1213
    %v1251 = vpack.c.bf16 %v1216, %v1215
    %v1252 = vpack.c.bf16 %v1218, %v1217
    %v1253 = vpack.c.bf16 %v1220, %v1219
    %v1254 = vpack.c.bf16 %v1222, %v1221
    %v1287 = vunpack.c.l.b16 %v1223
    %v1288 = vunpack.c.h.b16 %v1223
    %v1289 = vunpack.c.l.b16 %v1224
    %v1290 = vunpack.c.h.b16 %v1224
    %v1291 = vunpack.c.l.b16 %v1225
    %v1292 = vunpack.c.h.b16 %v1225
    %v1293 = vunpack.c.l.b16 %v1226
    %v1294 = vunpack.c.h.b16 %v1226
    %v1295 = vunpack.c.l.b16 %v1227
    %v1296 = vunpack.c.h.b16 %v1227
    %v1297 = vunpack.c.l.b16 %v1228
    %v1298 = vunpack.c.h.b16 %v1228
    %v1299 = vunpack.c.l.b16 %v1229
    %v1300 = vunpack.c.h.b16 %v1229
    %v1301 = vunpack.c.l.b16 %v1230
    %v1302 = vunpack.c.h.b16 %v1230
    %v1303 = vunpack.c.l.b16 %v1231
    %v1304 = vunpack.c.h.b16 %v1231
    %v1305 = vunpack.c.l.b16 %v1232
    %v1306 = vunpack.c.h.b16 %v1232
    %v1307 = vunpack.c.l.b16 %v1233
    %v1308 = vunpack.c.h.b16 %v1233
    %v1309 = vunpack.c.l.b16 %v1234
    %v1310 = vunpack.c.h.b16 %v1234
    %v1311 = vunpack.c.l.b16 %v1235
    %v1312 = vunpack.c.h.b16 %v1235
    %v1313 = vunpack.c.l.b16 %v1236
    %v1314 = vunpack.c.h.b16 %v1236
    %v1315 = vunpack.c.l.b16 %v1237
    %v1316 = vunpack.c.h.b16 %v1237
    %v1317 = vunpack.c.l.b16 %v1238
    %v1318 = vunpack.c.h.b16 %v1238
    %v1319 = vunpack.c.l.b16 %v1239
    %v1320 = vunpack.c.h.b16 %v1239
    %v1321 = vunpack.c.l.b16 %v1240
    %v1322 = vunpack.c.h.b16 %v1240
    %v1323 = vunpack.c.l.b16 %v1241
    %v1324 = vunpack.c.h.b16 %v1241
    %v1325 = vunpack.c.l.b16 %v1242
    %v1326 = vunpack.c.h.b16 %v1242
    %v1327 = vunpack.c.l.b16 %v1243
    %v1328 = vunpack.c.h.b16 %v1243
    %v1329 = vunpack.c.l.b16 %v1244
    %v1330 = vunpack.c.h.b16 %v1244
    %v1331 = vunpack.c.l.b16 %v1245
    %v1332 = vunpack.c.h.b16 %v1245
    %v1333 = vunpack.c.l.b16 %v1246
    %v1334 = vunpack.c.h.b16 %v1246
    %v1335 = vunpack.c.l.b16 %v1247
    %v1336 = vunpack.c.h.b16 %v1247
    %v1337 = vunpack.c.l.b16 %v1248
    %v1338 = vunpack.c.h.b16 %v1248
    %v1339 = vunpack.c.l.b16 %v1249
    %v1340 = vunpack.c.h.b16 %v1249
    %v1341 = vunpack.c.l.b16 %v1250
    %v1342 = vunpack.c.h.b16 %v1250
    %v1343 = vunpack.c.l.b16 %v1251
    %v1344 = vunpack.c.h.b16 %v1251
    %v1345 = vunpack.c.l.b16 %v1252
    %v1346 = vunpack.c.h.b16 %v1252
    %v1347 = vunpack.c.l.b16 %v1253
    %v1348 = vunpack.c.h.b16 %v1253
    %v1349 = vunpack.c.l.b16 %v1254
    %v1350 = vunpack.c.h.b16 %v1254
    %v1351 = vpack.c.b16 %v1287, %v1287
    %v1352 = vpack.c.b16 %v1288, %v1288
    %v1353 = vpack.c.b16 %v1289, %v1289
    %v1354 = vpack.c.b16 %v1290, %v1290
    %v1355 = vpack.c.b16 %v1291, %v1291
    %v1356 = vpack.c.b16 %v1292, %v1292
    %v1357 = vpack.c.b16 %v1293, %v1293
    %v1358 = vpack.c.b16 %v1294, %v1294
    %v1359 = vpack.c.b16 %v1295, %v1295
    %v1360 = vpack.c.b16 %v1296, %v1296
    %v1361 = vpack.c.b16 %v1297, %v1297
    %v1362 = vpack.c.b16 %v1298, %v1298
    %v1363 = vpack.c.b16 %v1299, %v1299
    %v1364 = vpack.c.b16 %v1300, %v1300
    %v1365 = vpack.c.b16 %v1301, %v1301
    %v1366 = vpack.c.b16 %v1302, %v1302
    %v1367 = vpack.c.b16 %v1303, %v1303
    %v1368 = vpack.c.b16 %v1304, %v1304
    %v1369 = vpack.c.b16 %v1305, %v1305
    %v1370 = vpack.c.b16 %v1306, %v1306
    %v1371 = vpack.c.b16 %v1307, %v1307
    %v1372 = vpack.c.b16 %v1308, %v1308
    %v1373 = vpack.c.b16 %v1309, %v1309
    %v1374 = vpack.c.b16 %v1310, %v1310
    %v1375 = vpack.c.b16 %v1311, %v1311
    %v1376 = vpack.c.b16 %v1312, %v1312
    %v1377 = vpack.c.b16 %v1313, %v1313
    %v1378 = vpack.c.b16 %v1314, %v1314
    %v1379 = vpack.c.b16 %v1315, %v1315
    %v1380 = vpack.c.b16 %v1316, %v1316
    %v1381 = vpack.c.b16 %v1317, %v1317
    %v1382 = vpack.c.b16 %v1318, %v1318
    %v1383 = vpack.c.b16 %v1319, %v1319
    %v1384 = vpack.c.b16 %v1320, %v1320
    %v1385 = vpack.c.b16 %v1321, %v1321
    %v1386 = vpack.c.b16 %v1322, %v1322
    %v1387 = vpack.c.b16 %v1323, %v1323
    %v1388 = vpack.c.b16 %v1324, %v1324
    %v1389 = vpack.c.b16 %v1325, %v1325
    %v1390 = vpack.c.b16 %v1326, %v1326
    %v1391 = vpack.c.b16 %v1327, %v1327
    %v1392 = vpack.c.b16 %v1328, %v1328
    %v1393 = vpack.c.b16 %v1329, %v1329
    %v1394 = vpack.c.b16 %v1330, %v1330
    %v1395 = vpack.c.b16 %v1331, %v1331
    %v1396 = vpack.c.b16 %v1332, %v1332
    %v1397 = vpack.c.b16 %v1333, %v1333
    %v1398 = vpack.c.b16 %v1334, %v1334
    %v1399 = vpack.c.b16 %v1335, %v1335
    %v1400 = vpack.c.b16 %v1336, %v1336
    %v1401 = vpack.c.b16 %v1337, %v1337
    %v1402 = vpack.c.b16 %v1338, %v1338
    %v1403 = vpack.c.b16 %v1339, %v1339
    %v1404 = vpack.c.b16 %v1340, %v1340
    %v1405 = vpack.c.b16 %v1341, %v1341
    %v1406 = vpack.c.b16 %v1342, %v1342
    %v1407 = vpack.c.b16 %v1343, %v1343
    %v1408 = vpack.c.b16 %v1344, %v1344
    %v1409 = vpack.c.b16 %v1345, %v1345
    %v1410 = vpack.c.b16 %v1346, %v1346
    %v1411 = vpack.c.b16 %v1347, %v1347
    %v1412 = vpack.c.b16 %v1348, %v1348
    %v1413 = vpack.c.b16 %v1349, %v1349
    %v1414 = vpack.c.b16 %v1350, %v1350
    %1479 = vst [vmem:[%s3] sm:$0xf] %v1351
    %1480 = vst [vmem:[%s3 + $0x4] sm:$0xf] %v1352
    %1481 = vst [vmem:[%s3 + $0x8] sm:$0xf] %v1353
    %1482 = vst [vmem:[%s3 + $0xc] sm:$0xf] %v1354
    %1483 = vst [vmem:[%s3 + $0x10] sm:$0xf] %v1355
    %1484 = vst [vmem:[%s3 + $0x14] sm:$0xf] %v1356
    %1485 = vst [vmem:[%s3 + $0x18] sm:$0xf] %v1357
    %1486 = vst [vmem:[%s3 + $0x1c] sm:$0xf] %v1358
    %1487 = vst [vmem:[%s3 + $0x20] sm:$0xf] %v1359
    %1488 = vst [vmem:[%s3 + $0x24] sm:$0xf] %v1360
    %1489 = vst [vmem:[%s3 + $0x28] sm:$0xf] %v1361
    %1490 = vst [vmem:[%s3 + $0x2c] sm:$0xf] %v1362
    %1491 = vst [vmem:[%s3 + $0x30] sm:$0xf] %v1363
    %1492 = vst [vmem:[%s3 + $0x34] sm:$0xf] %v1364
    %1493 = vst [vmem:[%s3 + $0x38] sm:$0xf] %v1365
    %1494 = vst [vmem:[%s3 + $0x3c] sm:$0xf] %v1366
    %1495 = vst [vmem:[%s3 + $0x40] sm:$0xf] %v1367
    %1496 = vst [vmem:[%s3 + $0x44] sm:$0xf] %v1368
    %1497 = vst [vmem:[%s3 + $0x48] sm:$0xf] %v1369
    %1498 = vst [vmem:[%s3 + $0x4c] sm:$0xf] %v1370
    %1499 = vst [vmem:[%s3 + $0x50] sm:$0xf] %v1371
    %1500 = vst [vmem:[%s3 + $0x54] sm:$0xf] %v1372
    %1501 = vst [vmem:[%s3 + $0x58] sm:$0xf] %v1373
    %1502 = vst [vmem:[%s3 + $0x5c] sm:$0xf] %v1374
    %1503 = vst [vmem:[%s3 + $0x60] sm:$0xf] %v1375
    %1504 = vst [vmem:[%s3 + $0x64] sm:$0xf] %v1376
    %1505 = vst [vmem:[%s3 + $0x68] sm:$0xf] %v1377
    %1506 = vst [vmem:[%s3 + $0x6c] sm:$0xf] %v1378
    %1507 = vst [vmem:[%s3 + $0x70] sm:$0xf] %v1379
    %1508 = vst [vmem:[%s3 + $0x74] sm:$0xf] %v1380
    %1509 = vst [vmem:[%s3 + $0x78] sm:$0xf] %v1381
    %1510 = vst [vmem:[%s3 + $0x7c] sm:$0xf] %v1382
    %1511 = vst [vmem:[%s3 + $0x80] sm:$0xf] %v1383
    %1512 = vst [vmem:[%s3 + $0x84] sm:$0xf] %v1384
    %1513 = vst [vmem:[%s3 + $0x88] sm:$0xf] %v1385
    %1514 = vst [vmem:[%s3 + $0x8c] sm:$0xf] %v1386
    %1515 = vst [vmem:[%s3 + $0x90] sm:$0xf] %v1387
    %1516 = vst [vmem:[%s3 + $0x94] sm:$0xf] %v1388
    %1517 = vst [vmem:[%s3 + $0x98] sm:$0xf] %v1389
    %1518 = vst [vmem:[%s3 + $0x9c] sm:$0xf] %v1390
    %1519 = vst [vmem:[%s3 + $0xa0] sm:$0xf] %v1391
    %1520 = vst [vmem:[%s3 + $0xa4] sm:$0xf] %v1392
    %1521 = vst [vmem:[%s3 + $0xa8] sm:$0xf] %v1393
    %1522 = vst [vmem:[%s3 + $0xac] sm:$0xf] %v1394
    %1523 = vst [vmem:[%s3 + $0xb0] sm:$0xf] %v1395
    %1524 = vst [vmem:[%s3 + $0xb4] sm:$0xf] %v1396
    %1525 = vst [vmem:[%s3 + $0xb8] sm:$0xf] %v1397
    %1526 = vst [vmem:[%s3 + $0xbc] sm:$0xf] %v1398
    %1527 = vst [vmem:[%s3 + $0xc0] sm:$0xf] %v1399
    %1528 = vst [vmem:[%s3 + $0xc4] sm:$0xf] %v1400
    %1529 = vst [vmem:[%s3 + $0xc8] sm:$0xf] %v1401
    %1530 = vst [vmem:[%s3 + $0xcc] sm:$0xf] %v1402
    %1531 = vst [vmem:[%s3 + $0xd0] sm:$0xf] %v1403
    %1532 = vst [vmem:[%s3 + $0xd4] sm:$0xf] %v1404
    %1533 = vst [vmem:[%s3 + $0xd8] sm:$0xf] %v1405
    %1534 = vst [vmem:[%s3 + $0xdc] sm:$0xf] %v1406
    %1535 = vst [vmem:[%s3 + $0xe0] sm:$0xf] %v1407
    %1536 = vst [vmem:[%s3 + $0xe4] sm:$0xf] %v1408
    %1537 = vst [vmem:[%s3 + $0xe8] sm:$0xf] %v1409
    %1538 = vst [vmem:[%s3 + $0xec] sm:$0xf] %v1410
    %1539 = vst [vmem:[%s3 + $0xf0] sm:$0xf] %v1411
    %1540 = vst [vmem:[%s3 + $0xf4] sm:$0xf] %v1412
    %1541 = vst [vmem:[%s3 + $0xf8] sm:$0xf] %v1413
    %1542 = vst [vmem:[%s3 + $0xfc] sm:$0xf] %v1414
  $region21: #{unet_forward.14} parent=0 // pred_fallthru
    _
  // Predicated region
  $region22: #{unet_forward.14} parent=0 // pred_check
    _
  $region23: #{unet_forward.14} parent=0 // pred_check_branch
    %1544 = sbr.rel (0) target = $region25
  $region24: #{unet_forward.14} parent=0 // pred_region
    _
  $region25: #{unet_forward.14} parent=0 // pred_fallthru
    _
  // Predicated region
  $region26: #{unet_forward.14} parent=0 // pred_check
    _
  $region27: #{unet_forward.14} parent=0 // pred_check_branch
    %1546 = sbr.rel (0) target = $region29
  $region28: #{unet_forward.14} parent=0 // pred_region
    _
  $region29: #{unet_forward.14} parent=0 // pred_fallthru
    _

// kernel: unet_forward.15
$region0: #{unet_forward.15}
  #allocation0 [shape = 'u32[]', space=smem, size = 0x4, offset = 0x4, fixed_abs, tag = 'smem constant byte address 0x4 - core index']
  #allocation1 [shape = 'u32[144,128]{1,0:T(1,128)}', space=vmem, size = 0x12000, scoped, tag = 'internal scratch']
  #allocation2 [shape = 'f32[128,128]{1,0:T(8,128)}', space=vmem, size = 0x10000, scoped, tag = 'scratch operand']
  %s0 = inlined_call_operand.vmem [shape: bf16[128,144], index: 0, kind: input, shape index: {}]
  %s1 = inlined_call_operand.vmem [shape: bf16[144,128], index: 1, kind: input, shape index: {}]
  %s2 = inlined_call_operand.vmem [shape: f32[1,128], index: 2, kind: input, shape index: {}]
  %s3 = inlined_call_operand.vmem [shape: bf16[128,128], index: 3, kind: output, shape index: {}]
  %s4 = sld [smem:[#allocation0]]
  $region30: #{unet_forward.15} parent=0
    _
  %s6 = ssub.s32 1, %s4
  %s7 = scalar_select 0, %s6, %s4
  // Predicated region
  $region2: #{unet_forward.15} parent=0 // pred_check
    _
  $region3: #{unet_forward.15} parent=0 // pred_check_branch
    %9 = sbr.rel (0) target = $region5
  $region4: #{unet_forward.15} parent=0 // pred_region
    _
  $region5: #{unet_forward.15} parent=0 // pred_fallthru
    _
  // Predicated region
  $region6: #{unet_forward.15} parent=0 // pred_check
    _
  $region7: #{unet_forward.15} parent=0 // pred_check_branch
    %11 = sbr.rel (0) target = $region9
  $region8: #{unet_forward.15} parent=0 // pred_region
    _
  $region9: #{unet_forward.15} parent=0 // pred_fallthru
    _
  // Predicated region
  $region10: #{unet_forward.15} parent=0 // pred_check
    _
  $region11: #{unet_forward.15} parent=0 // pred_check_branch
    %13 = sbr.rel (0) target = $region13
  $region12: #{unet_forward.15} parent=0 // pred_region
    _
  $region13: #{unet_forward.15} parent=0 // pred_fallthru
    _
  %p15 = scmp.eq.s32.totalorder 0, 0
  // Predicated region
  $region14: #{unet_forward.15} parent=0 // pred_check
    %p16 = pneg %p15
  $region15: #{unet_forward.15} parent=0 // pred_check_branch
    %18 = sbr.rel (%p16) target = $region17
  $region16: #{unet_forward.15} parent=0 // pred_region
    %19 = vst [vmem:[#allocation2] sm:$0xff] 0.0
    %20 = vst [vmem:[#allocation2 + $0x8] sm:$0xff] 0.0
    %21 = vst [vmem:[#allocation2 + $0x10] sm:$0xff] 0.0
    %22 = vst [vmem:[#allocation2 + $0x18] sm:$0xff] 0.0
    %23 = vst [vmem:[#allocation2 + $0x20] sm:$0xff] 0.0
    %24 = vst [vmem:[#allocation2 + $0x28] sm:$0xff] 0.0
    %25 = vst [vmem:[#allocation2 + $0x30] sm:$0xff] 0.0
    %26 = vst [vmem:[#allocation2 + $0x38] sm:$0xff] 0.0
    %27 = vst [vmem:[#allocation2 + $0x40] sm:$0xff] 0.0
    %28 = vst [vmem:[#allocation2 + $0x48] sm:$0xff] 0.0
    %29 = vst [vmem:[#allocation2 + $0x50] sm:$0xff] 0.0
    %30 = vst [vmem:[#allocation2 + $0x58] sm:$0xff] 0.0
    %31 = vst [vmem:[#allocation2 + $0x60] sm:$0xff] 0.0
    %32 = vst [vmem:[#allocation2 + $0x68] sm:$0xff] 0.0
    %33 = vst [vmem:[#allocation2 + $0x70] sm:$0xff] 0.0
    %34 = vst [vmem:[#allocation2 + $0x78] sm:$0xff] 0.0
  $region17: #{unet_forward.15} parent=0 // pred_fallthru
    _
  %v35 = vld [vmem:[#allocation2] sm:$0xff]
  %v36 = vld [vmem:[#allocation2 + $0x8] sm:$0xff]
  %v37 = vld [vmem:[#allocation2 + $0x10] sm:$0xff]
  %v38 = vld [vmem:[#allocation2 + $0x18] sm:$0xff]
  %v39 = vld [vmem:[#allocation2 + $0x20] sm:$0xff]
  %v40 = vld [vmem:[#allocation2 + $0x28] sm:$0xff]
  %v41 = vld [vmem:[#allocation2 + $0x30] sm:$0xff]
  %v42 = vld [vmem:[#allocation2 + $0x38] sm:$0xff]
  %v43 = vld [vmem:[#allocation2 + $0x40] sm:$0xff]
  %v44 = vld [vmem:[#allocation2 + $0x48] sm:$0xff]
  %v45 = vld [vmem:[#allocation2 + $0x50] sm:$0xff]
  %v46 = vld [vmem:[#allocation2 + $0x58] sm:$0xff]
  %v47 = vld [vmem:[#allocation2 + $0x60] sm:$0xff]
  %v48 = vld [vmem:[#allocation2 + $0x68] sm:$0xff]
  %v49 = vld [vmem:[#allocation2 + $0x70] sm:$0xff]
  %v50 = vld [vmem:[#allocation2 + $0x78] sm:$0xff]
  %v51 = vld [vmem:[%s0] sm:$0xff]
  %v52 = vld [vmem:[%s0 + $0x8] sm:$0xff]
  %v53 = vld [vmem:[%s0 + $0x10] sm:$0xff]
  %v54 = vld [vmem:[%s0 + $0x18] sm:$0xff]
  %v55 = vld [vmem:[%s0 + $0x20] sm:$0xff]
  %v56 = vld [vmem:[%s0 + $0x28] sm:$0xff]
  %v57 = vld [vmem:[%s0 + $0x30] sm:$0xff]
  %v58 = vld [vmem:[%s0 + $0x38] sm:$0xff]
  %v59 = vld [vmem:[%s0 + $0x40] sm:$0xff]
  %v60 = vld [vmem:[%s0 + $0x48] sm:$0xff]
  %v61 = vld [vmem:[%s0 + $0x50] sm:$0xff]
  %v62 = vld [vmem:[%s0 + $0x58] sm:$0xff]
  %v63 = vld [vmem:[%s0 + $0x60] sm:$0xff]
  %v64 = vld [vmem:[%s0 + $0x68] sm:$0xff]
  %v65 = vld [vmem:[%s0 + $0x70] sm:$0xff]
  %v66 = vld [vmem:[%s0 + $0x78] sm:$0xff]
  %v67 = vld [vmem:[%s1] sm:$0xf]
  %v68 = vld [vmem:[%s1 + $0x4] sm:$0xf]
  %v69 = vld [vmem:[%s1 + $0x8] sm:$0xf]
  %v70 = vld [vmem:[%s1 + $0xc] sm:$0xf]
  %v71 = vld [vmem:[%s1 + $0x10] sm:$0xf]
  %v72 = vld [vmem:[%s1 + $0x14] sm:$0xf]
  %v73 = vld [vmem:[%s1 + $0x18] sm:$0xf]
  %v74 = vld [vmem:[%s1 + $0x1c] sm:$0xf]
  %v75 = vld [vmem:[%s1 + $0x20] sm:$0xf]
  %v76 = vld [vmem:[%s1 + $0x24] sm:$0xf]
  %v77 = vld [vmem:[%s1 + $0x28] sm:$0xf]
  %v78 = vld [vmem:[%s1 + $0x2c] sm:$0xf]
  %v79 = vld [vmem:[%s1 + $0x30] sm:$0xf]
  %v80 = vld [vmem:[%s1 + $0x34] sm:$0xf]
  %v81 = vld [vmem:[%s1 + $0x38] sm:$0xf]
  %v82 = vld [vmem:[%s1 + $0x3c] sm:$0xf]
  %v83 = vld [vmem:[%s1 + $0x40] sm:$0xf]
  %v84 = vld [vmem:[%s1 + $0x44] sm:$0xf]
  %v101 = vunpack.c.l.b16 %v51
  %v102 = vunpack.c.h.b16 %v51
  %v103 = vunpack.c.l.b16 %v52
  %v104 = vunpack.c.h.b16 %v52
  %v105 = vunpack.c.l.b16 %v53
  %v106 = vunpack.c.h.b16 %v53
  %v107 = vunpack.c.l.b16 %v54
  %v108 = vunpack.c.h.b16 %v54
  %v109 = vunpack.c.l.b16 %v55
  %v110 = vunpack.c.h.b16 %v55
  %v111 = vunpack.c.l.b16 %v56
  %v112 = vunpack.c.h.b16 %v56
  %v113 = vunpack.c.l.b16 %v57
  %v114 = vunpack.c.h.b16 %v57
  %v115 = vunpack.c.l.b16 %v58
  %v116 = vunpack.c.h.b16 %v58
  %v117 = vunpack.c.l.b16 %v59
  %v118 = vunpack.c.h.b16 %v59
  %v119 = vunpack.c.l.b16 %v60
  %v120 = vunpack.c.h.b16 %v60
  %v121 = vunpack.c.l.b16 %v61
  %v122 = vunpack.c.h.b16 %v61
  %v123 = vunpack.c.l.b16 %v62
  %v124 = vunpack.c.h.b16 %v62
  %v125 = vunpack.c.l.b16 %v63
  %v126 = vunpack.c.h.b16 %v63
  %v127 = vunpack.c.l.b16 %v64
  %v128 = vunpack.c.h.b16 %v64
  %v129 = vunpack.c.l.b16 %v65
  %v130 = vunpack.c.h.b16 %v65
  %v131 = vunpack.c.l.b16 %v66
  %v132 = vunpack.c.h.b16 %v66
  %v133 = vpack.c.b16 %v103, %v101
  %v134 = vpack.c.b16 %v104, %v102
  %v135 = vpack.c.b16 %v107, %v105
  %v136 = vpack.c.b16 %v108, %v106
  %v137 = vpack.c.b16 %v111, %v109
  %v138 = vpack.c.b16 %v112, %v110
  %v139 = vpack.c.b16 %v115, %v113
  %v140 = vpack.c.b16 %v116, %v114
  %v141 = vpack.c.b16 %v119, %v117
  %v142 = vpack.c.b16 %v120, %v118
  %v143 = vpack.c.b16 %v123, %v121
  %v144 = vpack.c.b16 %v124, %v122
  %v145 = vpack.c.b16 %v127, %v125
  %v146 = vpack.c.b16 %v128, %v126
  %v147 = vpack.c.b16 %v131, %v129
  %v148 = vpack.c.b16 %v132, %v130
  %v175 = vunpack.c.l.b16 %v67
  %v176 = vunpack.c.l.b16 %v68
  %v177 = vunpack.c.l.b16 %v69
  %v178 = vunpack.c.l.b16 %v70
  %v179 = vunpack.c.l.b16 %v71
  %v180 = vunpack.c.l.b16 %v72
  %v181 = vunpack.c.l.b16 %v73
  %v182 = vunpack.c.l.b16 %v74
  %v183 = vunpack.c.l.b16 %v75
  %v184 = vunpack.c.l.b16 %v76
  %v185 = vunpack.c.l.b16 %v77
  %v186 = vunpack.c.l.b16 %v78
  %v187 = vunpack.c.l.b16 %v79
  %v188 = vunpack.c.l.b16 %v80
  %v189 = vunpack.c.l.b16 %v81
  %v190 = vunpack.c.l.b16 %v82
  %v191 = vunpack.c.l.b16 %v83
  %v192 = vunpack.c.l.b16 %v84
  %v193 = vpack.c.b16 %v176, %v175
  %v194 = vpack.c.b16 %v178, %v177
  %v195 = vpack.c.b16 %v180, %v179
  %v196 = vpack.c.b16 %v182, %v181
  %v197 = vpack.c.b16 %v184, %v183
  %v198 = vpack.c.b16 %v186, %v185
  %v199 = vpack.c.b16 %v188, %v187
  %v200 = vpack.c.b16 %v190, %v189
  %v201 = vpack.c.b16 %v192, %v191
  %vm211 = vcmask 130048
  %v213 = vsel %vm211, %v134, 0
  %v216 = vsel %vm211, %v136, 0
  %v219 = vsel %vm211, %v138, 0
  %v222 = vsel %vm211, %v140, 0
  %v225 = vsel %vm211, %v142, 0
  %v228 = vsel %vm211, %v144, 0
  %v231 = vsel %vm211, %v146, 0
  %v234 = vsel %vm211, %v148, 0
  %236 = vmatprep.subr.bf16.mxu0 0
  %237 = vmatpush1.bf16.msra.mxu0 %v200
  %238 = vmatprep.subr.bf16.mxu0 0
  %239 = vmatpush1.bf16.msra.mxu0 %v199
  %240 = vmatprep.subr.bf16.mxu0 0
  %241 = vmatpush1.bf16.msra.mxu0 %v198
  %242 = vmatprep.subr.bf16.mxu0 0
  %243 = vmatpush1.bf16.msra.mxu0 %v197
  %244 = vmatprep.subr.bf16.mxu0 0
  %245 = vmatpush1.bf16.msra.mxu0 %v196
  %246 = vmatprep.subr.bf16.mxu0 0
  %247 = vmatpush1.bf16.msra.mxu0 %v195
  %248 = vmatprep.subr.bf16.mxu0 0
  %249 = vmatpush1.bf16.msra.mxu0 %v194
  %250 = vmatprep.subr.bf16.mxu0 0
  %251 = vmatpush1.bf16.msra.mxu0 %v193
  %252 = vmatprep.subr.bf16.mxu0 0
  %253 = vmatpush2.bf16.msra.mxu0 0
  %254 = vmatprep.subr.bf16.mxu0 0
  %255 = vmatpush2.bf16.msra.mxu0 0
  %256 = vmatprep.subr.bf16.mxu0 0
  %257 = vmatpush2.bf16.msra.mxu0 0
  %258 = vmatprep.subr.bf16.mxu0 0
  %259 = vmatpush2.bf16.msra.mxu0 0
  %260 = vmatprep.subr.bf16.mxu0 0
  %261 = vmatpush2.bf16.msra.mxu0 0
  %262 = vmatprep.subr.bf16.mxu0 0
  %263 = vmatpush2.bf16.msra.mxu0 0
  %264 = vmatprep.subr.bf16.mxu0 0
  %265 = vmatpush2.bf16.msra.mxu0 0
  %266 = vmatprep.subr.bf16.mxu0 0
  %267 = vmatpush2.bf16.msra.mxu0 %v201
  %268 = vmatprep.mubr.bf16.mxu0 %v213
  %269 = vmatmul.mubr.bf16.gmra.mxu0 %v133
  %v270 = vpop.f32.mrf.mxu0
  %v271 = vadd.f32 0.0, %v270
  %v272 = vpop.f32.mrf.mxu0
  %v273 = vpop.f32.mrf.mxu0
  %v274 = vadd.f32 0.0, %v273
  %v275 = vpop.f32.mrf.mxu0
  %276 = vmatprep.mubr.bf16.mxu0 %v216
  %277 = vmatmul.mubr.bf16.gmra.mxu0 %v135
  %v278 = vpop.f32.mrf.mxu0
  %v279 = vadd.f32 0.0, %v278
  %v280 = vpop.f32.mrf.mxu0
  %v281 = vpop.f32.mrf.mxu0
  %v282 = vadd.f32 0.0, %v281
  %v283 = vpop.f32.mrf.mxu0
  %284 = vmatprep.mubr.bf16.mxu0 %v219
  %285 = vmatmul.mubr.bf16.gmra.mxu0 %v137
  %v286 = vpop.f32.mrf.mxu0
  %v287 = vadd.f32 0.0, %v286
  %v288 = vpop.f32.mrf.mxu0
  %v289 = vpop.f32.mrf.mxu0
  %v290 = vadd.f32 0.0, %v289
  %v291 = vpop.f32.mrf.mxu0
  %292 = vmatprep.mubr.bf16.mxu0 %v222
  %293 = vmatmul.mubr.bf16.gmra.mxu0 %v139
  %v294 = vpop.f32.mrf.mxu0
  %v295 = vadd.f32 0.0, %v294
  %v296 = vpop.f32.mrf.mxu0
  %v297 = vpop.f32.mrf.mxu0
  %v298 = vadd.f32 0.0, %v297
  %v299 = vpop.f32.mrf.mxu0
  %300 = vmatprep.mubr.bf16.mxu0 %v225
  %301 = vmatmul.mubr.bf16.gmra.mxu0 %v141
  %v302 = vpop.f32.mrf.mxu0
  %v303 = vadd.f32 0.0, %v302
  %v304 = vpop.f32.mrf.mxu0
  %v305 = vpop.f32.mrf.mxu0
  %v306 = vadd.f32 0.0, %v305
  %v307 = vpop.f32.mrf.mxu0
  %308 = vmatprep.mubr.bf16.mxu0 %v228
  %309 = vmatmul.mubr.bf16.gmra.mxu0 %v143
  %v310 = vpop.f32.mrf.mxu0
  %v311 = vadd.f32 0.0, %v310
  %v312 = vpop.f32.mrf.mxu0
  %v313 = vpop.f32.mrf.mxu0
  %v314 = vadd.f32 0.0, %v313
  %v315 = vpop.f32.mrf.mxu0
  %316 = vmatprep.mubr.bf16.mxu0 %v231
  %317 = vmatmul.mubr.bf16.gmra.mxu0 %v145
  %v318 = vpop.f32.mrf.mxu0
  %v319 = vadd.f32 0.0, %v318
  %v320 = vpop.f32.mrf.mxu0
  %v321 = vpop.f32.mrf.mxu0
  %v322 = vadd.f32 0.0, %v321
  %v323 = vpop.f32.mrf.mxu0
  %324 = vmatprep.mubr.bf16.mxu0 %v234
  %325 = vmatmul.mubr.bf16.gmra.mxu0 %v147
  %v326 = vpop.f32.mrf.mxu0
  %v327 = vadd.f32 0.0, %v326
  %v328 = vpop.f32.mrf.mxu0
  %v329 = vpop.f32.mrf.mxu0
  %v330 = vadd.f32 0.0, %v329
  %v331 = vpop.f32.mrf.mxu0
  %332 = vdwg.mxu0
  %v333 = vadd.f32 %v35, %v271
  %v334 = vadd.f32 %v36, %v274
  %v335 = vadd.f32 %v37, %v279
  %v336 = vadd.f32 %v38, %v282
  %v337 = vadd.f32 %v39, %v287
  %v338 = vadd.f32 %v40, %v290
  %v339 = vadd.f32 %v41, %v295
  %v340 = vadd.f32 %v42, %v298
  %v341 = vadd.f32 %v43, %v303
  %v342 = vadd.f32 %v44, %v306
  %v343 = vadd.f32 %v45, %v311
  %v344 = vadd.f32 %v46, %v314
  %v345 = vadd.f32 %v47, %v319
  %v346 = vadd.f32 %v48, %v322
  %v347 = vadd.f32 %v49, %v327
  %v348 = vadd.f32 %v50, %v330
  %349 = vst [vmem:[#allocation2] sm:$0xff] %v333
  %350 = vst [vmem:[#allocation2 + $0x8] sm:$0xff] %v334
  %351 = vst [vmem:[#allocation2 + $0x10] sm:$0xff] %v335
  %352 = vst [vmem:[#allocation2 + $0x18] sm:$0xff] %v336
  %353 = vst [vmem:[#allocation2 + $0x20] sm:$0xff] %v337
  %354 = vst [vmem:[#allocation2 + $0x28] sm:$0xff] %v338
  %355 = vst [vmem:[#allocation2 + $0x30] sm:$0xff] %v339
  %356 = vst [vmem:[#allocation2 + $0x38] sm:$0xff] %v340
  %357 = vst [vmem:[#allocation2 + $0x40] sm:$0xff] %v341
  %358 = vst [vmem:[#allocation2 + $0x48] sm:$0xff] %v342
  %359 = vst [vmem:[#allocation2 + $0x50] sm:$0xff] %v343
  %360 = vst [vmem:[#allocation2 + $0x58] sm:$0xff] %v344
  %361 = vst [vmem:[#allocation2 + $0x60] sm:$0xff] %v345
  %362 = vst [vmem:[#allocation2 + $0x68] sm:$0xff] %v346
  %363 = vst [vmem:[#allocation2 + $0x70] sm:$0xff] %v347
  %364 = vst [vmem:[#allocation2 + $0x78] sm:$0xff] %v348
  // Predicated region
  $region18: #{unet_forward.15} parent=0 // pred_check
    %p365 = pneg %p15
  $region19: #{unet_forward.15} parent=0 // pred_check_branch
    %367 = sbr.rel (%p365) target = $region21
  $region20: #{unet_forward.15} parent=0 // pred_region
    %v368 = vld [vmem:[#allocation2] sm:$0xff]
    %v369 = vld [vmem:[#allocation2 + $0x8] sm:$0xff]
    %v370 = vld [vmem:[#allocation2 + $0x10] sm:$0xff]
    %v371 = vld [vmem:[#allocation2 + $0x18] sm:$0xff]
    %v372 = vld [vmem:[#allocation2 + $0x20] sm:$0xff]
    %v373 = vld [vmem:[#allocation2 + $0x28] sm:$0xff]
    %v374 = vld [vmem:[#allocation2 + $0x30] sm:$0xff]
    %v375 = vld [vmem:[#allocation2 + $0x38] sm:$0xff]
    %v376 = vld [vmem:[#allocation2 + $0x40] sm:$0xff]
    %v377 = vld [vmem:[#allocation2 + $0x48] sm:$0xff]
    %v378 = vld [vmem:[#allocation2 + $0x50] sm:$0xff]
    %v379 = vld [vmem:[#allocation2 + $0x58] sm:$0xff]
    %v380 = vld [vmem:[#allocation2 + $0x60] sm:$0xff]
    %v381 = vld [vmem:[#allocation2 + $0x68] sm:$0xff]
    %v382 = vld [vmem:[#allocation2 + $0x70] sm:$0xff]
    %v383 = vld [vmem:[#allocation2 + $0x78] sm:$0xff]
    %v384 = vld [vmem:[%s2] sm:$0x1]
    %v386 = vlaneseq
    %v387 = vshrl.u32 %v386, 7
    %v388 = vsub.s32 0, %v387
    %v389 = vrot.slane %v384, %v388
    %v391 = vadd.f32 %v368, %v389
    %v392 = vadd.f32 %v369, %v389
    %v393 = vadd.f32 %v370, %v389
    %v394 = vadd.f32 %v371, %v389
    %v395 = vadd.f32 %v372, %v389
    %v396 = vadd.f32 %v373, %v389
    %v397 = vadd.f32 %v374, %v389
    %v398 = vadd.f32 %v375, %v389
    %v399 = vadd.f32 %v376, %v389
    %v400 = vadd.f32 %v377, %v389
    %v401 = vadd.f32 %v378, %v389
    %v402 = vadd.f32 %v379, %v389
    %v403 = vadd.f32 %v380, %v389
    %v404 = vadd.f32 %v381, %v389
    %v405 = vadd.f32 %v382, %v389
    %v406 = vadd.f32 %v383, %v389
    %v407 = vmax.f32 %v391, 0.0
    %v408 = vmax.f32 %v392, 0.0
    %v409 = vmax.f32 %v393, 0.0
    %v410 = vmax.f32 %v394, 0.0
    %v411 = vmax.f32 %v395, 0.0
    %v412 = vmax.f32 %v396, 0.0
    %v413 = vmax.f32 %v397, 0.0
    %v414 = vmax.f32 %v398, 0.0
    %v415 = vmax.f32 %v399, 0.0
    %v416 = vmax.f32 %v400, 0.0
    %v417 = vmax.f32 %v401, 0.0
    %v418 = vmax.f32 %v402, 0.0
    %v419 = vmax.f32 %v403, 0.0
    %v420 = vmax.f32 %v404, 0.0
    %v421 = vmax.f32 %v405, 0.0
    %v422 = vmax.f32 %v406, 0.0
    %v423 = vpack.c.bf16 %v408, %v407
    %v424 = vpack.c.bf16 %v410, %v409
    %v425 = vpack.c.bf16 %v412, %v411
    %v426 = vpack.c.bf16 %v414, %v413
    %v427 = vpack.c.bf16 %v416, %v415
    %v428 = vpack.c.bf16 %v418, %v417
    %v429 = vpack.c.bf16 %v420, %v419
    %v430 = vpack.c.bf16 %v422, %v421
    %v439 = vunpack.c.l.b16 %v423
    %v440 = vunpack.c.h.b16 %v423
    %v441 = vunpack.c.l.b16 %v424
    %v442 = vunpack.c.h.b16 %v424
    %v443 = vunpack.c.l.b16 %v425
    %v444 = vunpack.c.h.b16 %v425
    %v445 = vunpack.c.l.b16 %v426
    %v446 = vunpack.c.h.b16 %v426
    %v447 = vunpack.c.l.b16 %v427
    %v448 = vunpack.c.h.b16 %v427
    %v449 = vunpack.c.l.b16 %v428
    %v450 = vunpack.c.h.b16 %v428
    %v451 = vunpack.c.l.b16 %v429
    %v452 = vunpack.c.h.b16 %v429
    %v453 = vunpack.c.l.b16 %v430
    %v454 = vunpack.c.h.b16 %v430
    %v455 = vpack.c.b16 %v439, %v439
    %v456 = vpack.c.b16 %v440, %v440
    %v457 = vpack.c.b16 %v441, %v441
    %v458 = vpack.c.b16 %v442, %v442
    %v459 = vpack.c.b16 %v443, %v443
    %v460 = vpack.c.b16 %v444, %v444
    %v461 = vpack.c.b16 %v445, %v445
    %v462 = vpack.c.b16 %v446, %v446
    %v463 = vpack.c.b16 %v447, %v447
    %v464 = vpack.c.b16 %v448, %v448
    %v465 = vpack.c.b16 %v449, %v449
    %v466 = vpack.c.b16 %v450, %v450
    %v467 = vpack.c.b16 %v451, %v451
    %v468 = vpack.c.b16 %v452, %v452
    %v469 = vpack.c.b16 %v453, %v453
    %v470 = vpack.c.b16 %v454, %v454
    %487 = vst [vmem:[%s3] sm:$0xf] %v455
    %488 = vst [vmem:[%s3 + $0x4] sm:$0xf] %v456
    %489 = vst [vmem:[%s3 + $0x8] sm:$0xf] %v457
    %490 = vst [vmem:[%s3 + $0xc] sm:$0xf] %v458
    %491 = vst [vmem:[%s3 + $0x10] sm:$0xf] %v459
    %492 = vst [vmem:[%s3 + $0x14] sm:$0xf] %v460
    %493 = vst [vmem:[%s3 + $0x18] sm:$0xf] %v461
    %494 = vst [vmem:[%s3 + $0x1c] sm:$0xf] %v462
    %495 = vst [vmem:[%s3 + $0x20] sm:$0xf] %v463
    %496 = vst [vmem:[%s3 + $0x24] sm:$0xf] %v464
    %497 = vst [vmem:[%s3 + $0x28] sm:$0xf] %v465
    %498 = vst [vmem:[%s3 + $0x2c] sm:$0xf] %v466
    %499 = vst [vmem:[%s3 + $0x30] sm:$0xf] %v467
    %500 = vst [vmem:[%s3 + $0x34] sm:$0xf] %v468
    %501 = vst [vmem:[%s3 + $0x38] sm:$0xf] %v469
    %502 = vst [vmem:[%s3 + $0x3c] sm:$0xf] %v470
  $region21: #{unet_forward.15} parent=0 // pred_fallthru
    _
  // Predicated region
  $region22: #{unet_forward.15} parent=0 // pred_check
    _
  $region23: #{unet_forward.15} parent=0 // pred_check_branch
    %504 = sbr.rel (0) target = $region25
  $region24: #{unet_forward.15} parent=0 // pred_region
    _
  $region25: #{unet_forward.15} parent=0 // pred_fallthru
    _
  // Predicated region
  $region26: #{unet_forward.15} parent=0 // pred_check
    _
  $region27: #{unet_forward.15} parent=0 // pred_check_branch
    %506 = sbr.rel (0) target = $region29
  $region28: #{unet_forward.15} parent=0 // pred_region
    _
  $region29: #{unet_forward.15} parent=0 // pred_fallthru
    _

// kernel: unet_forward.16
$region0: #{unet_forward.16}
  #allocation0 [shape = 'u32[]', space=smem, size = 0x4, offset = 0x4, fixed_abs, tag = 'smem constant byte address 0x4 - core index']
  #allocation1 [shape = 'u32[144,128]{1,0:T(1,128)}', space=vmem, size = 0x12000, scoped, tag = 'internal scratch']
  #allocation2 [shape = 'f32[128,128]{1,0:T(8,128)}', space=vmem, size = 0x10000, scoped, tag = 'scratch operand']
  %s0 = inlined_call_operand.vmem [shape: bf16[128,288], index: 0, kind: input, shape index: {}]
  %s1 = inlined_call_operand.vmem [shape: bf16[288,128], index: 1, kind: input, shape index: {}]
  %s2 = inlined_call_operand.vmem [shape: f32[1,128], index: 2, kind: input, shape index: {}]
  %s3 = inlined_call_operand.vmem [shape: bf16[128,128], index: 3, kind: output, shape index: {}]
  %s4 = sld [smem:[#allocation0]]
  $region30: #{unet_forward.16} parent=0
    _
  %s6 = ssub.s32 1, %s4
  %s7 = scalar_select 0, %s6, %s4
  // Predicated region
  $region2: #{unet_forward.16} parent=0 // pred_check
    _
  $region3: #{unet_forward.16} parent=0 // pred_check_branch
    %9 = sbr.rel (0) target = $region5
  $region4: #{unet_forward.16} parent=0 // pred_region
    _
  $region5: #{unet_forward.16} parent=0 // pred_fallthru
    _
  // Predicated region
  $region6: #{unet_forward.16} parent=0 // pred_check
    _
  $region7: #{unet_forward.16} parent=0 // pred_check_branch
    %11 = sbr.rel (0) target = $region9
  $region8: #{unet_forward.16} parent=0 // pred_region
    _
  $region9: #{unet_forward.16} parent=0 // pred_fallthru
    _
  // Predicated region
  $region10: #{unet_forward.16} parent=0 // pred_check
    _
  $region11: #{unet_forward.16} parent=0 // pred_check_branch
    %13 = sbr.rel (0) target = $region13
  $region12: #{unet_forward.16} parent=0 // pred_region
    _
  $region13: #{unet_forward.16} parent=0 // pred_fallthru
    _
  %p15 = scmp.eq.s32.totalorder 0, 0
  // Predicated region
  $region14: #{unet_forward.16} parent=0 // pred_check
    %p16 = pneg %p15
  $region15: #{unet_forward.16} parent=0 // pred_check_branch
    %18 = sbr.rel (%p16) target = $region17
  $region16: #{unet_forward.16} parent=0 // pred_region
    %19 = vst [vmem:[#allocation2] sm:$0xff] 0.0
    %20 = vst [vmem:[#allocation2 + $0x8] sm:$0xff] 0.0
    %21 = vst [vmem:[#allocation2 + $0x10] sm:$0xff] 0.0
    %22 = vst [vmem:[#allocation2 + $0x18] sm:$0xff] 0.0
    %23 = vst [vmem:[#allocation2 + $0x20] sm:$0xff] 0.0
    %24 = vst [vmem:[#allocation2 + $0x28] sm:$0xff] 0.0
    %25 = vst [vmem:[#allocation2 + $0x30] sm:$0xff] 0.0
    %26 = vst [vmem:[#allocation2 + $0x38] sm:$0xff] 0.0
    %27 = vst [vmem:[#allocation2 + $0x40] sm:$0xff] 0.0
    %28 = vst [vmem:[#allocation2 + $0x48] sm:$0xff] 0.0
    %29 = vst [vmem:[#allocation2 + $0x50] sm:$0xff] 0.0
    %30 = vst [vmem:[#allocation2 + $0x58] sm:$0xff] 0.0
    %31 = vst [vmem:[#allocation2 + $0x60] sm:$0xff] 0.0
    %32 = vst [vmem:[#allocation2 + $0x68] sm:$0xff] 0.0
    %33 = vst [vmem:[#allocation2 + $0x70] sm:$0xff] 0.0
    %34 = vst [vmem:[#allocation2 + $0x78] sm:$0xff] 0.0
  $region17: #{unet_forward.16} parent=0 // pred_fallthru
    _
  %v35 = vld [vmem:[#allocation2] sm:$0xff]
  %v36 = vld [vmem:[#allocation2 + $0x8] sm:$0xff]
  %v37 = vld [vmem:[#allocation2 + $0x10] sm:$0xff]
  %v38 = vld [vmem:[#allocation2 + $0x18] sm:$0xff]
  %v39 = vld [vmem:[#allocation2 + $0x20] sm:$0xff]
  %v40 = vld [vmem:[#allocation2 + $0x28] sm:$0xff]
  %v41 = vld [vmem:[#allocation2 + $0x30] sm:$0xff]
  %v42 = vld [vmem:[#allocation2 + $0x38] sm:$0xff]
  %v43 = vld [vmem:[#allocation2 + $0x40] sm:$0xff]
  %v44 = vld [vmem:[#allocation2 + $0x48] sm:$0xff]
  %v45 = vld [vmem:[#allocation2 + $0x50] sm:$0xff]
  %v46 = vld [vmem:[#allocation2 + $0x58] sm:$0xff]
  %v47 = vld [vmem:[#allocation2 + $0x60] sm:$0xff]
  %v48 = vld [vmem:[#allocation2 + $0x68] sm:$0xff]
  %v49 = vld [vmem:[#allocation2 + $0x70] sm:$0xff]
  %v50 = vld [vmem:[#allocation2 + $0x78] sm:$0xff]
  %v51 = vld [vmem:[%s0] sm:$0xff]
  %v52 = vld [vmem:[%s0 + $0x8] sm:$0xf]
  %v53 = vld [vmem:[%s0 + $0xc] sm:$0xff]
  %v54 = vld [vmem:[%s0 + $0x14] sm:$0xf]
  %v55 = vld [vmem:[%s0 + $0x18] sm:$0xff]
  %v56 = vld [vmem:[%s0 + $0x20] sm:$0xf]
  %v57 = vld [vmem:[%s0 + $0x24] sm:$0xff]
  %v58 = vld [vmem:[%s0 + $0x2c] sm:$0xf]
  %v59 = vld [vmem:[%s0 + $0x30] sm:$0xff]
  %v60 = vld [vmem:[%s0 + $0x38] sm:$0xf]
  %v61 = vld [vmem:[%s0 + $0x3c] sm:$0xff]
  %v62 = vld [vmem:[%s0 + $0x44] sm:$0xf]
  %v63 = vld [vmem:[%s0 + $0x48] sm:$0xff]
  %v64 = vld [vmem:[%s0 + $0x50] sm:$0xf]
  %v65 = vld [vmem:[%s0 + $0x54] sm:$0xff]
  %v66 = vld [vmem:[%s0 + $0x5c] sm:$0xf]
  %v67 = vld [vmem:[%s0 + $0x60] sm:$0xff]
  %v68 = vld [vmem:[%s0 + $0x68] sm:$0xf]
  %v69 = vld [vmem:[%s0 + $0x6c] sm:$0xff]
  %v70 = vld [vmem:[%s0 + $0x74] sm:$0xf]
  %v71 = vld [vmem:[%s0 + $0x78] sm:$0xff]
  %v72 = vld [vmem:[%s0 + $0x80] sm:$0xf]
  %v73 = vld [vmem:[%s0 + $0x84] sm:$0xff]
  %v74 = vld [vmem:[%s0 + $0x8c] sm:$0xf]
  %v75 = vld [vmem:[%s0 + $0x90] sm:$0xff]
  %v76 = vld [vmem:[%s0 + $0x98] sm:$0xf]
  %v77 = vld [vmem:[%s0 + $0x9c] sm:$0xff]
  %v78 = vld [vmem:[%s0 + $0xa4] sm:$0xf]
  %v79 = vld [vmem:[%s0 + $0xa8] sm:$0xff]
  %v80 = vld [vmem:[%s0 + $0xb0] sm:$0xf]
  %v81 = vld [vmem:[%s0 + $0xb4] sm:$0xff]
  %v82 = vld [vmem:[%s0 + $0xbc] sm:$0xf]
  %v83 = vld [vmem:[%s1] sm:$0xf]
  %v84 = vld [vmem:[%s1 + $0x4] sm:$0xf]
  %v85 = vld [vmem:[%s1 + $0x8] sm:$0xf]
  %v86 = vld [vmem:[%s1 + $0xc] sm:$0xf]
  %v87 = vld [vmem:[%s1 + $0x10] sm:$0xf]
  %v88 = vld [vmem:[%s1 + $0x14] sm:$0xf]
  %v89 = vld [vmem:[%s1 + $0x18] sm:$0xf]
  %v90 = vld [vmem:[%s1 + $0x1c] sm:$0xf]
  %v91 = vld [vmem:[%s1 + $0x20] sm:$0xf]
  %v92 = vld [vmem:[%s1 + $0x24] sm:$0xf]
  %v93 = vld [vmem:[%s1 + $0x28] sm:$0xf]
  %v94 = vld [vmem:[%s1 + $0x2c] sm:$0xf]
  %v95 = vld [vmem:[%s1 + $0x30] sm:$0xf]
  %v96 = vld [vmem:[%s1 + $0x34] sm:$0xf]
  %v97 = vld [vmem:[%s1 + $0x38] sm:$0xf]
  %v98 = vld [vmem:[%s1 + $0x3c] sm:$0xf]
  %v99 = vld [vmem:[%s1 + $0x40] sm:$0xf]
  %v100 = vld [vmem:[%s1 + $0x44] sm:$0xf]
  %v101 = vld [vmem:[%s1 + $0x48] sm:$0xf]
  %v102 = vld [vmem:[%s1 + $0x4c] sm:$0xf]
  %v103 = vld [vmem:[%s1 + $0x50] sm:$0xf]
  %v104 = vld [vmem:[%s1 + $0x54] sm:$0xf]
  %v105 = vld [vmem:[%s1 + $0x58] sm:$0xf]
  %v106 = vld [vmem:[%s1 + $0x5c] sm:$0xf]
  %v107 = vld [vmem:[%s1 + $0x60] sm:$0xf]
  %v108 = vld [vmem:[%s1 + $0x64] sm:$0xf]
  %v109 = vld [vmem:[%s1 + $0x68] sm:$0xf]
  %v110 = vld [vmem:[%s1 + $0x6c] sm:$0xf]
  %v111 = vld [vmem:[%s1 + $0x70] sm:$0xf]
  %v112 = vld [vmem:[%s1 + $0x74] sm:$0xf]
  %v113 = vld [vmem:[%s1 + $0x78] sm:$0xf]
  %v114 = vld [vmem:[%s1 + $0x7c] sm:$0xf]
  %v115 = vld [vmem:[%s1 + $0x80] sm:$0xf]
  %v116 = vld [vmem:[%s1 + $0x84] sm:$0xf]
  %v117 = vld [vmem:[%s1 + $0x88] sm:$0xf]
  %v118 = vld [vmem:[%s1 + $0x8c] sm:$0xf]
  %v151 = vunpack.c.l.b16 %v51
  %v152 = vunpack.c.h.b16 %v51
  %v153 = vunpack.c.l.b16 %v52
  %v154 = vunpack.c.l.b16 %v53
  %v155 = vunpack.c.h.b16 %v53
  %v156 = vunpack.c.l.b16 %v54
  %v157 = vunpack.c.l.b16 %v55
  %v158 = vunpack.c.h.b16 %v55
  %v159 = vunpack.c.l.b16 %v56
  %v160 = vunpack.c.l.b16 %v57
  %v161 = vunpack.c.h.b16 %v57
  %v162 = vunpack.c.l.b16 %v58
  %v163 = vunpack.c.l.b16 %v59
  %v164 = vunpack.c.h.b16 %v59
  %v165 = vunpack.c.l.b16 %v60
  %v166 = vunpack.c.l.b16 %v61
  %v167 = vunpack.c.h.b16 %v61
  %v168 = vunpack.c.l.b16 %v62
  %v169 = vunpack.c.l.b16 %v63
  %v170 = vunpack.c.h.b16 %v63
  %v171 = vunpack.c.l.b16 %v64
  %v172 = vunpack.c.l.b16 %v65
  %v173 = vunpack.c.h.b16 %v65
  %v174 = vunpack.c.l.b16 %v66
  %v175 = vunpack.c.l.b16 %v67
  %v176 = vunpack.c.h.b16 %v67
  %v177 = vunpack.c.l.b16 %v68
  %v178 = vunpack.c.l.b16 %v69
  %v179 = vunpack.c.h.b16 %v69
  %v180 = vunpack.c.l.b16 %v70
  %v181 = vunpack.c.l.b16 %v71
  %v182 = vunpack.c.h.b16 %v71
  %v183 = vunpack.c.l.b16 %v72
  %v184 = vunpack.c.l.b16 %v73
  %v185 = vunpack.c.h.b16 %v73
  %v186 = vunpack.c.l.b16 %v74
  %v187 = vunpack.c.l.b16 %v75
  %v188 = vunpack.c.h.b16 %v75
  %v189 = vunpack.c.l.b16 %v76
  %v190 = vunpack.c.l.b16 %v77
  %v191 = vunpack.c.h.b16 %v77
  %v192 = vunpack.c.l.b16 %v78
  %v193 = vunpack.c.l.b16 %v79
  %v194 = vunpack.c.h.b16 %v79
  %v195 = vunpack.c.l.b16 %v80
  %v196 = vunpack.c.l.b16 %v81
  %v197 = vunpack.c.h.b16 %v81
  %v198 = vunpack.c.l.b16 %v82
  %v199 = vpack.c.b16 %v154, %v151
  %v200 = vpack.c.b16 %v155, %v152
  %v201 = vpack.c.b16 %v156, %v153
  %v202 = vpack.c.b16 %v160, %v157
  %v203 = vpack.c.b16 %v161, %v158
  %v204 = vpack.c.b16 %v162, %v159
  %v205 = vpack.c.b16 %v166, %v163
  %v206 = vpack.c.b16 %v167, %v164
  %v207 = vpack.c.b16 %v168, %v165
  %v208 = vpack.c.b16 %v172, %v169
  %v209 = vpack.c.b16 %v173, %v170
  %v210 = vpack.c.b16 %v174, %v171
  %v211 = vpack.c.b16 %v178, %v175
  %v212 = vpack.c.b16 %v179, %v176
  %v213 = vpack.c.b16 %v180, %v177
  %v214 = vpack.c.b16 %v184, %v181
  %v215 = vpack.c.b16 %v185, %v182
  %v216 = vpack.c.b16 %v186, %v183
  %v217 = vpack.c.b16 %v190, %v187
  %v218 = vpack.c.b16 %v191, %v188
  %v219 = vpack.c.b16 %v192, %v189
  %v220 = vpack.c.b16 %v196, %v193
  %v221 = vpack.c.b16 %v197, %v194
  %v222 = vpack.c.b16 %v198, %v195
  %v275 = vunpack.c.l.b16 %v83
  %v276 = vunpack.c.l.b16 %v84
  %v277 = vunpack.c.l.b16 %v85
  %v278 = vunpack.c.l.b16 %v86
  %v279 = vunpack.c.l.b16 %v87
  %v280 = vunpack.c.l.b16 %v88
  %v281 = vunpack.c.l.b16 %v89
  %v282 = vunpack.c.l.b16 %v90
  %v283 = vunpack.c.l.b16 %v91
  %v284 = vunpack.c.l.b16 %v92
  %v285 = vunpack.c.l.b16 %v93
  %v286 = vunpack.c.l.b16 %v94
  %v287 = vunpack.c.l.b16 %v95
  %v288 = vunpack.c.l.b16 %v96
  %v289 = vunpack.c.l.b16 %v97
  %v290 = vunpack.c.l.b16 %v98
  %v291 = vunpack.c.l.b16 %v99
  %v292 = vunpack.c.l.b16 %v100
  %v293 = vunpack.c.l.b16 %v101
  %v294 = vunpack.c.l.b16 %v102
  %v295 = vunpack.c.l.b16 %v103
  %v296 = vunpack.c.l.b16 %v104
  %v297 = vunpack.c.l.b16 %v105
  %v298 = vunpack.c.l.b16 %v106
  %v299 = vunpack.c.l.b16 %v107
  %v300 = vunpack.c.l.b16 %v108
  %v301 = vunpack.c.l.b16 %v109
  %v302 = vunpack.c.l.b16 %v110
  %v303 = vunpack.c.l.b16 %v111
  %v304 = vunpack.c.l.b16 %v112
  %v305 = vunpack.c.l.b16 %v113
  %v306 = vunpack.c.l.b16 %v114
  %v307 = vunpack.c.l.b16 %v115
  %v308 = vunpack.c.l.b16 %v116
  %v309 = vunpack.c.l.b16 %v117
  %v310 = vunpack.c.l.b16 %v118
  %v311 = vpack.c.b16 %v276, %v275
  %v312 = vpack.c.b16 %v278, %v277
  %v313 = vpack.c.b16 %v280, %v279
  %v314 = vpack.c.b16 %v282, %v281
  %v315 = vpack.c.b16 %v284, %v283
  %v316 = vpack.c.b16 %v286, %v285
  %v317 = vpack.c.b16 %v288, %v287
  %v318 = vpack.c.b16 %v290, %v289
  %v319 = vpack.c.b16 %v292, %v291
  %v320 = vpack.c.b16 %v294, %v293
  %v321 = vpack.c.b16 %v296, %v295
  %v322 = vpack.c.b16 %v298, %v297
  %v323 = vpack.c.b16 %v300, %v299
  %v324 = vpack.c.b16 %v302, %v301
  %v325 = vpack.c.b16 %v304, %v303
  %v326 = vpack.c.b16 %v306, %v305
  %v327 = vpack.c.b16 %v308, %v307
  %v328 = vpack.c.b16 %v310, %v309
  %vm347 = vcmask 261120
  %v349 = vsel %vm347, %v201, 0
  %v352 = vsel %vm347, %v204, 0
  %v355 = vsel %vm347, %v207, 0
  %v358 = vsel %vm347, %v210, 0
  %v361 = vsel %vm347, %v213, 0
  %v364 = vsel %vm347, %v216, 0
  %v367 = vsel %vm347, %v219, 0
  %v370 = vsel %vm347, %v222, 0
  %372 = vmatprep.subr.bf16.mxu0 0
  %373 = vmatpush1.bf16.msra.mxu0 %v318
  %374 = vmatprep.subr.bf16.mxu0 0
  %375 = vmatpush1.bf16.msra.mxu0 %v317
  %376 = vmatprep.subr.bf16.mxu0 0
  %377 = vmatpush1.bf16.msra.mxu0 %v316
  %378 = vmatprep.subr.bf16.mxu0 0
  %379 = vmatpush1.bf16.msra.mxu0 %v315
  %380 = vmatprep.subr.bf16.mxu0 0
  %381 = vmatpush1.bf16.msra.mxu0 %v314
  %382 = vmatprep.subr.bf16.mxu0 0
  %383 = vmatpush1.bf16.msra.mxu0 %v313
  %384 = vmatprep.subr.bf16.mxu0 0
  %385 = vmatpush1.bf16.msra.mxu0 %v312
  %386 = vmatprep.subr.bf16.mxu0 0
  %387 = vmatpush1.bf16.msra.mxu0 %v311
  %388 = vmatprep.subr.bf16.mxu0 0
  %389 = vmatpush2.bf16.msra.mxu0 %v326
  %390 = vmatprep.subr.bf16.mxu0 0
  %391 = vmatpush2.bf16.msra.mxu0 %v325
  %392 = vmatprep.subr.bf16.mxu0 0
  %393 = vmatpush2.bf16.msra.mxu0 %v324
  %394 = vmatprep.subr.bf16.mxu0 0
  %395 = vmatpush2.bf16.msra.mxu0 %v323
  %396 = vmatprep.subr.bf16.mxu0 0
  %397 = vmatpush2.bf16.msra.mxu0 %v322
  %398 = vmatprep.subr.bf16.mxu0 0
  %399 = vmatpush2.bf16.msra.mxu0 %v321
  %400 = vmatprep.subr.bf16.mxu0 0
  %401 = vmatpush2.bf16.msra.mxu0 %v320
  %402 = vmatprep.subr.bf16.mxu0 0
  %403 = vmatpush2.bf16.msra.mxu0 %v319
  %404 = vmatprep.mubr.bf16.mxu0 %v200
  %405 = vmatmul.mubr.bf16.gmra.mxu0 %v199
  %v406 = vpop.f32.mrf.mxu0
  %v407 = vadd.f32 0.0, %v406
  %v408 = vpop.f32.mrf.mxu0
  %v409 = vpop.f32.mrf.mxu0
  %v410 = vadd.f32 0.0, %v409
  %v411 = vpop.f32.mrf.mxu0
  %412 = vmatprep.mubr.bf16.mxu0 %v203
  %413 = vmatmul.mubr.bf16.gmra.mxu0 %v202
  %v414 = vpop.f32.mrf.mxu0
  %v415 = vadd.f32 0.0, %v414
  %v416 = vpop.f32.mrf.mxu0
  %v417 = vpop.f32.mrf.mxu0
  %v418 = vadd.f32 0.0, %v417
  %v419 = vpop.f32.mrf.mxu0
  %420 = vmatprep.mubr.bf16.mxu0 %v206
  %421 = vmatmul.mubr.bf16.gmra.mxu0 %v205
  %v422 = vpop.f32.mrf.mxu0
  %v423 = vadd.f32 0.0, %v422
  %v424 = vpop.f32.mrf.mxu0
  %v425 = vpop.f32.mrf.mxu0
  %v426 = vadd.f32 0.0, %v425
  %v427 = vpop.f32.mrf.mxu0
  %428 = vmatprep.mubr.bf16.mxu0 %v209
  %429 = vmatmul.mubr.bf16.gmra.mxu0 %v208
  %v430 = vpop.f32.mrf.mxu0
  %v431 = vadd.f32 0.0, %v430
  %v432 = vpop.f32.mrf.mxu0
  %v433 = vpop.f32.mrf.mxu0
  %v434 = vadd.f32 0.0, %v433
  %v435 = vpop.f32.mrf.mxu0
  %436 = vmatprep.mubr.bf16.mxu0 %v212
  %437 = vmatmul.mubr.bf16.gmra.mxu0 %v211
  %v438 = vpop.f32.mrf.mxu0
  %v439 = vadd.f32 0.0, %v438
  %v440 = vpop.f32.mrf.mxu0
  %v441 = vpop.f32.mrf.mxu0
  %v442 = vadd.f32 0.0, %v441
  %v443 = vpop.f32.mrf.mxu0
  %444 = vmatprep.mubr.bf16.mxu0 %v215
  %445 = vmatmul.mubr.bf16.gmra.mxu0 %v214
  %v446 = vpop.f32.mrf.mxu0
  %v447 = vadd.f32 0.0, %v446
  %v448 = vpop.f32.mrf.mxu0
  %v449 = vpop.f32.mrf.mxu0
  %v450 = vadd.f32 0.0, %v449
  %v451 = vpop.f32.mrf.mxu0
  %452 = vmatprep.mubr.bf16.mxu0 %v218
  %453 = vmatmul.mubr.bf16.gmra.mxu0 %v217
  %v454 = vpop.f32.mrf.mxu0
  %v455 = vadd.f32 0.0, %v454
  %v456 = vpop.f32.mrf.mxu0
  %v457 = vpop.f32.mrf.mxu0
  %v458 = vadd.f32 0.0, %v457
  %v459 = vpop.f32.mrf.mxu0
  %460 = vmatprep.mubr.bf16.mxu0 %v221
  %461 = vmatmul.mubr.bf16.gmra.mxu0 %v220
  %v462 = vpop.f32.mrf.mxu0
  %v463 = vadd.f32 0.0, %v462
  %v464 = vpop.f32.mrf.mxu0
  %v465 = vpop.f32.mrf.mxu0
  %v466 = vadd.f32 0.0, %v465
  %v467 = vpop.f32.mrf.mxu0
  %468 = vdwg.mxu0
  %469 = vmatprep.subr.bf16.mxu0 0
  %470 = vmatpush1.bf16.msra.mxu0 0
  %471 = vmatprep.subr.bf16.mxu0 0
  %472 = vmatpush1.bf16.msra.mxu0 0
  %473 = vmatprep.subr.bf16.mxu0 0
  %474 = vmatpush1.bf16.msra.mxu0 0
  %475 = vmatprep.subr.bf16.mxu0 0
  %476 = vmatpush1.bf16.msra.mxu0 0
  %477 = vmatprep.subr.bf16.mxu0 0
  %478 = vmatpush1.bf16.msra.mxu0 0
  %479 = vmatprep.subr.bf16.mxu0 0
  %480 = vmatpush1.bf16.msra.mxu0 0
  %481 = vmatprep.subr.bf16.mxu0 0
  %482 = vmatpush1.bf16.msra.mxu0 %v328
  %483 = vmatprep.subr.bf16.mxu0 0
  %484 = vmatpush1.bf16.msra.mxu0 %v327
  %485 = vmatprep.subr.bf16.mxu0 0
  %486 = vmatpush2.bf16.msra.mxu0 0
  %487 = vmatprep.subr.bf16.mxu0 0
  %488 = vmatpush2.bf16.msra.mxu0 0
  %489 = vmatprep.subr.bf16.mxu0 0
  %490 = vmatpush2.bf16.msra.mxu0 0
  %491 = vmatprep.subr.bf16.mxu0 0
  %492 = vmatpush2.bf16.msra.mxu0 0
  %493 = vmatprep.subr.bf16.mxu0 0
  %494 = vmatpush2.bf16.msra.mxu0 0
  %495 = vmatprep.subr.bf16.mxu0 0
  %496 = vmatpush2.bf16.msra.mxu0 0
  %497 = vmatprep.subr.bf16.mxu0 0
  %498 = vmatpush2.bf16.msra.mxu0 0
  %499 = vmatprep.subr.bf16.mxu0 0
  %500 = vmatpush2.bf16.msra.mxu0 0
  %501 = vmatprep.mubr.bf16.mxu0 0
  %502 = vmatmul.mubr.bf16.gmra.mxu0 %v349
  %v503 = vpop.f32.mrf.mxu0
  %v504 = vadd.f32 %v407, %v503
  %v505 = vpop.f32.mrf.mxu0
  %v506 = vpop.f32.mrf.mxu0
  %v507 = vadd.f32 %v410, %v506
  %v508 = vpop.f32.mrf.mxu0
  %509 = vmatprep.mubr.bf16.mxu0 0
  %510 = vmatmul.mubr.bf16.gmra.mxu0 %v352
  %v511 = vpop.f32.mrf.mxu0
  %v512 = vadd.f32 %v415, %v511
  %v513 = vpop.f32.mrf.mxu0
  %v514 = vpop.f32.mrf.mxu0
  %v515 = vadd.f32 %v418, %v514
  %v516 = vpop.f32.mrf.mxu0
  %517 = vmatprep.mubr.bf16.mxu0 0
  %518 = vmatmul.mubr.bf16.gmra.mxu0 %v355
  %v519 = vpop.f32.mrf.mxu0
  %v520 = vadd.f32 %v423, %v519
  %v521 = vpop.f32.mrf.mxu0
  %v522 = vpop.f32.mrf.mxu0
  %v523 = vadd.f32 %v426, %v522
  %v524 = vpop.f32.mrf.mxu0
  %525 = vmatprep.mubr.bf16.mxu0 0
  %526 = vmatmul.mubr.bf16.gmra.mxu0 %v358
  %v527 = vpop.f32.mrf.mxu0
  %v528 = vadd.f32 %v431, %v527
  %v529 = vpop.f32.mrf.mxu0
  %v530 = vpop.f32.mrf.mxu0
  %v531 = vadd.f32 %v434, %v530
  %v532 = vpop.f32.mrf.mxu0
  %533 = vmatprep.mubr.bf16.mxu0 0
  %534 = vmatmul.mubr.bf16.gmra.mxu0 %v361
  %v535 = vpop.f32.mrf.mxu0
  %v536 = vadd.f32 %v439, %v535
  %v537 = vpop.f32.mrf.mxu0
  %v538 = vpop.f32.mrf.mxu0
  %v539 = vadd.f32 %v442, %v538
  %v540 = vpop.f32.mrf.mxu0
  %541 = vmatprep.mubr.bf16.mxu0 0
  %542 = vmatmul.mubr.bf16.gmra.mxu0 %v364
  %v543 = vpop.f32.mrf.mxu0
  %v544 = vadd.f32 %v447, %v543
  %v545 = vpop.f32.mrf.mxu0
  %v546 = vpop.f32.mrf.mxu0
  %v547 = vadd.f32 %v450, %v546
  %v548 = vpop.f32.mrf.mxu0
  %549 = vmatprep.mubr.bf16.mxu0 0
  %550 = vmatmul.mubr.bf16.gmra.mxu0 %v367
  %v551 = vpop.f32.mrf.mxu0
  %v552 = vadd.f32 %v455, %v551
  %v553 = vpop.f32.mrf.mxu0
  %v554 = vpop.f32.mrf.mxu0
  %v555 = vadd.f32 %v458, %v554
  %v556 = vpop.f32.mrf.mxu0
  %557 = vmatprep.mubr.bf16.mxu0 0
  %558 = vmatmul.mubr.bf16.gmra.mxu0 %v370
  %v559 = vpop.f32.mrf.mxu0
  %v560 = vadd.f32 %v463, %v559
  %v561 = vpop.f32.mrf.mxu0
  %v562 = vpop.f32.mrf.mxu0
  %v563 = vadd.f32 %v466, %v562
  %v564 = vpop.f32.mrf.mxu0
  %565 = vdwg.mxu0
  %v566 = vadd.f32 %v35, %v504
  %v567 = vadd.f32 %v36, %v507
  %v568 = vadd.f32 %v37, %v512
  %v569 = vadd.f32 %v38, %v515
  %v570 = vadd.f32 %v39, %v520
  %v571 = vadd.f32 %v40, %v523
  %v572 = vadd.f32 %v41, %v528
  %v573 = vadd.f32 %v42, %v531
  %v574 = vadd.f32 %v43, %v536
  %v575 = vadd.f32 %v44, %v539
  %v576 = vadd.f32 %v45, %v544
  %v577 = vadd.f32 %v46, %v547
  %v578 = vadd.f32 %v47, %v552
  %v579 = vadd.f32 %v48, %v555
  %v580 = vadd.f32 %v49, %v560
  %v581 = vadd.f32 %v50, %v563
  %582 = vst [vmem:[#allocation2] sm:$0xff] %v566
  %583 = vst [vmem:[#allocation2 + $0x8] sm:$0xff] %v567
  %584 = vst [vmem:[#allocation2 + $0x10] sm:$0xff] %v568
  %585 = vst [vmem:[#allocation2 + $0x18] sm:$0xff] %v569
  %586 = vst [vmem:[#allocation2 + $0x20] sm:$0xff] %v570
  %587 = vst [vmem:[#allocation2 + $0x28] sm:$0xff] %v571
  %588 = vst [vmem:[#allocation2 + $0x30] sm:$0xff] %v572
  %589 = vst [vmem:[#allocation2 + $0x38] sm:$0xff] %v573
  %590 = vst [vmem:[#allocation2 + $0x40] sm:$0xff] %v574
  %591 = vst [vmem:[#allocation2 + $0x48] sm:$0xff] %v575
  %592 = vst [vmem:[#allocation2 + $0x50] sm:$0xff] %v576
  %593 = vst [vmem:[#allocation2 + $0x58] sm:$0xff] %v577
  %594 = vst [vmem:[#allocation2 + $0x60] sm:$0xff] %v578
  %595 = vst [vmem:[#allocation2 + $0x68] sm:$0xff] %v579
  %596 = vst [vmem:[#allocation2 + $0x70] sm:$0xff] %v580
  %597 = vst [vmem:[#allocation2 + $0x78] sm:$0xff] %v581
  // Predicated region
  $region18: #{unet_forward.16} parent=0 // pred_check
    %p598 = pneg %p15
  $region19: #{unet_forward.16} parent=0 // pred_check_branch
    %600 = sbr.rel (%p598) target = $region21
  $region20: #{unet_forward.16} parent=0 // pred_region
    %v601 = vld [vmem:[#allocation2] sm:$0xff]
    %v602 = vld [vmem:[#allocation2 + $0x8] sm:$0xff]
    %v603 = vld [vmem:[#allocation2 + $0x10] sm:$0xff]
    %v604 = vld [vmem:[#allocation2 + $0x18] sm:$0xff]
    %v605 = vld [vmem:[#allocation2 + $0x20] sm:$0xff]
    %v606 = vld [vmem:[#allocation2 + $0x28] sm:$0xff]
    %v607 = vld [vmem:[#allocation2 + $0x30] sm:$0xff]
    %v608 = vld [vmem:[#allocation2 + $0x38] sm:$0xff]
    %v609 = vld [vmem:[#allocation2 + $0x40] sm:$0xff]
    %v610 = vld [vmem:[#allocation2 + $0x48] sm:$0xff]
    %v611 = vld [vmem:[#allocation2 + $0x50] sm:$0xff]
    %v612 = vld [vmem:[#allocation2 + $0x58] sm:$0xff]
    %v613 = vld [vmem:[#allocation2 + $0x60] sm:$0xff]
    %v614 = vld [vmem:[#allocation2 + $0x68] sm:$0xff]
    %v615 = vld [vmem:[#allocation2 + $0x70] sm:$0xff]
    %v616 = vld [vmem:[#allocation2 + $0x78] sm:$0xff]
    %v617 = vld [vmem:[%s2] sm:$0x1]
    %v619 = vlaneseq
    %v620 = vshrl.u32 %v619, 7
    %v621 = vsub.s32 0, %v620
    %v622 = vrot.slane %v617, %v621
    %v624 = vadd.f32 %v601, %v622
    %v625 = vadd.f32 %v602, %v622
    %v626 = vadd.f32 %v603, %v622
    %v627 = vadd.f32 %v604, %v622
    %v628 = vadd.f32 %v605, %v622
    %v629 = vadd.f32 %v606, %v622
    %v630 = vadd.f32 %v607, %v622
    %v631 = vadd.f32 %v608, %v622
    %v632 = vadd.f32 %v609, %v622
    %v633 = vadd.f32 %v610, %v622
    %v634 = vadd.f32 %v611, %v622
    %v635 = vadd.f32 %v612, %v622
    %v636 = vadd.f32 %v613, %v622
    %v637 = vadd.f32 %v614, %v622
    %v638 = vadd.f32 %v615, %v622
    %v639 = vadd.f32 %v616, %v622
    %v640 = vpack.c.bf16 %v625, %v624
    %v641 = vpack.c.bf16 %v627, %v626
    %v642 = vpack.c.bf16 %v629, %v628
    %v643 = vpack.c.bf16 %v631, %v630
    %v644 = vpack.c.bf16 %v633, %v632
    %v645 = vpack.c.bf16 %v635, %v634
    %v646 = vpack.c.bf16 %v637, %v636
    %v647 = vpack.c.bf16 %v639, %v638
    %v656 = vunpack.c.l.b16 %v640
    %v657 = vunpack.c.h.b16 %v640
    %v658 = vunpack.c.l.b16 %v641
    %v659 = vunpack.c.h.b16 %v641
    %v660 = vunpack.c.l.b16 %v642
    %v661 = vunpack.c.h.b16 %v642
    %v662 = vunpack.c.l.b16 %v643
    %v663 = vunpack.c.h.b16 %v643
    %v664 = vunpack.c.l.b16 %v644
    %v665 = vunpack.c.h.b16 %v644
    %v666 = vunpack.c.l.b16 %v645
    %v667 = vunpack.c.h.b16 %v645
    %v668 = vunpack.c.l.b16 %v646
    %v669 = vunpack.c.h.b16 %v646
    %v670 = vunpack.c.l.b16 %v647
    %v671 = vunpack.c.h.b16 %v647
    %v672 = vpack.c.b16 %v656, %v656
    %v673 = vpack.c.b16 %v657, %v657
    %v674 = vpack.c.b16 %v658, %v658
    %v675 = vpack.c.b16 %v659, %v659
    %v676 = vpack.c.b16 %v660, %v660
    %v677 = vpack.c.b16 %v661, %v661
    %v678 = vpack.c.b16 %v662, %v662
    %v679 = vpack.c.b16 %v663, %v663
    %v680 = vpack.c.b16 %v664, %v664
    %v681 = vpack.c.b16 %v665, %v665
    %v682 = vpack.c.b16 %v666, %v666
    %v683 = vpack.c.b16 %v667, %v667
    %v684 = vpack.c.b16 %v668, %v668
    %v685 = vpack.c.b16 %v669, %v669
    %v686 = vpack.c.b16 %v670, %v670
    %v687 = vpack.c.b16 %v671, %v671
    %704 = vst [vmem:[%s3] sm:$0xf] %v672
    %705 = vst [vmem:[%s3 + $0x4] sm:$0xf] %v673
    %706 = vst [vmem:[%s3 + $0x8] sm:$0xf] %v674
    %707 = vst [vmem:[%s3 + $0xc] sm:$0xf] %v675
    %708 = vst [vmem:[%s3 + $0x10] sm:$0xf] %v676
    %709 = vst [vmem:[%s3 + $0x14] sm:$0xf] %v677
    %710 = vst [vmem:[%s3 + $0x18] sm:$0xf] %v678
    %711 = vst [vmem:[%s3 + $0x1c] sm:$0xf] %v679
    %712 = vst [vmem:[%s3 + $0x20] sm:$0xf] %v680
    %713 = vst [vmem:[%s3 + $0x24] sm:$0xf] %v681
    %714 = vst [vmem:[%s3 + $0x28] sm:$0xf] %v682
    %715 = vst [vmem:[%s3 + $0x2c] sm:$0xf] %v683
    %716 = vst [vmem:[%s3 + $0x30] sm:$0xf] %v684
    %717 = vst [vmem:[%s3 + $0x34] sm:$0xf] %v685
    %718 = vst [vmem:[%s3 + $0x38] sm:$0xf] %v686
    %719 = vst [vmem:[%s3 + $0x3c] sm:$0xf] %v687
  $region21: #{unet_forward.16} parent=0 // pred_fallthru
    _
  // Predicated region
  $region22: #{unet_forward.16} parent=0 // pred_check
    _
  $region23: #{unet_forward.16} parent=0 // pred_check_branch
    %721 = sbr.rel (0) target = $region25
  $region24: #{unet_forward.16} parent=0 // pred_region
    _
  $region25: #{unet_forward.16} parent=0 // pred_fallthru
    _
  // Predicated region
  $region26: #{unet_forward.16} parent=0 // pred_check
    _
  $region27: #{unet_forward.16} parent=0 // pred_check_branch
    %723 = sbr.rel (0) target = $region29
  $region28: #{unet_forward.16} parent=0 // pred_region
    _
  $region29: #{unet_forward.16} parent=0 // pred_fallthru
    _

// kernel: unet_forward.17
$region0: #{unet_forward.17}
  #allocation0 [shape = 'u32[]', space=smem, size = 0x4, offset = 0x4, fixed_abs, tag = 'smem constant byte address 0x4 - core index']
  #allocation1 [shape = 'u32[144,128]{1,0:T(1,128)}', space=vmem, size = 0x12000, scoped, tag = 'internal scratch']
  #allocation2 [shape = 'f32[32,128]{1,0:T(8,128)}', space=vmem, size = 0x4000, scoped, tag = 'scratch operand']
  %s0 = inlined_call_operand.vmem [shape: bf16[32,288], index: 0, kind: input, shape index: {}]
  %s1 = inlined_call_operand.vmem [shape: bf16[288,128], index: 1, kind: input, shape index: {}]
  %s2 = inlined_call_operand.vmem [shape: f32[1,128], index: 2, kind: input, shape index: {}]
  %s3 = inlined_call_operand.vmem [shape: bf16[32,128], index: 3, kind: output, shape index: {}]
  %s4 = sld [smem:[#allocation0]]
  $region30: #{unet_forward.17} parent=0
    _
  %s6 = ssub.s32 1, %s4
  %s7 = scalar_select 0, %s6, %s4
  // Predicated region
  $region2: #{unet_forward.17} parent=0 // pred_check
    _
  $region3: #{unet_forward.17} parent=0 // pred_check_branch
    %9 = sbr.rel (0) target = $region5
  $region4: #{unet_forward.17} parent=0 // pred_region
    _
  $region5: #{unet_forward.17} parent=0 // pred_fallthru
    _
  // Predicated region
  $region6: #{unet_forward.17} parent=0 // pred_check
    _
  $region7: #{unet_forward.17} parent=0 // pred_check_branch
    %11 = sbr.rel (0) target = $region9
  $region8: #{unet_forward.17} parent=0 // pred_region
    _
  $region9: #{unet_forward.17} parent=0 // pred_fallthru
    _
  // Predicated region
  $region10: #{unet_forward.17} parent=0 // pred_check
    _
  $region11: #{unet_forward.17} parent=0 // pred_check_branch
    %13 = sbr.rel (0) target = $region13
  $region12: #{unet_forward.17} parent=0 // pred_region
    _
  $region13: #{unet_forward.17} parent=0 // pred_fallthru
    _
  %p15 = scmp.eq.s32.totalorder 0, 0
  // Predicated region
  $region14: #{unet_forward.17} parent=0 // pred_check
    %p16 = pneg %p15
  $region15: #{unet_forward.17} parent=0 // pred_check_branch
    %18 = sbr.rel (%p16) target = $region17
  $region16: #{unet_forward.17} parent=0 // pred_region
    %19 = vst [vmem:[#allocation2] sm:$0xff] 0.0
    %20 = vst [vmem:[#allocation2 + $0x8] sm:$0xff] 0.0
    %21 = vst [vmem:[#allocation2 + $0x10] sm:$0xff] 0.0
    %22 = vst [vmem:[#allocation2 + $0x18] sm:$0xff] 0.0
  $region17: #{unet_forward.17} parent=0 // pred_fallthru
    _
  %v23 = vld [vmem:[#allocation2] sm:$0xff]
  %v24 = vld [vmem:[#allocation2 + $0x8] sm:$0xff]
  %v25 = vld [vmem:[#allocation2 + $0x10] sm:$0xff]
  %v26 = vld [vmem:[#allocation2 + $0x18] sm:$0xff]
  %v27 = vld [vmem:[%s0] sm:$0xff]
  %v28 = vld [vmem:[%s0 + $0x8] sm:$0xf]
  %v29 = vld [vmem:[%s0 + $0xc] sm:$0xff]
  %v30 = vld [vmem:[%s0 + $0x14] sm:$0xf]
  %v31 = vld [vmem:[%s0 + $0x18] sm:$0xff]
  %v32 = vld [vmem:[%s0 + $0x20] sm:$0xf]
  %v33 = vld [vmem:[%s0 + $0x24] sm:$0xff]
  %v34 = vld [vmem:[%s0 + $0x2c] sm:$0xf]
  %v35 = vld [vmem:[%s1] sm:$0xf]
  %v36 = vld [vmem:[%s1 + $0x4] sm:$0xf]
  %v37 = vld [vmem:[%s1 + $0x8] sm:$0xf]
  %v38 = vld [vmem:[%s1 + $0xc] sm:$0xf]
  %v39 = vld [vmem:[%s1 + $0x10] sm:$0xf]
  %v40 = vld [vmem:[%s1 + $0x14] sm:$0xf]
  %v41 = vld [vmem:[%s1 + $0x18] sm:$0xf]
  %v42 = vld [vmem:[%s1 + $0x1c] sm:$0xf]
  %v43 = vld [vmem:[%s1 + $0x20] sm:$0xf]
  %v44 = vld [vmem:[%s1 + $0x24] sm:$0xf]
  %v45 = vld [vmem:[%s1 + $0x28] sm:$0xf]
  %v46 = vld [vmem:[%s1 + $0x2c] sm:$0xf]
  %v47 = vld [vmem:[%s1 + $0x30] sm:$0xf]
  %v48 = vld [vmem:[%s1 + $0x34] sm:$0xf]
  %v49 = vld [vmem:[%s1 + $0x38] sm:$0xf]
  %v50 = vld [vmem:[%s1 + $0x3c] sm:$0xf]
  %v51 = vld [vmem:[%s1 + $0x40] sm:$0xf]
  %v52 = vld [vmem:[%s1 + $0x44] sm:$0xf]
  %v53 = vld [vmem:[%s1 + $0x48] sm:$0xf]
  %v54 = vld [vmem:[%s1 + $0x4c] sm:$0xf]
  %v55 = vld [vmem:[%s1 + $0x50] sm:$0xf]
  %v56 = vld [vmem:[%s1 + $0x54] sm:$0xf]
  %v57 = vld [vmem:[%s1 + $0x58] sm:$0xf]
  %v58 = vld [vmem:[%s1 + $0x5c] sm:$0xf]
  %v59 = vld [vmem:[%s1 + $0x60] sm:$0xf]
  %v60 = vld [vmem:[%s1 + $0x64] sm:$0xf]
  %v61 = vld [vmem:[%s1 + $0x68] sm:$0xf]
  %v62 = vld [vmem:[%s1 + $0x6c] sm:$0xf]
  %v63 = vld [vmem:[%s1 + $0x70] sm:$0xf]
  %v64 = vld [vmem:[%s1 + $0x74] sm:$0xf]
  %v65 = vld [vmem:[%s1 + $0x78] sm:$0xf]
  %v66 = vld [vmem:[%s1 + $0x7c] sm:$0xf]
  %v67 = vld [vmem:[%s1 + $0x80] sm:$0xf]
  %v68 = vld [vmem:[%s1 + $0x84] sm:$0xf]
  %v69 = vld [vmem:[%s1 + $0x88] sm:$0xf]
  %v70 = vld [vmem:[%s1 + $0x8c] sm:$0xf]
  %v79 = vunpack.c.l.b16 %v27
  %v80 = vunpack.c.h.b16 %v27
  %v81 = vunpack.c.l.b16 %v28
  %v82 = vunpack.c.l.b16 %v29
  %v83 = vunpack.c.h.b16 %v29
  %v84 = vunpack.c.l.b16 %v30
  %v85 = vunpack.c.l.b16 %v31
  %v86 = vunpack.c.h.b16 %v31
  %v87 = vunpack.c.l.b16 %v32
  %v88 = vunpack.c.l.b16 %v33
  %v89 = vunpack.c.h.b16 %v33
  %v90 = vunpack.c.l.b16 %v34
  %v91 = vpack.c.b16 %v82, %v79
  %v92 = vpack.c.b16 %v83, %v80
  %v93 = vpack.c.b16 %v84, %v81
  %v94 = vpack.c.b16 %v88, %v85
  %v95 = vpack.c.b16 %v89, %v86
  %v96 = vpack.c.b16 %v90, %v87
  %v137 = vunpack.c.l.b16 %v35
  %v138 = vunpack.c.l.b16 %v36
  %v139 = vunpack.c.l.b16 %v37
  %v140 = vunpack.c.l.b16 %v38
  %v141 = vunpack.c.l.b16 %v39
  %v142 = vunpack.c.l.b16 %v40
  %v143 = vunpack.c.l.b16 %v41
  %v144 = vunpack.c.l.b16 %v42
  %v145 = vunpack.c.l.b16 %v43
  %v146 = vunpack.c.l.b16 %v44
  %v147 = vunpack.c.l.b16 %v45
  %v148 = vunpack.c.l.b16 %v46
  %v149 = vunpack.c.l.b16 %v47
  %v150 = vunpack.c.l.b16 %v48
  %v151 = vunpack.c.l.b16 %v49
  %v152 = vunpack.c.l.b16 %v50
  %v153 = vunpack.c.l.b16 %v51
  %v154 = vunpack.c.l.b16 %v52
  %v155 = vunpack.c.l.b16 %v53
  %v156 = vunpack.c.l.b16 %v54
  %v157 = vunpack.c.l.b16 %v55
  %v158 = vunpack.c.l.b16 %v56
  %v159 = vunpack.c.l.b16 %v57
  %v160 = vunpack.c.l.b16 %v58
  %v161 = vunpack.c.l.b16 %v59
  %v162 = vunpack.c.l.b16 %v60
  %v163 = vunpack.c.l.b16 %v61
  %v164 = vunpack.c.l.b16 %v62
  %v165 = vunpack.c.l.b16 %v63
  %v166 = vunpack.c.l.b16 %v64
  %v167 = vunpack.c.l.b16 %v65
  %v168 = vunpack.c.l.b16 %v66
  %v169 = vunpack.c.l.b16 %v67
  %v170 = vunpack.c.l.b16 %v68
  %v171 = vunpack.c.l.b16 %v69
  %v172 = vunpack.c.l.b16 %v70
  %v173 = vpack.c.b16 %v138, %v137
  %v174 = vpack.c.b16 %v140, %v139
  %v175 = vpack.c.b16 %v142, %v141
  %v176 = vpack.c.b16 %v144, %v143
  %v177 = vpack.c.b16 %v146, %v145
  %v178 = vpack.c.b16 %v148, %v147
  %v179 = vpack.c.b16 %v150, %v149
  %v180 = vpack.c.b16 %v152, %v151
  %v181 = vpack.c.b16 %v154, %v153
  %v182 = vpack.c.b16 %v156, %v155
  %v183 = vpack.c.b16 %v158, %v157
  %v184 = vpack.c.b16 %v160, %v159
  %v185 = vpack.c.b16 %v162, %v161
  %v186 = vpack.c.b16 %v164, %v163
  %v187 = vpack.c.b16 %v166, %v165
  %v188 = vpack.c.b16 %v168, %v167
  %v189 = vpack.c.b16 %v170, %v169
  %v190 = vpack.c.b16 %v172, %v171
  %vm209 = vcmask 261120
  %v211 = vsel %vm209, %v93, 0
  %v214 = vsel %vm209, %v96, 0
  %216 = vmatprep.subr.bf16.mxu0 0
  %217 = vmatpush1.bf16.msra.mxu0 %v180
  %218 = vmatprep.subr.bf16.mxu0 0
  %219 = vmatpush1.bf16.msra.mxu0 %v179
  %220 = vmatprep.subr.bf16.mxu0 0
  %221 = vmatpush1.bf16.msra.mxu0 %v178
  %222 = vmatprep.subr.bf16.mxu0 0
  %223 = vmatpush1.bf16.msra.mxu0 %v177
  %224 = vmatprep.subr.bf16.mxu0 0
  %225 = vmatpush1.bf16.msra.mxu0 %v176
  %226 = vmatprep.subr.bf16.mxu0 0
  %227 = vmatpush1.bf16.msra.mxu0 %v175
  %228 = vmatprep.subr.bf16.mxu0 0
  %229 = vmatpush1.bf16.msra.mxu0 %v174
  %230 = vmatprep.subr.bf16.mxu0 0
  %231 = vmatpush1.bf16.msra.mxu0 %v173
  %232 = vmatprep.subr.bf16.mxu0 0
  %233 = vmatpush2.bf16.msra.mxu0 %v188
  %234 = vmatprep.subr.bf16.mxu0 0
  %235 = vmatpush2.bf16.msra.mxu0 %v187
  %236 = vmatprep.subr.bf16.mxu0 0
  %237 = vmatpush2.bf16.msra.mxu0 %v186
  %238 = vmatprep.subr.bf16.mxu0 0
  %239 = vmatpush2.bf16.msra.mxu0 %v185
  %240 = vmatprep.subr.bf16.mxu0 0
  %241 = vmatpush2.bf16.msra.mxu0 %v184
  %242 = vmatprep.subr.bf16.mxu0 0
  %243 = vmatpush2.bf16.msra.mxu0 %v183
  %244 = vmatprep.subr.bf16.mxu0 0
  %245 = vmatpush2.bf16.msra.mxu0 %v182
  %246 = vmatprep.subr.bf16.mxu0 0
  %247 = vmatpush2.bf16.msra.mxu0 %v181
  %248 = vmatprep.mubr.bf16.mxu0 %v92
  %249 = vmatmul.mubr.bf16.gmra.mxu0 %v91
  %v250 = vpop.f32.mrf.mxu0
  %v251 = vadd.f32 0.0, %v250
  %v252 = vpop.f32.mrf.mxu0
  %v253 = vpop.f32.mrf.mxu0
  %v254 = vadd.f32 0.0, %v253
  %v255 = vpop.f32.mrf.mxu0
  %256 = vmatprep.mubr.bf16.mxu0 %v95
  %257 = vmatmul.mubr.bf16.gmra.mxu0 %v94
  %v258 = vpop.f32.mrf.mxu0
  %v259 = vadd.f32 0.0, %v258
  %v260 = vpop.f32.mrf.mxu0
  %v261 = vpop.f32.mrf.mxu0
  %v262 = vadd.f32 0.0, %v261
  %v263 = vpop.f32.mrf.mxu0
  %264 = vdwg.mxu0
  %265 = vmatprep.subr.bf16.mxu0 0
  %266 = vmatpush1.bf16.msra.mxu0 0
  %267 = vmatprep.subr.bf16.mxu0 0
  %268 = vmatpush1.bf16.msra.mxu0 0
  %269 = vmatprep.subr.bf16.mxu0 0
  %270 = vmatpush1.bf16.msra.mxu0 0
  %271 = vmatprep.subr.bf16.mxu0 0
  %272 = vmatpush1.bf16.msra.mxu0 0
  %273 = vmatprep.subr.bf16.mxu0 0
  %274 = vmatpush1.bf16.msra.mxu0 0
  %275 = vmatprep.subr.bf16.mxu0 0
  %276 = vmatpush1.bf16.msra.mxu0 0
  %277 = vmatprep.subr.bf16.mxu0 0
  %278 = vmatpush1.bf16.msra.mxu0 %v190
  %279 = vmatprep.subr.bf16.mxu0 0
  %280 = vmatpush1.bf16.msra.mxu0 %v189
  %281 = vmatprep.subr.bf16.mxu0 0
  %282 = vmatpush2.bf16.msra.mxu0 0
  %283 = vmatprep.subr.bf16.mxu0 0
  %284 = vmatpush2.bf16.msra.mxu0 0
  %285 = vmatprep.subr.bf16.mxu0 0
  %286 = vmatpush2.bf16.msra.mxu0 0
  %287 = vmatprep.subr.bf16.mxu0 0
  %288 = vmatpush2.bf16.msra.mxu0 0
  %289 = vmatprep.subr.bf16.mxu0 0
  %290 = vmatpush2.bf16.msra.mxu0 0
  %291 = vmatprep.subr.bf16.mxu0 0
  %292 = vmatpush2.bf16.msra.mxu0 0
  %293 = vmatprep.subr.bf16.mxu0 0
  %294 = vmatpush2.bf16.msra.mxu0 0
  %295 = vmatprep.subr.bf16.mxu0 0
  %296 = vmatpush2.bf16.msra.mxu0 0
  %297 = vmatprep.mubr.bf16.mxu0 0
  %298 = vmatmul.mubr.bf16.gmra.mxu0 %v211
  %v299 = vpop.f32.mrf.mxu0
  %v300 = vadd.f32 %v251, %v299
  %v301 = vpop.f32.mrf.mxu0
  %v302 = vpop.f32.mrf.mxu0
  %v303 = vadd.f32 %v254, %v302
  %v304 = vpop.f32.mrf.mxu0
  %305 = vmatprep.mubr.bf16.mxu0 0
  %306 = vmatmul.mubr.bf16.gmra.mxu0 %v214
  %v307 = vpop.f32.mrf.mxu0
  %v308 = vadd.f32 %v259, %v307
  %v309 = vpop.f32.mrf.mxu0
  %v310 = vpop.f32.mrf.mxu0
  %v311 = vadd.f32 %v262, %v310
  %v312 = vpop.f32.mrf.mxu0
  %313 = vdwg.mxu0
  %v314 = vadd.f32 %v23, %v300
  %v315 = vadd.f32 %v24, %v303
  %v316 = vadd.f32 %v25, %v308
  %v317 = vadd.f32 %v26, %v311
  %318 = vst [vmem:[#allocation2] sm:$0xff] %v314
  %319 = vst [vmem:[#allocation2 + $0x8] sm:$0xff] %v315
  %320 = vst [vmem:[#allocation2 + $0x10] sm:$0xff] %v316
  %321 = vst [vmem:[#allocation2 + $0x18] sm:$0xff] %v317
  // Predicated region
  $region18: #{unet_forward.17} parent=0 // pred_check
    %p322 = pneg %p15
  $region19: #{unet_forward.17} parent=0 // pred_check_branch
    %324 = sbr.rel (%p322) target = $region21
  $region20: #{unet_forward.17} parent=0 // pred_region
    %v325 = vld [vmem:[#allocation2] sm:$0xff]
    %v326 = vld [vmem:[#allocation2 + $0x8] sm:$0xff]
    %v327 = vld [vmem:[#allocation2 + $0x10] sm:$0xff]
    %v328 = vld [vmem:[#allocation2 + $0x18] sm:$0xff]
    %v329 = vld [vmem:[%s2] sm:$0x1]
    %v331 = vlaneseq
    %v332 = vshrl.u32 %v331, 7
    %v333 = vsub.s32 0, %v332
    %v334 = vrot.slane %v329, %v333
    %v336 = vadd.f32 %v325, %v334
    %v337 = vadd.f32 %v326, %v334
    %v338 = vadd.f32 %v327, %v334
    %v339 = vadd.f32 %v328, %v334
    %v340 = vmax.f32 %v336, 0.0
    %v341 = vmax.f32 %v337, 0.0
    %v342 = vmax.f32 %v338, 0.0
    %v343 = vmax.f32 %v339, 0.0
    %v344 = vpack.c.bf16 %v341, %v340
    %v345 = vpack.c.bf16 %v343, %v342
    %v348 = vunpack.c.l.b16 %v344
    %v349 = vunpack.c.h.b16 %v344
    %v350 = vunpack.c.l.b16 %v345
    %v351 = vunpack.c.h.b16 %v345
    %v352 = vpack.c.b16 %v348, %v348
    %v353 = vpack.c.b16 %v349, %v349
    %v354 = vpack.c.b16 %v350, %v350
    %v355 = vpack.c.b16 %v351, %v351
    %360 = vst [vmem:[%s3] sm:$0xf] %v352
    %361 = vst [vmem:[%s3 + $0x4] sm:$0xf] %v353
    %362 = vst [vmem:[%s3 + $0x8] sm:$0xf] %v354
    %363 = vst [vmem:[%s3 + $0xc] sm:$0xf] %v355
  $region21: #{unet_forward.17} parent=0 // pred_fallthru
    _
  // Predicated region
  $region22: #{unet_forward.17} parent=0 // pred_check
    _
  $region23: #{unet_forward.17} parent=0 // pred_check_branch
    %365 = sbr.rel (0) target = $region25
  $region24: #{unet_forward.17} parent=0 // pred_region
    _
  $region25: #{unet_forward.17} parent=0 // pred_fallthru
    _
  // Predicated region
  $region26: #{unet_forward.17} parent=0 // pred_check
    _
  $region27: #{unet_forward.17} parent=0 // pred_check_branch
    %367 = sbr.rel (0) target = $region29
  $region28: #{unet_forward.17} parent=0 // pred_region
    _
  $region29: #{unet_forward.17} parent=0 // pred_fallthru
    _

// kernel: tile.13
$region0: #{tile.13}
  #allocation0 [shape = 's32[1]{0}', space=sflag, size = 0x4, scoped, tag = 'scoped memory for tile.13']
  %s0 = inlined_call_operand.vmem [shape: f32[32], index: 0, kind: input, shape index: {}]
  %s1 = inlined_call_operand.vmem [shape: f32[4,32], index: 1, kind: output, shape index: {}]
  // Predicated region
  $region2: #{tile.13} parent=0 // pred_check
    _
  $region3: #{tile.13} parent=0 // pred_check_branch
    %3 = sbr.rel (0) target = $region5
  $region4: #{tile.13} parent=0 // pred_region
    _
  $region5: #{tile.13} parent=0 // pred_fallthru
    _
  %v4 = vld [vmem:[%s0] ss:$0 sm:$0xff]
  %5 = vst [vmem:[%s1] sm:$0xf] %v4

// kernel: tile.14
$region0: #{tile.14}
  %s0 = inlined_call_operand.vmem [shape: f32[4,32], index: 0, kind: input, shape index: {}]
  %s1 = inlined_call_operand.vmem [shape: f32[1,128], index: 1, kind: output, shape index: {}]
  $region1: #{tile.14} parent=0
    #allocation0 [shape = 'u8[4096]{0}', space=vmem, size = 0x1000, scoped, tag = 'scoped mem for output reshape']
    #allocation1 [shape = 'u8[4096]{0}', space=vmem, size = 0x1000, scoped, tag = 'scoped mem for input reshape']
    %s3 = sshll.u32 1, 4
    %s4 = ssub.s32 %s3, 1
    %v5 = vld [vmem:[%s0] sm:%s4]
    %6 = vst [vmem:[#allocation1] sm:%s4] %v5
    %v7 = vld [vmem:[#allocation1] sm:$0x1]
    %vm8 = vcmask 261120
    %9 = vst.msk [vmem:[#allocation0] sm:$0x1] %vm8, %v7
    %s10 = scalar_lea.vmem [#allocation1], 3
    %v11 = vld [vmem:[%s10] sm:$0x1]
    %12 = vrot.lane.b32.xlu0 %v11, 96
    %v13 = vpop.permute.xlu0 %12
    %vm14 = vcmask 1048320
    %15 = vst.msk [vmem:[#allocation0] sm:$0x1] %vm14, %v13
    %s16 = scalar_lea.vmem [#allocation1], 2
    %v17 = vld [vmem:[%s16] sm:$0x1]
    %18 = vrot.lane.b32.xlu0 %v17, 64
    %v19 = vpop.permute.xlu0 %18
    %vm20 = vcmask 785920
    %21 = vst.msk [vmem:[#allocation0] sm:$0x1] %vm20, %v19
    %s22 = scalar_lea.vmem [#allocation1], 1
    %v23 = vld [vmem:[%s22] sm:$0x1]
    %24 = vrot.lane.b32.xlu0 %v23, 32
    %v25 = vpop.permute.xlu0 %24
    %vm26 = vcmask 523520
    %27 = vst.msk [vmem:[#allocation0] sm:$0x1] %vm26, %v25
    %s29 = sshll.u32 1, 1
    %s30 = ssub.s32 %s29, 1
    %v32 = vld [vmem:[#allocation0] sm:%s30]
    %s33 = sshll.u32 1, 1
    %s34 = ssub.s32 %s33, 1
    %35 = vst [vmem:[%s1] sm:%s34] %v32

// kernel: unet_forward.18
$region0: #{unet_forward.18}
  #allocation0 [shape = 'u32[]', space=smem, size = 0x4, offset = 0x4, fixed_abs, tag = 'smem constant byte address 0x4 - core index']
  #allocation1 [shape = 'u32[144,128]{1,0:T(1,128)}', space=vmem, size = 0x12000, scoped, tag = 'internal scratch']
  #allocation2 [shape = 'f32[32,128]{1,0:T(8,128)}', space=vmem, size = 0x4000, scoped, tag = 'scratch operand']
  %s0 = inlined_call_operand.vmem [shape: bf16[32,576], index: 0, kind: input, shape index: {}]
  %s1 = inlined_call_operand.vmem [shape: bf16[576,128], index: 1, kind: input, shape index: {}]
  %s2 = inlined_call_operand.vmem [shape: f32[1,128], index: 2, kind: input, shape index: {}]
  %s3 = inlined_call_operand.vmem [shape: bf16[32,128], index: 3, kind: output, shape index: {}]
  %s4 = sld [smem:[#allocation0]]
  $region30: #{unet_forward.18} parent=0
    _
  %s6 = ssub.s32 1, %s4
  %s7 = scalar_select 0, %s6, %s4
  // Predicated region
  $region2: #{unet_forward.18} parent=0 // pred_check
    _
  $region3: #{unet_forward.18} parent=0 // pred_check_branch
    %9 = sbr.rel (0) target = $region5
  $region4: #{unet_forward.18} parent=0 // pred_region
    _
  $region5: #{unet_forward.18} parent=0 // pred_fallthru
    _
  // Predicated region
  $region6: #{unet_forward.18} parent=0 // pred_check
    _
  $region7: #{unet_forward.18} parent=0 // pred_check_branch
    %11 = sbr.rel (0) target = $region9
  $region8: #{unet_forward.18} parent=0 // pred_region
    _
  $region9: #{unet_forward.18} parent=0 // pred_fallthru
    _
  // Predicated region
  $region10: #{unet_forward.18} parent=0 // pred_check
    _
  $region11: #{unet_forward.18} parent=0 // pred_check_branch
    %13 = sbr.rel (0) target = $region13
  $region12: #{unet_forward.18} parent=0 // pred_region
    _
  $region13: #{unet_forward.18} parent=0 // pred_fallthru
    _
  %p15 = scmp.eq.s32.totalorder 0, 0
  // Predicated region
  $region14: #{unet_forward.18} parent=0 // pred_check
    %p16 = pneg %p15
  $region15: #{unet_forward.18} parent=0 // pred_check_branch
    %18 = sbr.rel (%p16) target = $region17
  $region16: #{unet_forward.18} parent=0 // pred_region
    %19 = vst [vmem:[#allocation2] sm:$0xff] 0.0
    %20 = vst [vmem:[#allocation2 + $0x8] sm:$0xff] 0.0
    %21 = vst [vmem:[#allocation2 + $0x10] sm:$0xff] 0.0
    %22 = vst [vmem:[#allocation2 + $0x18] sm:$0xff] 0.0
  $region17: #{unet_forward.18} parent=0 // pred_fallthru
    _
  %v23 = vld [vmem:[#allocation2] sm:$0xff]
  %v24 = vld [vmem:[#allocation2 + $0x8] sm:$0xff]
  %v25 = vld [vmem:[#allocation2 + $0x10] sm:$0xff]
  %v26 = vld [vmem:[#allocation2 + $0x18] sm:$0xff]
  %v27 = vld [vmem:[%s0] sm:$0xff]
  %v28 = vld [vmem:[%s0 + $0x8] sm:$0xff]
  %v29 = vld [vmem:[%s0 + $0x10] sm:$0xf]
  %v30 = vld [vmem:[%s0 + $0x14] sm:$0xff]
  %v31 = vld [vmem:[%s0 + $0x1c] sm:$0xff]
  %v32 = vld [vmem:[%s0 + $0x24] sm:$0xf]
  %v33 = vld [vmem:[%s0 + $0x28] sm:$0xff]
  %v34 = vld [vmem:[%s0 + $0x30] sm:$0xff]
  %v35 = vld [vmem:[%s0 + $0x38] sm:$0xf]
  %v36 = vld [vmem:[%s0 + $0x3c] sm:$0xff]
  %v37 = vld [vmem:[%s0 + $0x44] sm:$0xff]
  %v38 = vld [vmem:[%s0 + $0x4c] sm:$0xf]
  %v39 = vld [vmem:[%s1] sm:$0xf]
  %v40 = vld [vmem:[%s1 + $0x4] sm:$0xf]
  %v41 = vld [vmem:[%s1 + $0x8] sm:$0xf]
  %v42 = vld [vmem:[%s1 + $0xc] sm:$0xf]
  %v43 = vld [vmem:[%s1 + $0x10] sm:$0xf]
  %v44 = vld [vmem:[%s1 + $0x14] sm:$0xf]
  %v45 = vld [vmem:[%s1 + $0x18] sm:$0xf]
  %v46 = vld [vmem:[%s1 + $0x1c] sm:$0xf]
  %v47 = vld [vmem:[%s1 + $0x20] sm:$0xf]
  %v48 = vld [vmem:[%s1 + $0x24] sm:$0xf]
  %v49 = vld [vmem:[%s1 + $0x28] sm:$0xf]
  %v50 = vld [vmem:[%s1 + $0x2c] sm:$0xf]
  %v51 = vld [vmem:[%s1 + $0x30] sm:$0xf]
  %v52 = vld [vmem:[%s1 + $0x34] sm:$0xf]
  %v53 = vld [vmem:[%s1 + $0x38] sm:$0xf]
  %v54 = vld [vmem:[%s1 + $0x3c] sm:$0xf]
  %v55 = vld [vmem:[%s1 + $0x40] sm:$0xf]
  %v56 = vld [vmem:[%s1 + $0x44] sm:$0xf]
  %v57 = vld [vmem:[%s1 + $0x48] sm:$0xf]
  %v58 = vld [vmem:[%s1 + $0x4c] sm:$0xf]
  %v59 = vld [vmem:[%s1 + $0x50] sm:$0xf]
  %v60 = vld [vmem:[%s1 + $0x54] sm:$0xf]
  %v61 = vld [vmem:[%s1 + $0x58] sm:$0xf]
  %v62 = vld [vmem:[%s1 + $0x5c] sm:$0xf]
  %v63 = vld [vmem:[%s1 + $0x60] sm:$0xf]
  %v64 = vld [vmem:[%s1 + $0x64] sm:$0xf]
  %v65 = vld [vmem:[%s1 + $0x68] sm:$0xf]
  %v66 = vld [vmem:[%s1 + $0x6c] sm:$0xf]
  %v67 = vld [vmem:[%s1 + $0x70] sm:$0xf]
  %v68 = vld [vmem:[%s1 + $0x74] sm:$0xf]
  %v69 = vld [vmem:[%s1 + $0x78] sm:$0xf]
  %v70 = vld [vmem:[%s1 + $0x7c] sm:$0xf]
  %v71 = vld [vmem:[%s1 + $0x80] sm:$0xf]
  %v72 = vld [vmem:[%s1 + $0x84] sm:$0xf]
  %v73 = vld [vmem:[%s1 + $0x88] sm:$0xf]
  %v74 = vld [vmem:[%s1 + $0x8c] sm:$0xf]
  %v75 = vld [vmem:[%s1 + $0x90] sm:$0xf]
  %v76 = vld [vmem:[%s1 + $0x94] sm:$0xf]
  %v77 = vld [vmem:[%s1 + $0x98] sm:$0xf]
  %v78 = vld [vmem:[%s1 + $0x9c] sm:$0xf]
  %v79 = vld [vmem:[%s1 + $0xa0] sm:$0xf]
  %v80 = vld [vmem:[%s1 + $0xa4] sm:$0xf]
  %v81 = vld [vmem:[%s1 + $0xa8] sm:$0xf]
  %v82 = vld [vmem:[%s1 + $0xac] sm:$0xf]
  %v83 = vld [vmem:[%s1 + $0xb0] sm:$0xf]
  %v84 = vld [vmem:[%s1 + $0xb4] sm:$0xf]
  %v85 = vld [vmem:[%s1 + $0xb8] sm:$0xf]
  %v86 = vld [vmem:[%s1 + $0xbc] sm:$0xf]
  %v87 = vld [vmem:[%s1 + $0xc0] sm:$0xf]
  %v88 = vld [vmem:[%s1 + $0xc4] sm:$0xf]
  %v89 = vld [vmem:[%s1 + $0xc8] sm:$0xf]
  %v90 = vld [vmem:[%s1 + $0xcc] sm:$0xf]
  %v91 = vld [vmem:[%s1 + $0xd0] sm:$0xf]
  %v92 = vld [vmem:[%s1 + $0xd4] sm:$0xf]
  %v93 = vld [vmem:[%s1 + $0xd8] sm:$0xf]
  %v94 = vld [vmem:[%s1 + $0xdc] sm:$0xf]
  %v95 = vld [vmem:[%s1 + $0xe0] sm:$0xf]
  %v96 = vld [vmem:[%s1 + $0xe4] sm:$0xf]
  %v97 = vld [vmem:[%s1 + $0xe8] sm:$0xf]
  %v98 = vld [vmem:[%s1 + $0xec] sm:$0xf]
  %v99 = vld [vmem:[%s1 + $0xf0] sm:$0xf]
  %v100 = vld [vmem:[%s1 + $0xf4] sm:$0xf]
  %v101 = vld [vmem:[%s1 + $0xf8] sm:$0xf]
  %v102 = vld [vmem:[%s1 + $0xfc] sm:$0xf]
  %v103 = vld [vmem:[%s1 + $0x100] sm:$0xf]
  %v104 = vld [vmem:[%s1 + $0x104] sm:$0xf]
  %v105 = vld [vmem:[%s1 + $0x108] sm:$0xf]
  %v106 = vld [vmem:[%s1 + $0x10c] sm:$0xf]
  %v107 = vld [vmem:[%s1 + $0x110] sm:$0xf]
  %v108 = vld [vmem:[%s1 + $0x114] sm:$0xf]
  %v109 = vld [vmem:[%s1 + $0x118] sm:$0xf]
  %v110 = vld [vmem:[%s1 + $0x11c] sm:$0xf]
  %v123 = vunpack.c.l.b16 %v27
  %v124 = vunpack.c.h.b16 %v27
  %v125 = vunpack.c.l.b16 %v28
  %v126 = vunpack.c.h.b16 %v28
  %v127 = vunpack.c.l.b16 %v29
  %v128 = vunpack.c.l.b16 %v30
  %v129 = vunpack.c.h.b16 %v30
  %v130 = vunpack.c.l.b16 %v31
  %v131 = vunpack.c.h.b16 %v31
  %v132 = vunpack.c.l.b16 %v32
  %v133 = vunpack.c.l.b16 %v33
  %v134 = vunpack.c.h.b16 %v33
  %v135 = vunpack.c.l.b16 %v34
  %v136 = vunpack.c.h.b16 %v34
  %v137 = vunpack.c.l.b16 %v35
  %v138 = vunpack.c.l.b16 %v36
  %v139 = vunpack.c.h.b16 %v36
  %v140 = vunpack.c.l.b16 %v37
  %v141 = vunpack.c.h.b16 %v37
  %v142 = vunpack.c.l.b16 %v38
  %v143 = vpack.c.b16 %v128, %v123
  %v144 = vpack.c.b16 %v129, %v124
  %v145 = vpack.c.b16 %v130, %v125
  %v146 = vpack.c.b16 %v131, %v126
  %v147 = vpack.c.b16 %v132, %v127
  %v148 = vpack.c.b16 %v138, %v133
  %v149 = vpack.c.b16 %v139, %v134
  %v150 = vpack.c.b16 %v140, %v135
  %v151 = vpack.c.b16 %v141, %v136
  %v152 = vpack.c.b16 %v142, %v137
  %v233 = vunpack.c.l.b16 %v39
  %v234 = vunpack.c.l.b16 %v40
  %v235 = vunpack.c.l.b16 %v41
  %v236 = vunpack.c.l.b16 %v42
  %v237 = vunpack.c.l.b16 %v43
  %v238 = vunpack.c.l.b16 %v44
  %v239 = vunpack.c.l.b16 %v45
  %v240 = vunpack.c.l.b16 %v46
  %v241 = vunpack.c.l.b16 %v47
  %v242 = vunpack.c.l.b16 %v48
  %v243 = vunpack.c.l.b16 %v49
  %v244 = vunpack.c.l.b16 %v50
  %v245 = vunpack.c.l.b16 %v51
  %v246 = vunpack.c.l.b16 %v52
  %v247 = vunpack.c.l.b16 %v53
  %v248 = vunpack.c.l.b16 %v54
  %v249 = vunpack.c.l.b16 %v55
  %v250 = vunpack.c.l.b16 %v56
  %v251 = vunpack.c.l.b16 %v57
  %v252 = vunpack.c.l.b16 %v58
  %v253 = vunpack.c.l.b16 %v59
  %v254 = vunpack.c.l.b16 %v60
  %v255 = vunpack.c.l.b16 %v61
  %v256 = vunpack.c.l.b16 %v62
  %v257 = vunpack.c.l.b16 %v63
  %v258 = vunpack.c.l.b16 %v64
  %v259 = vunpack.c.l.b16 %v65
  %v260 = vunpack.c.l.b16 %v66
  %v261 = vunpack.c.l.b16 %v67
  %v262 = vunpack.c.l.b16 %v68
  %v263 = vunpack.c.l.b16 %v69
  %v264 = vunpack.c.l.b16 %v70
  %v265 = vunpack.c.l.b16 %v71
  %v266 = vunpack.c.l.b16 %v72
  %v267 = vunpack.c.l.b16 %v73
  %v268 = vunpack.c.l.b16 %v74
  %v269 = vunpack.c.l.b16 %v75
  %v270 = vunpack.c.l.b16 %v76
  %v271 = vunpack.c.l.b16 %v77
  %v272 = vunpack.c.l.b16 %v78
  %v273 = vunpack.c.l.b16 %v79
  %v274 = vunpack.c.l.b16 %v80
  %v275 = vunpack.c.l.b16 %v81
  %v276 = vunpack.c.l.b16 %v82
  %v277 = vunpack.c.l.b16 %v83
  %v278 = vunpack.c.l.b16 %v84
  %v279 = vunpack.c.l.b16 %v85
  %v280 = vunpack.c.l.b16 %v86
  %v281 = vunpack.c.l.b16 %v87
  %v282 = vunpack.c.l.b16 %v88
  %v283 = vunpack.c.l.b16 %v89
  %v284 = vunpack.c.l.b16 %v90
  %v285 = vunpack.c.l.b16 %v91
  %v286 = vunpack.c.l.b16 %v92
  %v287 = vunpack.c.l.b16 %v93
  %v288 = vunpack.c.l.b16 %v94
  %v289 = vunpack.c.l.b16 %v95
  %v290 = vunpack.c.l.b16 %v96
  %v291 = vunpack.c.l.b16 %v97
  %v292 = vunpack.c.l.b16 %v98
  %v293 = vunpack.c.l.b16 %v99
  %v294 = vunpack.c.l.b16 %v100
  %v295 = vunpack.c.l.b16 %v101
  %v296 = vunpack.c.l.b16 %v102
  %v297 = vunpack.c.l.b16 %v103
  %v298 = vunpack.c.l.b16 %v104
  %v299 = vunpack.c.l.b16 %v105
  %v300 = vunpack.c.l.b16 %v106
  %v301 = vunpack.c.l.b16 %v107
  %v302 = vunpack.c.l.b16 %v108
  %v303 = vunpack.c.l.b16 %v109
  %v304 = vunpack.c.l.b16 %v110
  %v305 = vpack.c.b16 %v234, %v233
  %v306 = vpack.c.b16 %v236, %v235
  %v307 = vpack.c.b16 %v238, %v237
  %v308 = vpack.c.b16 %v240, %v239
  %v309 = vpack.c.b16 %v242, %v241
  %v310 = vpack.c.b16 %v244, %v243
  %v311 = vpack.c.b16 %v246, %v245
  %v312 = vpack.c.b16 %v248, %v247
  %v313 = vpack.c.b16 %v250, %v249
  %v314 = vpack.c.b16 %v252, %v251
  %v315 = vpack.c.b16 %v254, %v253
  %v316 = vpack.c.b16 %v256, %v255
  %v317 = vpack.c.b16 %v258, %v257
  %v318 = vpack.c.b16 %v260, %v259
  %v319 = vpack.c.b16 %v262, %v261
  %v320 = vpack.c.b16 %v264, %v263
  %v321 = vpack.c.b16 %v266, %v265
  %v322 = vpack.c.b16 %v268, %v267
  %v323 = vpack.c.b16 %v270, %v269
  %v324 = vpack.c.b16 %v272, %v271
  %v325 = vpack.c.b16 %v274, %v273
  %v326 = vpack.c.b16 %v276, %v275
  %v327 = vpack.c.b16 %v278, %v277
  %v328 = vpack.c.b16 %v280, %v279
  %v329 = vpack.c.b16 %v282, %v281
  %v330 = vpack.c.b16 %v284, %v283
  %v331 = vpack.c.b16 %v286, %v285
  %v332 = vpack.c.b16 %v288, %v287
  %v333 = vpack.c.b16 %v290, %v289
  %v334 = vpack.c.b16 %v292, %v291
  %v335 = vpack.c.b16 %v294, %v293
  %v336 = vpack.c.b16 %v296, %v295
  %v337 = vpack.c.b16 %v298, %v297
  %v338 = vpack.c.b16 %v300, %v299
  %v339 = vpack.c.b16 %v302, %v301
  %v340 = vpack.c.b16 %v304, %v303
  %vm377 = vcmask 523264
  %v379 = vsel %vm377, %v147, 0
  %v382 = vsel %vm377, %v152, 0
  %384 = vmatprep.subr.bf16.mxu0 0
  %385 = vmatpush1.bf16.msra.mxu0 %v312
  %386 = vmatprep.subr.bf16.mxu0 0
  %387 = vmatpush1.bf16.msra.mxu0 %v311
  %388 = vmatprep.subr.bf16.mxu0 0
  %389 = vmatpush1.bf16.msra.mxu0 %v310
  %390 = vmatprep.subr.bf16.mxu0 0
  %391 = vmatpush1.bf16.msra.mxu0 %v309
  %392 = vmatprep.subr.bf16.mxu0 0
  %393 = vmatpush1.bf16.msra.mxu0 %v308
  %394 = vmatprep.subr.bf16.mxu0 0
  %395 = vmatpush1.bf16.msra.mxu0 %v307
  %396 = vmatprep.subr.bf16.mxu0 0
  %397 = vmatpush1.bf16.msra.mxu0 %v306
  %398 = vmatprep.subr.bf16.mxu0 0
  %399 = vmatpush1.bf16.msra.mxu0 %v305
  %400 = vmatprep.subr.bf16.mxu0 0
  %401 = vmatpush2.bf16.msra.mxu0 %v320
  %402 = vmatprep.subr.bf16.mxu0 0
  %403 = vmatpush2.bf16.msra.mxu0 %v319
  %404 = vmatprep.subr.bf16.mxu0 0
  %405 = vmatpush2.bf16.msra.mxu0 %v318
  %406 = vmatprep.subr.bf16.mxu0 0
  %407 = vmatpush2.bf16.msra.mxu0 %v317
  %408 = vmatprep.subr.bf16.mxu0 0
  %409 = vmatpush2.bf16.msra.mxu0 %v316
  %410 = vmatprep.subr.bf16.mxu0 0
  %411 = vmatpush2.bf16.msra.mxu0 %v315
  %412 = vmatprep.subr.bf16.mxu0 0
  %413 = vmatpush2.bf16.msra.mxu0 %v314
  %414 = vmatprep.subr.bf16.mxu0 0
  %415 = vmatpush2.bf16.msra.mxu0 %v313
  %416 = vmatprep.mubr.bf16.mxu0 %v144
  %417 = vmatmul.mubr.bf16.gmra.mxu0 %v143
  %v418 = vpop.f32.mrf.mxu0
  %v419 = vadd.f32 0.0, %v418
  %v420 = vpop.f32.mrf.mxu0
  %v421 = vpop.f32.mrf.mxu0
  %v422 = vadd.f32 0.0, %v421
  %v423 = vpop.f32.mrf.mxu0
  %424 = vmatprep.mubr.bf16.mxu0 %v149
  %425 = vmatmul.mubr.bf16.gmra.mxu0 %v148
  %v426 = vpop.f32.mrf.mxu0
  %v427 = vadd.f32 0.0, %v426
  %v428 = vpop.f32.mrf.mxu0
  %v429 = vpop.f32.mrf.mxu0
  %v430 = vadd.f32 0.0, %v429
  %v431 = vpop.f32.mrf.mxu0
  %432 = vdwg.mxu0
  %433 = vmatprep.subr.bf16.mxu0 0
  %434 = vmatpush1.bf16.msra.mxu0 %v328
  %435 = vmatprep.subr.bf16.mxu0 0
  %436 = vmatpush1.bf16.msra.mxu0 %v327
  %437 = vmatprep.subr.bf16.mxu0 0
  %438 = vmatpush1.bf16.msra.mxu0 %v326
  %439 = vmatprep.subr.bf16.mxu0 0
  %440 = vmatpush1.bf16.msra.mxu0 %v325
  %441 = vmatprep.subr.bf16.mxu0 0
  %442 = vmatpush1.bf16.msra.mxu0 %v324
  %443 = vmatprep.subr.bf16.mxu0 0
  %444 = vmatpush1.bf16.msra.mxu0 %v323
  %445 = vmatprep.subr.bf16.mxu0 0
  %446 = vmatpush1.bf16.msra.mxu0 %v322
  %447 = vmatprep.subr.bf16.mxu0 0
  %448 = vmatpush1.bf16.msra.mxu0 %v321
  %449 = vmatprep.subr.bf16.mxu0 0
  %450 = vmatpush2.bf16.msra.mxu0 %v336
  %451 = vmatprep.subr.bf16.mxu0 0
  %452 = vmatpush2.bf16.msra.mxu0 %v335
  %453 = vmatprep.subr.bf16.mxu0 0
  %454 = vmatpush2.bf16.msra.mxu0 %v334
  %455 = vmatprep.subr.bf16.mxu0 0
  %456 = vmatpush2.bf16.msra.mxu0 %v333
  %457 = vmatprep.subr.bf16.mxu0 0
  %458 = vmatpush2.bf16.msra.mxu0 %v332
  %459 = vmatprep.subr.bf16.mxu0 0
  %460 = vmatpush2.bf16.msra.mxu0 %v331
  %461 = vmatprep.subr.bf16.mxu0 0
  %462 = vmatpush2.bf16.msra.mxu0 %v330
  %463 = vmatprep.subr.bf16.mxu0 0
  %464 = vmatpush2.bf16.msra.mxu0 %v329
  %465 = vmatprep.mubr.bf16.mxu0 %v146
  %466 = vmatmul.mubr.bf16.gmra.mxu0 %v145
  %v467 = vpop.f32.mrf.mxu0
  %v468 = vadd.f32 %v419, %v467
  %v469 = vpop.f32.mrf.mxu0
  %v470 = vpop.f32.mrf.mxu0
  %v471 = vadd.f32 %v422, %v470
  %v472 = vpop.f32.mrf.mxu0
  %473 = vmatprep.mubr.bf16.mxu0 %v151
  %474 = vmatmul.mubr.bf16.gmra.mxu0 %v150
  %v475 = vpop.f32.mrf.mxu0
  %v476 = vadd.f32 %v427, %v475
  %v477 = vpop.f32.mrf.mxu0
  %v478 = vpop.f32.mrf.mxu0
  %v479 = vadd.f32 %v430, %v478
  %v480 = vpop.f32.mrf.mxu0
  %481 = vdwg.mxu0
  %482 = vmatprep.subr.bf16.mxu0 0
  %483 = vmatpush1.bf16.msra.mxu0 0
  %484 = vmatprep.subr.bf16.mxu0 0
  %485 = vmatpush1.bf16.msra.mxu0 0
  %486 = vmatprep.subr.bf16.mxu0 0
  %487 = vmatpush1.bf16.msra.mxu0 0
  %488 = vmatprep.subr.bf16.mxu0 0
  %489 = vmatpush1.bf16.msra.mxu0 0
  %490 = vmatprep.subr.bf16.mxu0 0
  %491 = vmatpush1.bf16.msra.mxu0 %v340
  %492 = vmatprep.subr.bf16.mxu0 0
  %493 = vmatpush1.bf16.msra.mxu0 %v339
  %494 = vmatprep.subr.bf16.mxu0 0
  %495 = vmatpush1.bf16.msra.mxu0 %v338
  %496 = vmatprep.subr.bf16.mxu0 0
  %497 = vmatpush1.bf16.msra.mxu0 %v337
  %498 = vmatprep.subr.bf16.mxu0 0
  %499 = vmatpush2.bf16.msra.mxu0 0
  %500 = vmatprep.subr.bf16.mxu0 0
  %501 = vmatpush2.bf16.msra.mxu0 0
  %502 = vmatprep.subr.bf16.mxu0 0
  %503 = vmatpush2.bf16.msra.mxu0 0
  %504 = vmatprep.subr.bf16.mxu0 0
  %505 = vmatpush2.bf16.msra.mxu0 0
  %506 = vmatprep.subr.bf16.mxu0 0
  %507 = vmatpush2.bf16.msra.mxu0 0
  %508 = vmatprep.subr.bf16.mxu0 0
  %509 = vmatpush2.bf16.msra.mxu0 0
  %510 = vmatprep.subr.bf16.mxu0 0
  %511 = vmatpush2.bf16.msra.mxu0 0
  %512 = vmatprep.subr.bf16.mxu0 0
  %513 = vmatpush2.bf16.msra.mxu0 0
  %514 = vmatprep.mubr.bf16.mxu0 0
  %515 = vmatmul.mubr.bf16.gmra.mxu0 %v379
  %v516 = vpop.f32.mrf.mxu0
  %v517 = vadd.f32 %v468, %v516
  %v518 = vpop.f32.mrf.mxu0
  %v519 = vpop.f32.mrf.mxu0
  %v520 = vadd.f32 %v471, %v519
  %v521 = vpop.f32.mrf.mxu0
  %522 = vmatprep.mubr.bf16.mxu0 0
  %523 = vmatmul.mubr.bf16.gmra.mxu0 %v382
  %v524 = vpop.f32.mrf.mxu0
  %v525 = vadd.f32 %v476, %v524
  %v526 = vpop.f32.mrf.mxu0
  %v527 = vpop.f32.mrf.mxu0
  %v528 = vadd.f32 %v479, %v527
  %v529 = vpop.f32.mrf.mxu0
  %530 = vdwg.mxu0
  %v531 = vadd.f32 %v23, %v517
  %v532 = vadd.f32 %v24, %v520
  %v533 = vadd.f32 %v25, %v525
  %v534 = vadd.f32 %v26, %v528
  %535 = vst [vmem:[#allocation2] sm:$0xff] %v531
  %536 = vst [vmem:[#allocation2 + $0x8] sm:$0xff] %v532
  %537 = vst [vmem:[#allocation2 + $0x10] sm:$0xff] %v533
  %538 = vst [vmem:[#allocation2 + $0x18] sm:$0xff] %v534
  // Predicated region
  $region18: #{unet_forward.18} parent=0 // pred_check
    %p539 = pneg %p15
  $region19: #{unet_forward.18} parent=0 // pred_check_branch
    %541 = sbr.rel (%p539) target = $region21
  $region20: #{unet_forward.18} parent=0 // pred_region
    %v542 = vld [vmem:[#allocation2] sm:$0xff]
    %v543 = vld [vmem:[#allocation2 + $0x8] sm:$0xff]
    %v544 = vld [vmem:[#allocation2 + $0x10] sm:$0xff]
    %v545 = vld [vmem:[#allocation2 + $0x18] sm:$0xff]
    %v546 = vld [vmem:[%s2] sm:$0x1]
    %v548 = vlaneseq
    %v549 = vshrl.u32 %v548, 7
    %v550 = vsub.s32 0, %v549
    %v551 = vrot.slane %v546, %v550
    %v553 = vadd.f32 %v542, %v551
    %v554 = vadd.f32 %v543, %v551
    %v555 = vadd.f32 %v544, %v551
    %v556 = vadd.f32 %v545, %v551
    %v557 = vpack.c.bf16 %v554, %v553
    %v558 = vpack.c.bf16 %v556, %v555
    %v561 = vunpack.c.l.b16 %v557
    %v562 = vunpack.c.h.b16 %v557
    %v563 = vunpack.c.l.b16 %v558
    %v564 = vunpack.c.h.b16 %v558
    %v565 = vpack.c.b16 %v561, %v561
    %v566 = vpack.c.b16 %v562, %v562
    %v567 = vpack.c.b16 %v563, %v563
    %v568 = vpack.c.b16 %v564, %v564
    %573 = vst [vmem:[%s3] sm:$0xf] %v565
    %574 = vst [vmem:[%s3 + $0x4] sm:$0xf] %v566
    %575 = vst [vmem:[%s3 + $0x8] sm:$0xf] %v567
    %576 = vst [vmem:[%s3 + $0xc] sm:$0xf] %v568
  $region21: #{unet_forward.18} parent=0 // pred_fallthru
    _
  // Predicated region
  $region22: #{unet_forward.18} parent=0 // pred_check
    _
  $region23: #{unet_forward.18} parent=0 // pred_check_branch
    %578 = sbr.rel (0) target = $region25
  $region24: #{unet_forward.18} parent=0 // pred_region
    _
  $region25: #{unet_forward.18} parent=0 // pred_fallthru
    _
  // Predicated region
  $region26: #{unet_forward.18} parent=0 // pred_check
    _
  $region27: #{unet_forward.18} parent=0 // pred_check_branch
    %580 = sbr.rel (0) target = $region29
  $region28: #{unet_forward.18} parent=0 // pred_region
    _
  $region29: #{unet_forward.18} parent=0 // pred_fallthru
    _

// kernel: unet_forward.19
$region0: #{unet_forward.19}
  #allocation0 [shape = 'u32[]', space=smem, size = 0x4, offset = 0x4, fixed_abs, tag = 'smem constant byte address 0x4 - core index']
  #allocation1 [shape = 'u32[144,128]{1,0:T(1,128)}', space=vmem, size = 0x12000, scoped, tag = 'internal scratch']
  #allocation2 [shape = 'f32[32,128]{1,0:T(8,128)}', space=vmem, size = 0x4000, scoped, tag = 'scratch operand']
  %s0 = inlined_call_operand.vmem [shape: bf16[32,64], index: 0, kind: input, shape index: {}]
  %s1 = inlined_call_operand.vmem [shape: bf16[64,128], index: 1, kind: input, shape index: {}]
  %s2 = inlined_call_operand.vmem [shape: f32[1,128], index: 2, kind: input, shape index: {}]
  %s3 = inlined_call_operand.vmem [shape: bf16[32,128], index: 3, kind: output, shape index: {}]
  %s4 = sld [smem:[#allocation0]]
  $region30: #{unet_forward.19} parent=0
    _
  %s6 = ssub.s32 1, %s4
  %s7 = scalar_select 0, %s6, %s4
  // Predicated region
  $region2: #{unet_forward.19} parent=0 // pred_check
    _
  $region3: #{unet_forward.19} parent=0 // pred_check_branch
    %9 = sbr.rel (0) target = $region5
  $region4: #{unet_forward.19} parent=0 // pred_region
    _
  $region5: #{unet_forward.19} parent=0 // pred_fallthru
    _
  // Predicated region
  $region6: #{unet_forward.19} parent=0 // pred_check
    _
  $region7: #{unet_forward.19} parent=0 // pred_check_branch
    %11 = sbr.rel (0) target = $region9
  $region8: #{unet_forward.19} parent=0 // pred_region
    _
  $region9: #{unet_forward.19} parent=0 // pred_fallthru
    _
  // Predicated region
  $region10: #{unet_forward.19} parent=0 // pred_check
    _
  $region11: #{unet_forward.19} parent=0 // pred_check_branch
    %13 = sbr.rel (0) target = $region13
  $region12: #{unet_forward.19} parent=0 // pred_region
    _
  $region13: #{unet_forward.19} parent=0 // pred_fallthru
    _
  %p15 = scmp.eq.s32.totalorder 0, 0
  // Predicated region
  $region14: #{unet_forward.19} parent=0 // pred_check
    %p16 = pneg %p15
  $region15: #{unet_forward.19} parent=0 // pred_check_branch
    %18 = sbr.rel (%p16) target = $region17
  $region16: #{unet_forward.19} parent=0 // pred_region
    %19 = vst [vmem:[#allocation2] sm:$0xff] 0.0
    %20 = vst [vmem:[#allocation2 + $0x8] sm:$0xff] 0.0
    %21 = vst [vmem:[#allocation2 + $0x10] sm:$0xff] 0.0
    %22 = vst [vmem:[#allocation2 + $0x18] sm:$0xff] 0.0
  $region17: #{unet_forward.19} parent=0 // pred_fallthru
    _
  %v23 = vld [vmem:[#allocation2] sm:$0xff]
  %v24 = vld [vmem:[#allocation2 + $0x8] sm:$0xff]
  %v25 = vld [vmem:[#allocation2 + $0x10] sm:$0xff]
  %v26 = vld [vmem:[#allocation2 + $0x18] sm:$0xff]
  %v27 = vld [vmem:[%s0] sm:$0xf]
  %v28 = vld [vmem:[%s0 + $0x4] sm:$0xf]
  %v29 = vld [vmem:[%s0 + $0x8] sm:$0xf]
  %v30 = vld [vmem:[%s0 + $0xc] sm:$0xf]
  %v31 = vld [vmem:[%s1] sm:$0xf]
  %v32 = vld [vmem:[%s1 + $0x4] sm:$0xf]
  %v33 = vld [vmem:[%s1 + $0x8] sm:$0xf]
  %v34 = vld [vmem:[%s1 + $0xc] sm:$0xf]
  %v35 = vld [vmem:[%s1 + $0x10] sm:$0xf]
  %v36 = vld [vmem:[%s1 + $0x14] sm:$0xf]
  %v37 = vld [vmem:[%s1 + $0x18] sm:$0xf]
  %v38 = vld [vmem:[%s1 + $0x1c] sm:$0xf]
  %v43 = vunpack.c.l.b16 %v27
  %v44 = vunpack.c.l.b16 %v28
  %v45 = vunpack.c.l.b16 %v29
  %v46 = vunpack.c.l.b16 %v30
  %v47 = vpack.c.b16 %v44, %v43
  %v48 = vpack.c.b16 %v46, %v45
  %v57 = vunpack.c.l.b16 %v31
  %v58 = vunpack.c.l.b16 %v32
  %v59 = vunpack.c.l.b16 %v33
  %v60 = vunpack.c.l.b16 %v34
  %v61 = vunpack.c.l.b16 %v35
  %v62 = vunpack.c.l.b16 %v36
  %v63 = vunpack.c.l.b16 %v37
  %v64 = vunpack.c.l.b16 %v38
  %v65 = vpack.c.b16 %v58, %v57
  %v66 = vpack.c.b16 %v60, %v59
  %v67 = vpack.c.b16 %v62, %v61
  %v68 = vpack.c.b16 %v64, %v63
  %vm73 = vcmask 523264
  %v75 = vsel %vm73, %v47, 0
  %v78 = vsel %vm73, %v48, 0
  %80 = vmatprep.subr.bf16.mxu0 0
  %81 = vmatpush1.bf16.msra.mxu0 0
  %82 = vmatprep.subr.bf16.mxu0 0
  %83 = vmatpush1.bf16.msra.mxu0 0
  %84 = vmatprep.subr.bf16.mxu0 0
  %85 = vmatpush1.bf16.msra.mxu0 0
  %86 = vmatprep.subr.bf16.mxu0 0
  %87 = vmatpush1.bf16.msra.mxu0 0
  %88 = vmatprep.subr.bf16.mxu0 0
  %89 = vmatpush1.bf16.msra.mxu0 %v68
  %90 = vmatprep.subr.bf16.mxu0 0
  %91 = vmatpush1.bf16.msra.mxu0 %v67
  %92 = vmatprep.subr.bf16.mxu0 0
  %93 = vmatpush1.bf16.msra.mxu0 %v66
  %94 = vmatprep.subr.bf16.mxu0 0
  %95 = vmatpush1.bf16.msra.mxu0 %v65
  %96 = vmatprep.subr.bf16.mxu0 0
  %97 = vmatpush2.bf16.msra.mxu0 0
  %98 = vmatprep.subr.bf16.mxu0 0
  %99 = vmatpush2.bf16.msra.mxu0 0
  %100 = vmatprep.subr.bf16.mxu0 0
  %101 = vmatpush2.bf16.msra.mxu0 0
  %102 = vmatprep.subr.bf16.mxu0 0
  %103 = vmatpush2.bf16.msra.mxu0 0
  %104 = vmatprep.subr.bf16.mxu0 0
  %105 = vmatpush2.bf16.msra.mxu0 0
  %106 = vmatprep.subr.bf16.mxu0 0
  %107 = vmatpush2.bf16.msra.mxu0 0
  %108 = vmatprep.subr.bf16.mxu0 0
  %109 = vmatpush2.bf16.msra.mxu0 0
  %110 = vmatprep.subr.bf16.mxu0 0
  %111 = vmatpush2.bf16.msra.mxu0 0
  %112 = vmatprep.mubr.bf16.mxu0 0
  %113 = vmatmul.mubr.bf16.gmra.mxu0 %v75
  %v114 = vpop.f32.mrf.mxu0
  %v115 = vadd.f32 0.0, %v114
  %v116 = vpop.f32.mrf.mxu0
  %v117 = vpop.f32.mrf.mxu0
  %v118 = vadd.f32 0.0, %v117
  %v119 = vpop.f32.mrf.mxu0
  %120 = vmatprep.mubr.bf16.mxu0 0
  %121 = vmatmul.mubr.bf16.gmra.mxu0 %v78
  %v122 = vpop.f32.mrf.mxu0
  %v123 = vadd.f32 0.0, %v122
  %v124 = vpop.f32.mrf.mxu0
  %v125 = vpop.f32.mrf.mxu0
  %v126 = vadd.f32 0.0, %v125
  %v127 = vpop.f32.mrf.mxu0
  %128 = vdwg.mxu0
  %v129 = vadd.f32 %v23, %v115
  %v130 = vadd.f32 %v24, %v118
  %v131 = vadd.f32 %v25, %v123
  %v132 = vadd.f32 %v26, %v126
  %133 = vst [vmem:[#allocation2] sm:$0xff] %v129
  %134 = vst [vmem:[#allocation2 + $0x8] sm:$0xff] %v130
  %135 = vst [vmem:[#allocation2 + $0x10] sm:$0xff] %v131
  %136 = vst [vmem:[#allocation2 + $0x18] sm:$0xff] %v132
  // Predicated region
  $region18: #{unet_forward.19} parent=0 // pred_check
    %p137 = pneg %p15
  $region19: #{unet_forward.19} parent=0 // pred_check_branch
    %139 = sbr.rel (%p137) target = $region21
  $region20: #{unet_forward.19} parent=0 // pred_region
    %v140 = vld [vmem:[#allocation2] sm:$0xff]
    %v141 = vld [vmem:[#allocation2 + $0x8] sm:$0xff]
    %v142 = vld [vmem:[#allocation2 + $0x10] sm:$0xff]
    %v143 = vld [vmem:[#allocation2 + $0x18] sm:$0xff]
    %v144 = vld [vmem:[%s2] sm:$0x1]
    %v146 = vlaneseq
    %v147 = vshrl.u32 %v146, 7
    %v148 = vsub.s32 0, %v147
    %v149 = vrot.slane %v144, %v148
    %v151 = vadd.f32 %v140, %v149
    %v152 = vadd.f32 %v141, %v149
    %v153 = vadd.f32 %v142, %v149
    %v154 = vadd.f32 %v143, %v149
    %v155 = vpack.c.bf16 %v152, %v151
    %v156 = vpack.c.bf16 %v154, %v153
    %v159 = vunpack.c.l.b16 %v155
    %v160 = vunpack.c.h.b16 %v155
    %v161 = vunpack.c.l.b16 %v156
    %v162 = vunpack.c.h.b16 %v156
    %v163 = vpack.c.b16 %v159, %v159
    %v164 = vpack.c.b16 %v160, %v160
    %v165 = vpack.c.b16 %v161, %v161
    %v166 = vpack.c.b16 %v162, %v162
    %171 = vst [vmem:[%s3] sm:$0xf] %v163
    %172 = vst [vmem:[%s3 + $0x4] sm:$0xf] %v164
    %173 = vst [vmem:[%s3 + $0x8] sm:$0xf] %v165
    %174 = vst [vmem:[%s3 + $0xc] sm:$0xf] %v166
  $region21: #{unet_forward.19} parent=0 // pred_fallthru
    _
  // Predicated region
  $region22: #{unet_forward.19} parent=0 // pred_check
    _
  $region23: #{unet_forward.19} parent=0 // pred_check_branch
    %176 = sbr.rel (0) target = $region25
  $region24: #{unet_forward.19} parent=0 // pred_region
    _
  $region25: #{unet_forward.19} parent=0 // pred_fallthru
    _
  // Predicated region
  $region26: #{unet_forward.19} parent=0 // pred_check
    _
  $region27: #{unet_forward.19} parent=0 // pred_check_branch
    %178 = sbr.rel (0) target = $region29
  $region28: #{unet_forward.19} parent=0 // pred_region
    _
  $region29: #{unet_forward.19} parent=0 // pred_fallthru
    _

// kernel: tile.18
$region0: #{tile.18}
  #allocation0 [shape = 's32[1]{0}', space=sflag, size = 0x4, scoped, tag = 'scoped memory for tile.18']
  %s0 = inlined_call_operand.vmem [shape: f32[16], index: 0, kind: input, shape index: {}]
  %s1 = inlined_call_operand.vmem [shape: f32[4,16], index: 1, kind: output, shape index: {}]
  // Predicated region
  $region2: #{tile.18} parent=0 // pred_check
    _
  $region3: #{tile.18} parent=0 // pred_check_branch
    %3 = sbr.rel (0) target = $region5
  $region4: #{tile.18} parent=0 // pred_region
    _
  $region5: #{tile.18} parent=0 // pred_fallthru
    _
  %v4 = vld [vmem:[%s0] ss:$0 sm:$0xff]
  %5 = vst [vmem:[%s1] sm:$0xf] %v4

// kernel: tile.19
$region0: #{tile.19}
  %s0 = inlined_call_operand.vmem [shape: f32[4,16], index: 0, kind: input, shape index: {}]
  %s1 = inlined_call_operand.vmem [shape: f32[64], index: 1, kind: output, shape index: {}]
  $region1: #{tile.19} parent=0
    #allocation0 [shape = 'u8[4096]{0}', space=vmem, size = 0x1000, scoped, tag = 'scoped mem for output reshape']
    #allocation1 [shape = 'u8[4096]{0}', space=vmem, size = 0x1000, scoped, tag = 'scoped mem for input reshape']
    %s3 = sshll.u32 1, 4
    %s4 = ssub.s32 %s3, 1
    %v5 = vld [vmem:[%s0] sm:%s4]
    %6 = vst [vmem:[#allocation1] sm:%s4] %v5
    %v7 = vld [vmem:[#allocation1] sm:$0x1]
    %vm8 = vcmask 130048
    %9 = vst.msk [vmem:[#allocation0] sm:$0x1] %vm8, %v7
    %s10 = scalar_lea.vmem [#allocation1], 3
    %v11 = vld [vmem:[%s10] sm:$0x1]
    %12 = vrot.lane.b32.xlu0 %v11, 48
    %v13 = vpop.permute.xlu0 %12
    %vm14 = vcmask 523648
    %15 = vst.msk [vmem:[#allocation0] sm:$0x1] %vm14, %v13
    %s16 = scalar_lea.vmem [#allocation1], 2
    %v17 = vld [vmem:[%s16] sm:$0x1]
    %18 = vrot.lane.b32.xlu0 %v17, 32
    %v19 = vpop.permute.xlu0 %18
    %vm20 = vcmask 392448
    %21 = vst.msk [vmem:[#allocation0] sm:$0x1] %vm20, %v19
    %s22 = scalar_lea.vmem [#allocation1], 1
    %v23 = vld [vmem:[%s22] sm:$0x1]
    %24 = vrot.lane.b32.xlu0 %v23, 16
    %v25 = vpop.permute.xlu0 %24
    %vm26 = vcmask 261248
    %27 = vst.msk [vmem:[#allocation0] sm:$0x1] %vm26, %v25
    %s29 = sshll.u32 1, 1
    %s30 = ssub.s32 %s29, 1
    %v32 = vld [vmem:[#allocation0] sm:%s30]
    %s33 = sshll.u32 1, 1
    %s34 = ssub.s32 %s33, 1
    %35 = vst [vmem:[%s1] sm:%s34] %v32

// kernel: unet_forward.22
$region0: #{unet_forward.22}
  #allocation0 [shape = 'u32[]', space=smem, size = 0x4, offset = 0x4, fixed_abs, tag = 'smem constant byte address 0x4 - core index']
  #allocation1 [shape = 'u32[144,128]{1,0:T(1,128)}', space=vmem, size = 0x12000, scoped, tag = 'internal scratch']
  #allocation2 [shape = 'f32[128,128]{1,0:T(8,128)}', space=vmem, size = 0x10000, scoped, tag = 'scratch operand']
  %s0 = inlined_call_operand.vmem [shape: bf16[128,32], index: 0, kind: input, shape index: {}]
  %s1 = inlined_call_operand.vmem [shape: bf16[32,128], index: 1, kind: input, shape index: {}]
  %s2 = inlined_call_operand.vmem [shape: f32[1,128], index: 2, kind: input, shape index: {}]
  %s3 = inlined_call_operand.vmem [shape: bf16[128,128], index: 3, kind: output, shape index: {}]
  %s4 = sld [smem:[#allocation0]]
  $region30: #{unet_forward.22} parent=0
    _
  %s6 = ssub.s32 1, %s4
  %s7 = scalar_select 0, %s6, %s4
  // Predicated region
  $region2: #{unet_forward.22} parent=0 // pred_check
    _
  $region3: #{unet_forward.22} parent=0 // pred_check_branch
    %9 = sbr.rel (0) target = $region5
  $region4: #{unet_forward.22} parent=0 // pred_region
    _
  $region5: #{unet_forward.22} parent=0 // pred_fallthru
    _
  // Predicated region
  $region6: #{unet_forward.22} parent=0 // pred_check
    _
  $region7: #{unet_forward.22} parent=0 // pred_check_branch
    %11 = sbr.rel (0) target = $region9
  $region8: #{unet_forward.22} parent=0 // pred_region
    _
  $region9: #{unet_forward.22} parent=0 // pred_fallthru
    _
  // Predicated region
  $region10: #{unet_forward.22} parent=0 // pred_check
    _
  $region11: #{unet_forward.22} parent=0 // pred_check_branch
    %13 = sbr.rel (0) target = $region13
  $region12: #{unet_forward.22} parent=0 // pred_region
    _
  $region13: #{unet_forward.22} parent=0 // pred_fallthru
    _
  %p15 = scmp.eq.s32.totalorder 0, 0
  // Predicated region
  $region14: #{unet_forward.22} parent=0 // pred_check
    %p16 = pneg %p15
  $region15: #{unet_forward.22} parent=0 // pred_check_branch
    %18 = sbr.rel (%p16) target = $region17
  $region16: #{unet_forward.22} parent=0 // pred_region
    %19 = vst [vmem:[#allocation2] sm:$0xff] 0.0
    %20 = vst [vmem:[#allocation2 + $0x8] sm:$0xff] 0.0
    %21 = vst [vmem:[#allocation2 + $0x10] sm:$0xff] 0.0
    %22 = vst [vmem:[#allocation2 + $0x18] sm:$0xff] 0.0
    %23 = vst [vmem:[#allocation2 + $0x20] sm:$0xff] 0.0
    %24 = vst [vmem:[#allocation2 + $0x28] sm:$0xff] 0.0
    %25 = vst [vmem:[#allocation2 + $0x30] sm:$0xff] 0.0
    %26 = vst [vmem:[#allocation2 + $0x38] sm:$0xff] 0.0
    %27 = vst [vmem:[#allocation2 + $0x40] sm:$0xff] 0.0
    %28 = vst [vmem:[#allocation2 + $0x48] sm:$0xff] 0.0
    %29 = vst [vmem:[#allocation2 + $0x50] sm:$0xff] 0.0
    %30 = vst [vmem:[#allocation2 + $0x58] sm:$0xff] 0.0
    %31 = vst [vmem:[#allocation2 + $0x60] sm:$0xff] 0.0
    %32 = vst [vmem:[#allocation2 + $0x68] sm:$0xff] 0.0
    %33 = vst [vmem:[#allocation2 + $0x70] sm:$0xff] 0.0
    %34 = vst [vmem:[#allocation2 + $0x78] sm:$0xff] 0.0
  $region17: #{unet_forward.22} parent=0 // pred_fallthru
    _
  %v35 = vld [vmem:[#allocation2] sm:$0xff]
  %v36 = vld [vmem:[#allocation2 + $0x8] sm:$0xff]
  %v37 = vld [vmem:[#allocation2 + $0x10] sm:$0xff]
  %v38 = vld [vmem:[#allocation2 + $0x18] sm:$0xff]
  %v39 = vld [vmem:[#allocation2 + $0x20] sm:$0xff]
  %v40 = vld [vmem:[#allocation2 + $0x28] sm:$0xff]
  %v41 = vld [vmem:[#allocation2 + $0x30] sm:$0xff]
  %v42 = vld [vmem:[#allocation2 + $0x38] sm:$0xff]
  %v43 = vld [vmem:[#allocation2 + $0x40] sm:$0xff]
  %v44 = vld [vmem:[#allocation2 + $0x48] sm:$0xff]
  %v45 = vld [vmem:[#allocation2 + $0x50] sm:$0xff]
  %v46 = vld [vmem:[#allocation2 + $0x58] sm:$0xff]
  %v47 = vld [vmem:[#allocation2 + $0x60] sm:$0xff]
  %v48 = vld [vmem:[#allocation2 + $0x68] sm:$0xff]
  %v49 = vld [vmem:[#allocation2 + $0x70] sm:$0xff]
  %v50 = vld [vmem:[#allocation2 + $0x78] sm:$0xff]
  %v51 = vld [vmem:[%s0] sm:$0xf]
  %v52 = vld [vmem:[%s0 + $0x4] sm:$0xf]
  %v53 = vld [vmem:[%s0 + $0x8] sm:$0xf]
  %v54 = vld [vmem:[%s0 + $0xc] sm:$0xf]
  %v55 = vld [vmem:[%s0 + $0x10] sm:$0xf]
  %v56 = vld [vmem:[%s0 + $0x14] sm:$0xf]
  %v57 = vld [vmem:[%s0 + $0x18] sm:$0xf]
  %v58 = vld [vmem:[%s0 + $0x1c] sm:$0xf]
  %v59 = vld [vmem:[%s0 + $0x20] sm:$0xf]
  %v60 = vld [vmem:[%s0 + $0x24] sm:$0xf]
  %v61 = vld [vmem:[%s0 + $0x28] sm:$0xf]
  %v62 = vld [vmem:[%s0 + $0x2c] sm:$0xf]
  %v63 = vld [vmem:[%s0 + $0x30] sm:$0xf]
  %v64 = vld [vmem:[%s0 + $0x34] sm:$0xf]
  %v65 = vld [vmem:[%s0 + $0x38] sm:$0xf]
  %v66 = vld [vmem:[%s0 + $0x3c] sm:$0xf]
  %v67 = vld [vmem:[%s1] sm:$0xf]
  %v68 = vld [vmem:[%s1 + $0x4] sm:$0xf]
  %v69 = vld [vmem:[%s1 + $0x8] sm:$0xf]
  %v70 = vld [vmem:[%s1 + $0xc] sm:$0xf]
  %v87 = vunpack.c.l.b16 %v51
  %v88 = vunpack.c.l.b16 %v52
  %v89 = vunpack.c.l.b16 %v53
  %v90 = vunpack.c.l.b16 %v54
  %v91 = vunpack.c.l.b16 %v55
  %v92 = vunpack.c.l.b16 %v56
  %v93 = vunpack.c.l.b16 %v57
  %v94 = vunpack.c.l.b16 %v58
  %v95 = vunpack.c.l.b16 %v59
  %v96 = vunpack.c.l.b16 %v60
  %v97 = vunpack.c.l.b16 %v61
  %v98 = vunpack.c.l.b16 %v62
  %v99 = vunpack.c.l.b16 %v63
  %v100 = vunpack.c.l.b16 %v64
  %v101 = vunpack.c.l.b16 %v65
  %v102 = vunpack.c.l.b16 %v66
  %v103 = vpack.c.b16 %v88, %v87
  %v104 = vpack.c.b16 %v90, %v89
  %v105 = vpack.c.b16 %v92, %v91
  %v106 = vpack.c.b16 %v94, %v93
  %v107 = vpack.c.b16 %v96, %v95
  %v108 = vpack.c.b16 %v98, %v97
  %v109 = vpack.c.b16 %v100, %v99
  %v110 = vpack.c.b16 %v102, %v101
  %v115 = vunpack.c.l.b16 %v67
  %v116 = vunpack.c.l.b16 %v68
  %v117 = vunpack.c.l.b16 %v69
  %v118 = vunpack.c.l.b16 %v70
  %v119 = vpack.c.b16 %v116, %v115
  %v120 = vpack.c.b16 %v118, %v117
  %vm123 = vcmask 261120
  %v125 = vsel %vm123, %v103, 0
  %v128 = vsel %vm123, %v104, 0
  %v131 = vsel %vm123, %v105, 0
  %v134 = vsel %vm123, %v106, 0
  %v137 = vsel %vm123, %v107, 0
  %v140 = vsel %vm123, %v108, 0
  %v143 = vsel %vm123, %v109, 0
  %v146 = vsel %vm123, %v110, 0
  %148 = vmatprep.subr.bf16.mxu0 0
  %149 = vmatpush1.bf16.msra.mxu0 0
  %150 = vmatprep.subr.bf16.mxu0 0
  %151 = vmatpush1.bf16.msra.mxu0 0
  %152 = vmatprep.subr.bf16.mxu0 0
  %153 = vmatpush1.bf16.msra.mxu0 0
  %154 = vmatprep.subr.bf16.mxu0 0
  %155 = vmatpush1.bf16.msra.mxu0 0
  %156 = vmatprep.subr.bf16.mxu0 0
  %157 = vmatpush1.bf16.msra.mxu0 0
  %158 = vmatprep.subr.bf16.mxu0 0
  %159 = vmatpush1.bf16.msra.mxu0 0
  %160 = vmatprep.subr.bf16.mxu0 0
  %161 = vmatpush1.bf16.msra.mxu0 %v120
  %162 = vmatprep.subr.bf16.mxu0 0
  %163 = vmatpush1.bf16.msra.mxu0 %v119
  %164 = vmatprep.subr.bf16.mxu0 0
  %165 = vmatpush2.bf16.msra.mxu0 0
  %166 = vmatprep.subr.bf16.mxu0 0
  %167 = vmatpush2.bf16.msra.mxu0 0
  %168 = vmatprep.subr.bf16.mxu0 0
  %169 = vmatpush2.bf16.msra.mxu0 0
  %170 = vmatprep.subr.bf16.mxu0 0
  %171 = vmatpush2.bf16.msra.mxu0 0
  %172 = vmatprep.subr.bf16.mxu0 0
  %173 = vmatpush2.bf16.msra.mxu0 0
  %174 = vmatprep.subr.bf16.mxu0 0
  %175 = vmatpush2.bf16.msra.mxu0 0
  %176 = vmatprep.subr.bf16.mxu0 0
  %177 = vmatpush2.bf16.msra.mxu0 0
  %178 = vmatprep.subr.bf16.mxu0 0
  %179 = vmatpush2.bf16.msra.mxu0 0
  %180 = vmatprep.mubr.bf16.mxu0 0
  %181 = vmatmul.mubr.bf16.gmra.mxu0 %v125
  %v182 = vpop.f32.mrf.mxu0
  %v183 = vadd.f32 0.0, %v182
  %v184 = vpop.f32.mrf.mxu0
  %v185 = vpop.f32.mrf.mxu0
  %v186 = vadd.f32 0.0, %v185
  %v187 = vpop.f32.mrf.mxu0
  %188 = vmatprep.mubr.bf16.mxu0 0
  %189 = vmatmul.mubr.bf16.gmra.mxu0 %v128
  %v190 = vpop.f32.mrf.mxu0
  %v191 = vadd.f32 0.0, %v190
  %v192 = vpop.f32.mrf.mxu0
  %v193 = vpop.f32.mrf.mxu0
  %v194 = vadd.f32 0.0, %v193
  %v195 = vpop.f32.mrf.mxu0
  %196 = vmatprep.mubr.bf16.mxu0 0
  %197 = vmatmul.mubr.bf16.gmra.mxu0 %v131
  %v198 = vpop.f32.mrf.mxu0
  %v199 = vadd.f32 0.0, %v198
  %v200 = vpop.f32.mrf.mxu0
  %v201 = vpop.f32.mrf.mxu0
  %v202 = vadd.f32 0.0, %v201
  %v203 = vpop.f32.mrf.mxu0
  %204 = vmatprep.mubr.bf16.mxu0 0
  %205 = vmatmul.mubr.bf16.gmra.mxu0 %v134
  %v206 = vpop.f32.mrf.mxu0
  %v207 = vadd.f32 0.0, %v206
  %v208 = vpop.f32.mrf.mxu0
  %v209 = vpop.f32.mrf.mxu0
  %v210 = vadd.f32 0.0, %v209
  %v211 = vpop.f32.mrf.mxu0
  %212 = vmatprep.mubr.bf16.mxu0 0
  %213 = vmatmul.mubr.bf16.gmra.mxu0 %v137
  %v214 = vpop.f32.mrf.mxu0
  %v215 = vadd.f32 0.0, %v214
  %v216 = vpop.f32.mrf.mxu0
  %v217 = vpop.f32.mrf.mxu0
  %v218 = vadd.f32 0.0, %v217
  %v219 = vpop.f32.mrf.mxu0
  %220 = vmatprep.mubr.bf16.mxu0 0
  %221 = vmatmul.mubr.bf16.gmra.mxu0 %v140
  %v222 = vpop.f32.mrf.mxu0
  %v223 = vadd.f32 0.0, %v222
  %v224 = vpop.f32.mrf.mxu0
  %v225 = vpop.f32.mrf.mxu0
  %v226 = vadd.f32 0.0, %v225
  %v227 = vpop.f32.mrf.mxu0
  %228 = vmatprep.mubr.bf16.mxu0 0
  %229 = vmatmul.mubr.bf16.gmra.mxu0 %v143
  %v230 = vpop.f32.mrf.mxu0
  %v231 = vadd.f32 0.0, %v230
  %v232 = vpop.f32.mrf.mxu0
  %v233 = vpop.f32.mrf.mxu0
  %v234 = vadd.f32 0.0, %v233
  %v235 = vpop.f32.mrf.mxu0
  %236 = vmatprep.mubr.bf16.mxu0 0
  %237 = vmatmul.mubr.bf16.gmra.mxu0 %v146
  %v238 = vpop.f32.mrf.mxu0
  %v239 = vadd.f32 0.0, %v238
  %v240 = vpop.f32.mrf.mxu0
  %v241 = vpop.f32.mrf.mxu0
  %v242 = vadd.f32 0.0, %v241
  %v243 = vpop.f32.mrf.mxu0
  %244 = vdwg.mxu0
  %v245 = vadd.f32 %v35, %v183
  %v246 = vadd.f32 %v36, %v186
  %v247 = vadd.f32 %v37, %v191
  %v248 = vadd.f32 %v38, %v194
  %v249 = vadd.f32 %v39, %v199
  %v250 = vadd.f32 %v40, %v202
  %v251 = vadd.f32 %v41, %v207
  %v252 = vadd.f32 %v42, %v210
  %v253 = vadd.f32 %v43, %v215
  %v254 = vadd.f32 %v44, %v218
  %v255 = vadd.f32 %v45, %v223
  %v256 = vadd.f32 %v46, %v226
  %v257 = vadd.f32 %v47, %v231
  %v258 = vadd.f32 %v48, %v234
  %v259 = vadd.f32 %v49, %v239
  %v260 = vadd.f32 %v50, %v242
  %261 = vst [vmem:[#allocation2] sm:$0xff] %v245
  %262 = vst [vmem:[#allocation2 + $0x8] sm:$0xff] %v246
  %263 = vst [vmem:[#allocation2 + $0x10] sm:$0xff] %v247
  %264 = vst [vmem:[#allocation2 + $0x18] sm:$0xff] %v248
  %265 = vst [vmem:[#allocation2 + $0x20] sm:$0xff] %v249
  %266 = vst [vmem:[#allocation2 + $0x28] sm:$0xff] %v250
  %267 = vst [vmem:[#allocation2 + $0x30] sm:$0xff] %v251
  %268 = vst [vmem:[#allocation2 + $0x38] sm:$0xff] %v252
  %269 = vst [vmem:[#allocation2 + $0x40] sm:$0xff] %v253
  %270 = vst [vmem:[#allocation2 + $0x48] sm:$0xff] %v254
  %271 = vst [vmem:[#allocation2 + $0x50] sm:$0xff] %v255
  %272 = vst [vmem:[#allocation2 + $0x58] sm:$0xff] %v256
  %273 = vst [vmem:[#allocation2 + $0x60] sm:$0xff] %v257
  %274 = vst [vmem:[#allocation2 + $0x68] sm:$0xff] %v258
  %275 = vst [vmem:[#allocation2 + $0x70] sm:$0xff] %v259
  %276 = vst [vmem:[#allocation2 + $0x78] sm:$0xff] %v260
  // Predicated region
  $region18: #{unet_forward.22} parent=0 // pred_check
    %p277 = pneg %p15
  $region19: #{unet_forward.22} parent=0 // pred_check_branch
    %279 = sbr.rel (%p277) target = $region21
  $region20: #{unet_forward.22} parent=0 // pred_region
    %v280 = vld [vmem:[#allocation2] sm:$0xff]
    %v281 = vld [vmem:[#allocation2 + $0x8] sm:$0xff]
    %v282 = vld [vmem:[#allocation2 + $0x10] sm:$0xff]
    %v283 = vld [vmem:[#allocation2 + $0x18] sm:$0xff]
    %v284 = vld [vmem:[#allocation2 + $0x20] sm:$0xff]
    %v285 = vld [vmem:[#allocation2 + $0x28] sm:$0xff]
    %v286 = vld [vmem:[#allocation2 + $0x30] sm:$0xff]
    %v287 = vld [vmem:[#allocation2 + $0x38] sm:$0xff]
    %v288 = vld [vmem:[#allocation2 + $0x40] sm:$0xff]
    %v289 = vld [vmem:[#allocation2 + $0x48] sm:$0xff]
    %v290 = vld [vmem:[#allocation2 + $0x50] sm:$0xff]
    %v291 = vld [vmem:[#allocation2 + $0x58] sm:$0xff]
    %v292 = vld [vmem:[#allocation2 + $0x60] sm:$0xff]
    %v293 = vld [vmem:[#allocation2 + $0x68] sm:$0xff]
    %v294 = vld [vmem:[#allocation2 + $0x70] sm:$0xff]
    %v295 = vld [vmem:[#allocation2 + $0x78] sm:$0xff]
    %v296 = vld [vmem:[%s2] sm:$0x1]
    %v298 = vlaneseq
    %v299 = vshrl.u32 %v298, 7
    %v300 = vsub.s32 0, %v299
    %v301 = vrot.slane %v296, %v300
    %v303 = vadd.f32 %v280, %v301
    %v304 = vadd.f32 %v281, %v301
    %v305 = vadd.f32 %v282, %v301
    %v306 = vadd.f32 %v283, %v301
    %v307 = vadd.f32 %v284, %v301
    %v308 = vadd.f32 %v285, %v301
    %v309 = vadd.f32 %v286, %v301
    %v310 = vadd.f32 %v287, %v301
    %v311 = vadd.f32 %v288, %v301
    %v312 = vadd.f32 %v289, %v301
    %v313 = vadd.f32 %v290, %v301
    %v314 = vadd.f32 %v291, %v301
    %v315 = vadd.f32 %v292, %v301
    %v316 = vadd.f32 %v293, %v301
    %v317 = vadd.f32 %v294, %v301
    %v318 = vadd.f32 %v295, %v301
    %v319 = vpack.c.bf16 %v304, %v303
    %v320 = vpack.c.bf16 %v306, %v305
    %v321 = vpack.c.bf16 %v308, %v307
    %v322 = vpack.c.bf16 %v310, %v309
    %v323 = vpack.c.bf16 %v312, %v311
    %v324 = vpack.c.bf16 %v314, %v313
    %v325 = vpack.c.bf16 %v316, %v315
    %v326 = vpack.c.bf16 %v318, %v317
    %v335 = vunpack.c.l.b16 %v319
    %v336 = vunpack.c.h.b16 %v319
    %v337 = vunpack.c.l.b16 %v320
    %v338 = vunpack.c.h.b16 %v320
    %v339 = vunpack.c.l.b16 %v321
    %v340 = vunpack.c.h.b16 %v321
    %v341 = vunpack.c.l.b16 %v322
    %v342 = vunpack.c.h.b16 %v322
    %v343 = vunpack.c.l.b16 %v323
    %v344 = vunpack.c.h.b16 %v323
    %v345 = vunpack.c.l.b16 %v324
    %v346 = vunpack.c.h.b16 %v324
    %v347 = vunpack.c.l.b16 %v325
    %v348 = vunpack.c.h.b16 %v325
    %v349 = vunpack.c.l.b16 %v326
    %v350 = vunpack.c.h.b16 %v326
    %v351 = vpack.c.b16 %v335, %v335
    %v352 = vpack.c.b16 %v336, %v336
    %v353 = vpack.c.b16 %v337, %v337
    %v354 = vpack.c.b16 %v338, %v338
    %v355 = vpack.c.b16 %v339, %v339
    %v356 = vpack.c.b16 %v340, %v340
    %v357 = vpack.c.b16 %v341, %v341
    %v358 = vpack.c.b16 %v342, %v342
    %v359 = vpack.c.b16 %v343, %v343
    %v360 = vpack.c.b16 %v344, %v344
    %v361 = vpack.c.b16 %v345, %v345
    %v362 = vpack.c.b16 %v346, %v346
    %v363 = vpack.c.b16 %v347, %v347
    %v364 = vpack.c.b16 %v348, %v348
    %v365 = vpack.c.b16 %v349, %v349
    %v366 = vpack.c.b16 %v350, %v350
    %383 = vst [vmem:[%s3] sm:$0xf] %v351
    %384 = vst [vmem:[%s3 + $0x4] sm:$0xf] %v352
    %385 = vst [vmem:[%s3 + $0x8] sm:$0xf] %v353
    %386 = vst [vmem:[%s3 + $0xc] sm:$0xf] %v354
    %387 = vst [vmem:[%s3 + $0x10] sm:$0xf] %v355
    %388 = vst [vmem:[%s3 + $0x14] sm:$0xf] %v356
    %389 = vst [vmem:[%s3 + $0x18] sm:$0xf] %v357
    %390 = vst [vmem:[%s3 + $0x1c] sm:$0xf] %v358
    %391 = vst [vmem:[%s3 + $0x20] sm:$0xf] %v359
    %392 = vst [vmem:[%s3 + $0x24] sm:$0xf] %v360
    %393 = vst [vmem:[%s3 + $0x28] sm:$0xf] %v361
    %394 = vst [vmem:[%s3 + $0x2c] sm:$0xf] %v362
    %395 = vst [vmem:[%s3 + $0x30] sm:$0xf] %v363
    %396 = vst [vmem:[%s3 + $0x34] sm:$0xf] %v364
    %397 = vst [vmem:[%s3 + $0x38] sm:$0xf] %v365
    %398 = vst [vmem:[%s3 + $0x3c] sm:$0xf] %v366
  $region21: #{unet_forward.22} parent=0 // pred_fallthru
    _
  // Predicated region
  $region22: #{unet_forward.22} parent=0 // pred_check
    _
  $region23: #{unet_forward.22} parent=0 // pred_check_branch
    %400 = sbr.rel (0) target = $region25
  $region24: #{unet_forward.22} parent=0 // pred_region
    _
  $region25: #{unet_forward.22} parent=0 // pred_fallthru
    _
  // Predicated region
  $region26: #{unet_forward.22} parent=0 // pred_check
    _
  $region27: #{unet_forward.22} parent=0 // pred_check_branch
    %402 = sbr.rel (0) target = $region29
  $region28: #{unet_forward.22} parent=0 // pred_region
    _
  $region29: #{unet_forward.22} parent=0 // pred_fallthru
    _

// kernel: unet_forward.20
$region0: #{unet_forward.20}
  #allocation0 [shape = 'u32[]', space=smem, size = 0x4, offset = 0x4, fixed_abs, tag = 'smem constant byte address 0x4 - core index']
  #allocation1 [shape = 'u32[144,128]{1,0:T(1,128)}', space=vmem, size = 0x12000, scoped, tag = 'internal scratch']
  #allocation2 [shape = 'f32[128,128]{1,0:T(8,128)}', space=vmem, size = 0x10000, scoped, tag = 'scratch operand']
  %s0 = inlined_call_operand.vmem [shape: bf16[128,288], index: 0, kind: input, shape index: {}]
  %s1 = inlined_call_operand.vmem [shape: bf16[288,128], index: 1, kind: input, shape index: {}]
  %s2 = inlined_call_operand.vmem [shape: bf16[128,288], index: 2, kind: input, shape index: {}]
  %s3 = inlined_call_operand.vmem [shape: bf16[288,128], index: 3, kind: input, shape index: {}]
  %s4 = inlined_call_operand.vmem [shape: f32[1,128], index: 4, kind: input, shape index: {}]
  %s5 = inlined_call_operand.vmem [shape: bf16[128,128], index: 5, kind: output, shape index: {}]
  %s6 = sld [smem:[#allocation0]]
  $region38: #{unet_forward.20} parent=0
    _
  %s8 = ssub.s32 1, %s6
  %s9 = scalar_select 0, %s8, %s6
  // Predicated region
  $region2: #{unet_forward.20} parent=0 // pred_check
    _
  $region3: #{unet_forward.20} parent=0 // pred_check_branch
    %11 = sbr.rel (0) target = $region5
  $region4: #{unet_forward.20} parent=0 // pred_region
    _
  $region5: #{unet_forward.20} parent=0 // pred_fallthru
    _
  // Predicated region
  $region6: #{unet_forward.20} parent=0 // pred_check
    _
  $region7: #{unet_forward.20} parent=0 // pred_check_branch
    %13 = sbr.rel (0) target = $region9
  $region8: #{unet_forward.20} parent=0 // pred_region
    _
  $region9: #{unet_forward.20} parent=0 // pred_fallthru
    _
  // Predicated region
  $region10: #{unet_forward.20} parent=0 // pred_check
    _
  $region11: #{unet_forward.20} parent=0 // pred_check_branch
    %15 = sbr.rel (0) target = $region13
  $region12: #{unet_forward.20} parent=0 // pred_region
    _
  $region13: #{unet_forward.20} parent=0 // pred_fallthru
    _
  // Predicated region
  $region14: #{unet_forward.20} parent=0 // pred_check
    _
  $region15: #{unet_forward.20} parent=0 // pred_check_branch
    %17 = sbr.rel (0) target = $region17
  $region16: #{unet_forward.20} parent=0 // pred_region
    _
  $region17: #{unet_forward.20} parent=0 // pred_fallthru
    _
  // Predicated region
  $region18: #{unet_forward.20} parent=0 // pred_check
    _
  $region19: #{unet_forward.20} parent=0 // pred_check_branch
    %19 = sbr.rel (0) target = $region21
  $region20: #{unet_forward.20} parent=0 // pred_region
    _
  $region21: #{unet_forward.20} parent=0 // pred_fallthru
    _
  %p21 = scmp.eq.s32.totalorder 0, 0
  // Predicated region
  $region22: #{unet_forward.20} parent=0 // pred_check
    %p22 = pneg %p21
  $region23: #{unet_forward.20} parent=0 // pred_check_branch
    %24 = sbr.rel (%p22) target = $region25
  $region24: #{unet_forward.20} parent=0 // pred_region
    %25 = vst [vmem:[#allocation2] sm:$0xff] 0.0
    %26 = vst [vmem:[#allocation2 + $0x8] sm:$0xff] 0.0
    %27 = vst [vmem:[#allocation2 + $0x10] sm:$0xff] 0.0
    %28 = vst [vmem:[#allocation2 + $0x18] sm:$0xff] 0.0
    %29 = vst [vmem:[#allocation2 + $0x20] sm:$0xff] 0.0
    %30 = vst [vmem:[#allocation2 + $0x28] sm:$0xff] 0.0
    %31 = vst [vmem:[#allocation2 + $0x30] sm:$0xff] 0.0
    %32 = vst [vmem:[#allocation2 + $0x38] sm:$0xff] 0.0
    %33 = vst [vmem:[#allocation2 + $0x40] sm:$0xff] 0.0
    %34 = vst [vmem:[#allocation2 + $0x48] sm:$0xff] 0.0
    %35 = vst [vmem:[#allocation2 + $0x50] sm:$0xff] 0.0
    %36 = vst [vmem:[#allocation2 + $0x58] sm:$0xff] 0.0
    %37 = vst [vmem:[#allocation2 + $0x60] sm:$0xff] 0.0
    %38 = vst [vmem:[#allocation2 + $0x68] sm:$0xff] 0.0
    %39 = vst [vmem:[#allocation2 + $0x70] sm:$0xff] 0.0
    %40 = vst [vmem:[#allocation2 + $0x78] sm:$0xff] 0.0
  $region25: #{unet_forward.20} parent=0 // pred_fallthru
    _
  %v41 = vld [vmem:[#allocation2] sm:$0xff]
  %v42 = vld [vmem:[#allocation2 + $0x8] sm:$0xff]
  %v43 = vld [vmem:[#allocation2 + $0x10] sm:$0xff]
  %v44 = vld [vmem:[#allocation2 + $0x18] sm:$0xff]
  %v45 = vld [vmem:[#allocation2 + $0x20] sm:$0xff]
  %v46 = vld [vmem:[#allocation2 + $0x28] sm:$0xff]
  %v47 = vld [vmem:[#allocation2 + $0x30] sm:$0xff]
  %v48 = vld [vmem:[#allocation2 + $0x38] sm:$0xff]
  %v49 = vld [vmem:[#allocation2 + $0x40] sm:$0xff]
  %v50 = vld [vmem:[#allocation2 + $0x48] sm:$0xff]
  %v51 = vld [vmem:[#allocation2 + $0x50] sm:$0xff]
  %v52 = vld [vmem:[#allocation2 + $0x58] sm:$0xff]
  %v53 = vld [vmem:[#allocation2 + $0x60] sm:$0xff]
  %v54 = vld [vmem:[#allocation2 + $0x68] sm:$0xff]
  %v55 = vld [vmem:[#allocation2 + $0x70] sm:$0xff]
  %v56 = vld [vmem:[#allocation2 + $0x78] sm:$0xff]
  %v57 = vld [vmem:[%s0] sm:$0xff]
  %v58 = vld [vmem:[%s0 + $0x8] sm:$0xf]
  %v59 = vld [vmem:[%s0 + $0xc] sm:$0xff]
  %v60 = vld [vmem:[%s0 + $0x14] sm:$0xf]
  %v61 = vld [vmem:[%s0 + $0x18] sm:$0xff]
  %v62 = vld [vmem:[%s0 + $0x20] sm:$0xf]
  %v63 = vld [vmem:[%s0 + $0x24] sm:$0xff]
  %v64 = vld [vmem:[%s0 + $0x2c] sm:$0xf]
  %v65 = vld [vmem:[%s0 + $0x30] sm:$0xff]
  %v66 = vld [vmem:[%s0 + $0x38] sm:$0xf]
  %v67 = vld [vmem:[%s0 + $0x3c] sm:$0xff]
  %v68 = vld [vmem:[%s0 + $0x44] sm:$0xf]
  %v69 = vld [vmem:[%s0 + $0x48] sm:$0xff]
  %v70 = vld [vmem:[%s0 + $0x50] sm:$0xf]
  %v71 = vld [vmem:[%s0 + $0x54] sm:$0xff]
  %v72 = vld [vmem:[%s0 + $0x5c] sm:$0xf]
  %v73 = vld [vmem:[%s0 + $0x60] sm:$0xff]
  %v74 = vld [vmem:[%s0 + $0x68] sm:$0xf]
  %v75 = vld [vmem:[%s0 + $0x6c] sm:$0xff]
  %v76 = vld [vmem:[%s0 + $0x74] sm:$0xf]
  %v77 = vld [vmem:[%s0 + $0x78] sm:$0xff]
  %v78 = vld [vmem:[%s0 + $0x80] sm:$0xf]
  %v79 = vld [vmem:[%s0 + $0x84] sm:$0xff]
  %v80 = vld [vmem:[%s0 + $0x8c] sm:$0xf]
  %v81 = vld [vmem:[%s0 + $0x90] sm:$0xff]
  %v82 = vld [vmem:[%s0 + $0x98] sm:$0xf]
  %v83 = vld [vmem:[%s0 + $0x9c] sm:$0xff]
  %v84 = vld [vmem:[%s0 + $0xa4] sm:$0xf]
  %v85 = vld [vmem:[%s0 + $0xa8] sm:$0xff]
  %v86 = vld [vmem:[%s0 + $0xb0] sm:$0xf]
  %v87 = vld [vmem:[%s0 + $0xb4] sm:$0xff]
  %v88 = vld [vmem:[%s0 + $0xbc] sm:$0xf]
  %v89 = vld [vmem:[%s1] sm:$0xf]
  %v90 = vld [vmem:[%s1 + $0x4] sm:$0xf]
  %v91 = vld [vmem:[%s1 + $0x8] sm:$0xf]
  %v92 = vld [vmem:[%s1 + $0xc] sm:$0xf]
  %v93 = vld [vmem:[%s1 + $0x10] sm:$0xf]
  %v94 = vld [vmem:[%s1 + $0x14] sm:$0xf]
  %v95 = vld [vmem:[%s1 + $0x18] sm:$0xf]
  %v96 = vld [vmem:[%s1 + $0x1c] sm:$0xf]
  %v97 = vld [vmem:[%s1 + $0x20] sm:$0xf]
  %v98 = vld [vmem:[%s1 + $0x24] sm:$0xf]
  %v99 = vld [vmem:[%s1 + $0x28] sm:$0xf]
  %v100 = vld [vmem:[%s1 + $0x2c] sm:$0xf]
  %v101 = vld [vmem:[%s1 + $0x30] sm:$0xf]
  %v102 = vld [vmem:[%s1 + $0x34] sm:$0xf]
  %v103 = vld [vmem:[%s1 + $0x38] sm:$0xf]
  %v104 = vld [vmem:[%s1 + $0x3c] sm:$0xf]
  %v105 = vld [vmem:[%s1 + $0x40] sm:$0xf]
  %v106 = vld [vmem:[%s1 + $0x44] sm:$0xf]
  %v107 = vld [vmem:[%s1 + $0x48] sm:$0xf]
  %v108 = vld [vmem:[%s1 + $0x4c] sm:$0xf]
  %v109 = vld [vmem:[%s1 + $0x50] sm:$0xf]
  %v110 = vld [vmem:[%s1 + $0x54] sm:$0xf]
  %v111 = vld [vmem:[%s1 + $0x58] sm:$0xf]
  %v112 = vld [vmem:[%s1 + $0x5c] sm:$0xf]
  %v113 = vld [vmem:[%s1 + $0x60] sm:$0xf]
  %v114 = vld [vmem:[%s1 + $0x64] sm:$0xf]
  %v115 = vld [vmem:[%s1 + $0x68] sm:$0xf]
  %v116 = vld [vmem:[%s1 + $0x6c] sm:$0xf]
  %v117 = vld [vmem:[%s1 + $0x70] sm:$0xf]
  %v118 = vld [vmem:[%s1 + $0x74] sm:$0xf]
  %v119 = vld [vmem:[%s1 + $0x78] sm:$0xf]
  %v120 = vld [vmem:[%s1 + $0x7c] sm:$0xf]
  %v121 = vld [vmem:[%s1 + $0x80] sm:$0xf]
  %v122 = vld [vmem:[%s1 + $0x84] sm:$0xf]
  %v123 = vld [vmem:[%s1 + $0x88] sm:$0xf]
  %v124 = vld [vmem:[%s1 + $0x8c] sm:$0xf]
  %v157 = vunpack.c.l.b16 %v57
  %v158 = vunpack.c.h.b16 %v57
  %v159 = vunpack.c.l.b16 %v58
  %v160 = vunpack.c.l.b16 %v59
  %v161 = vunpack.c.h.b16 %v59
  %v162 = vunpack.c.l.b16 %v60
  %v163 = vunpack.c.l.b16 %v61
  %v164 = vunpack.c.h.b16 %v61
  %v165 = vunpack.c.l.b16 %v62
  %v166 = vunpack.c.l.b16 %v63
  %v167 = vunpack.c.h.b16 %v63
  %v168 = vunpack.c.l.b16 %v64
  %v169 = vunpack.c.l.b16 %v65
  %v170 = vunpack.c.h.b16 %v65
  %v171 = vunpack.c.l.b16 %v66
  %v172 = vunpack.c.l.b16 %v67
  %v173 = vunpack.c.h.b16 %v67
  %v174 = vunpack.c.l.b16 %v68
  %v175 = vunpack.c.l.b16 %v69
  %v176 = vunpack.c.h.b16 %v69
  %v177 = vunpack.c.l.b16 %v70
  %v178 = vunpack.c.l.b16 %v71
  %v179 = vunpack.c.h.b16 %v71
  %v180 = vunpack.c.l.b16 %v72
  %v181 = vunpack.c.l.b16 %v73
  %v182 = vunpack.c.h.b16 %v73
  %v183 = vunpack.c.l.b16 %v74
  %v184 = vunpack.c.l.b16 %v75
  %v185 = vunpack.c.h.b16 %v75
  %v186 = vunpack.c.l.b16 %v76
  %v187 = vunpack.c.l.b16 %v77
  %v188 = vunpack.c.h.b16 %v77
  %v189 = vunpack.c.l.b16 %v78
  %v190 = vunpack.c.l.b16 %v79
  %v191 = vunpack.c.h.b16 %v79
  %v192 = vunpack.c.l.b16 %v80
  %v193 = vunpack.c.l.b16 %v81
  %v194 = vunpack.c.h.b16 %v81
  %v195 = vunpack.c.l.b16 %v82
  %v196 = vunpack.c.l.b16 %v83
  %v197 = vunpack.c.h.b16 %v83
  %v198 = vunpack.c.l.b16 %v84
  %v199 = vunpack.c.l.b16 %v85
  %v200 = vunpack.c.h.b16 %v85
  %v201 = vunpack.c.l.b16 %v86
  %v202 = vunpack.c.l.b16 %v87
  %v203 = vunpack.c.h.b16 %v87
  %v204 = vunpack.c.l.b16 %v88
  %v205 = vpack.c.b16 %v160, %v157
  %v206 = vpack.c.b16 %v161, %v158
  %v207 = vpack.c.b16 %v162, %v159
  %v208 = vpack.c.b16 %v166, %v163
  %v209 = vpack.c.b16 %v167, %v164
  %v210 = vpack.c.b16 %v168, %v165
  %v211 = vpack.c.b16 %v172, %v169
  %v212 = vpack.c.b16 %v173, %v170
  %v213 = vpack.c.b16 %v174, %v171
  %v214 = vpack.c.b16 %v178, %v175
  %v215 = vpack.c.b16 %v179, %v176
  %v216 = vpack.c.b16 %v180, %v177
  %v217 = vpack.c.b16 %v184, %v181
  %v218 = vpack.c.b16 %v185, %v182
  %v219 = vpack.c.b16 %v186, %v183
  %v220 = vpack.c.b16 %v190, %v187
  %v221 = vpack.c.b16 %v191, %v188
  %v222 = vpack.c.b16 %v192, %v189
  %v223 = vpack.c.b16 %v196, %v193
  %v224 = vpack.c.b16 %v197, %v194
  %v225 = vpack.c.b16 %v198, %v195
  %v226 = vpack.c.b16 %v202, %v199
  %v227 = vpack.c.b16 %v203, %v200
  %v228 = vpack.c.b16 %v204, %v201
  %v281 = vunpack.c.l.b16 %v89
  %v282 = vunpack.c.l.b16 %v90
  %v283 = vunpack.c.l.b16 %v91
  %v284 = vunpack.c.l.b16 %v92
  %v285 = vunpack.c.l.b16 %v93
  %v286 = vunpack.c.l.b16 %v94
  %v287 = vunpack.c.l.b16 %v95
  %v288 = vunpack.c.l.b16 %v96
  %v289 = vunpack.c.l.b16 %v97
  %v290 = vunpack.c.l.b16 %v98
  %v291 = vunpack.c.l.b16 %v99
  %v292 = vunpack.c.l.b16 %v100
  %v293 = vunpack.c.l.b16 %v101
  %v294 = vunpack.c.l.b16 %v102
  %v295 = vunpack.c.l.b16 %v103
  %v296 = vunpack.c.l.b16 %v104
  %v297 = vunpack.c.l.b16 %v105
  %v298 = vunpack.c.l.b16 %v106
  %v299 = vunpack.c.l.b16 %v107
  %v300 = vunpack.c.l.b16 %v108
  %v301 = vunpack.c.l.b16 %v109
  %v302 = vunpack.c.l.b16 %v110
  %v303 = vunpack.c.l.b16 %v111
  %v304 = vunpack.c.l.b16 %v112
  %v305 = vunpack.c.l.b16 %v113
  %v306 = vunpack.c.l.b16 %v114
  %v307 = vunpack.c.l.b16 %v115
  %v308 = vunpack.c.l.b16 %v116
  %v309 = vunpack.c.l.b16 %v117
  %v310 = vunpack.c.l.b16 %v118
  %v311 = vunpack.c.l.b16 %v119
  %v312 = vunpack.c.l.b16 %v120
  %v313 = vunpack.c.l.b16 %v121
  %v314 = vunpack.c.l.b16 %v122
  %v315 = vunpack.c.l.b16 %v123
  %v316 = vunpack.c.l.b16 %v124
  %v317 = vpack.c.b16 %v282, %v281
  %v318 = vpack.c.b16 %v284, %v283
  %v319 = vpack.c.b16 %v286, %v285
  %v320 = vpack.c.b16 %v288, %v287
  %v321 = vpack.c.b16 %v290, %v289
  %v322 = vpack.c.b16 %v292, %v291
  %v323 = vpack.c.b16 %v294, %v293
  %v324 = vpack.c.b16 %v296, %v295
  %v325 = vpack.c.b16 %v298, %v297
  %v326 = vpack.c.b16 %v300, %v299
  %v327 = vpack.c.b16 %v302, %v301
  %v328 = vpack.c.b16 %v304, %v303
  %v329 = vpack.c.b16 %v306, %v305
  %v330 = vpack.c.b16 %v308, %v307
  %v331 = vpack.c.b16 %v310, %v309
  %v332 = vpack.c.b16 %v312, %v311
  %v333 = vpack.c.b16 %v314, %v313
  %v334 = vpack.c.b16 %v316, %v315
  %vm353 = vcmask 261120
  %v355 = vsel %vm353, %v207, 0
  %v358 = vsel %vm353, %v210, 0
  %v361 = vsel %vm353, %v213, 0
  %v364 = vsel %vm353, %v216, 0
  %v367 = vsel %vm353, %v219, 0
  %v370 = vsel %vm353, %v222, 0
  %v373 = vsel %vm353, %v225, 0
  %v376 = vsel %vm353, %v228, 0
  %378 = vmatprep.subr.bf16.mxu0 0
  %379 = vmatpush1.bf16.msra.mxu0 %v324
  %380 = vmatprep.subr.bf16.mxu0 0
  %381 = vmatpush1.bf16.msra.mxu0 %v323
  %382 = vmatprep.subr.bf16.mxu0 0
  %383 = vmatpush1.bf16.msra.mxu0 %v322
  %384 = vmatprep.subr.bf16.mxu0 0
  %385 = vmatpush1.bf16.msra.mxu0 %v321
  %386 = vmatprep.subr.bf16.mxu0 0
  %387 = vmatpush1.bf16.msra.mxu0 %v320
  %388 = vmatprep.subr.bf16.mxu0 0
  %389 = vmatpush1.bf16.msra.mxu0 %v319
  %390 = vmatprep.subr.bf16.mxu0 0
  %391 = vmatpush1.bf16.msra.mxu0 %v318
  %392 = vmatprep.subr.bf16.mxu0 0
  %393 = vmatpush1.bf16.msra.mxu0 %v317
  %394 = vmatprep.subr.bf16.mxu0 0
  %395 = vmatpush2.bf16.msra.mxu0 %v332
  %396 = vmatprep.subr.bf16.mxu0 0
  %397 = vmatpush2.bf16.msra.mxu0 %v331
  %398 = vmatprep.subr.bf16.mxu0 0
  %399 = vmatpush2.bf16.msra.mxu0 %v330
  %400 = vmatprep.subr.bf16.mxu0 0
  %401 = vmatpush2.bf16.msra.mxu0 %v329
  %402 = vmatprep.subr.bf16.mxu0 0
  %403 = vmatpush2.bf16.msra.mxu0 %v328
  %404 = vmatprep.subr.bf16.mxu0 0
  %405 = vmatpush2.bf16.msra.mxu0 %v327
  %406 = vmatprep.subr.bf16.mxu0 0
  %407 = vmatpush2.bf16.msra.mxu0 %v326
  %408 = vmatprep.subr.bf16.mxu0 0
  %409 = vmatpush2.bf16.msra.mxu0 %v325
  %410 = vmatprep.mubr.bf16.mxu0 %v206
  %411 = vmatmul.mubr.bf16.gmra.mxu0 %v205
  %v412 = vpop.f32.mrf.mxu0
  %v413 = vadd.f32 0.0, %v412
  %v414 = vpop.f32.mrf.mxu0
  %v415 = vpop.f32.mrf.mxu0
  %v416 = vadd.f32 0.0, %v415
  %v417 = vpop.f32.mrf.mxu0
  %418 = vmatprep.mubr.bf16.mxu0 %v209
  %419 = vmatmul.mubr.bf16.gmra.mxu0 %v208
  %v420 = vpop.f32.mrf.mxu0
  %v421 = vadd.f32 0.0, %v420
  %v422 = vpop.f32.mrf.mxu0
  %v423 = vpop.f32.mrf.mxu0
  %v424 = vadd.f32 0.0, %v423
  %v425 = vpop.f32.mrf.mxu0
  %426 = vmatprep.mubr.bf16.mxu0 %v212
  %427 = vmatmul.mubr.bf16.gmra.mxu0 %v211
  %v428 = vpop.f32.mrf.mxu0
  %v429 = vadd.f32 0.0, %v428
  %v430 = vpop.f32.mrf.mxu0
  %v431 = vpop.f32.mrf.mxu0
  %v432 = vadd.f32 0.0, %v431
  %v433 = vpop.f32.mrf.mxu0
  %434 = vmatprep.mubr.bf16.mxu0 %v215
  %435 = vmatmul.mubr.bf16.gmra.mxu0 %v214
  %v436 = vpop.f32.mrf.mxu0
  %v437 = vadd.f32 0.0, %v436
  %v438 = vpop.f32.mrf.mxu0
  %v439 = vpop.f32.mrf.mxu0
  %v440 = vadd.f32 0.0, %v439
  %v441 = vpop.f32.mrf.mxu0
  %442 = vmatprep.mubr.bf16.mxu0 %v218
  %443 = vmatmul.mubr.bf16.gmra.mxu0 %v217
  %v444 = vpop.f32.mrf.mxu0
  %v445 = vadd.f32 0.0, %v444
  %v446 = vpop.f32.mrf.mxu0
  %v447 = vpop.f32.mrf.mxu0
  %v448 = vadd.f32 0.0, %v447
  %v449 = vpop.f32.mrf.mxu0
  %450 = vmatprep.mubr.bf16.mxu0 %v221
  %451 = vmatmul.mubr.bf16.gmra.mxu0 %v220
  %v452 = vpop.f32.mrf.mxu0
  %v453 = vadd.f32 0.0, %v452
  %v454 = vpop.f32.mrf.mxu0
  %v455 = vpop.f32.mrf.mxu0
  %v456 = vadd.f32 0.0, %v455
  %v457 = vpop.f32.mrf.mxu0
  %458 = vmatprep.mubr.bf16.mxu0 %v224
  %459 = vmatmul.mubr.bf16.gmra.mxu0 %v223
  %v460 = vpop.f32.mrf.mxu0
  %v461 = vadd.f32 0.0, %v460
  %v462 = vpop.f32.mrf.mxu0
  %v463 = vpop.f32.mrf.mxu0
  %v464 = vadd.f32 0.0, %v463
  %v465 = vpop.f32.mrf.mxu0
  %466 = vmatprep.mubr.bf16.mxu0 %v227
  %467 = vmatmul.mubr.bf16.gmra.mxu0 %v226
  %v468 = vpop.f32.mrf.mxu0
  %v469 = vadd.f32 0.0, %v468
  %v470 = vpop.f32.mrf.mxu0
  %v471 = vpop.f32.mrf.mxu0
  %v472 = vadd.f32 0.0, %v471
  %v473 = vpop.f32.mrf.mxu0
  %474 = vdwg.mxu0
  %475 = vmatprep.subr.bf16.mxu0 0
  %476 = vmatpush1.bf16.msra.mxu0 0
  %477 = vmatprep.subr.bf16.mxu0 0
  %478 = vmatpush1.bf16.msra.mxu0 0
  %479 = vmatprep.subr.bf16.mxu0 0
  %480 = vmatpush1.bf16.msra.mxu0 0
  %481 = vmatprep.subr.bf16.mxu0 0
  %482 = vmatpush1.bf16.msra.mxu0 0
  %483 = vmatprep.subr.bf16.mxu0 0
  %484 = vmatpush1.bf16.msra.mxu0 0
  %485 = vmatprep.subr.bf16.mxu0 0
  %486 = vmatpush1.bf16.msra.mxu0 0
  %487 = vmatprep.subr.bf16.mxu0 0
  %488 = vmatpush1.bf16.msra.mxu0 %v334
  %489 = vmatprep.subr.bf16.mxu0 0
  %490 = vmatpush1.bf16.msra.mxu0 %v333
  %491 = vmatprep.subr.bf16.mxu0 0
  %492 = vmatpush2.bf16.msra.mxu0 0
  %493 = vmatprep.subr.bf16.mxu0 0
  %494 = vmatpush2.bf16.msra.mxu0 0
  %495 = vmatprep.subr.bf16.mxu0 0
  %496 = vmatpush2.bf16.msra.mxu0 0
  %497 = vmatprep.subr.bf16.mxu0 0
  %498 = vmatpush2.bf16.msra.mxu0 0
  %499 = vmatprep.subr.bf16.mxu0 0
  %500 = vmatpush2.bf16.msra.mxu0 0
  %501 = vmatprep.subr.bf16.mxu0 0
  %502 = vmatpush2.bf16.msra.mxu0 0
  %503 = vmatprep.subr.bf16.mxu0 0
  %504 = vmatpush2.bf16.msra.mxu0 0
  %505 = vmatprep.subr.bf16.mxu0 0
  %506 = vmatpush2.bf16.msra.mxu0 0
  %507 = vmatprep.mubr.bf16.mxu0 0
  %508 = vmatmul.mubr.bf16.gmra.mxu0 %v355
  %v509 = vpop.f32.mrf.mxu0
  %v510 = vadd.f32 %v413, %v509
  %v511 = vpop.f32.mrf.mxu0
  %v512 = vpop.f32.mrf.mxu0
  %v513 = vadd.f32 %v416, %v512
  %v514 = vpop.f32.mrf.mxu0
  %515 = vmatprep.mubr.bf16.mxu0 0
  %516 = vmatmul.mubr.bf16.gmra.mxu0 %v358
  %v517 = vpop.f32.mrf.mxu0
  %v518 = vadd.f32 %v421, %v517
  %v519 = vpop.f32.mrf.mxu0
  %v520 = vpop.f32.mrf.mxu0
  %v521 = vadd.f32 %v424, %v520
  %v522 = vpop.f32.mrf.mxu0
  %523 = vmatprep.mubr.bf16.mxu0 0
  %524 = vmatmul.mubr.bf16.gmra.mxu0 %v361
  %v525 = vpop.f32.mrf.mxu0
  %v526 = vadd.f32 %v429, %v525
  %v527 = vpop.f32.mrf.mxu0
  %v528 = vpop.f32.mrf.mxu0
  %v529 = vadd.f32 %v432, %v528
  %v530 = vpop.f32.mrf.mxu0
  %531 = vmatprep.mubr.bf16.mxu0 0
  %532 = vmatmul.mubr.bf16.gmra.mxu0 %v364
  %v533 = vpop.f32.mrf.mxu0
  %v534 = vadd.f32 %v437, %v533
  %v535 = vpop.f32.mrf.mxu0
  %v536 = vpop.f32.mrf.mxu0
  %v537 = vadd.f32 %v440, %v536
  %v538 = vpop.f32.mrf.mxu0
  %539 = vmatprep.mubr.bf16.mxu0 0
  %540 = vmatmul.mubr.bf16.gmra.mxu0 %v367
  %v541 = vpop.f32.mrf.mxu0
  %v542 = vadd.f32 %v445, %v541
  %v543 = vpop.f32.mrf.mxu0
  %v544 = vpop.f32.mrf.mxu0
  %v545 = vadd.f32 %v448, %v544
  %v546 = vpop.f32.mrf.mxu0
  %547 = vmatprep.mubr.bf16.mxu0 0
  %548 = vmatmul.mubr.bf16.gmra.mxu0 %v370
  %v549 = vpop.f32.mrf.mxu0
  %v550 = vadd.f32 %v453, %v549
  %v551 = vpop.f32.mrf.mxu0
  %v552 = vpop.f32.mrf.mxu0
  %v553 = vadd.f32 %v456, %v552
  %v554 = vpop.f32.mrf.mxu0
  %555 = vmatprep.mubr.bf16.mxu0 0
  %556 = vmatmul.mubr.bf16.gmra.mxu0 %v373
  %v557 = vpop.f32.mrf.mxu0
  %v558 = vadd.f32 %v461, %v557
  %v559 = vpop.f32.mrf.mxu0
  %v560 = vpop.f32.mrf.mxu0
  %v561 = vadd.f32 %v464, %v560
  %v562 = vpop.f32.mrf.mxu0
  %563 = vmatprep.mubr.bf16.mxu0 0
  %564 = vmatmul.mubr.bf16.gmra.mxu0 %v376
  %v565 = vpop.f32.mrf.mxu0
  %v566 = vadd.f32 %v469, %v565
  %v567 = vpop.f32.mrf.mxu0
  %v568 = vpop.f32.mrf.mxu0
  %v569 = vadd.f32 %v472, %v568
  %v570 = vpop.f32.mrf.mxu0
  %571 = vdwg.mxu0
  %v572 = vadd.f32 %v41, %v510
  %v573 = vadd.f32 %v42, %v513
  %v574 = vadd.f32 %v43, %v518
  %v575 = vadd.f32 %v44, %v521
  %v576 = vadd.f32 %v45, %v526
  %v577 = vadd.f32 %v46, %v529
  %v578 = vadd.f32 %v47, %v534
  %v579 = vadd.f32 %v48, %v537
  %v580 = vadd.f32 %v49, %v542
  %v581 = vadd.f32 %v50, %v545
  %v582 = vadd.f32 %v51, %v550
  %v583 = vadd.f32 %v52, %v553
  %v584 = vadd.f32 %v53, %v558
  %v585 = vadd.f32 %v54, %v561
  %v586 = vadd.f32 %v55, %v566
  %v587 = vadd.f32 %v56, %v569
  %588 = vst [vmem:[#allocation2] sm:$0xff] %v572
  %589 = vst [vmem:[#allocation2 + $0x8] sm:$0xff] %v573
  %590 = vst [vmem:[#allocation2 + $0x10] sm:$0xff] %v574
  %591 = vst [vmem:[#allocation2 + $0x18] sm:$0xff] %v575
  %592 = vst [vmem:[#allocation2 + $0x20] sm:$0xff] %v576
  %593 = vst [vmem:[#allocation2 + $0x28] sm:$0xff] %v577
  %594 = vst [vmem:[#allocation2 + $0x30] sm:$0xff] %v578
  %595 = vst [vmem:[#allocation2 + $0x38] sm:$0xff] %v579
  %596 = vst [vmem:[#allocation2 + $0x40] sm:$0xff] %v580
  %597 = vst [vmem:[#allocation2 + $0x48] sm:$0xff] %v581
  %598 = vst [vmem:[#allocation2 + $0x50] sm:$0xff] %v582
  %599 = vst [vmem:[#allocation2 + $0x58] sm:$0xff] %v583
  %600 = vst [vmem:[#allocation2 + $0x60] sm:$0xff] %v584
  %601 = vst [vmem:[#allocation2 + $0x68] sm:$0xff] %v585
  %602 = vst [vmem:[#allocation2 + $0x70] sm:$0xff] %v586
  %603 = vst [vmem:[#allocation2 + $0x78] sm:$0xff] %v587
  %v604 = vld [vmem:[#allocation2] sm:$0xff]
  %v605 = vld [vmem:[#allocation2 + $0x8] sm:$0xff]
  %v606 = vld [vmem:[#allocation2 + $0x10] sm:$0xff]
  %v607 = vld [vmem:[#allocation2 + $0x18] sm:$0xff]
  %v608 = vld [vmem:[#allocation2 + $0x20] sm:$0xff]
  %v609 = vld [vmem:[#allocation2 + $0x28] sm:$0xff]
  %v610 = vld [vmem:[#allocation2 + $0x30] sm:$0xff]
  %v611 = vld [vmem:[#allocation2 + $0x38] sm:$0xff]
  %v612 = vld [vmem:[#allocation2 + $0x40] sm:$0xff]
  %v613 = vld [vmem:[#allocation2 + $0x48] sm:$0xff]
  %v614 = vld [vmem:[#allocation2 + $0x50] sm:$0xff]
  %v615 = vld [vmem:[#allocation2 + $0x58] sm:$0xff]
  %v616 = vld [vmem:[#allocation2 + $0x60] sm:$0xff]
  %v617 = vld [vmem:[#allocation2 + $0x68] sm:$0xff]
  %v618 = vld [vmem:[#allocation2 + $0x70] sm:$0xff]
  %v619 = vld [vmem:[#allocation2 + $0x78] sm:$0xff]
  %v620 = vld [vmem:[%s2] sm:$0xff]
  %v621 = vld [vmem:[%s2 + $0x8] sm:$0xf]
  %v622 = vld [vmem:[%s2 + $0xc] sm:$0xff]
  %v623 = vld [vmem:[%s2 + $0x14] sm:$0xf]
  %v624 = vld [vmem:[%s2 + $0x18] sm:$0xff]
  %v625 = vld [vmem:[%s2 + $0x20] sm:$0xf]
  %v626 = vld [vmem:[%s2 + $0x24] sm:$0xff]
  %v627 = vld [vmem:[%s2 + $0x2c] sm:$0xf]
  %v628 = vld [vmem:[%s2 + $0x30] sm:$0xff]
  %v629 = vld [vmem:[%s2 + $0x38] sm:$0xf]
  %v630 = vld [vmem:[%s2 + $0x3c] sm:$0xff]
  %v631 = vld [vmem:[%s2 + $0x44] sm:$0xf]
  %v632 = vld [vmem:[%s2 + $0x48] sm:$0xff]
  %v633 = vld [vmem:[%s2 + $0x50] sm:$0xf]
  %v634 = vld [vmem:[%s2 + $0x54] sm:$0xff]
  %v635 = vld [vmem:[%s2 + $0x5c] sm:$0xf]
  %v636 = vld [vmem:[%s2 + $0x60] sm:$0xff]
  %v637 = vld [vmem:[%s2 + $0x68] sm:$0xf]
  %v638 = vld [vmem:[%s2 + $0x6c] sm:$0xff]
  %v639 = vld [vmem:[%s2 + $0x74] sm:$0xf]
  %v640 = vld [vmem:[%s2 + $0x78] sm:$0xff]
  %v641 = vld [vmem:[%s2 + $0x80] sm:$0xf]
  %v642 = vld [vmem:[%s2 + $0x84] sm:$0xff]
  %v643 = vld [vmem:[%s2 + $0x8c] sm:$0xf]
  %v644 = vld [vmem:[%s2 + $0x90] sm:$0xff]
  %v645 = vld [vmem:[%s2 + $0x98] sm:$0xf]
  %v646 = vld [vmem:[%s2 + $0x9c] sm:$0xff]
  %v647 = vld [vmem:[%s2 + $0xa4] sm:$0xf]
  %v648 = vld [vmem:[%s2 + $0xa8] sm:$0xff]
  %v649 = vld [vmem:[%s2 + $0xb0] sm:$0xf]
  %v650 = vld [vmem:[%s2 + $0xb4] sm:$0xff]
  %v651 = vld [vmem:[%s2 + $0xbc] sm:$0xf]
  %v652 = vld [vmem:[%s3] sm:$0xf]
  %v653 = vld [vmem:[%s3 + $0x4] sm:$0xf]
  %v654 = vld [vmem:[%s3 + $0x8] sm:$0xf]
  %v655 = vld [vmem:[%s3 + $0xc] sm:$0xf]
  %v656 = vld [vmem:[%s3 + $0x10] sm:$0xf]
  %v657 = vld [vmem:[%s3 + $0x14] sm:$0xf]
  %v658 = vld [vmem:[%s3 + $0x18] sm:$0xf]
  %v659 = vld [vmem:[%s3 + $0x1c] sm:$0xf]
  %v660 = vld [vmem:[%s3 + $0x20] sm:$0xf]
  %v661 = vld [vmem:[%s3 + $0x24] sm:$0xf]
  %v662 = vld [vmem:[%s3 + $0x28] sm:$0xf]
  %v663 = vld [vmem:[%s3 + $0x2c] sm:$0xf]
  %v664 = vld [vmem:[%s3 + $0x30] sm:$0xf]
  %v665 = vld [vmem:[%s3 + $0x34] sm:$0xf]
  %v666 = vld [vmem:[%s3 + $0x38] sm:$0xf]
  %v667 = vld [vmem:[%s3 + $0x3c] sm:$0xf]
  %v668 = vld [vmem:[%s3 + $0x40] sm:$0xf]
  %v669 = vld [vmem:[%s3 + $0x44] sm:$0xf]
  %v670 = vld [vmem:[%s3 + $0x48] sm:$0xf]
  %v671 = vld [vmem:[%s3 + $0x4c] sm:$0xf]
  %v672 = vld [vmem:[%s3 + $0x50] sm:$0xf]
  %v673 = vld [vmem:[%s3 + $0x54] sm:$0xf]
  %v674 = vld [vmem:[%s3 + $0x58] sm:$0xf]
  %v675 = vld [vmem:[%s3 + $0x5c] sm:$0xf]
  %v676 = vld [vmem:[%s3 + $0x60] sm:$0xf]
  %v677 = vld [vmem:[%s3 + $0x64] sm:$0xf]
  %v678 = vld [vmem:[%s3 + $0x68] sm:$0xf]
  %v679 = vld [vmem:[%s3 + $0x6c] sm:$0xf]
  %v680 = vld [vmem:[%s3 + $0x70] sm:$0xf]
  %v681 = vld [vmem:[%s3 + $0x74] sm:$0xf]
  %v682 = vld [vmem:[%s3 + $0x78] sm:$0xf]
  %v683 = vld [vmem:[%s3 + $0x7c] sm:$0xf]
  %v684 = vld [vmem:[%s3 + $0x80] sm:$0xf]
  %v685 = vld [vmem:[%s3 + $0x84] sm:$0xf]
  %v686 = vld [vmem:[%s3 + $0x88] sm:$0xf]
  %v687 = vld [vmem:[%s3 + $0x8c] sm:$0xf]
  %v720 = vunpack.c.l.b16 %v620
  %v721 = vunpack.c.h.b16 %v620
  %v722 = vunpack.c.l.b16 %v621
  %v723 = vunpack.c.l.b16 %v622
  %v724 = vunpack.c.h.b16 %v622
  %v725 = vunpack.c.l.b16 %v623
  %v726 = vunpack.c.l.b16 %v624
  %v727 = vunpack.c.h.b16 %v624
  %v728 = vunpack.c.l.b16 %v625
  %v729 = vunpack.c.l.b16 %v626
  %v730 = vunpack.c.h.b16 %v626
  %v731 = vunpack.c.l.b16 %v627
  %v732 = vunpack.c.l.b16 %v628
  %v733 = vunpack.c.h.b16 %v628
  %v734 = vunpack.c.l.b16 %v629
  %v735 = vunpack.c.l.b16 %v630
  %v736 = vunpack.c.h.b16 %v630
  %v737 = vunpack.c.l.b16 %v631
  %v738 = vunpack.c.l.b16 %v632
  %v739 = vunpack.c.h.b16 %v632
  %v740 = vunpack.c.l.b16 %v633
  %v741 = vunpack.c.l.b16 %v634
  %v742 = vunpack.c.h.b16 %v634
  %v743 = vunpack.c.l.b16 %v635
  %v744 = vunpack.c.l.b16 %v636
  %v745 = vunpack.c.h.b16 %v636
  %v746 = vunpack.c.l.b16 %v637
  %v747 = vunpack.c.l.b16 %v638
  %v748 = vunpack.c.h.b16 %v638
  %v749 = vunpack.c.l.b16 %v639
  %v750 = vunpack.c.l.b16 %v640
  %v751 = vunpack.c.h.b16 %v640
  %v752 = vunpack.c.l.b16 %v641
  %v753 = vunpack.c.l.b16 %v642
  %v754 = vunpack.c.h.b16 %v642
  %v755 = vunpack.c.l.b16 %v643
  %v756 = vunpack.c.l.b16 %v644
  %v757 = vunpack.c.h.b16 %v644
  %v758 = vunpack.c.l.b16 %v645
  %v759 = vunpack.c.l.b16 %v646
  %v760 = vunpack.c.h.b16 %v646
  %v761 = vunpack.c.l.b16 %v647
  %v762 = vunpack.c.l.b16 %v648
  %v763 = vunpack.c.h.b16 %v648
  %v764 = vunpack.c.l.b16 %v649
  %v765 = vunpack.c.l.b16 %v650
  %v766 = vunpack.c.h.b16 %v650
  %v767 = vunpack.c.l.b16 %v651
  %v768 = vpack.c.b16 %v723, %v720
  %v769 = vpack.c.b16 %v724, %v721
  %v770 = vpack.c.b16 %v725, %v722
  %v771 = vpack.c.b16 %v729, %v726
  %v772 = vpack.c.b16 %v730, %v727
  %v773 = vpack.c.b16 %v731, %v728
  %v774 = vpack.c.b16 %v735, %v732
  %v775 = vpack.c.b16 %v736, %v733
  %v776 = vpack.c.b16 %v737, %v734
  %v777 = vpack.c.b16 %v741, %v738
  %v778 = vpack.c.b16 %v742, %v739
  %v779 = vpack.c.b16 %v743, %v740
  %v780 = vpack.c.b16 %v747, %v744
  %v781 = vpack.c.b16 %v748, %v745
  %v782 = vpack.c.b16 %v749, %v746
  %v783 = vpack.c.b16 %v753, %v750
  %v784 = vpack.c.b16 %v754, %v751
  %v785 = vpack.c.b16 %v755, %v752
  %v786 = vpack.c.b16 %v759, %v756
  %v787 = vpack.c.b16 %v760, %v757
  %v788 = vpack.c.b16 %v761, %v758
  %v789 = vpack.c.b16 %v765, %v762
  %v790 = vpack.c.b16 %v766, %v763
  %v791 = vpack.c.b16 %v767, %v764
  %v844 = vunpack.c.l.b16 %v652
  %v845 = vunpack.c.l.b16 %v653
  %v846 = vunpack.c.l.b16 %v654
  %v847 = vunpack.c.l.b16 %v655
  %v848 = vunpack.c.l.b16 %v656
  %v849 = vunpack.c.l.b16 %v657
  %v850 = vunpack.c.l.b16 %v658
  %v851 = vunpack.c.l.b16 %v659
  %v852 = vunpack.c.l.b16 %v660
  %v853 = vunpack.c.l.b16 %v661
  %v854 = vunpack.c.l.b16 %v662
  %v855 = vunpack.c.l.b16 %v663
  %v856 = vunpack.c.l.b16 %v664
  %v857 = vunpack.c.l.b16 %v665
  %v858 = vunpack.c.l.b16 %v666
  %v859 = vunpack.c.l.b16 %v667
  %v860 = vunpack.c.l.b16 %v668
  %v861 = vunpack.c.l.b16 %v669
  %v862 = vunpack.c.l.b16 %v670
  %v863 = vunpack.c.l.b16 %v671
  %v864 = vunpack.c.l.b16 %v672
  %v865 = vunpack.c.l.b16 %v673
  %v866 = vunpack.c.l.b16 %v674
  %v867 = vunpack.c.l.b16 %v675
  %v868 = vunpack.c.l.b16 %v676
  %v869 = vunpack.c.l.b16 %v677
  %v870 = vunpack.c.l.b16 %v678
  %v871 = vunpack.c.l.b16 %v679
  %v872 = vunpack.c.l.b16 %v680
  %v873 = vunpack.c.l.b16 %v681
  %v874 = vunpack.c.l.b16 %v682
  %v875 = vunpack.c.l.b16 %v683
  %v876 = vunpack.c.l.b16 %v684
  %v877 = vunpack.c.l.b16 %v685
  %v878 = vunpack.c.l.b16 %v686
  %v879 = vunpack.c.l.b16 %v687
  %v880 = vpack.c.b16 %v845, %v844
  %v881 = vpack.c.b16 %v847, %v846
  %v882 = vpack.c.b16 %v849, %v848
  %v883 = vpack.c.b16 %v851, %v850
  %v884 = vpack.c.b16 %v853, %v852
  %v885 = vpack.c.b16 %v855, %v854
  %v886 = vpack.c.b16 %v857, %v856
  %v887 = vpack.c.b16 %v859, %v858
  %v888 = vpack.c.b16 %v861, %v860
  %v889 = vpack.c.b16 %v863, %v862
  %v890 = vpack.c.b16 %v865, %v864
  %v891 = vpack.c.b16 %v867, %v866
  %v892 = vpack.c.b16 %v869, %v868
  %v893 = vpack.c.b16 %v871, %v870
  %v894 = vpack.c.b16 %v873, %v872
  %v895 = vpack.c.b16 %v875, %v874
  %v896 = vpack.c.b16 %v877, %v876
  %v897 = vpack.c.b16 %v879, %v878
  %v917 = vsel %vm353, %v770, 0
  %v920 = vsel %vm353, %v773, 0
  %v923 = vsel %vm353, %v776, 0
  %v926 = vsel %vm353, %v779, 0
  %v929 = vsel %vm353, %v782, 0
  %v932 = vsel %vm353, %v785, 0
  %v935 = vsel %vm353, %v788, 0
  %v938 = vsel %vm353, %v791, 0
  %940 = vmatprep.subr.bf16.mxu0 0
  %941 = vmatpush1.bf16.msra.mxu0 %v887
  %942 = vmatprep.subr.bf16.mxu0 0
  %943 = vmatpush1.bf16.msra.mxu0 %v886
  %944 = vmatprep.subr.bf16.mxu0 0
  %945 = vmatpush1.bf16.msra.mxu0 %v885
  %946 = vmatprep.subr.bf16.mxu0 0
  %947 = vmatpush1.bf16.msra.mxu0 %v884
  %948 = vmatprep.subr.bf16.mxu0 0
  %949 = vmatpush1.bf16.msra.mxu0 %v883
  %950 = vmatprep.subr.bf16.mxu0 0
  %951 = vmatpush1.bf16.msra.mxu0 %v882
  %952 = vmatprep.subr.bf16.mxu0 0
  %953 = vmatpush1.bf16.msra.mxu0 %v881
  %954 = vmatprep.subr.bf16.mxu0 0
  %955 = vmatpush1.bf16.msra.mxu0 %v880
  %956 = vmatprep.subr.bf16.mxu0 0
  %957 = vmatpush2.bf16.msra.mxu0 %v895
  %958 = vmatprep.subr.bf16.mxu0 0
  %959 = vmatpush2.bf16.msra.mxu0 %v894
  %960 = vmatprep.subr.bf16.mxu0 0
  %961 = vmatpush2.bf16.msra.mxu0 %v893
  %962 = vmatprep.subr.bf16.mxu0 0
  %963 = vmatpush2.bf16.msra.mxu0 %v892
  %964 = vmatprep.subr.bf16.mxu0 0
  %965 = vmatpush2.bf16.msra.mxu0 %v891
  %966 = vmatprep.subr.bf16.mxu0 0
  %967 = vmatpush2.bf16.msra.mxu0 %v890
  %968 = vmatprep.subr.bf16.mxu0 0
  %969 = vmatpush2.bf16.msra.mxu0 %v889
  %970 = vmatprep.subr.bf16.mxu0 0
  %971 = vmatpush2.bf16.msra.mxu0 %v888
  %972 = vmatprep.mubr.bf16.mxu0 %v769
  %973 = vmatmul.mubr.bf16.gmra.mxu0 %v768
  %v974 = vpop.f32.mrf.mxu0
  %v975 = vadd.f32 0.0, %v974
  %v976 = vpop.f32.mrf.mxu0
  %v977 = vpop.f32.mrf.mxu0
  %v978 = vadd.f32 0.0, %v977
  %v979 = vpop.f32.mrf.mxu0
  %980 = vmatprep.mubr.bf16.mxu0 %v772
  %981 = vmatmul.mubr.bf16.gmra.mxu0 %v771
  %v982 = vpop.f32.mrf.mxu0
  %v983 = vadd.f32 0.0, %v982
  %v984 = vpop.f32.mrf.mxu0
  %v985 = vpop.f32.mrf.mxu0
  %v986 = vadd.f32 0.0, %v985
  %v987 = vpop.f32.mrf.mxu0
  %988 = vmatprep.mubr.bf16.mxu0 %v775
  %989 = vmatmul.mubr.bf16.gmra.mxu0 %v774
  %v990 = vpop.f32.mrf.mxu0
  %v991 = vadd.f32 0.0, %v990
  %v992 = vpop.f32.mrf.mxu0
  %v993 = vpop.f32.mrf.mxu0
  %v994 = vadd.f32 0.0, %v993
  %v995 = vpop.f32.mrf.mxu0
  %996 = vmatprep.mubr.bf16.mxu0 %v778
  %997 = vmatmul.mubr.bf16.gmra.mxu0 %v777
  %v998 = vpop.f32.mrf.mxu0
  %v999 = vadd.f32 0.0, %v998
  %v1000 = vpop.f32.mrf.mxu0
  %v1001 = vpop.f32.mrf.mxu0
  %v1002 = vadd.f32 0.0, %v1001
  %v1003 = vpop.f32.mrf.mxu0
  %1004 = vmatprep.mubr.bf16.mxu0 %v781
  %1005 = vmatmul.mubr.bf16.gmra.mxu0 %v780
  %v1006 = vpop.f32.mrf.mxu0
  %v1007 = vadd.f32 0.0, %v1006
  %v1008 = vpop.f32.mrf.mxu0
  %v1009 = vpop.f32.mrf.mxu0
  %v1010 = vadd.f32 0.0, %v1009
  %v1011 = vpop.f32.mrf.mxu0
  %1012 = vmatprep.mubr.bf16.mxu0 %v784
  %1013 = vmatmul.mubr.bf16.gmra.mxu0 %v783
  %v1014 = vpop.f32.mrf.mxu0
  %v1015 = vadd.f32 0.0, %v1014
  %v1016 = vpop.f32.mrf.mxu0
  %v1017 = vpop.f32.mrf.mxu0
  %v1018 = vadd.f32 0.0, %v1017
  %v1019 = vpop.f32.mrf.mxu0
  %1020 = vmatprep.mubr.bf16.mxu0 %v787
  %1021 = vmatmul.mubr.bf16.gmra.mxu0 %v786
  %v1022 = vpop.f32.mrf.mxu0
  %v1023 = vadd.f32 0.0, %v1022
  %v1024 = vpop.f32.mrf.mxu0
  %v1025 = vpop.f32.mrf.mxu0
  %v1026 = vadd.f32 0.0, %v1025
  %v1027 = vpop.f32.mrf.mxu0
  %1028 = vmatprep.mubr.bf16.mxu0 %v790
  %1029 = vmatmul.mubr.bf16.gmra.mxu0 %v789
  %v1030 = vpop.f32.mrf.mxu0
  %v1031 = vadd.f32 0.0, %v1030
  %v1032 = vpop.f32.mrf.mxu0
  %v1033 = vpop.f32.mrf.mxu0
  %v1034 = vadd.f32 0.0, %v1033
  %v1035 = vpop.f32.mrf.mxu0
  %1036 = vdwg.mxu0
  %1037 = vmatprep.subr.bf16.mxu0 0
  %1038 = vmatpush1.bf16.msra.mxu0 0
  %1039 = vmatprep.subr.bf16.mxu0 0
  %1040 = vmatpush1.bf16.msra.mxu0 0
  %1041 = vmatprep.subr.bf16.mxu0 0
  %1042 = vmatpush1.bf16.msra.mxu0 0
  %1043 = vmatprep.subr.bf16.mxu0 0
  %1044 = vmatpush1.bf16.msra.mxu0 0
  %1045 = vmatprep.subr.bf16.mxu0 0
  %1046 = vmatpush1.bf16.msra.mxu0 0
  %1047 = vmatprep.subr.bf16.mxu0 0
  %1048 = vmatpush1.bf16.msra.mxu0 0
  %1049 = vmatprep.subr.bf16.mxu0 0
  %1050 = vmatpush1.bf16.msra.mxu0 %v897
  %1051 = vmatprep.subr.bf16.mxu0 0
  %1052 = vmatpush1.bf16.msra.mxu0 %v896
  %1053 = vmatprep.subr.bf16.mxu0 0
  %1054 = vmatpush2.bf16.msra.mxu0 0
  %1055 = vmatprep.subr.bf16.mxu0 0
  %1056 = vmatpush2.bf16.msra.mxu0 0
  %1057 = vmatprep.subr.bf16.mxu0 0
  %1058 = vmatpush2.bf16.msra.mxu0 0
  %1059 = vmatprep.subr.bf16.mxu0 0
  %1060 = vmatpush2.bf16.msra.mxu0 0
  %1061 = vmatprep.subr.bf16.mxu0 0
  %1062 = vmatpush2.bf16.msra.mxu0 0
  %1063 = vmatprep.subr.bf16.mxu0 0
  %1064 = vmatpush2.bf16.msra.mxu0 0
  %1065 = vmatprep.subr.bf16.mxu0 0
  %1066 = vmatpush2.bf16.msra.mxu0 0
  %1067 = vmatprep.subr.bf16.mxu0 0
  %1068 = vmatpush2.bf16.msra.mxu0 0
  %1069 = vmatprep.mubr.bf16.mxu0 0
  %1070 = vmatmul.mubr.bf16.gmra.mxu0 %v917
  %v1071 = vpop.f32.mrf.mxu0
  %v1072 = vadd.f32 %v975, %v1071
  %v1073 = vpop.f32.mrf.mxu0
  %v1074 = vpop.f32.mrf.mxu0
  %v1075 = vadd.f32 %v978, %v1074
  %v1076 = vpop.f32.mrf.mxu0
  %1077 = vmatprep.mubr.bf16.mxu0 0
  %1078 = vmatmul.mubr.bf16.gmra.mxu0 %v920
  %v1079 = vpop.f32.mrf.mxu0
  %v1080 = vadd.f32 %v983, %v1079
  %v1081 = vpop.f32.mrf.mxu0
  %v1082 = vpop.f32.mrf.mxu0
  %v1083 = vadd.f32 %v986, %v1082
  %v1084 = vpop.f32.mrf.mxu0
  %1085 = vmatprep.mubr.bf16.mxu0 0
  %1086 = vmatmul.mubr.bf16.gmra.mxu0 %v923
  %v1087 = vpop.f32.mrf.mxu0
  %v1088 = vadd.f32 %v991, %v1087
  %v1089 = vpop.f32.mrf.mxu0
  %v1090 = vpop.f32.mrf.mxu0
  %v1091 = vadd.f32 %v994, %v1090
  %v1092 = vpop.f32.mrf.mxu0
  %1093 = vmatprep.mubr.bf16.mxu0 0
  %1094 = vmatmul.mubr.bf16.gmra.mxu0 %v926
  %v1095 = vpop.f32.mrf.mxu0
  %v1096 = vadd.f32 %v999, %v1095
  %v1097 = vpop.f32.mrf.mxu0
  %v1098 = vpop.f32.mrf.mxu0
  %v1099 = vadd.f32 %v1002, %v1098
  %v1100 = vpop.f32.mrf.mxu0
  %1101 = vmatprep.mubr.bf16.mxu0 0
  %1102 = vmatmul.mubr.bf16.gmra.mxu0 %v929
  %v1103 = vpop.f32.mrf.mxu0
  %v1104 = vadd.f32 %v1007, %v1103
  %v1105 = vpop.f32.mrf.mxu0
  %v1106 = vpop.f32.mrf.mxu0
  %v1107 = vadd.f32 %v1010, %v1106
  %v1108 = vpop.f32.mrf.mxu0
  %1109 = vmatprep.mubr.bf16.mxu0 0
  %1110 = vmatmul.mubr.bf16.gmra.mxu0 %v932
  %v1111 = vpop.f32.mrf.mxu0
  %v1112 = vadd.f32 %v1015, %v1111
  %v1113 = vpop.f32.mrf.mxu0
  %v1114 = vpop.f32.mrf.mxu0
  %v1115 = vadd.f32 %v1018, %v1114
  %v1116 = vpop.f32.mrf.mxu0
  %1117 = vmatprep.mubr.bf16.mxu0 0
  %1118 = vmatmul.mubr.bf16.gmra.mxu0 %v935
  %v1119 = vpop.f32.mrf.mxu0
  %v1120 = vadd.f32 %v1023, %v1119
  %v1121 = vpop.f32.mrf.mxu0
  %v1122 = vpop.f32.mrf.mxu0
  %v1123 = vadd.f32 %v1026, %v1122
  %v1124 = vpop.f32.mrf.mxu0
  %1125 = vmatprep.mubr.bf16.mxu0 0
  %1126 = vmatmul.mubr.bf16.gmra.mxu0 %v938
  %v1127 = vpop.f32.mrf.mxu0
  %v1128 = vadd.f32 %v1031, %v1127
  %v1129 = vpop.f32.mrf.mxu0
  %v1130 = vpop.f32.mrf.mxu0
  %v1131 = vadd.f32 %v1034, %v1130
  %v1132 = vpop.f32.mrf.mxu0
  %1133 = vdwg.mxu0
  %v1134 = vadd.f32 %v604, %v1072
  %v1135 = vadd.f32 %v605, %v1075
  %v1136 = vadd.f32 %v606, %v1080
  %v1137 = vadd.f32 %v607, %v1083
  %v1138 = vadd.f32 %v608, %v1088
  %v1139 = vadd.f32 %v609, %v1091
  %v1140 = vadd.f32 %v610, %v1096
  %v1141 = vadd.f32 %v611, %v1099
  %v1142 = vadd.f32 %v612, %v1104
  %v1143 = vadd.f32 %v613, %v1107
  %v1144 = vadd.f32 %v614, %v1112
  %v1145 = vadd.f32 %v615, %v1115
  %v1146 = vadd.f32 %v616, %v1120
  %v1147 = vadd.f32 %v617, %v1123
  %v1148 = vadd.f32 %v618, %v1128
  %v1149 = vadd.f32 %v619, %v1131
  %1150 = vst [vmem:[#allocation2] sm:$0xff] %v1134
  %1151 = vst [vmem:[#allocation2 + $0x8] sm:$0xff] %v1135
  %1152 = vst [vmem:[#allocation2 + $0x10] sm:$0xff] %v1136
  %1153 = vst [vmem:[#allocation2 + $0x18] sm:$0xff] %v1137
  %1154 = vst [vmem:[#allocation2 + $0x20] sm:$0xff] %v1138
  %1155 = vst [vmem:[#allocation2 + $0x28] sm:$0xff] %v1139
  %1156 = vst [vmem:[#allocation2 + $0x30] sm:$0xff] %v1140
  %1157 = vst [vmem:[#allocation2 + $0x38] sm:$0xff] %v1141
  %1158 = vst [vmem:[#allocation2 + $0x40] sm:$0xff] %v1142
  %1159 = vst [vmem:[#allocation2 + $0x48] sm:$0xff] %v1143
  %1160 = vst [vmem:[#allocation2 + $0x50] sm:$0xff] %v1144
  %1161 = vst [vmem:[#allocation2 + $0x58] sm:$0xff] %v1145
  %1162 = vst [vmem:[#allocation2 + $0x60] sm:$0xff] %v1146
  %1163 = vst [vmem:[#allocation2 + $0x68] sm:$0xff] %v1147
  %1164 = vst [vmem:[#allocation2 + $0x70] sm:$0xff] %v1148
  %1165 = vst [vmem:[#allocation2 + $0x78] sm:$0xff] %v1149
  // Predicated region
  $region26: #{unet_forward.20} parent=0 // pred_check
    %p1166 = pneg %p21
  $region27: #{unet_forward.20} parent=0 // pred_check_branch
    %1168 = sbr.rel (%p1166) target = $region29
  $region28: #{unet_forward.20} parent=0 // pred_region
    %v1169 = vld [vmem:[#allocation2] sm:$0xff]
    %v1170 = vld [vmem:[#allocation2 + $0x8] sm:$0xff]
    %v1171 = vld [vmem:[#allocation2 + $0x10] sm:$0xff]
    %v1172 = vld [vmem:[#allocation2 + $0x18] sm:$0xff]
    %v1173 = vld [vmem:[#allocation2 + $0x20] sm:$0xff]
    %v1174 = vld [vmem:[#allocation2 + $0x28] sm:$0xff]
    %v1175 = vld [vmem:[#allocation2 + $0x30] sm:$0xff]
    %v1176 = vld [vmem:[#allocation2 + $0x38] sm:$0xff]
    %v1177 = vld [vmem:[#allocation2 + $0x40] sm:$0xff]
    %v1178 = vld [vmem:[#allocation2 + $0x48] sm:$0xff]
    %v1179 = vld [vmem:[#allocation2 + $0x50] sm:$0xff]
    %v1180 = vld [vmem:[#allocation2 + $0x58] sm:$0xff]
    %v1181 = vld [vmem:[#allocation2 + $0x60] sm:$0xff]
    %v1182 = vld [vmem:[#allocation2 + $0x68] sm:$0xff]
    %v1183 = vld [vmem:[#allocation2 + $0x70] sm:$0xff]
    %v1184 = vld [vmem:[#allocation2 + $0x78] sm:$0xff]
    %v1185 = vld [vmem:[%s4] sm:$0x1]
    %v1187 = vlaneseq
    %v1188 = vshrl.u32 %v1187, 7
    %v1189 = vsub.s32 0, %v1188
    %v1190 = vrot.slane %v1185, %v1189
    %v1192 = vadd.f32 %v1169, %v1190
    %v1193 = vadd.f32 %v1170, %v1190
    %v1194 = vadd.f32 %v1171, %v1190
    %v1195 = vadd.f32 %v1172, %v1190
    %v1196 = vadd.f32 %v1173, %v1190
    %v1197 = vadd.f32 %v1174, %v1190
    %v1198 = vadd.f32 %v1175, %v1190
    %v1199 = vadd.f32 %v1176, %v1190
    %v1200 = vadd.f32 %v1177, %v1190
    %v1201 = vadd.f32 %v1178, %v1190
    %v1202 = vadd.f32 %v1179, %v1190
    %v1203 = vadd.f32 %v1180, %v1190
    %v1204 = vadd.f32 %v1181, %v1190
    %v1205 = vadd.f32 %v1182, %v1190
    %v1206 = vadd.f32 %v1183, %v1190
    %v1207 = vadd.f32 %v1184, %v1190
    %v1208 = vmax.f32 %v1192, 0.0
    %v1209 = vmax.f32 %v1193, 0.0
    %v1210 = vmax.f32 %v1194, 0.0
    %v1211 = vmax.f32 %v1195, 0.0
    %v1212 = vmax.f32 %v1196, 0.0
    %v1213 = vmax.f32 %v1197, 0.0
    %v1214 = vmax.f32 %v1198, 0.0
    %v1215 = vmax.f32 %v1199, 0.0
    %v1216 = vmax.f32 %v1200, 0.0
    %v1217 = vmax.f32 %v1201, 0.0
    %v1218 = vmax.f32 %v1202, 0.0
    %v1219 = vmax.f32 %v1203, 0.0
    %v1220 = vmax.f32 %v1204, 0.0
    %v1221 = vmax.f32 %v1205, 0.0
    %v1222 = vmax.f32 %v1206, 0.0
    %v1223 = vmax.f32 %v1207, 0.0
    %v1224 = vpack.c.bf16 %v1209, %v1208
    %v1225 = vpack.c.bf16 %v1211, %v1210
    %v1226 = vpack.c.bf16 %v1213, %v1212
    %v1227 = vpack.c.bf16 %v1215, %v1214
    %v1228 = vpack.c.bf16 %v1217, %v1216
    %v1229 = vpack.c.bf16 %v1219, %v1218
    %v1230 = vpack.c.bf16 %v1221, %v1220
    %v1231 = vpack.c.bf16 %v1223, %v1222
    %v1240 = vunpack.c.l.b16 %v1224
    %v1241 = vunpack.c.h.b16 %v1224
    %v1242 = vunpack.c.l.b16 %v1225
    %v1243 = vunpack.c.h.b16 %v1225
    %v1244 = vunpack.c.l.b16 %v1226
    %v1245 = vunpack.c.h.b16 %v1226
    %v1246 = vunpack.c.l.b16 %v1227
    %v1247 = vunpack.c.h.b16 %v1227
    %v1248 = vunpack.c.l.b16 %v1228
    %v1249 = vunpack.c.h.b16 %v1228
    %v1250 = vunpack.c.l.b16 %v1229
    %v1251 = vunpack.c.h.b16 %v1229
    %v1252 = vunpack.c.l.b16 %v1230
    %v1253 = vunpack.c.h.b16 %v1230
    %v1254 = vunpack.c.l.b16 %v1231
    %v1255 = vunpack.c.h.b16 %v1231
    %v1256 = vpack.c.b16 %v1240, %v1240
    %v1257 = vpack.c.b16 %v1241, %v1241
    %v1258 = vpack.c.b16 %v1242, %v1242
    %v1259 = vpack.c.b16 %v1243, %v1243
    %v1260 = vpack.c.b16 %v1244, %v1244
    %v1261 = vpack.c.b16 %v1245, %v1245
    %v1262 = vpack.c.b16 %v1246, %v1246
    %v1263 = vpack.c.b16 %v1247, %v1247
    %v1264 = vpack.c.b16 %v1248, %v1248
    %v1265 = vpack.c.b16 %v1249, %v1249
    %v1266 = vpack.c.b16 %v1250, %v1250
    %v1267 = vpack.c.b16 %v1251, %v1251
    %v1268 = vpack.c.b16 %v1252, %v1252
    %v1269 = vpack.c.b16 %v1253, %v1253
    %v1270 = vpack.c.b16 %v1254, %v1254
    %v1271 = vpack.c.b16 %v1255, %v1255
    %1288 = vst [vmem:[%s5] sm:$0xf] %v1256
    %1289 = vst [vmem:[%s5 + $0x4] sm:$0xf] %v1257
    %1290 = vst [vmem:[%s5 + $0x8] sm:$0xf] %v1258
    %1291 = vst [vmem:[%s5 + $0xc] sm:$0xf] %v1259
    %1292 = vst [vmem:[%s5 + $0x10] sm:$0xf] %v1260
    %1293 = vst [vmem:[%s5 + $0x14] sm:$0xf] %v1261
    %1294 = vst [vmem:[%s5 + $0x18] sm:$0xf] %v1262
    %1295 = vst [vmem:[%s5 + $0x1c] sm:$0xf] %v1263
    %1296 = vst [vmem:[%s5 + $0x20] sm:$0xf] %v1264
    %1297 = vst [vmem:[%s5 + $0x24] sm:$0xf] %v1265
    %1298 = vst [vmem:[%s5 + $0x28] sm:$0xf] %v1266
    %1299 = vst [vmem:[%s5 + $0x2c] sm:$0xf] %v1267
    %1300 = vst [vmem:[%s5 + $0x30] sm:$0xf] %v1268
    %1301 = vst [vmem:[%s5 + $0x34] sm:$0xf] %v1269
    %1302 = vst [vmem:[%s5 + $0x38] sm:$0xf] %v1270
    %1303 = vst [vmem:[%s5 + $0x3c] sm:$0xf] %v1271
  $region29: #{unet_forward.20} parent=0 // pred_fallthru
    _
  // Predicated region
  $region30: #{unet_forward.20} parent=0 // pred_check
    _
  $region31: #{unet_forward.20} parent=0 // pred_check_branch
    %1305 = sbr.rel (0) target = $region33
  $region32: #{unet_forward.20} parent=0 // pred_region
    _
  $region33: #{unet_forward.20} parent=0 // pred_fallthru
    _
  // Predicated region
  $region34: #{unet_forward.20} parent=0 // pred_check
    _
  $region35: #{unet_forward.20} parent=0 // pred_check_branch
    %1307 = sbr.rel (0) target = $region37
  $region36: #{unet_forward.20} parent=0 // pred_region
    _
  $region37: #{unet_forward.20} parent=0 // pred_fallthru
    _

// kernel: unet_forward.25
$region0: #{unet_forward.25}
  #allocation0 [shape = 'u32[]', space=smem, size = 0x4, offset = 0x4, fixed_abs, tag = 'smem constant byte address 0x4 - core index']
  #allocation1 [shape = 'u32[144,128]{1,0:T(1,128)}', space=vmem, size = 0x12000, scoped, tag = 'internal scratch']
  #allocation2 [shape = 'f32[512,128]{1,0:T(8,128)}', space=vmem, size = 0x40000, scoped, tag = 'scratch operand']
  %s0 = inlined_call_operand.vmem [shape: bf16[512,16], index: 0, kind: input, shape index: {}]
  %s1 = inlined_call_operand.vmem [shape: bf16[16,128], index: 1, kind: input, shape index: {}]
  %s2 = inlined_call_operand.vmem [shape: f32[1,128], index: 2, kind: input, shape index: {}]
  %s3 = inlined_call_operand.vmem [shape: f32[512,128], index: 3, kind: output, shape index: {}]
  %s4 = sld [smem:[#allocation0]]
  $region30: #{unet_forward.25} parent=0
    _
  %s6 = ssub.s32 1, %s4
  %s7 = scalar_select 0, %s6, %s4
  // Predicated region
  $region2: #{unet_forward.25} parent=0 // pred_check
    _
  $region3: #{unet_forward.25} parent=0 // pred_check_branch
    %9 = sbr.rel (0) target = $region5
  $region4: #{unet_forward.25} parent=0 // pred_region
    _
  $region5: #{unet_forward.25} parent=0 // pred_fallthru
    _
  // Predicated region
  $region6: #{unet_forward.25} parent=0 // pred_check
    _
  $region7: #{unet_forward.25} parent=0 // pred_check_branch
    %11 = sbr.rel (0) target = $region9
  $region8: #{unet_forward.25} parent=0 // pred_region
    _
  $region9: #{unet_forward.25} parent=0 // pred_fallthru
    _
  // Predicated region
  $region10: #{unet_forward.25} parent=0 // pred_check
    _
  $region11: #{unet_forward.25} parent=0 // pred_check_branch
    %13 = sbr.rel (0) target = $region13
  $region12: #{unet_forward.25} parent=0 // pred_region
    _
  $region13: #{unet_forward.25} parent=0 // pred_fallthru
    _
  %p15 = scmp.eq.s32.totalorder 0, 0
  // Predicated region
  $region14: #{unet_forward.25} parent=0 // pred_check
    %p16 = pneg %p15
  $region15: #{unet_forward.25} parent=0 // pred_check_branch
    %18 = sbr.rel (%p16) target = $region17
  $region16: #{unet_forward.25} parent=0 // pred_region
    %19 = vst [vmem:[#allocation2] sm:$0xff] 0.0
    %20 = vst [vmem:[#allocation2 + $0x8] sm:$0xff] 0.0
    %21 = vst [vmem:[#allocation2 + $0x10] sm:$0xff] 0.0
    %22 = vst [vmem:[#allocation2 + $0x18] sm:$0xff] 0.0
    %23 = vst [vmem:[#allocation2 + $0x20] sm:$0xff] 0.0
    %24 = vst [vmem:[#allocation2 + $0x28] sm:$0xff] 0.0
    %25 = vst [vmem:[#allocation2 + $0x30] sm:$0xff] 0.0
    %26 = vst [vmem:[#allocation2 + $0x38] sm:$0xff] 0.0
    %27 = vst [vmem:[#allocation2 + $0x40] sm:$0xff] 0.0
    %28 = vst [vmem:[#allocation2 + $0x48] sm:$0xff] 0.0
    %29 = vst [vmem:[#allocation2 + $0x50] sm:$0xff] 0.0
    %30 = vst [vmem:[#allocation2 + $0x58] sm:$0xff] 0.0
    %31 = vst [vmem:[#allocation2 + $0x60] sm:$0xff] 0.0
    %32 = vst [vmem:[#allocation2 + $0x68] sm:$0xff] 0.0
    %33 = vst [vmem:[#allocation2 + $0x70] sm:$0xff] 0.0
    %34 = vst [vmem:[#allocation2 + $0x78] sm:$0xff] 0.0
    %35 = vst [vmem:[#allocation2 + $0x80] sm:$0xff] 0.0
    %36 = vst [vmem:[#allocation2 + $0x88] sm:$0xff] 0.0
    %37 = vst [vmem:[#allocation2 + $0x90] sm:$0xff] 0.0
    %38 = vst [vmem:[#allocation2 + $0x98] sm:$0xff] 0.0
    %39 = vst [vmem:[#allocation2 + $0xa0] sm:$0xff] 0.0
    %40 = vst [vmem:[#allocation2 + $0xa8] sm:$0xff] 0.0
    %41 = vst [vmem:[#allocation2 + $0xb0] sm:$0xff] 0.0
    %42 = vst [vmem:[#allocation2 + $0xb8] sm:$0xff] 0.0
    %43 = vst [vmem:[#allocation2 + $0xc0] sm:$0xff] 0.0
    %44 = vst [vmem:[#allocation2 + $0xc8] sm:$0xff] 0.0
    %45 = vst [vmem:[#allocation2 + $0xd0] sm:$0xff] 0.0
    %46 = vst [vmem:[#allocation2 + $0xd8] sm:$0xff] 0.0
    %47 = vst [vmem:[#allocation2 + $0xe0] sm:$0xff] 0.0
    %48 = vst [vmem:[#allocation2 + $0xe8] sm:$0xff] 0.0
    %49 = vst [vmem:[#allocation2 + $0xf0] sm:$0xff] 0.0
    %50 = vst [vmem:[#allocation2 + $0xf8] sm:$0xff] 0.0
    %51 = vst [vmem:[#allocation2 + $0x100] sm:$0xff] 0.0
    %52 = vst [vmem:[#allocation2 + $0x108] sm:$0xff] 0.0
    %53 = vst [vmem:[#allocation2 + $0x110] sm:$0xff] 0.0
    %54 = vst [vmem:[#allocation2 + $0x118] sm:$0xff] 0.0
    %55 = vst [vmem:[#allocation2 + $0x120] sm:$0xff] 0.0
    %56 = vst [vmem:[#allocation2 + $0x128] sm:$0xff] 0.0
    %57 = vst [vmem:[#allocation2 + $0x130] sm:$0xff] 0.0
    %58 = vst [vmem:[#allocation2 + $0x138] sm:$0xff] 0.0
    %59 = vst [vmem:[#allocation2 + $0x140] sm:$0xff] 0.0
    %60 = vst [vmem:[#allocation2 + $0x148] sm:$0xff] 0.0
    %61 = vst [vmem:[#allocation2 + $0x150] sm:$0xff] 0.0
    %62 = vst [vmem:[#allocation2 + $0x158] sm:$0xff] 0.0
    %63 = vst [vmem:[#allocation2 + $0x160] sm:$0xff] 0.0
    %64 = vst [vmem:[#allocation2 + $0x168] sm:$0xff] 0.0
    %65 = vst [vmem:[#allocation2 + $0x170] sm:$0xff] 0.0
    %66 = vst [vmem:[#allocation2 + $0x178] sm:$0xff] 0.0
    %67 = vst [vmem:[#allocation2 + $0x180] sm:$0xff] 0.0
    %68 = vst [vmem:[#allocation2 + $0x188] sm:$0xff] 0.0
    %69 = vst [vmem:[#allocation2 + $0x190] sm:$0xff] 0.0
    %70 = vst [vmem:[#allocation2 + $0x198] sm:$0xff] 0.0
    %71 = vst [vmem:[#allocation2 + $0x1a0] sm:$0xff] 0.0
    %72 = vst [vmem:[#allocation2 + $0x1a8] sm:$0xff] 0.0
    %73 = vst [vmem:[#allocation2 + $0x1b0] sm:$0xff] 0.0
    %74 = vst [vmem:[#allocation2 + $0x1b8] sm:$0xff] 0.0
    %75 = vst [vmem:[#allocation2 + $0x1c0] sm:$0xff] 0.0
    %76 = vst [vmem:[#allocation2 + $0x1c8] sm:$0xff] 0.0
    %77 = vst [vmem:[#allocation2 + $0x1d0] sm:$0xff] 0.0
    %78 = vst [vmem:[#allocation2 + $0x1d8] sm:$0xff] 0.0
    %79 = vst [vmem:[#allocation2 + $0x1e0] sm:$0xff] 0.0
    %80 = vst [vmem:[#allocation2 + $0x1e8] sm:$0xff] 0.0
    %81 = vst [vmem:[#allocation2 + $0x1f0] sm:$0xff] 0.0
    %82 = vst [vmem:[#allocation2 + $0x1f8] sm:$0xff] 0.0
  $region17: #{unet_forward.25} parent=0 // pred_fallthru
    _
  %v83 = vld [vmem:[#allocation2] sm:$0xff]
  %v84 = vld [vmem:[#allocation2 + $0x8] sm:$0xff]
  %v85 = vld [vmem:[#allocation2 + $0x10] sm:$0xff]
  %v86 = vld [vmem:[#allocation2 + $0x18] sm:$0xff]
  %v87 = vld [vmem:[#allocation2 + $0x20] sm:$0xff]
  %v88 = vld [vmem:[#allocation2 + $0x28] sm:$0xff]
  %v89 = vld [vmem:[#allocation2 + $0x30] sm:$0xff]
  %v90 = vld [vmem:[#allocation2 + $0x38] sm:$0xff]
  %v91 = vld [vmem:[#allocation2 + $0x40] sm:$0xff]
  %v92 = vld [vmem:[#allocation2 + $0x48] sm:$0xff]
  %v93 = vld [vmem:[#allocation2 + $0x50] sm:$0xff]
  %v94 = vld [vmem:[#allocation2 + $0x58] sm:$0xff]
  %v95 = vld [vmem:[#allocation2 + $0x60] sm:$0xff]
  %v96 = vld [vmem:[#allocation2 + $0x68] sm:$0xff]
  %v97 = vld [vmem:[#allocation2 + $0x70] sm:$0xff]
  %v98 = vld [vmem:[#allocation2 + $0x78] sm:$0xff]
  %v99 = vld [vmem:[#allocation2 + $0x80] sm:$0xff]
  %v100 = vld [vmem:[#allocation2 + $0x88] sm:$0xff]
  %v101 = vld [vmem:[#allocation2 + $0x90] sm:$0xff]
  %v102 = vld [vmem:[#allocation2 + $0x98] sm:$0xff]
  %v103 = vld [vmem:[#allocation2 + $0xa0] sm:$0xff]
  %v104 = vld [vmem:[#allocation2 + $0xa8] sm:$0xff]
  %v105 = vld [vmem:[#allocation2 + $0xb0] sm:$0xff]
  %v106 = vld [vmem:[#allocation2 + $0xb8] sm:$0xff]
  %v107 = vld [vmem:[#allocation2 + $0xc0] sm:$0xff]
  %v108 = vld [vmem:[#allocation2 + $0xc8] sm:$0xff]
  %v109 = vld [vmem:[#allocation2 + $0xd0] sm:$0xff]
  %v110 = vld [vmem:[#allocation2 + $0xd8] sm:$0xff]
  %v111 = vld [vmem:[#allocation2 + $0xe0] sm:$0xff]
  %v112 = vld [vmem:[#allocation2 + $0xe8] sm:$0xff]
  %v113 = vld [vmem:[#allocation2 + $0xf0] sm:$0xff]
  %v114 = vld [vmem:[#allocation2 + $0xf8] sm:$0xff]
  %v115 = vld [vmem:[#allocation2 + $0x100] sm:$0xff]
  %v116 = vld [vmem:[#allocation2 + $0x108] sm:$0xff]
  %v117 = vld [vmem:[#allocation2 + $0x110] sm:$0xff]
  %v118 = vld [vmem:[#allocation2 + $0x118] sm:$0xff]
  %v119 = vld [vmem:[#allocation2 + $0x120] sm:$0xff]
  %v120 = vld [vmem:[#allocation2 + $0x128] sm:$0xff]
  %v121 = vld [vmem:[#allocation2 + $0x130] sm:$0xff]
  %v122 = vld [vmem:[#allocation2 + $0x138] sm:$0xff]
  %v123 = vld [vmem:[#allocation2 + $0x140] sm:$0xff]
  %v124 = vld [vmem:[#allocation2 + $0x148] sm:$0xff]
  %v125 = vld [vmem:[#allocation2 + $0x150] sm:$0xff]
  %v126 = vld [vmem:[#allocation2 + $0x158] sm:$0xff]
  %v127 = vld [vmem:[#allocation2 + $0x160] sm:$0xff]
  %v128 = vld [vmem:[#allocation2 + $0x168] sm:$0xff]
  %v129 = vld [vmem:[#allocation2 + $0x170] sm:$0xff]
  %v130 = vld [vmem:[#allocation2 + $0x178] sm:$0xff]
  %v131 = vld [vmem:[#allocation2 + $0x180] sm:$0xff]
  %v132 = vld [vmem:[#allocation2 + $0x188] sm:$0xff]
  %v133 = vld [vmem:[#allocation2 + $0x190] sm:$0xff]
  %v134 = vld [vmem:[#allocation2 + $0x198] sm:$0xff]
  %v135 = vld [vmem:[#allocation2 + $0x1a0] sm:$0xff]
  %v136 = vld [vmem:[#allocation2 + $0x1a8] sm:$0xff]
  %v137 = vld [vmem:[#allocation2 + $0x1b0] sm:$0xff]
  %v138 = vld [vmem:[#allocation2 + $0x1b8] sm:$0xff]
  %v139 = vld [vmem:[#allocation2 + $0x1c0] sm:$0xff]
  %v140 = vld [vmem:[#allocation2 + $0x1c8] sm:$0xff]
  %v141 = vld [vmem:[#allocation2 + $0x1d0] sm:$0xff]
  %v142 = vld [vmem:[#allocation2 + $0x1d8] sm:$0xff]
  %v143 = vld [vmem:[#allocation2 + $0x1e0] sm:$0xff]
  %v144 = vld [vmem:[#allocation2 + $0x1e8] sm:$0xff]
  %v145 = vld [vmem:[#allocation2 + $0x1f0] sm:$0xff]
  %v146 = vld [vmem:[#allocation2 + $0x1f8] sm:$0xff]
  %v147 = vld [vmem:[%s0] sm:$0xf]
  %v148 = vld [vmem:[%s0 + $0x4] sm:$0xf]
  %v149 = vld [vmem:[%s0 + $0x8] sm:$0xf]
  %v150 = vld [vmem:[%s0 + $0xc] sm:$0xf]
  %v151 = vld [vmem:[%s0 + $0x10] sm:$0xf]
  %v152 = vld [vmem:[%s0 + $0x14] sm:$0xf]
  %v153 = vld [vmem:[%s0 + $0x18] sm:$0xf]
  %v154 = vld [vmem:[%s0 + $0x1c] sm:$0xf]
  %v155 = vld [vmem:[%s0 + $0x20] sm:$0xf]
  %v156 = vld [vmem:[%s0 + $0x24] sm:$0xf]
  %v157 = vld [vmem:[%s0 + $0x28] sm:$0xf]
  %v158 = vld [vmem:[%s0 + $0x2c] sm:$0xf]
  %v159 = vld [vmem:[%s0 + $0x30] sm:$0xf]
  %v160 = vld [vmem:[%s0 + $0x34] sm:$0xf]
  %v161 = vld [vmem:[%s0 + $0x38] sm:$0xf]
  %v162 = vld [vmem:[%s0 + $0x3c] sm:$0xf]
  %v163 = vld [vmem:[%s0 + $0x40] sm:$0xf]
  %v164 = vld [vmem:[%s0 + $0x44] sm:$0xf]
  %v165 = vld [vmem:[%s0 + $0x48] sm:$0xf]
  %v166 = vld [vmem:[%s0 + $0x4c] sm:$0xf]
  %v167 = vld [vmem:[%s0 + $0x50] sm:$0xf]
  %v168 = vld [vmem:[%s0 + $0x54] sm:$0xf]
  %v169 = vld [vmem:[%s0 + $0x58] sm:$0xf]
  %v170 = vld [vmem:[%s0 + $0x5c] sm:$0xf]
  %v171 = vld [vmem:[%s0 + $0x60] sm:$0xf]
  %v172 = vld [vmem:[%s0 + $0x64] sm:$0xf]
  %v173 = vld [vmem:[%s0 + $0x68] sm:$0xf]
  %v174 = vld [vmem:[%s0 + $0x6c] sm:$0xf]
  %v175 = vld [vmem:[%s0 + $0x70] sm:$0xf]
  %v176 = vld [vmem:[%s0 + $0x74] sm:$0xf]
  %v177 = vld [vmem:[%s0 + $0x78] sm:$0xf]
  %v178 = vld [vmem:[%s0 + $0x7c] sm:$0xf]
  %v179 = vld [vmem:[%s0 + $0x80] sm:$0xf]
  %v180 = vld [vmem:[%s0 + $0x84] sm:$0xf]
  %v181 = vld [vmem:[%s0 + $0x88] sm:$0xf]
  %v182 = vld [vmem:[%s0 + $0x8c] sm:$0xf]
  %v183 = vld [vmem:[%s0 + $0x90] sm:$0xf]
  %v184 = vld [vmem:[%s0 + $0x94] sm:$0xf]
  %v185 = vld [vmem:[%s0 + $0x98] sm:$0xf]
  %v186 = vld [vmem:[%s0 + $0x9c] sm:$0xf]
  %v187 = vld [vmem:[%s0 + $0xa0] sm:$0xf]
  %v188 = vld [vmem:[%s0 + $0xa4] sm:$0xf]
  %v189 = vld [vmem:[%s0 + $0xa8] sm:$0xf]
  %v190 = vld [vmem:[%s0 + $0xac] sm:$0xf]
  %v191 = vld [vmem:[%s0 + $0xb0] sm:$0xf]
  %v192 = vld [vmem:[%s0 + $0xb4] sm:$0xf]
  %v193 = vld [vmem:[%s0 + $0xb8] sm:$0xf]
  %v194 = vld [vmem:[%s0 + $0xbc] sm:$0xf]
  %v195 = vld [vmem:[%s0 + $0xc0] sm:$0xf]
  %v196 = vld [vmem:[%s0 + $0xc4] sm:$0xf]
  %v197 = vld [vmem:[%s0 + $0xc8] sm:$0xf]
  %v198 = vld [vmem:[%s0 + $0xcc] sm:$0xf]
  %v199 = vld [vmem:[%s0 + $0xd0] sm:$0xf]
  %v200 = vld [vmem:[%s0 + $0xd4] sm:$0xf]
  %v201 = vld [vmem:[%s0 + $0xd8] sm:$0xf]
  %v202 = vld [vmem:[%s0 + $0xdc] sm:$0xf]
  %v203 = vld [vmem:[%s0 + $0xe0] sm:$0xf]
  %v204 = vld [vmem:[%s0 + $0xe4] sm:$0xf]
  %v205 = vld [vmem:[%s0 + $0xe8] sm:$0xf]
  %v206 = vld [vmem:[%s0 + $0xec] sm:$0xf]
  %v207 = vld [vmem:[%s0 + $0xf0] sm:$0xf]
  %v208 = vld [vmem:[%s0 + $0xf4] sm:$0xf]
  %v209 = vld [vmem:[%s0 + $0xf8] sm:$0xf]
  %v210 = vld [vmem:[%s0 + $0xfc] sm:$0xf]
  %v211 = vld [vmem:[%s1] sm:$0xf]
  %v212 = vld [vmem:[%s1 + $0x4] sm:$0xf]
  %v277 = vunpack.c.l.b16 %v147
  %v278 = vunpack.c.l.b16 %v148
  %v279 = vunpack.c.l.b16 %v149
  %v280 = vunpack.c.l.b16 %v150
  %v281 = vunpack.c.l.b16 %v151
  %v282 = vunpack.c.l.b16 %v152
  %v283 = vunpack.c.l.b16 %v153
  %v284 = vunpack.c.l.b16 %v154
  %v285 = vunpack.c.l.b16 %v155
  %v286 = vunpack.c.l.b16 %v156
  %v287 = vunpack.c.l.b16 %v157
  %v288 = vunpack.c.l.b16 %v158
  %v289 = vunpack.c.l.b16 %v159
  %v290 = vunpack.c.l.b16 %v160
  %v291 = vunpack.c.l.b16 %v161
  %v292 = vunpack.c.l.b16 %v162
  %v293 = vunpack.c.l.b16 %v163
  %v294 = vunpack.c.l.b16 %v164
  %v295 = vunpack.c.l.b16 %v165
  %v296 = vunpack.c.l.b16 %v166
  %v297 = vunpack.c.l.b16 %v167
  %v298 = vunpack.c.l.b16 %v168
  %v299 = vunpack.c.l.b16 %v169
  %v300 = vunpack.c.l.b16 %v170
  %v301 = vunpack.c.l.b16 %v171
  %v302 = vunpack.c.l.b16 %v172
  %v303 = vunpack.c.l.b16 %v173
  %v304 = vunpack.c.l.b16 %v174
  %v305 = vunpack.c.l.b16 %v175
  %v306 = vunpack.c.l.b16 %v176
  %v307 = vunpack.c.l.b16 %v177
  %v308 = vunpack.c.l.b16 %v178
  %v309 = vunpack.c.l.b16 %v179
  %v310 = vunpack.c.l.b16 %v180
  %v311 = vunpack.c.l.b16 %v181
  %v312 = vunpack.c.l.b16 %v182
  %v313 = vunpack.c.l.b16 %v183
  %v314 = vunpack.c.l.b16 %v184
  %v315 = vunpack.c.l.b16 %v185
  %v316 = vunpack.c.l.b16 %v186
  %v317 = vunpack.c.l.b16 %v187
  %v318 = vunpack.c.l.b16 %v188
  %v319 = vunpack.c.l.b16 %v189
  %v320 = vunpack.c.l.b16 %v190
  %v321 = vunpack.c.l.b16 %v191
  %v322 = vunpack.c.l.b16 %v192
  %v323 = vunpack.c.l.b16 %v193
  %v324 = vunpack.c.l.b16 %v194
  %v325 = vunpack.c.l.b16 %v195
  %v326 = vunpack.c.l.b16 %v196
  %v327 = vunpack.c.l.b16 %v197
  %v328 = vunpack.c.l.b16 %v198
  %v329 = vunpack.c.l.b16 %v199
  %v330 = vunpack.c.l.b16 %v200
  %v331 = vunpack.c.l.b16 %v201
  %v332 = vunpack.c.l.b16 %v202
  %v333 = vunpack.c.l.b16 %v203
  %v334 = vunpack.c.l.b16 %v204
  %v335 = vunpack.c.l.b16 %v205
  %v336 = vunpack.c.l.b16 %v206
  %v337 = vunpack.c.l.b16 %v207
  %v338 = vunpack.c.l.b16 %v208
  %v339 = vunpack.c.l.b16 %v209
  %v340 = vunpack.c.l.b16 %v210
  %v341 = vpack.c.b16 %v278, %v277
  %v342 = vpack.c.b16 %v280, %v279
  %v343 = vpack.c.b16 %v282, %v281
  %v344 = vpack.c.b16 %v284, %v283
  %v345 = vpack.c.b16 %v286, %v285
  %v346 = vpack.c.b16 %v288, %v287
  %v347 = vpack.c.b16 %v290, %v289
  %v348 = vpack.c.b16 %v292, %v291
  %v349 = vpack.c.b16 %v294, %v293
  %v350 = vpack.c.b16 %v296, %v295
  %v351 = vpack.c.b16 %v298, %v297
  %v352 = vpack.c.b16 %v300, %v299
  %v353 = vpack.c.b16 %v302, %v301
  %v354 = vpack.c.b16 %v304, %v303
  %v355 = vpack.c.b16 %v306, %v305
  %v356 = vpack.c.b16 %v308, %v307
  %v357 = vpack.c.b16 %v310, %v309
  %v358 = vpack.c.b16 %v312, %v311
  %v359 = vpack.c.b16 %v314, %v313
  %v360 = vpack.c.b16 %v316, %v315
  %v361 = vpack.c.b16 %v318, %v317
  %v362 = vpack.c.b16 %v320, %v319
  %v363 = vpack.c.b16 %v322, %v321
  %v364 = vpack.c.b16 %v324, %v323
  %v365 = vpack.c.b16 %v326, %v325
  %v366 = vpack.c.b16 %v328, %v327
  %v367 = vpack.c.b16 %v330, %v329
  %v368 = vpack.c.b16 %v332, %v331
  %v369 = vpack.c.b16 %v334, %v333
  %v370 = vpack.c.b16 %v336, %v335
  %v371 = vpack.c.b16 %v338, %v337
  %v372 = vpack.c.b16 %v340, %v339
  %v375 = vunpack.c.l.b16 %v211
  %v376 = vunpack.c.l.b16 %v212
  %v377 = vpack.c.b16 %v376, %v375
  %vm379 = vcmask 130048
  %v381 = vsel %vm379, %v341, 0
  %v384 = vsel %vm379, %v342, 0
  %v387 = vsel %vm379, %v343, 0
  %v390 = vsel %vm379, %v344, 0
  %v393 = vsel %vm379, %v345, 0
  %v396 = vsel %vm379, %v346, 0
  %v399 = vsel %vm379, %v347, 0
  %v402 = vsel %vm379, %v348, 0
  %v405 = vsel %vm379, %v349, 0
  %v408 = vsel %vm379, %v350, 0
  %v411 = vsel %vm379, %v351, 0
  %v414 = vsel %vm379, %v352, 0
  %v417 = vsel %vm379, %v353, 0
  %v420 = vsel %vm379, %v354, 0
  %v423 = vsel %vm379, %v355, 0
  %v426 = vsel %vm379, %v356, 0
  %v429 = vsel %vm379, %v357, 0
  %v432 = vsel %vm379, %v358, 0
  %v435 = vsel %vm379, %v359, 0
  %v438 = vsel %vm379, %v360, 0
  %v441 = vsel %vm379, %v361, 0
  %v444 = vsel %vm379, %v362, 0
  %v447 = vsel %vm379, %v363, 0
  %v450 = vsel %vm379, %v364, 0
  %v453 = vsel %vm379, %v365, 0
  %v456 = vsel %vm379, %v366, 0
  %v459 = vsel %vm379, %v367, 0
  %v462 = vsel %vm379, %v368, 0
  %v465 = vsel %vm379, %v369, 0
  %v468 = vsel %vm379, %v370, 0
  %v471 = vsel %vm379, %v371, 0
  %v474 = vsel %vm379, %v372, 0
  %476 = vmatprep.subr.bf16.mxu0 0
  %477 = vmatpush1.bf16.msra.mxu0 0
  %478 = vmatprep.subr.bf16.mxu0 0
  %479 = vmatpush1.bf16.msra.mxu0 0
  %480 = vmatprep.subr.bf16.mxu0 0
  %481 = vmatpush1.bf16.msra.mxu0 0
  %482 = vmatprep.subr.bf16.mxu0 0
  %483 = vmatpush1.bf16.msra.mxu0 0
  %484 = vmatprep.subr.bf16.mxu0 0
  %485 = vmatpush1.bf16.msra.mxu0 0
  %486 = vmatprep.subr.bf16.mxu0 0
  %487 = vmatpush1.bf16.msra.mxu0 0
  %488 = vmatprep.subr.bf16.mxu0 0
  %489 = vmatpush1.bf16.msra.mxu0 0
  %490 = vmatprep.subr.bf16.mxu0 0
  %491 = vmatpush1.bf16.msra.mxu0 %v377
  %492 = vmatprep.subr.bf16.mxu0 0
  %493 = vmatpush2.bf16.msra.mxu0 0
  %494 = vmatprep.subr.bf16.mxu0 0
  %495 = vmatpush2.bf16.msra.mxu0 0
  %496 = vmatprep.subr.bf16.mxu0 0
  %497 = vmatpush2.bf16.msra.mxu0 0
  %498 = vmatprep.subr.bf16.mxu0 0
  %499 = vmatpush2.bf16.msra.mxu0 0
  %500 = vmatprep.subr.bf16.mxu0 0
  %501 = vmatpush2.bf16.msra.mxu0 0
  %502 = vmatprep.subr.bf16.mxu0 0
  %503 = vmatpush2.bf16.msra.mxu0 0
  %504 = vmatprep.subr.bf16.mxu0 0
  %505 = vmatpush2.bf16.msra.mxu0 0
  %506 = vmatprep.subr.bf16.mxu0 0
  %507 = vmatpush2.bf16.msra.mxu0 0
  %508 = vmatprep.mubr.bf16.mxu0 0
  %509 = vmatmul.mubr.bf16.gmra.mxu0 %v381
  %v510 = vpop.f32.mrf.mxu0
  %v511 = vadd.f32 0.0, %v510
  %v512 = vpop.f32.mrf.mxu0
  %v513 = vpop.f32.mrf.mxu0
  %v514 = vadd.f32 0.0, %v513
  %v515 = vpop.f32.mrf.mxu0
  %516 = vmatprep.mubr.bf16.mxu0 0
  %517 = vmatmul.mubr.bf16.gmra.mxu0 %v384
  %v518 = vpop.f32.mrf.mxu0
  %v519 = vadd.f32 0.0, %v518
  %v520 = vpop.f32.mrf.mxu0
  %v521 = vpop.f32.mrf.mxu0
  %v522 = vadd.f32 0.0, %v521
  %v523 = vpop.f32.mrf.mxu0
  %524 = vmatprep.mubr.bf16.mxu0 0
  %525 = vmatmul.mubr.bf16.gmra.mxu0 %v387
  %v526 = vpop.f32.mrf.mxu0
  %v527 = vadd.f32 0.0, %v526
  %v528 = vpop.f32.mrf.mxu0
  %v529 = vpop.f32.mrf.mxu0
  %v530 = vadd.f32 0.0, %v529
  %v531 = vpop.f32.mrf.mxu0
  %532 = vmatprep.mubr.bf16.mxu0 0
  %533 = vmatmul.mubr.bf16.gmra.mxu0 %v390
  %v534 = vpop.f32.mrf.mxu0
  %v535 = vadd.f32 0.0, %v534
  %v536 = vpop.f32.mrf.mxu0
  %v537 = vpop.f32.mrf.mxu0
  %v538 = vadd.f32 0.0, %v537
  %v539 = vpop.f32.mrf.mxu0
  %540 = vmatprep.mubr.bf16.mxu0 0
  %541 = vmatmul.mubr.bf16.gmra.mxu0 %v393
  %v542 = vpop.f32.mrf.mxu0
  %v543 = vadd.f32 0.0, %v542
  %v544 = vpop.f32.mrf.mxu0
  %v545 = vpop.f32.mrf.mxu0
  %v546 = vadd.f32 0.0, %v545
  %v547 = vpop.f32.mrf.mxu0
  %548 = vmatprep.mubr.bf16.mxu0 0
  %549 = vmatmul.mubr.bf16.gmra.mxu0 %v396
  %v550 = vpop.f32.mrf.mxu0
  %v551 = vadd.f32 0.0, %v550
  %v552 = vpop.f32.mrf.mxu0
  %v553 = vpop.f32.mrf.mxu0
  %v554 = vadd.f32 0.0, %v553
  %v555 = vpop.f32.mrf.mxu0
  %556 = vmatprep.mubr.bf16.mxu0 0
  %557 = vmatmul.mubr.bf16.gmra.mxu0 %v399
  %v558 = vpop.f32.mrf.mxu0
  %v559 = vadd.f32 0.0, %v558
  %v560 = vpop.f32.mrf.mxu0
  %v561 = vpop.f32.mrf.mxu0
  %v562 = vadd.f32 0.0, %v561
  %v563 = vpop.f32.mrf.mxu0
  %564 = vmatprep.mubr.bf16.mxu0 0
  %565 = vmatmul.mubr.bf16.gmra.mxu0 %v402
  %v566 = vpop.f32.mrf.mxu0
  %v567 = vadd.f32 0.0, %v566
  %v568 = vpop.f32.mrf.mxu0
  %v569 = vpop.f32.mrf.mxu0
  %v570 = vadd.f32 0.0, %v569
  %v571 = vpop.f32.mrf.mxu0
  %572 = vmatprep.mubr.bf16.mxu0 0
  %573 = vmatmul.mubr.bf16.gmra.mxu0 %v405
  %v574 = vpop.f32.mrf.mxu0
  %v575 = vadd.f32 0.0, %v574
  %v576 = vpop.f32.mrf.mxu0
  %v577 = vpop.f32.mrf.mxu0
  %v578 = vadd.f32 0.0, %v577
  %v579 = vpop.f32.mrf.mxu0
  %580 = vmatprep.mubr.bf16.mxu0 0
  %581 = vmatmul.mubr.bf16.gmra.mxu0 %v408
  %v582 = vpop.f32.mrf.mxu0
  %v583 = vadd.f32 0.0, %v582
  %v584 = vpop.f32.mrf.mxu0
  %v585 = vpop.f32.mrf.mxu0
  %v586 = vadd.f32 0.0, %v585
  %v587 = vpop.f32.mrf.mxu0
  %588 = vmatprep.mubr.bf16.mxu0 0
  %589 = vmatmul.mubr.bf16.gmra.mxu0 %v411
  %v590 = vpop.f32.mrf.mxu0
  %v591 = vadd.f32 0.0, %v590
  %v592 = vpop.f32.mrf.mxu0
  %v593 = vpop.f32.mrf.mxu0
  %v594 = vadd.f32 0.0, %v593
  %v595 = vpop.f32.mrf.mxu0
  %596 = vmatprep.mubr.bf16.mxu0 0
  %597 = vmatmul.mubr.bf16.gmra.mxu0 %v414
  %v598 = vpop.f32.mrf.mxu0
  %v599 = vadd.f32 0.0, %v598
  %v600 = vpop.f32.mrf.mxu0
  %v601 = vpop.f32.mrf.mxu0
  %v602 = vadd.f32 0.0, %v601
  %v603 = vpop.f32.mrf.mxu0
  %604 = vmatprep.mubr.bf16.mxu0 0
  %605 = vmatmul.mubr.bf16.gmra.mxu0 %v417
  %v606 = vpop.f32.mrf.mxu0
  %v607 = vadd.f32 0.0, %v606
  %v608 = vpop.f32.mrf.mxu0
  %v609 = vpop.f32.mrf.mxu0
  %v610 = vadd.f32 0.0, %v609
  %v611 = vpop.f32.mrf.mxu0
  %612 = vmatprep.mubr.bf16.mxu0 0
  %613 = vmatmul.mubr.bf16.gmra.mxu0 %v420
  %v614 = vpop.f32.mrf.mxu0
  %v615 = vadd.f32 0.0, %v614
  %v616 = vpop.f32.mrf.mxu0
  %v617 = vpop.f32.mrf.mxu0
  %v618 = vadd.f32 0.0, %v617
  %v619 = vpop.f32.mrf.mxu0
  %620 = vmatprep.mubr.bf16.mxu0 0
  %621 = vmatmul.mubr.bf16.gmra.mxu0 %v423
  %v622 = vpop.f32.mrf.mxu0
  %v623 = vadd.f32 0.0, %v622
  %v624 = vpop.f32.mrf.mxu0
  %v625 = vpop.f32.mrf.mxu0
  %v626 = vadd.f32 0.0, %v625
  %v627 = vpop.f32.mrf.mxu0
  %628 = vmatprep.mubr.bf16.mxu0 0
  %629 = vmatmul.mubr.bf16.gmra.mxu0 %v426
  %v630 = vpop.f32.mrf.mxu0
  %v631 = vadd.f32 0.0, %v630
  %v632 = vpop.f32.mrf.mxu0
  %v633 = vpop.f32.mrf.mxu0
  %v634 = vadd.f32 0.0, %v633
  %v635 = vpop.f32.mrf.mxu0
  %636 = vmatprep.mubr.bf16.mxu0 0
  %637 = vmatmul.mubr.bf16.gmra.mxu0 %v429
  %v638 = vpop.f32.mrf.mxu0
  %v639 = vadd.f32 0.0, %v638
  %v640 = vpop.f32.mrf.mxu0
  %v641 = vpop.f32.mrf.mxu0
  %v642 = vadd.f32 0.0, %v641
  %v643 = vpop.f32.mrf.mxu0
  %644 = vmatprep.mubr.bf16.mxu0 0
  %645 = vmatmul.mubr.bf16.gmra.mxu0 %v432
  %v646 = vpop.f32.mrf.mxu0
  %v647 = vadd.f32 0.0, %v646
  %v648 = vpop.f32.mrf.mxu0
  %v649 = vpop.f32.mrf.mxu0
  %v650 = vadd.f32 0.0, %v649
  %v651 = vpop.f32.mrf.mxu0
  %652 = vmatprep.mubr.bf16.mxu0 0
  %653 = vmatmul.mubr.bf16.gmra.mxu0 %v435
  %v654 = vpop.f32.mrf.mxu0
  %v655 = vadd.f32 0.0, %v654
  %v656 = vpop.f32.mrf.mxu0
  %v657 = vpop.f32.mrf.mxu0
  %v658 = vadd.f32 0.0, %v657
  %v659 = vpop.f32.mrf.mxu0
  %660 = vmatprep.mubr.bf16.mxu0 0
  %661 = vmatmul.mubr.bf16.gmra.mxu0 %v438
  %v662 = vpop.f32.mrf.mxu0
  %v663 = vadd.f32 0.0, %v662
  %v664 = vpop.f32.mrf.mxu0
  %v665 = vpop.f32.mrf.mxu0
  %v666 = vadd.f32 0.0, %v665
  %v667 = vpop.f32.mrf.mxu0
  %668 = vmatprep.mubr.bf16.mxu0 0
  %669 = vmatmul.mubr.bf16.gmra.mxu0 %v441
  %v670 = vpop.f32.mrf.mxu0
  %v671 = vadd.f32 0.0, %v670
  %v672 = vpop.f32.mrf.mxu0
  %v673 = vpop.f32.mrf.mxu0
  %v674 = vadd.f32 0.0, %v673
  %v675 = vpop.f32.mrf.mxu0
  %676 = vmatprep.mubr.bf16.mxu0 0
  %677 = vmatmul.mubr.bf16.gmra.mxu0 %v444
  %v678 = vpop.f32.mrf.mxu0
  %v679 = vadd.f32 0.0, %v678
  %v680 = vpop.f32.mrf.mxu0
  %v681 = vpop.f32.mrf.mxu0
  %v682 = vadd.f32 0.0, %v681
  %v683 = vpop.f32.mrf.mxu0
  %684 = vmatprep.mubr.bf16.mxu0 0
  %685 = vmatmul.mubr.bf16.gmra.mxu0 %v447
  %v686 = vpop.f32.mrf.mxu0
  %v687 = vadd.f32 0.0, %v686
  %v688 = vpop.f32.mrf.mxu0
  %v689 = vpop.f32.mrf.mxu0
  %v690 = vadd.f32 0.0, %v689
  %v691 = vpop.f32.mrf.mxu0
  %692 = vmatprep.mubr.bf16.mxu0 0
  %693 = vmatmul.mubr.bf16.gmra.mxu0 %v450
  %v694 = vpop.f32.mrf.mxu0
  %v695 = vadd.f32 0.0, %v694
  %v696 = vpop.f32.mrf.mxu0
  %v697 = vpop.f32.mrf.mxu0
  %v698 = vadd.f32 0.0, %v697
  %v699 = vpop.f32.mrf.mxu0
  %700 = vmatprep.mubr.bf16.mxu0 0
  %701 = vmatmul.mubr.bf16.gmra.mxu0 %v453
  %v702 = vpop.f32.mrf.mxu0
  %v703 = vadd.f32 0.0, %v702
  %v704 = vpop.f32.mrf.mxu0
  %v705 = vpop.f32.mrf.mxu0
  %v706 = vadd.f32 0.0, %v705
  %v707 = vpop.f32.mrf.mxu0
  %708 = vmatprep.mubr.bf16.mxu0 0
  %709 = vmatmul.mubr.bf16.gmra.mxu0 %v456
  %v710 = vpop.f32.mrf.mxu0
  %v711 = vadd.f32 0.0, %v710
  %v712 = vpop.f32.mrf.mxu0
  %v713 = vpop.f32.mrf.mxu0
  %v714 = vadd.f32 0.0, %v713
  %v715 = vpop.f32.mrf.mxu0
  %716 = vmatprep.mubr.bf16.mxu0 0
  %717 = vmatmul.mubr.bf16.gmra.mxu0 %v459
  %v718 = vpop.f32.mrf.mxu0
  %v719 = vadd.f32 0.0, %v718
  %v720 = vpop.f32.mrf.mxu0
  %v721 = vpop.f32.mrf.mxu0
  %v722 = vadd.f32 0.0, %v721
  %v723 = vpop.f32.mrf.mxu0
  %724 = vmatprep.mubr.bf16.mxu0 0
  %725 = vmatmul.mubr.bf16.gmra.mxu0 %v462
  %v726 = vpop.f32.mrf.mxu0
  %v727 = vadd.f32 0.0, %v726
  %v728 = vpop.f32.mrf.mxu0
  %v729 = vpop.f32.mrf.mxu0
  %v730 = vadd.f32 0.0, %v729
  %v731 = vpop.f32.mrf.mxu0
  %732 = vmatprep.mubr.bf16.mxu0 0
  %733 = vmatmul.mubr.bf16.gmra.mxu0 %v465
  %v734 = vpop.f32.mrf.mxu0
  %v735 = vadd.f32 0.0, %v734
  %v736 = vpop.f32.mrf.mxu0
  %v737 = vpop.f32.mrf.mxu0
  %v738 = vadd.f32 0.0, %v737
  %v739 = vpop.f32.mrf.mxu0
  %740 = vmatprep.mubr.bf16.mxu0 0
  %741 = vmatmul.mubr.bf16.gmra.mxu0 %v468
  %v742 = vpop.f32.mrf.mxu0
  %v743 = vadd.f32 0.0, %v742
  %v744 = vpop.f32.mrf.mxu0
  %v745 = vpop.f32.mrf.mxu0
  %v746 = vadd.f32 0.0, %v745
  %v747 = vpop.f32.mrf.mxu0
  %748 = vmatprep.mubr.bf16.mxu0 0
  %749 = vmatmul.mubr.bf16.gmra.mxu0 %v471
  %v750 = vpop.f32.mrf.mxu0
  %v751 = vadd.f32 0.0, %v750
  %v752 = vpop.f32.mrf.mxu0
  %v753 = vpop.f32.mrf.mxu0
  %v754 = vadd.f32 0.0, %v753
  %v755 = vpop.f32.mrf.mxu0
  %756 = vmatprep.mubr.bf16.mxu0 0
  %757 = vmatmul.mubr.bf16.gmra.mxu0 %v474
  %v758 = vpop.f32.mrf.mxu0
  %v759 = vadd.f32 0.0, %v758
  %v760 = vpop.f32.mrf.mxu0
  %v761 = vpop.f32.mrf.mxu0
  %v762 = vadd.f32 0.0, %v761
  %v763 = vpop.f32.mrf.mxu0
  %764 = vdwg.mxu0
  %v765 = vadd.f32 %v83, %v511
  %v766 = vadd.f32 %v84, %v514
  %v767 = vadd.f32 %v85, %v519
  %v768 = vadd.f32 %v86, %v522
  %v769 = vadd.f32 %v87, %v527
  %v770 = vadd.f32 %v88, %v530
  %v771 = vadd.f32 %v89, %v535
  %v772 = vadd.f32 %v90, %v538
  %v773 = vadd.f32 %v91, %v543
  %v774 = vadd.f32 %v92, %v546
  %v775 = vadd.f32 %v93, %v551
  %v776 = vadd.f32 %v94, %v554
  %v777 = vadd.f32 %v95, %v559
  %v778 = vadd.f32 %v96, %v562
  %v779 = vadd.f32 %v97, %v567
  %v780 = vadd.f32 %v98, %v570
  %v781 = vadd.f32 %v99, %v575
  %v782 = vadd.f32 %v100, %v578
  %v783 = vadd.f32 %v101, %v583
  %v784 = vadd.f32 %v102, %v586
  %v785 = vadd.f32 %v103, %v591
  %v786 = vadd.f32 %v104, %v594
  %v787 = vadd.f32 %v105, %v599
  %v788 = vadd.f32 %v106, %v602
  %v789 = vadd.f32 %v107, %v607
  %v790 = vadd.f32 %v108, %v610
  %v791 = vadd.f32 %v109, %v615
  %v792 = vadd.f32 %v110, %v618
  %v793 = vadd.f32 %v111, %v623
  %v794 = vadd.f32 %v112, %v626
  %v795 = vadd.f32 %v113, %v631
  %v796 = vadd.f32 %v114, %v634
  %v797 = vadd.f32 %v115, %v639
  %v798 = vadd.f32 %v116, %v642
  %v799 = vadd.f32 %v117, %v647
  %v800 = vadd.f32 %v118, %v650
  %v801 = vadd.f32 %v119, %v655
  %v802 = vadd.f32 %v120, %v658
  %v803 = vadd.f32 %v121, %v663
  %v804 = vadd.f32 %v122, %v666
  %v805 = vadd.f32 %v123, %v671
  %v806 = vadd.f32 %v124, %v674
  %v807 = vadd.f32 %v125, %v679
  %v808 = vadd.f32 %v126, %v682
  %v809 = vadd.f32 %v127, %v687
  %v810 = vadd.f32 %v128, %v690
  %v811 = vadd.f32 %v129, %v695
  %v812 = vadd.f32 %v130, %v698
  %v813 = vadd.f32 %v131, %v703
  %v814 = vadd.f32 %v132, %v706
  %v815 = vadd.f32 %v133, %v711
  %v816 = vadd.f32 %v134, %v714
  %v817 = vadd.f32 %v135, %v719
  %v818 = vadd.f32 %v136, %v722
  %v819 = vadd.f32 %v137, %v727
  %v820 = vadd.f32 %v138, %v730
  %v821 = vadd.f32 %v139, %v735
  %v822 = vadd.f32 %v140, %v738
  %v823 = vadd.f32 %v141, %v743
  %v824 = vadd.f32 %v142, %v746
  %v825 = vadd.f32 %v143, %v751
  %v826 = vadd.f32 %v144, %v754
  %v827 = vadd.f32 %v145, %v759
  %v828 = vadd.f32 %v146, %v762
  %829 = vst [vmem:[#allocation2] sm:$0xff] %v765
  %830 = vst [vmem:[#allocation2 + $0x8] sm:$0xff] %v766
  %831 = vst [vmem:[#allocation2 + $0x10] sm:$0xff] %v767
  %832 = vst [vmem:[#allocation2 + $0x18] sm:$0xff] %v768
  %833 = vst [vmem:[#allocation2 + $0x20] sm:$0xff] %v769
  %834 = vst [vmem:[#allocation2 + $0x28] sm:$0xff] %v770
  %835 = vst [vmem:[#allocation2 + $0x30] sm:$0xff] %v771
  %836 = vst [vmem:[#allocation2 + $0x38] sm:$0xff] %v772
  %837 = vst [vmem:[#allocation2 + $0x40] sm:$0xff] %v773
  %838 = vst [vmem:[#allocation2 + $0x48] sm:$0xff] %v774
  %839 = vst [vmem:[#allocation2 + $0x50] sm:$0xff] %v775
  %840 = vst [vmem:[#allocation2 + $0x58] sm:$0xff] %v776
  %841 = vst [vmem:[#allocation2 + $0x60] sm:$0xff] %v777
  %842 = vst [vmem:[#allocation2 + $0x68] sm:$0xff] %v778
  %843 = vst [vmem:[#allocation2 + $0x70] sm:$0xff] %v779
  %844 = vst [vmem:[#allocation2 + $0x78] sm:$0xff] %v780
  %845 = vst [vmem:[#allocation2 + $0x80] sm:$0xff] %v781
  %846 = vst [vmem:[#allocation2 + $0x88] sm:$0xff] %v782
  %847 = vst [vmem:[#allocation2 + $0x90] sm:$0xff] %v783
  %848 = vst [vmem:[#allocation2 + $0x98] sm:$0xff] %v784
  %849 = vst [vmem:[#allocation2 + $0xa0] sm:$0xff] %v785
  %850 = vst [vmem:[#allocation2 + $0xa8] sm:$0xff] %v786
  %851 = vst [vmem:[#allocation2 + $0xb0] sm:$0xff] %v787
  %852 = vst [vmem:[#allocation2 + $0xb8] sm:$0xff] %v788
  %853 = vst [vmem:[#allocation2 + $0xc0] sm:$0xff] %v789
  %854 = vst [vmem:[#allocation2 + $0xc8] sm:$0xff] %v790
  %855 = vst [vmem:[#allocation2 + $0xd0] sm:$0xff] %v791
  %856 = vst [vmem:[#allocation2 + $0xd8] sm:$0xff] %v792
  %857 = vst [vmem:[#allocation2 + $0xe0] sm:$0xff] %v793
  %858 = vst [vmem:[#allocation2 + $0xe8] sm:$0xff] %v794
  %859 = vst [vmem:[#allocation2 + $0xf0] sm:$0xff] %v795
  %860 = vst [vmem:[#allocation2 + $0xf8] sm:$0xff] %v796
  %861 = vst [vmem:[#allocation2 + $0x100] sm:$0xff] %v797
  %862 = vst [vmem:[#allocation2 + $0x108] sm:$0xff] %v798
  %863 = vst [vmem:[#allocation2 + $0x110] sm:$0xff] %v799
  %864 = vst [vmem:[#allocation2 + $0x118] sm:$0xff] %v800
  %865 = vst [vmem:[#allocation2 + $0x120] sm:$0xff] %v801
  %866 = vst [vmem:[#allocation2 + $0x128] sm:$0xff] %v802
  %867 = vst [vmem:[#allocation2 + $0x130] sm:$0xff] %v803
  %868 = vst [vmem:[#allocation2 + $0x138] sm:$0xff] %v804
  %869 = vst [vmem:[#allocation2 + $0x140] sm:$0xff] %v805
  %870 = vst [vmem:[#allocation2 + $0x148] sm:$0xff] %v806
  %871 = vst [vmem:[#allocation2 + $0x150] sm:$0xff] %v807
  %872 = vst [vmem:[#allocation2 + $0x158] sm:$0xff] %v808
  %873 = vst [vmem:[#allocation2 + $0x160] sm:$0xff] %v809
  %874 = vst [vmem:[#allocation2 + $0x168] sm:$0xff] %v810
  %875 = vst [vmem:[#allocation2 + $0x170] sm:$0xff] %v811
  %876 = vst [vmem:[#allocation2 + $0x178] sm:$0xff] %v812
  %877 = vst [vmem:[#allocation2 + $0x180] sm:$0xff] %v813
  %878 = vst [vmem:[#allocation2 + $0x188] sm:$0xff] %v814
  %879 = vst [vmem:[#allocation2 + $0x190] sm:$0xff] %v815
  %880 = vst [vmem:[#allocation2 + $0x198] sm:$0xff] %v816
  %881 = vst [vmem:[#allocation2 + $0x1a0] sm:$0xff] %v817
  %882 = vst [vmem:[#allocation2 + $0x1a8] sm:$0xff] %v818
  %883 = vst [vmem:[#allocation2 + $0x1b0] sm:$0xff] %v819
  %884 = vst [vmem:[#allocation2 + $0x1b8] sm:$0xff] %v820
  %885 = vst [vmem:[#allocation2 + $0x1c0] sm:$0xff] %v821
  %886 = vst [vmem:[#allocation2 + $0x1c8] sm:$0xff] %v822
  %887 = vst [vmem:[#allocation2 + $0x1d0] sm:$0xff] %v823
  %888 = vst [vmem:[#allocation2 + $0x1d8] sm:$0xff] %v824
  %889 = vst [vmem:[#allocation2 + $0x1e0] sm:$0xff] %v825
  %890 = vst [vmem:[#allocation2 + $0x1e8] sm:$0xff] %v826
  %891 = vst [vmem:[#allocation2 + $0x1f0] sm:$0xff] %v827
  %892 = vst [vmem:[#allocation2 + $0x1f8] sm:$0xff] %v828
  // Predicated region
  $region18: #{unet_forward.25} parent=0 // pred_check
    %p893 = pneg %p15
  $region19: #{unet_forward.25} parent=0 // pred_check_branch
    %895 = sbr.rel (%p893) target = $region21
  $region20: #{unet_forward.25} parent=0 // pred_region
    %v896 = vld [vmem:[#allocation2] sm:$0xff]
    %v897 = vld [vmem:[#allocation2 + $0x8] sm:$0xff]
    %v898 = vld [vmem:[#allocation2 + $0x10] sm:$0xff]
    %v899 = vld [vmem:[#allocation2 + $0x18] sm:$0xff]
    %v900 = vld [vmem:[#allocation2 + $0x20] sm:$0xff]
    %v901 = vld [vmem:[#allocation2 + $0x28] sm:$0xff]
    %v902 = vld [vmem:[#allocation2 + $0x30] sm:$0xff]
    %v903 = vld [vmem:[#allocation2 + $0x38] sm:$0xff]
    %v904 = vld [vmem:[#allocation2 + $0x40] sm:$0xff]
    %v905 = vld [vmem:[#allocation2 + $0x48] sm:$0xff]
    %v906 = vld [vmem:[#allocation2 + $0x50] sm:$0xff]
    %v907 = vld [vmem:[#allocation2 + $0x58] sm:$0xff]
    %v908 = vld [vmem:[#allocation2 + $0x60] sm:$0xff]
    %v909 = vld [vmem:[#allocation2 + $0x68] sm:$0xff]
    %v910 = vld [vmem:[#allocation2 + $0x70] sm:$0xff]
    %v911 = vld [vmem:[#allocation2 + $0x78] sm:$0xff]
    %v912 = vld [vmem:[#allocation2 + $0x80] sm:$0xff]
    %v913 = vld [vmem:[#allocation2 + $0x88] sm:$0xff]
    %v914 = vld [vmem:[#allocation2 + $0x90] sm:$0xff]
    %v915 = vld [vmem:[#allocation2 + $0x98] sm:$0xff]
    %v916 = vld [vmem:[#allocation2 + $0xa0] sm:$0xff]
    %v917 = vld [vmem:[#allocation2 + $0xa8] sm:$0xff]
    %v918 = vld [vmem:[#allocation2 + $0xb0] sm:$0xff]
    %v919 = vld [vmem:[#allocation2 + $0xb8] sm:$0xff]
    %v920 = vld [vmem:[#allocation2 + $0xc0] sm:$0xff]
    %v921 = vld [vmem:[#allocation2 + $0xc8] sm:$0xff]
    %v922 = vld [vmem:[#allocation2 + $0xd0] sm:$0xff]
    %v923 = vld [vmem:[#allocation2 + $0xd8] sm:$0xff]
    %v924 = vld [vmem:[#allocation2 + $0xe0] sm:$0xff]
    %v925 = vld [vmem:[#allocation2 + $0xe8] sm:$0xff]
    %v926 = vld [vmem:[#allocation2 + $0xf0] sm:$0xff]
    %v927 = vld [vmem:[#allocation2 + $0xf8] sm:$0xff]
    %v928 = vld [vmem:[#allocation2 + $0x100] sm:$0xff]
    %v929 = vld [vmem:[#allocation2 + $0x108] sm:$0xff]
    %v930 = vld [vmem:[#allocation2 + $0x110] sm:$0xff]
    %v931 = vld [vmem:[#allocation2 + $0x118] sm:$0xff]
    %v932 = vld [vmem:[#allocation2 + $0x120] sm:$0xff]
    %v933 = vld [vmem:[#allocation2 + $0x128] sm:$0xff]
    %v934 = vld [vmem:[#allocation2 + $0x130] sm:$0xff]
    %v935 = vld [vmem:[#allocation2 + $0x138] sm:$0xff]
    %v936 = vld [vmem:[#allocation2 + $0x140] sm:$0xff]
    %v937 = vld [vmem:[#allocation2 + $0x148] sm:$0xff]
    %v938 = vld [vmem:[#allocation2 + $0x150] sm:$0xff]
    %v939 = vld [vmem:[#allocation2 + $0x158] sm:$0xff]
    %v940 = vld [vmem:[#allocation2 + $0x160] sm:$0xff]
    %v941 = vld [vmem:[#allocation2 + $0x168] sm:$0xff]
    %v942 = vld [vmem:[#allocation2 + $0x170] sm:$0xff]
    %v943 = vld [vmem:[#allocation2 + $0x178] sm:$0xff]
    %v944 = vld [vmem:[#allocation2 + $0x180] sm:$0xff]
    %v945 = vld [vmem:[#allocation2 + $0x188] sm:$0xff]
    %v946 = vld [vmem:[#allocation2 + $0x190] sm:$0xff]
    %v947 = vld [vmem:[#allocation2 + $0x198] sm:$0xff]
    %v948 = vld [vmem:[#allocation2 + $0x1a0] sm:$0xff]
    %v949 = vld [vmem:[#allocation2 + $0x1a8] sm:$0xff]
    %v950 = vld [vmem:[#allocation2 + $0x1b0] sm:$0xff]
    %v951 = vld [vmem:[#allocation2 + $0x1b8] sm:$0xff]
    %v952 = vld [vmem:[#allocation2 + $0x1c0] sm:$0xff]
    %v953 = vld [vmem:[#allocation2 + $0x1c8] sm:$0xff]
    %v954 = vld [vmem:[#allocation2 + $0x1d0] sm:$0xff]
    %v955 = vld [vmem:[#allocation2 + $0x1d8] sm:$0xff]
    %v956 = vld [vmem:[#allocation2 + $0x1e0] sm:$0xff]
    %v957 = vld [vmem:[#allocation2 + $0x1e8] sm:$0xff]
    %v958 = vld [vmem:[#allocation2 + $0x1f0] sm:$0xff]
    %v959 = vld [vmem:[#allocation2 + $0x1f8] sm:$0xff]
    %v960 = vld [vmem:[%s2] sm:$0x1]
    %v962 = vlaneseq
    %v963 = vshrl.u32 %v962, 7
    %v964 = vsub.s32 0, %v963
    %v965 = vrot.slane %v960, %v964
    %v967 = vadd.f32 %v896, %v965
    %v968 = vadd.f32 %v897, %v965
    %v969 = vadd.f32 %v898, %v965
    %v970 = vadd.f32 %v899, %v965
    %v971 = vadd.f32 %v900, %v965
    %v972 = vadd.f32 %v901, %v965
    %v973 = vadd.f32 %v902, %v965
    %v974 = vadd.f32 %v903, %v965
    %v975 = vadd.f32 %v904, %v965
    %v976 = vadd.f32 %v905, %v965
    %v977 = vadd.f32 %v906, %v965
    %v978 = vadd.f32 %v907, %v965
    %v979 = vadd.f32 %v908, %v965
    %v980 = vadd.f32 %v909, %v965
    %v981 = vadd.f32 %v910, %v965
    %v982 = vadd.f32 %v911, %v965
    %v983 = vadd.f32 %v912, %v965
    %v984 = vadd.f32 %v913, %v965
    %v985 = vadd.f32 %v914, %v965
    %v986 = vadd.f32 %v915, %v965
    %v987 = vadd.f32 %v916, %v965
    %v988 = vadd.f32 %v917, %v965
    %v989 = vadd.f32 %v918, %v965
    %v990 = vadd.f32 %v919, %v965
    %v991 = vadd.f32 %v920, %v965
    %v992 = vadd.f32 %v921, %v965
    %v993 = vadd.f32 %v922, %v965
    %v994 = vadd.f32 %v923, %v965
    %v995 = vadd.f32 %v924, %v965
    %v996 = vadd.f32 %v925, %v965
    %v997 = vadd.f32 %v926, %v965
    %v998 = vadd.f32 %v927, %v965
    %v999 = vadd.f32 %v928, %v965
    %v1000 = vadd.f32 %v929, %v965
    %v1001 = vadd.f32 %v930, %v965
    %v1002 = vadd.f32 %v931, %v965
    %v1003 = vadd.f32 %v932, %v965
    %v1004 = vadd.f32 %v933, %v965
    %v1005 = vadd.f32 %v934, %v965
    %v1006 = vadd.f32 %v935, %v965
    %v1007 = vadd.f32 %v936, %v965
    %v1008 = vadd.f32 %v937, %v965
    %v1009 = vadd.f32 %v938, %v965
    %v1010 = vadd.f32 %v939, %v965
    %v1011 = vadd.f32 %v940, %v965
    %v1012 = vadd.f32 %v941, %v965
    %v1013 = vadd.f32 %v942, %v965
    %v1014 = vadd.f32 %v943, %v965
    %v1015 = vadd.f32 %v944, %v965
    %v1016 = vadd.f32 %v945, %v965
    %v1017 = vadd.f32 %v946, %v965
    %v1018 = vadd.f32 %v947, %v965
    %v1019 = vadd.f32 %v948, %v965
    %v1020 = vadd.f32 %v949, %v965
    %v1021 = vadd.f32 %v950, %v965
    %v1022 = vadd.f32 %v951, %v965
    %v1023 = vadd.f32 %v952, %v965
    %v1024 = vadd.f32 %v953, %v965
    %v1025 = vadd.f32 %v954, %v965
    %v1026 = vadd.f32 %v955, %v965
    %v1027 = vadd.f32 %v956, %v965
    %v1028 = vadd.f32 %v957, %v965
    %v1029 = vadd.f32 %v958, %v965
    %v1030 = vadd.f32 %v959, %v965
    %1031 = vst [vmem:[%s3] sm:$0xff] %v967
    %1032 = vst [vmem:[%s3 + $0x8] sm:$0xff] %v968
    %1033 = vst [vmem:[%s3 + $0x10] sm:$0xff] %v969
    %1034 = vst [vmem:[%s3 + $0x18] sm:$0xff] %v970
    %1035 = vst [vmem:[%s3 + $0x20] sm:$0xff] %v971
    %1036 = vst [vmem:[%s3 + $0x28] sm:$0xff] %v972
    %1037 = vst [vmem:[%s3 + $0x30] sm:$0xff] %v973
    %1038 = vst [vmem:[%s3 + $0x38] sm:$0xff] %v974
    %1039 = vst [vmem:[%s3 + $0x40] sm:$0xff] %v975
    %1040 = vst [vmem:[%s3 + $0x48] sm:$0xff] %v976
    %1041 = vst [vmem:[%s3 + $0x50] sm:$0xff] %v977
    %1042 = vst [vmem:[%s3 + $0x58] sm:$0xff] %v978
    %1043 = vst [vmem:[%s3 + $0x60] sm:$0xff] %v979
    %1044 = vst [vmem:[%s3 + $0x68] sm:$0xff] %v980
    %1045 = vst [vmem:[%s3 + $0x70] sm:$0xff] %v981
    %1046 = vst [vmem:[%s3 + $0x78] sm:$0xff] %v982
    %1047 = vst [vmem:[%s3 + $0x80] sm:$0xff] %v983
    %1048 = vst [vmem:[%s3 + $0x88] sm:$0xff] %v984
    %1049 = vst [vmem:[%s3 + $0x90] sm:$0xff] %v985
    %1050 = vst [vmem:[%s3 + $0x98] sm:$0xff] %v986
    %1051 = vst [vmem:[%s3 + $0xa0] sm:$0xff] %v987
    %1052 = vst [vmem:[%s3 + $0xa8] sm:$0xff] %v988
    %1053 = vst [vmem:[%s3 + $0xb0] sm:$0xff] %v989
    %1054 = vst [vmem:[%s3 + $0xb8] sm:$0xff] %v990
    %1055 = vst [vmem:[%s3 + $0xc0] sm:$0xff] %v991
    %1056 = vst [vmem:[%s3 + $0xc8] sm:$0xff] %v992
    %1057 = vst [vmem:[%s3 + $0xd0] sm:$0xff] %v993
    %1058 = vst [vmem:[%s3 + $0xd8] sm:$0xff] %v994
    %1059 = vst [vmem:[%s3 + $0xe0] sm:$0xff] %v995
    %1060 = vst [vmem:[%s3 + $0xe8] sm:$0xff] %v996
    %1061 = vst [vmem:[%s3 + $0xf0] sm:$0xff] %v997
    %1062 = vst [vmem:[%s3 + $0xf8] sm:$0xff] %v998
    %1063 = vst [vmem:[%s3 + $0x100] sm:$0xff] %v999
    %1064 = vst [vmem:[%s3 + $0x108] sm:$0xff] %v1000
    %1065 = vst [vmem:[%s3 + $0x110] sm:$0xff] %v1001
    %1066 = vst [vmem:[%s3 + $0x118] sm:$0xff] %v1002
    %1067 = vst [vmem:[%s3 + $0x120] sm:$0xff] %v1003
    %1068 = vst [vmem:[%s3 + $0x128] sm:$0xff] %v1004
    %1069 = vst [vmem:[%s3 + $0x130] sm:$0xff] %v1005
    %1070 = vst [vmem:[%s3 + $0x138] sm:$0xff] %v1006
    %1071 = vst [vmem:[%s3 + $0x140] sm:$0xff] %v1007
    %1072 = vst [vmem:[%s3 + $0x148] sm:$0xff] %v1008
    %1073 = vst [vmem:[%s3 + $0x150] sm:$0xff] %v1009
    %1074 = vst [vmem:[%s3 + $0x158] sm:$0xff] %v1010
    %1075 = vst [vmem:[%s3 + $0x160] sm:$0xff] %v1011
    %1076 = vst [vmem:[%s3 + $0x168] sm:$0xff] %v1012
    %1077 = vst [vmem:[%s3 + $0x170] sm:$0xff] %v1013
    %1078 = vst [vmem:[%s3 + $0x178] sm:$0xff] %v1014
    %1079 = vst [vmem:[%s3 + $0x180] sm:$0xff] %v1015
    %1080 = vst [vmem:[%s3 + $0x188] sm:$0xff] %v1016
    %1081 = vst [vmem:[%s3 + $0x190] sm:$0xff] %v1017
    %1082 = vst [vmem:[%s3 + $0x198] sm:$0xff] %v1018
    %1083 = vst [vmem:[%s3 + $0x1a0] sm:$0xff] %v1019
    %1084 = vst [vmem:[%s3 + $0x1a8] sm:$0xff] %v1020
    %1085 = vst [vmem:[%s3 + $0x1b0] sm:$0xff] %v1021
    %1086 = vst [vmem:[%s3 + $0x1b8] sm:$0xff] %v1022
    %1087 = vst [vmem:[%s3 + $0x1c0] sm:$0xff] %v1023
    %1088 = vst [vmem:[%s3 + $0x1c8] sm:$0xff] %v1024
    %1089 = vst [vmem:[%s3 + $0x1d0] sm:$0xff] %v1025
    %1090 = vst [vmem:[%s3 + $0x1d8] sm:$0xff] %v1026
    %1091 = vst [vmem:[%s3 + $0x1e0] sm:$0xff] %v1027
    %1092 = vst [vmem:[%s3 + $0x1e8] sm:$0xff] %v1028
    %1093 = vst [vmem:[%s3 + $0x1f0] sm:$0xff] %v1029
    %1094 = vst [vmem:[%s3 + $0x1f8] sm:$0xff] %v1030
  $region21: #{unet_forward.25} parent=0 // pred_fallthru
    _
  // Predicated region
  $region22: #{unet_forward.25} parent=0 // pred_check
    _
  $region23: #{unet_forward.25} parent=0 // pred_check_branch
    %1096 = sbr.rel (0) target = $region25
  $region24: #{unet_forward.25} parent=0 // pred_region
    _
  $region25: #{unet_forward.25} parent=0 // pred_fallthru
    _
  // Predicated region
  $region26: #{unet_forward.25} parent=0 // pred_check
    _
  $region27: #{unet_forward.25} parent=0 // pred_check_branch
    %1098 = sbr.rel (0) target = $region29
  $region28: #{unet_forward.25} parent=0 // pred_region
    _
  $region29: #{unet_forward.25} parent=0 // pred_fallthru
    _

// kernel: unet_forward.23
$region0: #{unet_forward.23}
  #allocation0 [shape = 'u32[]', space=smem, size = 0x4, offset = 0x4, fixed_abs, tag = 'smem constant byte address 0x4 - core index']
  #allocation1 [shape = 'u32[144,128]{1,0:T(1,128)}', space=vmem, size = 0x12000, scoped, tag = 'internal scratch']
  #allocation2 [shape = 'f32[512,128]{1,0:T(8,128)}', space=vmem, size = 0x40000, scoped, tag = 'scratch operand']
  %s0 = inlined_call_operand.vmem [shape: bf16[512,144], index: 0, kind: input, shape index: {}]
  %s1 = inlined_call_operand.vmem [shape: bf16[144,128], index: 1, kind: input, shape index: {}]
  %s2 = inlined_call_operand.vmem [shape: bf16[512,144], index: 2, kind: input, shape index: {}]
  %s3 = inlined_call_operand.vmem [shape: bf16[144,128], index: 3, kind: input, shape index: {}]
  %s4 = inlined_call_operand.vmem [shape: f32[1,128], index: 4, kind: input, shape index: {}]
  %s5 = inlined_call_operand.vmem [shape: bf16[512,128], index: 5, kind: output, shape index: {}]
  %s6 = sld [smem:[#allocation0]]
  $region38: #{unet_forward.23} parent=0
    _
  %s8 = ssub.s32 1, %s6
  %s9 = scalar_select 0, %s8, %s6
  // Predicated region
  $region2: #{unet_forward.23} parent=0 // pred_check
    _
  $region3: #{unet_forward.23} parent=0 // pred_check_branch
    %11 = sbr.rel (0) target = $region5
  $region4: #{unet_forward.23} parent=0 // pred_region
    _
  $region5: #{unet_forward.23} parent=0 // pred_fallthru
    _
  // Predicated region
  $region6: #{unet_forward.23} parent=0 // pred_check
    _
  $region7: #{unet_forward.23} parent=0 // pred_check_branch
    %13 = sbr.rel (0) target = $region9
  $region8: #{unet_forward.23} parent=0 // pred_region
    _
  $region9: #{unet_forward.23} parent=0 // pred_fallthru
    _
  // Predicated region
  $region10: #{unet_forward.23} parent=0 // pred_check
    _
  $region11: #{unet_forward.23} parent=0 // pred_check_branch
    %15 = sbr.rel (0) target = $region13
  $region12: #{unet_forward.23} parent=0 // pred_region
    _
  $region13: #{unet_forward.23} parent=0 // pred_fallthru
    _
  // Predicated region
  $region14: #{unet_forward.23} parent=0 // pred_check
    _
  $region15: #{unet_forward.23} parent=0 // pred_check_branch
    %17 = sbr.rel (0) target = $region17
  $region16: #{unet_forward.23} parent=0 // pred_region
    _
  $region17: #{unet_forward.23} parent=0 // pred_fallthru
    _
  // Predicated region
  $region18: #{unet_forward.23} parent=0 // pred_check
    _
  $region19: #{unet_forward.23} parent=0 // pred_check_branch
    %19 = sbr.rel (0) target = $region21
  $region20: #{unet_forward.23} parent=0 // pred_region
    _
  $region21: #{unet_forward.23} parent=0 // pred_fallthru
    _
  %p21 = scmp.eq.s32.totalorder 0, 0
  // Predicated region
  $region22: #{unet_forward.23} parent=0 // pred_check
    %p22 = pneg %p21
  $region23: #{unet_forward.23} parent=0 // pred_check_branch
    %24 = sbr.rel (%p22) target = $region25
  $region24: #{unet_forward.23} parent=0 // pred_region
    %25 = vst [vmem:[#allocation2] sm:$0xff] 0.0
    %26 = vst [vmem:[#allocation2 + $0x8] sm:$0xff] 0.0
    %27 = vst [vmem:[#allocation2 + $0x10] sm:$0xff] 0.0
    %28 = vst [vmem:[#allocation2 + $0x18] sm:$0xff] 0.0
    %29 = vst [vmem:[#allocation2 + $0x20] sm:$0xff] 0.0
    %30 = vst [vmem:[#allocation2 + $0x28] sm:$0xff] 0.0
    %31 = vst [vmem:[#allocation2 + $0x30] sm:$0xff] 0.0
    %32 = vst [vmem:[#allocation2 + $0x38] sm:$0xff] 0.0
    %33 = vst [vmem:[#allocation2 + $0x40] sm:$0xff] 0.0
    %34 = vst [vmem:[#allocation2 + $0x48] sm:$0xff] 0.0
    %35 = vst [vmem:[#allocation2 + $0x50] sm:$0xff] 0.0
    %36 = vst [vmem:[#allocation2 + $0x58] sm:$0xff] 0.0
    %37 = vst [vmem:[#allocation2 + $0x60] sm:$0xff] 0.0
    %38 = vst [vmem:[#allocation2 + $0x68] sm:$0xff] 0.0
    %39 = vst [vmem:[#allocation2 + $0x70] sm:$0xff] 0.0
    %40 = vst [vmem:[#allocation2 + $0x78] sm:$0xff] 0.0
    %41 = vst [vmem:[#allocation2 + $0x80] sm:$0xff] 0.0
    %42 = vst [vmem:[#allocation2 + $0x88] sm:$0xff] 0.0
    %43 = vst [vmem:[#allocation2 + $0x90] sm:$0xff] 0.0
    %44 = vst [vmem:[#allocation2 + $0x98] sm:$0xff] 0.0
    %45 = vst [vmem:[#allocation2 + $0xa0] sm:$0xff] 0.0
    %46 = vst [vmem:[#allocation2 + $0xa8] sm:$0xff] 0.0
    %47 = vst [vmem:[#allocation2 + $0xb0] sm:$0xff] 0.0
    %48 = vst [vmem:[#allocation2 + $0xb8] sm:$0xff] 0.0
    %49 = vst [vmem:[#allocation2 + $0xc0] sm:$0xff] 0.0
    %50 = vst [vmem:[#allocation2 + $0xc8] sm:$0xff] 0.0
    %51 = vst [vmem:[#allocation2 + $0xd0] sm:$0xff] 0.0
    %52 = vst [vmem:[#allocation2 + $0xd8] sm:$0xff] 0.0
    %53 = vst [vmem:[#allocation2 + $0xe0] sm:$0xff] 0.0
    %54 = vst [vmem:[#allocation2 + $0xe8] sm:$0xff] 0.0
    %55 = vst [vmem:[#allocation2 + $0xf0] sm:$0xff] 0.0
    %56 = vst [vmem:[#allocation2 + $0xf8] sm:$0xff] 0.0
    %57 = vst [vmem:[#allocation2 + $0x100] sm:$0xff] 0.0
    %58 = vst [vmem:[#allocation2 + $0x108] sm:$0xff] 0.0
    %59 = vst [vmem:[#allocation2 + $0x110] sm:$0xff] 0.0
    %60 = vst [vmem:[#allocation2 + $0x118] sm:$0xff] 0.0
    %61 = vst [vmem:[#allocation2 + $0x120] sm:$0xff] 0.0
    %62 = vst [vmem:[#allocation2 + $0x128] sm:$0xff] 0.0
    %63 = vst [vmem:[#allocation2 + $0x130] sm:$0xff] 0.0
    %64 = vst [vmem:[#allocation2 + $0x138] sm:$0xff] 0.0
    %65 = vst [vmem:[#allocation2 + $0x140] sm:$0xff] 0.0
    %66 = vst [vmem:[#allocation2 + $0x148] sm:$0xff] 0.0
    %67 = vst [vmem:[#allocation2 + $0x150] sm:$0xff] 0.0
    %68 = vst [vmem:[#allocation2 + $0x158] sm:$0xff] 0.0
    %69 = vst [vmem:[#allocation2 + $0x160] sm:$0xff] 0.0
    %70 = vst [vmem:[#allocation2 + $0x168] sm:$0xff] 0.0
    %71 = vst [vmem:[#allocation2 + $0x170] sm:$0xff] 0.0
    %72 = vst [vmem:[#allocation2 + $0x178] sm:$0xff] 0.0
    %73 = vst [vmem:[#allocation2 + $0x180] sm:$0xff] 0.0
    %74 = vst [vmem:[#allocation2 + $0x188] sm:$0xff] 0.0
    %75 = vst [vmem:[#allocation2 + $0x190] sm:$0xff] 0.0
    %76 = vst [vmem:[#allocation2 + $0x198] sm:$0xff] 0.0
    %77 = vst [vmem:[#allocation2 + $0x1a0] sm:$0xff] 0.0
    %78 = vst [vmem:[#allocation2 + $0x1a8] sm:$0xff] 0.0
    %79 = vst [vmem:[#allocation2 + $0x1b0] sm:$0xff] 0.0
    %80 = vst [vmem:[#allocation2 + $0x1b8] sm:$0xff] 0.0
    %81 = vst [vmem:[#allocation2 + $0x1c0] sm:$0xff] 0.0
    %82 = vst [vmem:[#allocation2 + $0x1c8] sm:$0xff] 0.0
    %83 = vst [vmem:[#allocation2 + $0x1d0] sm:$0xff] 0.0
    %84 = vst [vmem:[#allocation2 + $0x1d8] sm:$0xff] 0.0
    %85 = vst [vmem:[#allocation2 + $0x1e0] sm:$0xff] 0.0
    %86 = vst [vmem:[#allocation2 + $0x1e8] sm:$0xff] 0.0
    %87 = vst [vmem:[#allocation2 + $0x1f0] sm:$0xff] 0.0
    %88 = vst [vmem:[#allocation2 + $0x1f8] sm:$0xff] 0.0
  $region25: #{unet_forward.23} parent=0 // pred_fallthru
    _
  %v89 = vld [vmem:[#allocation2] sm:$0xff]
  %v90 = vld [vmem:[#allocation2 + $0x8] sm:$0xff]
  %v91 = vld [vmem:[#allocation2 + $0x10] sm:$0xff]
  %v92 = vld [vmem:[#allocation2 + $0x18] sm:$0xff]
  %v93 = vld [vmem:[#allocation2 + $0x20] sm:$0xff]
  %v94 = vld [vmem:[#allocation2 + $0x28] sm:$0xff]
  %v95 = vld [vmem:[#allocation2 + $0x30] sm:$0xff]
  %v96 = vld [vmem:[#allocation2 + $0x38] sm:$0xff]
  %v97 = vld [vmem:[#allocation2 + $0x40] sm:$0xff]
  %v98 = vld [vmem:[#allocation2 + $0x48] sm:$0xff]
  %v99 = vld [vmem:[#allocation2 + $0x50] sm:$0xff]
  %v100 = vld [vmem:[#allocation2 + $0x58] sm:$0xff]
  %v101 = vld [vmem:[#allocation2 + $0x60] sm:$0xff]
  %v102 = vld [vmem:[#allocation2 + $0x68] sm:$0xff]
  %v103 = vld [vmem:[#allocation2 + $0x70] sm:$0xff]
  %v104 = vld [vmem:[#allocation2 + $0x78] sm:$0xff]
  %v105 = vld [vmem:[#allocation2 + $0x80] sm:$0xff]
  %v106 = vld [vmem:[#allocation2 + $0x88] sm:$0xff]
  %v107 = vld [vmem:[#allocation2 + $0x90] sm:$0xff]
  %v108 = vld [vmem:[#allocation2 + $0x98] sm:$0xff]
  %v109 = vld [vmem:[#allocation2 + $0xa0] sm:$0xff]
  %v110 = vld [vmem:[#allocation2 + $0xa8] sm:$0xff]
  %v111 = vld [vmem:[#allocation2 + $0xb0] sm:$0xff]
  %v112 = vld [vmem:[#allocation2 + $0xb8] sm:$0xff]
  %v113 = vld [vmem:[#allocation2 + $0xc0] sm:$0xff]
  %v114 = vld [vmem:[#allocation2 + $0xc8] sm:$0xff]
  %v115 = vld [vmem:[#allocation2 + $0xd0] sm:$0xff]
  %v116 = vld [vmem:[#allocation2 + $0xd8] sm:$0xff]
  %v117 = vld [vmem:[#allocation2 + $0xe0] sm:$0xff]
  %v118 = vld [vmem:[#allocation2 + $0xe8] sm:$0xff]
  %v119 = vld [vmem:[#allocation2 + $0xf0] sm:$0xff]
  %v120 = vld [vmem:[#allocation2 + $0xf8] sm:$0xff]
  %v121 = vld [vmem:[#allocation2 + $0x100] sm:$0xff]
  %v122 = vld [vmem:[#allocation2 + $0x108] sm:$0xff]
  %v123 = vld [vmem:[#allocation2 + $0x110] sm:$0xff]
  %v124 = vld [vmem:[#allocation2 + $0x118] sm:$0xff]
  %v125 = vld [vmem:[#allocation2 + $0x120] sm:$0xff]
  %v126 = vld [vmem:[#allocation2 + $0x128] sm:$0xff]
  %v127 = vld [vmem:[#allocation2 + $0x130] sm:$0xff]
  %v128 = vld [vmem:[#allocation2 + $0x138] sm:$0xff]
  %v129 = vld [vmem:[#allocation2 + $0x140] sm:$0xff]
  %v130 = vld [vmem:[#allocation2 + $0x148] sm:$0xff]
  %v131 = vld [vmem:[#allocation2 + $0x150] sm:$0xff]
  %v132 = vld [vmem:[#allocation2 + $0x158] sm:$0xff]
  %v133 = vld [vmem:[#allocation2 + $0x160] sm:$0xff]
  %v134 = vld [vmem:[#allocation2 + $0x168] sm:$0xff]
  %v135 = vld [vmem:[#allocation2 + $0x170] sm:$0xff]
  %v136 = vld [vmem:[#allocation2 + $0x178] sm:$0xff]
  %v137 = vld [vmem:[#allocation2 + $0x180] sm:$0xff]
  %v138 = vld [vmem:[#allocation2 + $0x188] sm:$0xff]
  %v139 = vld [vmem:[#allocation2 + $0x190] sm:$0xff]
  %v140 = vld [vmem:[#allocation2 + $0x198] sm:$0xff]
  %v141 = vld [vmem:[#allocation2 + $0x1a0] sm:$0xff]
  %v142 = vld [vmem:[#allocation2 + $0x1a8] sm:$0xff]
  %v143 = vld [vmem:[#allocation2 + $0x1b0] sm:$0xff]
  %v144 = vld [vmem:[#allocation2 + $0x1b8] sm:$0xff]
  %v145 = vld [vmem:[#allocation2 + $0x1c0] sm:$0xff]
  %v146 = vld [vmem:[#allocation2 + $0x1c8] sm:$0xff]
  %v147 = vld [vmem:[#allocation2 + $0x1d0] sm:$0xff]
  %v148 = vld [vmem:[#allocation2 + $0x1d8] sm:$0xff]
  %v149 = vld [vmem:[#allocation2 + $0x1e0] sm:$0xff]
  %v150 = vld [vmem:[#allocation2 + $0x1e8] sm:$0xff]
  %v151 = vld [vmem:[#allocation2 + $0x1f0] sm:$0xff]
  %v152 = vld [vmem:[#allocation2 + $0x1f8] sm:$0xff]
  %v153 = vld [vmem:[%s0] sm:$0xff]
  %v154 = vld [vmem:[%s0 + $0x8] sm:$0xff]
  %v155 = vld [vmem:[%s0 + $0x10] sm:$0xff]
  %v156 = vld [vmem:[%s0 + $0x18] sm:$0xff]
  %v157 = vld [vmem:[%s0 + $0x20] sm:$0xff]
  %v158 = vld [vmem:[%s0 + $0x28] sm:$0xff]
  %v159 = vld [vmem:[%s0 + $0x30] sm:$0xff]
  %v160 = vld [vmem:[%s0 + $0x38] sm:$0xff]
  %v161 = vld [vmem:[%s0 + $0x40] sm:$0xff]
  %v162 = vld [vmem:[%s0 + $0x48] sm:$0xff]
  %v163 = vld [vmem:[%s0 + $0x50] sm:$0xff]
  %v164 = vld [vmem:[%s0 + $0x58] sm:$0xff]
  %v165 = vld [vmem:[%s0 + $0x60] sm:$0xff]
  %v166 = vld [vmem:[%s0 + $0x68] sm:$0xff]
  %v167 = vld [vmem:[%s0 + $0x70] sm:$0xff]
  %v168 = vld [vmem:[%s0 + $0x78] sm:$0xff]
  %v169 = vld [vmem:[%s0 + $0x80] sm:$0xff]
  %v170 = vld [vmem:[%s0 + $0x88] sm:$0xff]
  %v171 = vld [vmem:[%s0 + $0x90] sm:$0xff]
  %v172 = vld [vmem:[%s0 + $0x98] sm:$0xff]
  %v173 = vld [vmem:[%s0 + $0xa0] sm:$0xff]
  %v174 = vld [vmem:[%s0 + $0xa8] sm:$0xff]
  %v175 = vld [vmem:[%s0 + $0xb0] sm:$0xff]
  %v176 = vld [vmem:[%s0 + $0xb8] sm:$0xff]
  %v177 = vld [vmem:[%s0 + $0xc0] sm:$0xff]
  %v178 = vld [vmem:[%s0 + $0xc8] sm:$0xff]
  %v179 = vld [vmem:[%s0 + $0xd0] sm:$0xff]
  %v180 = vld [vmem:[%s0 + $0xd8] sm:$0xff]
  %v181 = vld [vmem:[%s0 + $0xe0] sm:$0xff]
  %v182 = vld [vmem:[%s0 + $0xe8] sm:$0xff]
  %v183 = vld [vmem:[%s0 + $0xf0] sm:$0xff]
  %v184 = vld [vmem:[%s0 + $0xf8] sm:$0xff]
  %v185 = vld [vmem:[%s0 + $0x100] sm:$0xff]
  %v186 = vld [vmem:[%s0 + $0x108] sm:$0xff]
  %v187 = vld [vmem:[%s0 + $0x110] sm:$0xff]
  %v188 = vld [vmem:[%s0 + $0x118] sm:$0xff]
  %v189 = vld [vmem:[%s0 + $0x120] sm:$0xff]
  %v190 = vld [vmem:[%s0 + $0x128] sm:$0xff]
  %v191 = vld [vmem:[%s0 + $0x130] sm:$0xff]
  %v192 = vld [vmem:[%s0 + $0x138] sm:$0xff]
  %v193 = vld [vmem:[%s0 + $0x140] sm:$0xff]
  %v194 = vld [vmem:[%s0 + $0x148] sm:$0xff]
  %v195 = vld [vmem:[%s0 + $0x150] sm:$0xff]
  %v196 = vld [vmem:[%s0 + $0x158] sm:$0xff]
  %v197 = vld [vmem:[%s0 + $0x160] sm:$0xff]
  %v198 = vld [vmem:[%s0 + $0x168] sm:$0xff]
  %v199 = vld [vmem:[%s0 + $0x170] sm:$0xff]
  %v200 = vld [vmem:[%s0 + $0x178] sm:$0xff]
  %v201 = vld [vmem:[%s0 + $0x180] sm:$0xff]
  %v202 = vld [vmem:[%s0 + $0x188] sm:$0xff]
  %v203 = vld [vmem:[%s0 + $0x190] sm:$0xff]
  %v204 = vld [vmem:[%s0 + $0x198] sm:$0xff]
  %v205 = vld [vmem:[%s0 + $0x1a0] sm:$0xff]
  %v206 = vld [vmem:[%s0 + $0x1a8] sm:$0xff]
  %v207 = vld [vmem:[%s0 + $0x1b0] sm:$0xff]
  %v208 = vld [vmem:[%s0 + $0x1b8] sm:$0xff]
  %v209 = vld [vmem:[%s0 + $0x1c0] sm:$0xff]
  %v210 = vld [vmem:[%s0 + $0x1c8] sm:$0xff]
  %v211 = vld [vmem:[%s0 + $0x1d0] sm:$0xff]
  %v212 = vld [vmem:[%s0 + $0x1d8] sm:$0xff]
  %v213 = vld [vmem:[%s0 + $0x1e0] sm:$0xff]
  %v214 = vld [vmem:[%s0 + $0x1e8] sm:$0xff]
  %v215 = vld [vmem:[%s0 + $0x1f0] sm:$0xff]
  %v216 = vld [vmem:[%s0 + $0x1f8] sm:$0xff]
  %v217 = vld [vmem:[%s1] sm:$0xf]
  %v218 = vld [vmem:[%s1 + $0x4] sm:$0xf]
  %v219 = vld [vmem:[%s1 + $0x8] sm:$0xf]
  %v220 = vld [vmem:[%s1 + $0xc] sm:$0xf]
  %v221 = vld [vmem:[%s1 + $0x10] sm:$0xf]
  %v222 = vld [vmem:[%s1 + $0x14] sm:$0xf]
  %v223 = vld [vmem:[%s1 + $0x18] sm:$0xf]
  %v224 = vld [vmem:[%s1 + $0x1c] sm:$0xf]
  %v225 = vld [vmem:[%s1 + $0x20] sm:$0xf]
  %v226 = vld [vmem:[%s1 + $0x24] sm:$0xf]
  %v227 = vld [vmem:[%s1 + $0x28] sm:$0xf]
  %v228 = vld [vmem:[%s1 + $0x2c] sm:$0xf]
  %v229 = vld [vmem:[%s1 + $0x30] sm:$0xf]
  %v230 = vld [vmem:[%s1 + $0x34] sm:$0xf]
  %v231 = vld [vmem:[%s1 + $0x38] sm:$0xf]
  %v232 = vld [vmem:[%s1 + $0x3c] sm:$0xf]
  %v233 = vld [vmem:[%s1 + $0x40] sm:$0xf]
  %v234 = vld [vmem:[%s1 + $0x44] sm:$0xf]
  %v299 = vunpack.c.l.b16 %v153
  %v300 = vunpack.c.h.b16 %v153
  %v301 = vunpack.c.l.b16 %v154
  %v302 = vunpack.c.h.b16 %v154
  %v303 = vunpack.c.l.b16 %v155
  %v304 = vunpack.c.h.b16 %v155
  %v305 = vunpack.c.l.b16 %v156
  %v306 = vunpack.c.h.b16 %v156
  %v307 = vunpack.c.l.b16 %v157
  %v308 = vunpack.c.h.b16 %v157
  %v309 = vunpack.c.l.b16 %v158
  %v310 = vunpack.c.h.b16 %v158
  %v311 = vunpack.c.l.b16 %v159
  %v312 = vunpack.c.h.b16 %v159
  %v313 = vunpack.c.l.b16 %v160
  %v314 = vunpack.c.h.b16 %v160
  %v315 = vunpack.c.l.b16 %v161
  %v316 = vunpack.c.h.b16 %v161
  %v317 = vunpack.c.l.b16 %v162
  %v318 = vunpack.c.h.b16 %v162
  %v319 = vunpack.c.l.b16 %v163
  %v320 = vunpack.c.h.b16 %v163
  %v321 = vunpack.c.l.b16 %v164
  %v322 = vunpack.c.h.b16 %v164
  %v323 = vunpack.c.l.b16 %v165
  %v324 = vunpack.c.h.b16 %v165
  %v325 = vunpack.c.l.b16 %v166
  %v326 = vunpack.c.h.b16 %v166
  %v327 = vunpack.c.l.b16 %v167
  %v328 = vunpack.c.h.b16 %v167
  %v329 = vunpack.c.l.b16 %v168
  %v330 = vunpack.c.h.b16 %v168
  %v331 = vunpack.c.l.b16 %v169
  %v332 = vunpack.c.h.b16 %v169
  %v333 = vunpack.c.l.b16 %v170
  %v334 = vunpack.c.h.b16 %v170
  %v335 = vunpack.c.l.b16 %v171
  %v336 = vunpack.c.h.b16 %v171
  %v337 = vunpack.c.l.b16 %v172
  %v338 = vunpack.c.h.b16 %v172
  %v339 = vunpack.c.l.b16 %v173
  %v340 = vunpack.c.h.b16 %v173
  %v341 = vunpack.c.l.b16 %v174
  %v342 = vunpack.c.h.b16 %v174
  %v343 = vunpack.c.l.b16 %v175
  %v344 = vunpack.c.h.b16 %v175
  %v345 = vunpack.c.l.b16 %v176
  %v346 = vunpack.c.h.b16 %v176
  %v347 = vunpack.c.l.b16 %v177
  %v348 = vunpack.c.h.b16 %v177
  %v349 = vunpack.c.l.b16 %v178
  %v350 = vunpack.c.h.b16 %v178
  %v351 = vunpack.c.l.b16 %v179
  %v352 = vunpack.c.h.b16 %v179
  %v353 = vunpack.c.l.b16 %v180
  %v354 = vunpack.c.h.b16 %v180
  %v355 = vunpack.c.l.b16 %v181
  %v356 = vunpack.c.h.b16 %v181
  %v357 = vunpack.c.l.b16 %v182
  %v358 = vunpack.c.h.b16 %v182
  %v359 = vunpack.c.l.b16 %v183
  %v360 = vunpack.c.h.b16 %v183
  %v361 = vunpack.c.l.b16 %v184
  %v362 = vunpack.c.h.b16 %v184
  %v363 = vunpack.c.l.b16 %v185
  %v364 = vunpack.c.h.b16 %v185
  %v365 = vunpack.c.l.b16 %v186
  %v366 = vunpack.c.h.b16 %v186
  %v367 = vunpack.c.l.b16 %v187
  %v368 = vunpack.c.h.b16 %v187
  %v369 = vunpack.c.l.b16 %v188
  %v370 = vunpack.c.h.b16 %v188
  %v371 = vunpack.c.l.b16 %v189
  %v372 = vunpack.c.h.b16 %v189
  %v373 = vunpack.c.l.b16 %v190
  %v374 = vunpack.c.h.b16 %v190
  %v375 = vunpack.c.l.b16 %v191
  %v376 = vunpack.c.h.b16 %v191
  %v377 = vunpack.c.l.b16 %v192
  %v378 = vunpack.c.h.b16 %v192
  %v379 = vunpack.c.l.b16 %v193
  %v380 = vunpack.c.h.b16 %v193
  %v381 = vunpack.c.l.b16 %v194
  %v382 = vunpack.c.h.b16 %v194
  %v383 = vunpack.c.l.b16 %v195
  %v384 = vunpack.c.h.b16 %v195
  %v385 = vunpack.c.l.b16 %v196
  %v386 = vunpack.c.h.b16 %v196
  %v387 = vunpack.c.l.b16 %v197
  %v388 = vunpack.c.h.b16 %v197
  %v389 = vunpack.c.l.b16 %v198
  %v390 = vunpack.c.h.b16 %v198
  %v391 = vunpack.c.l.b16 %v199
  %v392 = vunpack.c.h.b16 %v199
  %v393 = vunpack.c.l.b16 %v200
  %v394 = vunpack.c.h.b16 %v200
  %v395 = vunpack.c.l.b16 %v201
  %v396 = vunpack.c.h.b16 %v201
  %v397 = vunpack.c.l.b16 %v202
  %v398 = vunpack.c.h.b16 %v202
  %v399 = vunpack.c.l.b16 %v203
  %v400 = vunpack.c.h.b16 %v203
  %v401 = vunpack.c.l.b16 %v204
  %v402 = vunpack.c.h.b16 %v204
  %v403 = vunpack.c.l.b16 %v205
  %v404 = vunpack.c.h.b16 %v205
  %v405 = vunpack.c.l.b16 %v206
  %v406 = vunpack.c.h.b16 %v206
  %v407 = vunpack.c.l.b16 %v207
  %v408 = vunpack.c.h.b16 %v207
  %v409 = vunpack.c.l.b16 %v208
  %v410 = vunpack.c.h.b16 %v208
  %v411 = vunpack.c.l.b16 %v209
  %v412 = vunpack.c.h.b16 %v209
  %v413 = vunpack.c.l.b16 %v210
  %v414 = vunpack.c.h.b16 %v210
  %v415 = vunpack.c.l.b16 %v211
  %v416 = vunpack.c.h.b16 %v211
  %v417 = vunpack.c.l.b16 %v212
  %v418 = vunpack.c.h.b16 %v212
  %v419 = vunpack.c.l.b16 %v213
  %v420 = vunpack.c.h.b16 %v213
  %v421 = vunpack.c.l.b16 %v214
  %v422 = vunpack.c.h.b16 %v214
  %v423 = vunpack.c.l.b16 %v215
  %v424 = vunpack.c.h.b16 %v215
  %v425 = vunpack.c.l.b16 %v216
  %v426 = vunpack.c.h.b16 %v216
  %v427 = vpack.c.b16 %v301, %v299
  %v428 = vpack.c.b16 %v302, %v300
  %v429 = vpack.c.b16 %v305, %v303
  %v430 = vpack.c.b16 %v306, %v304
  %v431 = vpack.c.b16 %v309, %v307
  %v432 = vpack.c.b16 %v310, %v308
  %v433 = vpack.c.b16 %v313, %v311
  %v434 = vpack.c.b16 %v314, %v312
  %v435 = vpack.c.b16 %v317, %v315
  %v436 = vpack.c.b16 %v318, %v316
  %v437 = vpack.c.b16 %v321, %v319
  %v438 = vpack.c.b16 %v322, %v320
  %v439 = vpack.c.b16 %v325, %v323
  %v440 = vpack.c.b16 %v326, %v324
  %v441 = vpack.c.b16 %v329, %v327
  %v442 = vpack.c.b16 %v330, %v328
  %v443 = vpack.c.b16 %v333, %v331
  %v444 = vpack.c.b16 %v334, %v332
  %v445 = vpack.c.b16 %v337, %v335
  %v446 = vpack.c.b16 %v338, %v336
  %v447 = vpack.c.b16 %v341, %v339
  %v448 = vpack.c.b16 %v342, %v340
  %v449 = vpack.c.b16 %v345, %v343
  %v450 = vpack.c.b16 %v346, %v344
  %v451 = vpack.c.b16 %v349, %v347
  %v452 = vpack.c.b16 %v350, %v348
  %v453 = vpack.c.b16 %v353, %v351
  %v454 = vpack.c.b16 %v354, %v352
  %v455 = vpack.c.b16 %v357, %v355
  %v456 = vpack.c.b16 %v358, %v356
  %v457 = vpack.c.b16 %v361, %v359
  %v458 = vpack.c.b16 %v362, %v360
  %v459 = vpack.c.b16 %v365, %v363
  %v460 = vpack.c.b16 %v366, %v364
  %v461 = vpack.c.b16 %v369, %v367
  %v462 = vpack.c.b16 %v370, %v368
  %v463 = vpack.c.b16 %v373, %v371
  %v464 = vpack.c.b16 %v374, %v372
  %v465 = vpack.c.b16 %v377, %v375
  %v466 = vpack.c.b16 %v378, %v376
  %v467 = vpack.c.b16 %v381, %v379
  %v468 = vpack.c.b16 %v382, %v380
  %v469 = vpack.c.b16 %v385, %v383
  %v470 = vpack.c.b16 %v386, %v384
  %v471 = vpack.c.b16 %v389, %v387
  %v472 = vpack.c.b16 %v390, %v388
  %v473 = vpack.c.b16 %v393, %v391
  %v474 = vpack.c.b16 %v394, %v392
  %v475 = vpack.c.b16 %v397, %v395
  %v476 = vpack.c.b16 %v398, %v396
  %v477 = vpack.c.b16 %v401, %v399
  %v478 = vpack.c.b16 %v402, %v400
  %v479 = vpack.c.b16 %v405, %v403
  %v480 = vpack.c.b16 %v406, %v404
  %v481 = vpack.c.b16 %v409, %v407
  %v482 = vpack.c.b16 %v410, %v408
  %v483 = vpack.c.b16 %v413, %v411
  %v484 = vpack.c.b16 %v414, %v412
  %v485 = vpack.c.b16 %v417, %v415
  %v486 = vpack.c.b16 %v418, %v416
  %v487 = vpack.c.b16 %v421, %v419
  %v488 = vpack.c.b16 %v422, %v420
  %v489 = vpack.c.b16 %v425, %v423
  %v490 = vpack.c.b16 %v426, %v424
  %v541 = vunpack.c.l.b16 %v217
  %v542 = vunpack.c.l.b16 %v218
  %v543 = vunpack.c.l.b16 %v219
  %v544 = vunpack.c.l.b16 %v220
  %v545 = vunpack.c.l.b16 %v221
  %v546 = vunpack.c.l.b16 %v222
  %v547 = vunpack.c.l.b16 %v223
  %v548 = vunpack.c.l.b16 %v224
  %v549 = vunpack.c.l.b16 %v225
  %v550 = vunpack.c.l.b16 %v226
  %v551 = vunpack.c.l.b16 %v227
  %v552 = vunpack.c.l.b16 %v228
  %v553 = vunpack.c.l.b16 %v229
  %v554 = vunpack.c.l.b16 %v230
  %v555 = vunpack.c.l.b16 %v231
  %v556 = vunpack.c.l.b16 %v232
  %v557 = vunpack.c.l.b16 %v233
  %v558 = vunpack.c.l.b16 %v234
  %v559 = vpack.c.b16 %v542, %v541
  %v560 = vpack.c.b16 %v544, %v543
  %v561 = vpack.c.b16 %v546, %v545
  %v562 = vpack.c.b16 %v548, %v547
  %v563 = vpack.c.b16 %v550, %v549
  %v564 = vpack.c.b16 %v552, %v551
  %v565 = vpack.c.b16 %v554, %v553
  %v566 = vpack.c.b16 %v556, %v555
  %v567 = vpack.c.b16 %v558, %v557
  %vm577 = vcmask 130048
  %v579 = vsel %vm577, %v428, 0
  %v582 = vsel %vm577, %v430, 0
  %v585 = vsel %vm577, %v432, 0
  %v588 = vsel %vm577, %v434, 0
  %v591 = vsel %vm577, %v436, 0
  %v594 = vsel %vm577, %v438, 0
  %v597 = vsel %vm577, %v440, 0
  %v600 = vsel %vm577, %v442, 0
  %v603 = vsel %vm577, %v444, 0
  %v606 = vsel %vm577, %v446, 0
  %v609 = vsel %vm577, %v448, 0
  %v612 = vsel %vm577, %v450, 0
  %v615 = vsel %vm577, %v452, 0
  %v618 = vsel %vm577, %v454, 0
  %v621 = vsel %vm577, %v456, 0
  %v624 = vsel %vm577, %v458, 0
  %v627 = vsel %vm577, %v460, 0
  %v630 = vsel %vm577, %v462, 0
  %v633 = vsel %vm577, %v464, 0
  %v636 = vsel %vm577, %v466, 0
  %v639 = vsel %vm577, %v468, 0
  %v642 = vsel %vm577, %v470, 0
  %v645 = vsel %vm577, %v472, 0
  %v648 = vsel %vm577, %v474, 0
  %v651 = vsel %vm577, %v476, 0
  %v654 = vsel %vm577, %v478, 0
  %v657 = vsel %vm577, %v480, 0
  %v660 = vsel %vm577, %v482, 0
  %v663 = vsel %vm577, %v484, 0
  %v666 = vsel %vm577, %v486, 0
  %v669 = vsel %vm577, %v488, 0
  %v672 = vsel %vm577, %v490, 0
  %674 = vmatprep.subr.bf16.mxu0 0
  %675 = vmatpush1.bf16.msra.mxu0 %v566
  %676 = vmatprep.subr.bf16.mxu0 0
  %677 = vmatpush1.bf16.msra.mxu0 %v565
  %678 = vmatprep.subr.bf16.mxu0 0
  %679 = vmatpush1.bf16.msra.mxu0 %v564
  %680 = vmatprep.subr.bf16.mxu0 0
  %681 = vmatpush1.bf16.msra.mxu0 %v563
  %682 = vmatprep.subr.bf16.mxu0 0
  %683 = vmatpush1.bf16.msra.mxu0 %v562
  %684 = vmatprep.subr.bf16.mxu0 0
  %685 = vmatpush1.bf16.msra.mxu0 %v561
  %686 = vmatprep.subr.bf16.mxu0 0
  %687 = vmatpush1.bf16.msra.mxu0 %v560
  %688 = vmatprep.subr.bf16.mxu0 0
  %689 = vmatpush1.bf16.msra.mxu0 %v559
  %690 = vmatprep.subr.bf16.mxu0 0
  %691 = vmatpush2.bf16.msra.mxu0 0
  %692 = vmatprep.subr.bf16.mxu0 0
  %693 = vmatpush2.bf16.msra.mxu0 0
  %694 = vmatprep.subr.bf16.mxu0 0
  %695 = vmatpush2.bf16.msra.mxu0 0
  %696 = vmatprep.subr.bf16.mxu0 0
  %697 = vmatpush2.bf16.msra.mxu0 0
  %698 = vmatprep.subr.bf16.mxu0 0
  %699 = vmatpush2.bf16.msra.mxu0 0
  %700 = vmatprep.subr.bf16.mxu0 0
  %701 = vmatpush2.bf16.msra.mxu0 0
  %702 = vmatprep.subr.bf16.mxu0 0
  %703 = vmatpush2.bf16.msra.mxu0 0
  %704 = vmatprep.subr.bf16.mxu0 0
  %705 = vmatpush2.bf16.msra.mxu0 %v567
  %706 = vmatprep.mubr.bf16.mxu0 %v579
  %707 = vmatmul.mubr.bf16.gmra.mxu0 %v427
  %v708 = vpop.f32.mrf.mxu0
  %v709 = vadd.f32 0.0, %v708
  %v710 = vpop.f32.mrf.mxu0
  %v711 = vpop.f32.mrf.mxu0
  %v712 = vadd.f32 0.0, %v711
  %v713 = vpop.f32.mrf.mxu0
  %714 = vmatprep.mubr.bf16.mxu0 %v582
  %715 = vmatmul.mubr.bf16.gmra.mxu0 %v429
  %v716 = vpop.f32.mrf.mxu0
  %v717 = vadd.f32 0.0, %v716
  %v718 = vpop.f32.mrf.mxu0
  %v719 = vpop.f32.mrf.mxu0
  %v720 = vadd.f32 0.0, %v719
  %v721 = vpop.f32.mrf.mxu0
  %722 = vmatprep.mubr.bf16.mxu0 %v585
  %723 = vmatmul.mubr.bf16.gmra.mxu0 %v431
  %v724 = vpop.f32.mrf.mxu0
  %v725 = vadd.f32 0.0, %v724
  %v726 = vpop.f32.mrf.mxu0
  %v727 = vpop.f32.mrf.mxu0
  %v728 = vadd.f32 0.0, %v727
  %v729 = vpop.f32.mrf.mxu0
  %730 = vmatprep.mubr.bf16.mxu0 %v588
  %731 = vmatmul.mubr.bf16.gmra.mxu0 %v433
  %v732 = vpop.f32.mrf.mxu0
  %v733 = vadd.f32 0.0, %v732
  %v734 = vpop.f32.mrf.mxu0
  %v735 = vpop.f32.mrf.mxu0
  %v736 = vadd.f32 0.0, %v735
  %v737 = vpop.f32.mrf.mxu0
  %738 = vmatprep.mubr.bf16.mxu0 %v591
  %739 = vmatmul.mubr.bf16.gmra.mxu0 %v435
  %v740 = vpop.f32.mrf.mxu0
  %v741 = vadd.f32 0.0, %v740
  %v742 = vpop.f32.mrf.mxu0
  %v743 = vpop.f32.mrf.mxu0
  %v744 = vadd.f32 0.0, %v743
  %v745 = vpop.f32.mrf.mxu0
  %746 = vmatprep.mubr.bf16.mxu0 %v594
  %747 = vmatmul.mubr.bf16.gmra.mxu0 %v437
  %v748 = vpop.f32.mrf.mxu0
  %v749 = vadd.f32 0.0, %v748
  %v750 = vpop.f32.mrf.mxu0
  %v751 = vpop.f32.mrf.mxu0
  %v752 = vadd.f32 0.0, %v751
  %v753 = vpop.f32.mrf.mxu0
  %754 = vmatprep.mubr.bf16.mxu0 %v597
  %755 = vmatmul.mubr.bf16.gmra.mxu0 %v439
  %v756 = vpop.f32.mrf.mxu0
  %v757 = vadd.f32 0.0, %v756
  %v758 = vpop.f32.mrf.mxu0
  %v759 = vpop.f32.mrf.mxu0
  %v760 = vadd.f32 0.0, %v759
  %v761 = vpop.f32.mrf.mxu0
  %762 = vmatprep.mubr.bf16.mxu0 %v600
  %763 = vmatmul.mubr.bf16.gmra.mxu0 %v441
  %v764 = vpop.f32.mrf.mxu0
  %v765 = vadd.f32 0.0, %v764
  %v766 = vpop.f32.mrf.mxu0
  %v767 = vpop.f32.mrf.mxu0
  %v768 = vadd.f32 0.0, %v767
  %v769 = vpop.f32.mrf.mxu0
  %770 = vmatprep.mubr.bf16.mxu0 %v603
  %771 = vmatmul.mubr.bf16.gmra.mxu0 %v443
  %v772 = vpop.f32.mrf.mxu0
  %v773 = vadd.f32 0.0, %v772
  %v774 = vpop.f32.mrf.mxu0
  %v775 = vpop.f32.mrf.mxu0
  %v776 = vadd.f32 0.0, %v775
  %v777 = vpop.f32.mrf.mxu0
  %778 = vmatprep.mubr.bf16.mxu0 %v606
  %779 = vmatmul.mubr.bf16.gmra.mxu0 %v445
  %v780 = vpop.f32.mrf.mxu0
  %v781 = vadd.f32 0.0, %v780
  %v782 = vpop.f32.mrf.mxu0
  %v783 = vpop.f32.mrf.mxu0
  %v784 = vadd.f32 0.0, %v783
  %v785 = vpop.f32.mrf.mxu0
  %786 = vmatprep.mubr.bf16.mxu0 %v609
  %787 = vmatmul.mubr.bf16.gmra.mxu0 %v447
  %v788 = vpop.f32.mrf.mxu0
  %v789 = vadd.f32 0.0, %v788
  %v790 = vpop.f32.mrf.mxu0
  %v791 = vpop.f32.mrf.mxu0
  %v792 = vadd.f32 0.0, %v791
  %v793 = vpop.f32.mrf.mxu0
  %794 = vmatprep.mubr.bf16.mxu0 %v612
  %795 = vmatmul.mubr.bf16.gmra.mxu0 %v449
  %v796 = vpop.f32.mrf.mxu0
  %v797 = vadd.f32 0.0, %v796
  %v798 = vpop.f32.mrf.mxu0
  %v799 = vpop.f32.mrf.mxu0
  %v800 = vadd.f32 0.0, %v799
  %v801 = vpop.f32.mrf.mxu0
  %802 = vmatprep.mubr.bf16.mxu0 %v615
  %803 = vmatmul.mubr.bf16.gmra.mxu0 %v451
  %v804 = vpop.f32.mrf.mxu0
  %v805 = vadd.f32 0.0, %v804
  %v806 = vpop.f32.mrf.mxu0
  %v807 = vpop.f32.mrf.mxu0
  %v808 = vadd.f32 0.0, %v807
  %v809 = vpop.f32.mrf.mxu0
  %810 = vmatprep.mubr.bf16.mxu0 %v618
  %811 = vmatmul.mubr.bf16.gmra.mxu0 %v453
  %v812 = vpop.f32.mrf.mxu0
  %v813 = vadd.f32 0.0, %v812
  %v814 = vpop.f32.mrf.mxu0
  %v815 = vpop.f32.mrf.mxu0
  %v816 = vadd.f32 0.0, %v815
  %v817 = vpop.f32.mrf.mxu0
  %818 = vmatprep.mubr.bf16.mxu0 %v621
  %819 = vmatmul.mubr.bf16.gmra.mxu0 %v455
  %v820 = vpop.f32.mrf.mxu0
  %v821 = vadd.f32 0.0, %v820
  %v822 = vpop.f32.mrf.mxu0
  %v823 = vpop.f32.mrf.mxu0
  %v824 = vadd.f32 0.0, %v823
  %v825 = vpop.f32.mrf.mxu0
  %826 = vmatprep.mubr.bf16.mxu0 %v624
  %827 = vmatmul.mubr.bf16.gmra.mxu0 %v457
  %v828 = vpop.f32.mrf.mxu0
  %v829 = vadd.f32 0.0, %v828
  %v830 = vpop.f32.mrf.mxu0
  %v831 = vpop.f32.mrf.mxu0
  %v832 = vadd.f32 0.0, %v831
  %v833 = vpop.f32.mrf.mxu0
  %834 = vmatprep.mubr.bf16.mxu0 %v627
  %835 = vmatmul.mubr.bf16.gmra.mxu0 %v459
  %v836 = vpop.f32.mrf.mxu0
  %v837 = vadd.f32 0.0, %v836
  %v838 = vpop.f32.mrf.mxu0
  %v839 = vpop.f32.mrf.mxu0
  %v840 = vadd.f32 0.0, %v839
  %v841 = vpop.f32.mrf.mxu0
  %842 = vmatprep.mubr.bf16.mxu0 %v630
  %843 = vmatmul.mubr.bf16.gmra.mxu0 %v461
  %v844 = vpop.f32.mrf.mxu0
  %v845 = vadd.f32 0.0, %v844
  %v846 = vpop.f32.mrf.mxu0
  %v847 = vpop.f32.mrf.mxu0
  %v848 = vadd.f32 0.0, %v847
  %v849 = vpop.f32.mrf.mxu0
  %850 = vmatprep.mubr.bf16.mxu0 %v633
  %851 = vmatmul.mubr.bf16.gmra.mxu0 %v463
  %v852 = vpop.f32.mrf.mxu0
  %v853 = vadd.f32 0.0, %v852
  %v854 = vpop.f32.mrf.mxu0
  %v855 = vpop.f32.mrf.mxu0
  %v856 = vadd.f32 0.0, %v855
  %v857 = vpop.f32.mrf.mxu0
  %858 = vmatprep.mubr.bf16.mxu0 %v636
  %859 = vmatmul.mubr.bf16.gmra.mxu0 %v465
  %v860 = vpop.f32.mrf.mxu0
  %v861 = vadd.f32 0.0, %v860
  %v862 = vpop.f32.mrf.mxu0
  %v863 = vpop.f32.mrf.mxu0
  %v864 = vadd.f32 0.0, %v863
  %v865 = vpop.f32.mrf.mxu0
  %866 = vmatprep.mubr.bf16.mxu0 %v639
  %867 = vmatmul.mubr.bf16.gmra.mxu0 %v467
  %v868 = vpop.f32.mrf.mxu0
  %v869 = vadd.f32 0.0, %v868
  %v870 = vpop.f32.mrf.mxu0
  %v871 = vpop.f32.mrf.mxu0
  %v872 = vadd.f32 0.0, %v871
  %v873 = vpop.f32.mrf.mxu0
  %874 = vmatprep.mubr.bf16.mxu0 %v642
  %875 = vmatmul.mubr.bf16.gmra.mxu0 %v469
  %v876 = vpop.f32.mrf.mxu0
  %v877 = vadd.f32 0.0, %v876
  %v878 = vpop.f32.mrf.mxu0
  %v879 = vpop.f32.mrf.mxu0
  %v880 = vadd.f32 0.0, %v879
  %v881 = vpop.f32.mrf.mxu0
  %882 = vmatprep.mubr.bf16.mxu0 %v645
  %883 = vmatmul.mubr.bf16.gmra.mxu0 %v471
  %v884 = vpop.f32.mrf.mxu0
  %v885 = vadd.f32 0.0, %v884
  %v886 = vpop.f32.mrf.mxu0
  %v887 = vpop.f32.mrf.mxu0
  %v888 = vadd.f32 0.0, %v887
  %v889 = vpop.f32.mrf.mxu0
  %890 = vmatprep.mubr.bf16.mxu0 %v648
  %891 = vmatmul.mubr.bf16.gmra.mxu0 %v473
  %v892 = vpop.f32.mrf.mxu0
  %v893 = vadd.f32 0.0, %v892
  %v894 = vpop.f32.mrf.mxu0
  %v895 = vpop.f32.mrf.mxu0
  %v896 = vadd.f32 0.0, %v895
  %v897 = vpop.f32.mrf.mxu0
  %898 = vmatprep.mubr.bf16.mxu0 %v651
  %899 = vmatmul.mubr.bf16.gmra.mxu0 %v475
  %v900 = vpop.f32.mrf.mxu0
  %v901 = vadd.f32 0.0, %v900
  %v902 = vpop.f32.mrf.mxu0
  %v903 = vpop.f32.mrf.mxu0
  %v904 = vadd.f32 0.0, %v903
  %v905 = vpop.f32.mrf.mxu0
  %906 = vmatprep.mubr.bf16.mxu0 %v654
  %907 = vmatmul.mubr.bf16.gmra.mxu0 %v477
  %v908 = vpop.f32.mrf.mxu0
  %v909 = vadd.f32 0.0, %v908
  %v910 = vpop.f32.mrf.mxu0
  %v911 = vpop.f32.mrf.mxu0
  %v912 = vadd.f32 0.0, %v911
  %v913 = vpop.f32.mrf.mxu0
  %914 = vmatprep.mubr.bf16.mxu0 %v657
  %915 = vmatmul.mubr.bf16.gmra.mxu0 %v479
  %v916 = vpop.f32.mrf.mxu0
  %v917 = vadd.f32 0.0, %v916
  %v918 = vpop.f32.mrf.mxu0
  %v919 = vpop.f32.mrf.mxu0
  %v920 = vadd.f32 0.0, %v919
  %v921 = vpop.f32.mrf.mxu0
  %922 = vmatprep.mubr.bf16.mxu0 %v660
  %923 = vmatmul.mubr.bf16.gmra.mxu0 %v481
  %v924 = vpop.f32.mrf.mxu0
  %v925 = vadd.f32 0.0, %v924
  %v926 = vpop.f32.mrf.mxu0
  %v927 = vpop.f32.mrf.mxu0
  %v928 = vadd.f32 0.0, %v927
  %v929 = vpop.f32.mrf.mxu0
  %930 = vmatprep.mubr.bf16.mxu0 %v663
  %931 = vmatmul.mubr.bf16.gmra.mxu0 %v483
  %v932 = vpop.f32.mrf.mxu0
  %v933 = vadd.f32 0.0, %v932
  %v934 = vpop.f32.mrf.mxu0
  %v935 = vpop.f32.mrf.mxu0
  %v936 = vadd.f32 0.0, %v935
  %v937 = vpop.f32.mrf.mxu0
  %938 = vmatprep.mubr.bf16.mxu0 %v666
  %939 = vmatmul.mubr.bf16.gmra.mxu0 %v485
  %v940 = vpop.f32.mrf.mxu0
  %v941 = vadd.f32 0.0, %v940
  %v942 = vpop.f32.mrf.mxu0
  %v943 = vpop.f32.mrf.mxu0
  %v944 = vadd.f32 0.0, %v943
  %v945 = vpop.f32.mrf.mxu0
  %946 = vmatprep.mubr.bf16.mxu0 %v669
  %947 = vmatmul.mubr.bf16.gmra.mxu0 %v487
  %v948 = vpop.f32.mrf.mxu0
  %v949 = vadd.f32 0.0, %v948
  %v950 = vpop.f32.mrf.mxu0
  %v951 = vpop.f32.mrf.mxu0
  %v952 = vadd.f32 0.0, %v951
  %v953 = vpop.f32.mrf.mxu0
  %954 = vmatprep.mubr.bf16.mxu0 %v672
  %955 = vmatmul.mubr.bf16.gmra.mxu0 %v489
  %v956 = vpop.f32.mrf.mxu0
  %v957 = vadd.f32 0.0, %v956
  %v958 = vpop.f32.mrf.mxu0
  %v959 = vpop.f32.mrf.mxu0
  %v960 = vadd.f32 0.0, %v959
  %v961 = vpop.f32.mrf.mxu0
  %962 = vdwg.mxu0
  %v963 = vadd.f32 %v89, %v709
  %v964 = vadd.f32 %v90, %v712
  %v965 = vadd.f32 %v91, %v717
  %v966 = vadd.f32 %v92, %v720
  %v967 = vadd.f32 %v93, %v725
  %v968 = vadd.f32 %v94, %v728
  %v969 = vadd.f32 %v95, %v733
  %v970 = vadd.f32 %v96, %v736
  %v971 = vadd.f32 %v97, %v741
  %v972 = vadd.f32 %v98, %v744
  %v973 = vadd.f32 %v99, %v749
  %v974 = vadd.f32 %v100, %v752
  %v975 = vadd.f32 %v101, %v757
  %v976 = vadd.f32 %v102, %v760
  %v977 = vadd.f32 %v103, %v765
  %v978 = vadd.f32 %v104, %v768
  %v979 = vadd.f32 %v105, %v773
  %v980 = vadd.f32 %v106, %v776
  %v981 = vadd.f32 %v107, %v781
  %v982 = vadd.f32 %v108, %v784
  %v983 = vadd.f32 %v109, %v789
  %v984 = vadd.f32 %v110, %v792
  %v985 = vadd.f32 %v111, %v797
  %v986 = vadd.f32 %v112, %v800
  %v987 = vadd.f32 %v113, %v805
  %v988 = vadd.f32 %v114, %v808
  %v989 = vadd.f32 %v115, %v813
  %v990 = vadd.f32 %v116, %v816
  %v991 = vadd.f32 %v117, %v821
  %v992 = vadd.f32 %v118, %v824
  %v993 = vadd.f32 %v119, %v829
  %v994 = vadd.f32 %v120, %v832
  %v995 = vadd.f32 %v121, %v837
  %v996 = vadd.f32 %v122, %v840
  %v997 = vadd.f32 %v123, %v845
  %v998 = vadd.f32 %v124, %v848
  %v999 = vadd.f32 %v125, %v853
  %v1000 = vadd.f32 %v126, %v856
  %v1001 = vadd.f32 %v127, %v861
  %v1002 = vadd.f32 %v128, %v864
  %v1003 = vadd.f32 %v129, %v869
  %v1004 = vadd.f32 %v130, %v872
  %v1005 = vadd.f32 %v131, %v877
  %v1006 = vadd.f32 %v132, %v880
  %v1007 = vadd.f32 %v133, %v885
  %v1008 = vadd.f32 %v134, %v888
  %v1009 = vadd.f32 %v135, %v893
  %v1010 = vadd.f32 %v136, %v896
  %v1011 = vadd.f32 %v137, %v901
  %v1012 = vadd.f32 %v138, %v904
  %v1013 = vadd.f32 %v139, %v909
  %v1014 = vadd.f32 %v140, %v912
  %v1015 = vadd.f32 %v141, %v917
  %v1016 = vadd.f32 %v142, %v920
  %v1017 = vadd.f32 %v143, %v925
  %v1018 = vadd.f32 %v144, %v928
  %v1019 = vadd.f32 %v145, %v933
  %v1020 = vadd.f32 %v146, %v936
  %v1021 = vadd.f32 %v147, %v941
  %v1022 = vadd.f32 %v148, %v944
  %v1023 = vadd.f32 %v149, %v949
  %v1024 = vadd.f32 %v150, %v952
  %v1025 = vadd.f32 %v151, %v957
  %v1026 = vadd.f32 %v152, %v960
  %1027 = vst [vmem:[#allocation2] sm:$0xff] %v963
  %1028 = vst [vmem:[#allocation2 + $0x8] sm:$0xff] %v964
  %1029 = vst [vmem:[#allocation2 + $0x10] sm:$0xff] %v965
  %1030 = vst [vmem:[#allocation2 + $0x18] sm:$0xff] %v966
  %1031 = vst [vmem:[#allocation2 + $0x20] sm:$0xff] %v967
  %1032 = vst [vmem:[#allocation2 + $0x28] sm:$0xff] %v968
  %1033 = vst [vmem:[#allocation2 + $0x30] sm:$0xff] %v969
  %1034 = vst [vmem:[#allocation2 + $0x38] sm:$0xff] %v970
  %1035 = vst [vmem:[#allocation2 + $0x40] sm:$0xff] %v971
  %1036 = vst [vmem:[#allocation2 + $0x48] sm:$0xff] %v972
  %1037 = vst [vmem:[#allocation2 + $0x50] sm:$0xff] %v973
  %1038 = vst [vmem:[#allocation2 + $0x58] sm:$0xff] %v974
  %1039 = vst [vmem:[#allocation2 + $0x60] sm:$0xff] %v975
  %1040 = vst [vmem:[#allocation2 + $0x68] sm:$0xff] %v976
  %1041 = vst [vmem:[#allocation2 + $0x70] sm:$0xff] %v977
  %1042 = vst [vmem:[#allocation2 + $0x78] sm:$0xff] %v978
  %1043 = vst [vmem:[#allocation2 + $0x80] sm:$0xff] %v979
  %1044 = vst [vmem:[#allocation2 + $0x88] sm:$0xff] %v980
  %1045 = vst [vmem:[#allocation2 + $0x90] sm:$0xff] %v981
  %1046 = vst [vmem:[#allocation2 + $0x98] sm:$0xff] %v982
  %1047 = vst [vmem:[#allocation2 + $0xa0] sm:$0xff] %v983
  %1048 = vst [vmem:[#allocation2 + $0xa8] sm:$0xff] %v984
  %1049 = vst [vmem:[#allocation2 + $0xb0] sm:$0xff] %v985
  %1050 = vst [vmem:[#allocation2 + $0xb8] sm:$0xff] %v986
  %1051 = vst [vmem:[#allocation2 + $0xc0] sm:$0xff] %v987
  %1052 = vst [vmem:[#allocation2 + $0xc8] sm:$0xff] %v988
  %1053 = vst [vmem:[#allocation2 + $0xd0] sm:$0xff] %v989
  %1054 = vst [vmem:[#allocation2 + $0xd8] sm:$0xff] %v990
  %1055 = vst [vmem:[#allocation2 + $0xe0] sm:$0xff] %v991
  %1056 = vst [vmem:[#allocation2 + $0xe8] sm:$0xff] %v992
  %1057 = vst [vmem:[#allocation2 + $0xf0] sm:$0xff] %v993
  %1058 = vst [vmem:[#allocation2 + $0xf8] sm:$0xff] %v994
  %1059 = vst [vmem:[#allocation2 + $0x100] sm:$0xff] %v995
  %1060 = vst [vmem:[#allocation2 + $0x108] sm:$0xff] %v996
  %1061 = vst [vmem:[#allocation2 + $0x110] sm:$0xff] %v997
  %1062 = vst [vmem:[#allocation2 + $0x118] sm:$0xff] %v998
  %1063 = vst [vmem:[#allocation2 + $0x120] sm:$0xff] %v999
  %1064 = vst [vmem:[#allocation2 + $0x128] sm:$0xff] %v1000
  %1065 = vst [vmem:[#allocation2 + $0x130] sm:$0xff] %v1001
  %1066 = vst [vmem:[#allocation2 + $0x138] sm:$0xff] %v1002
  %1067 = vst [vmem:[#allocation2 + $0x140] sm:$0xff] %v1003
  %1068 = vst [vmem:[#allocation2 + $0x148] sm:$0xff] %v1004
  %1069 = vst [vmem:[#allocation2 + $0x150] sm:$0xff] %v1005
  %1070 = vst [vmem:[#allocation2 + $0x158] sm:$0xff] %v1006
  %1071 = vst [vmem:[#allocation2 + $0x160] sm:$0xff] %v1007
  %1072 = vst [vmem:[#allocation2 + $0x168] sm:$0xff] %v1008
  %1073 = vst [vmem:[#allocation2 + $0x170] sm:$0xff] %v1009
  %1074 = vst [vmem:[#allocation2 + $0x178] sm:$0xff] %v1010
  %1075 = vst [vmem:[#allocation2 + $0x180] sm:$0xff] %v1011
  %1076 = vst [vmem:[#allocation2 + $0x188] sm:$0xff] %v1012
  %1077 = vst [vmem:[#allocation2 + $0x190] sm:$0xff] %v1013
  %1078 = vst [vmem:[#allocation2 + $0x198] sm:$0xff] %v1014
  %1079 = vst [vmem:[#allocation2 + $0x1a0] sm:$0xff] %v1015
  %1080 = vst [vmem:[#allocation2 + $0x1a8] sm:$0xff] %v1016
  %1081 = vst [vmem:[#allocation2 + $0x1b0] sm:$0xff] %v1017
  %1082 = vst [vmem:[#allocation2 + $0x1b8] sm:$0xff] %v1018
  %1083 = vst [vmem:[#allocation2 + $0x1c0] sm:$0xff] %v1019
  %1084 = vst [vmem:[#allocation2 + $0x1c8] sm:$0xff] %v1020
  %1085 = vst [vmem:[#allocation2 + $0x1d0] sm:$0xff] %v1021
  %1086 = vst [vmem:[#allocation2 + $0x1d8] sm:$0xff] %v1022
  %1087 = vst [vmem:[#allocation2 + $0x1e0] sm:$0xff] %v1023
  %1088 = vst [vmem:[#allocation2 + $0x1e8] sm:$0xff] %v1024
  %1089 = vst [vmem:[#allocation2 + $0x1f0] sm:$0xff] %v1025
  %1090 = vst [vmem:[#allocation2 + $0x1f8] sm:$0xff] %v1026
  %v1091 = vld [vmem:[#allocation2] sm:$0xff]
  %v1092 = vld [vmem:[#allocation2 + $0x8] sm:$0xff]
  %v1093 = vld [vmem:[#allocation2 + $0x10] sm:$0xff]
  %v1094 = vld [vmem:[#allocation2 + $0x18] sm:$0xff]
  %v1095 = vld [vmem:[#allocation2 + $0x20] sm:$0xff]
  %v1096 = vld [vmem:[#allocation2 + $0x28] sm:$0xff]
  %v1097 = vld [vmem:[#allocation2 + $0x30] sm:$0xff]
  %v1098 = vld [vmem:[#allocation2 + $0x38] sm:$0xff]
  %v1099 = vld [vmem:[#allocation2 + $0x40] sm:$0xff]
  %v1100 = vld [vmem:[#allocation2 + $0x48] sm:$0xff]
  %v1101 = vld [vmem:[#allocation2 + $0x50] sm:$0xff]
  %v1102 = vld [vmem:[#allocation2 + $0x58] sm:$0xff]
  %v1103 = vld [vmem:[#allocation2 + $0x60] sm:$0xff]
  %v1104 = vld [vmem:[#allocation2 + $0x68] sm:$0xff]
  %v1105 = vld [vmem:[#allocation2 + $0x70] sm:$0xff]
  %v1106 = vld [vmem:[#allocation2 + $0x78] sm:$0xff]
  %v1107 = vld [vmem:[#allocation2 + $0x80] sm:$0xff]
  %v1108 = vld [vmem:[#allocation2 + $0x88] sm:$0xff]
  %v1109 = vld [vmem:[#allocation2 + $0x90] sm:$0xff]
  %v1110 = vld [vmem:[#allocation2 + $0x98] sm:$0xff]
  %v1111 = vld [vmem:[#allocation2 + $0xa0] sm:$0xff]
  %v1112 = vld [vmem:[#allocation2 + $0xa8] sm:$0xff]
  %v1113 = vld [vmem:[#allocation2 + $0xb0] sm:$0xff]
  %v1114 = vld [vmem:[#allocation2 + $0xb8] sm:$0xff]
  %v1115 = vld [vmem:[#allocation2 + $0xc0] sm:$0xff]
  %v1116 = vld [vmem:[#allocation2 + $0xc8] sm:$0xff]
  %v1117 = vld [vmem:[#allocation2 + $0xd0] sm:$0xff]
  %v1118 = vld [vmem:[#allocation2 + $0xd8] sm:$0xff]
  %v1119 = vld [vmem:[#allocation2 + $0xe0] sm:$0xff]
  %v1120 = vld [vmem:[#allocation2 + $0xe8] sm:$0xff]
  %v1121 = vld [vmem:[#allocation2 + $0xf0] sm:$0xff]
  %v1122 = vld [vmem:[#allocation2 + $0xf8] sm:$0xff]
  %v1123 = vld [vmem:[#allocation2 + $0x100] sm:$0xff]
  %v1124 = vld [vmem:[#allocation2 + $0x108] sm:$0xff]
  %v1125 = vld [vmem:[#allocation2 + $0x110] sm:$0xff]
  %v1126 = vld [vmem:[#allocation2 + $0x118] sm:$0xff]
  %v1127 = vld [vmem:[#allocation2 + $0x120] sm:$0xff]
  %v1128 = vld [vmem:[#allocation2 + $0x128] sm:$0xff]
  %v1129 = vld [vmem:[#allocation2 + $0x130] sm:$0xff]
  %v1130 = vld [vmem:[#allocation2 + $0x138] sm:$0xff]
  %v1131 = vld [vmem:[#allocation2 + $0x140] sm:$0xff]
  %v1132 = vld [vmem:[#allocation2 + $0x148] sm:$0xff]
  %v1133 = vld [vmem:[#allocation2 + $0x150] sm:$0xff]
  %v1134 = vld [vmem:[#allocation2 + $0x158] sm:$0xff]
  %v1135 = vld [vmem:[#allocation2 + $0x160] sm:$0xff]
  %v1136 = vld [vmem:[#allocation2 + $0x168] sm:$0xff]
  %v1137 = vld [vmem:[#allocation2 + $0x170] sm:$0xff]
  %v1138 = vld [vmem:[#allocation2 + $0x178] sm:$0xff]
  %v1139 = vld [vmem:[#allocation2 + $0x180] sm:$0xff]
  %v1140 = vld [vmem:[#allocation2 + $0x188] sm:$0xff]
  %v1141 = vld [vmem:[#allocation2 + $0x190] sm:$0xff]
  %v1142 = vld [vmem:[#allocation2 + $0x198] sm:$0xff]
  %v1143 = vld [vmem:[#allocation2 + $0x1a0] sm:$0xff]
  %v1144 = vld [vmem:[#allocation2 + $0x1a8] sm:$0xff]
  %v1145 = vld [vmem:[#allocation2 + $0x1b0] sm:$0xff]
  %v1146 = vld [vmem:[#allocation2 + $0x1b8] sm:$0xff]
  %v1147 = vld [vmem:[#allocation2 + $0x1c0] sm:$0xff]
  %v1148 = vld [vmem:[#allocation2 + $0x1c8] sm:$0xff]
  %v1149 = vld [vmem:[#allocation2 + $0x1d0] sm:$0xff]
  %v1150 = vld [vmem:[#allocation2 + $0x1d8] sm:$0xff]
  %v1151 = vld [vmem:[#allocation2 + $0x1e0] sm:$0xff]
  %v1152 = vld [vmem:[#allocation2 + $0x1e8] sm:$0xff]
  %v1153 = vld [vmem:[#allocation2 + $0x1f0] sm:$0xff]
  %v1154 = vld [vmem:[#allocation2 + $0x1f8] sm:$0xff]
  %v1155 = vld [vmem:[%s2] sm:$0xff]
  %v1156 = vld [vmem:[%s2 + $0x8] sm:$0xff]
  %v1157 = vld [vmem:[%s2 + $0x10] sm:$0xff]
  %v1158 = vld [vmem:[%s2 + $0x18] sm:$0xff]
  %v1159 = vld [vmem:[%s2 + $0x20] sm:$0xff]
  %v1160 = vld [vmem:[%s2 + $0x28] sm:$0xff]
  %v1161 = vld [vmem:[%s2 + $0x30] sm:$0xff]
  %v1162 = vld [vmem:[%s2 + $0x38] sm:$0xff]
  %v1163 = vld [vmem:[%s2 + $0x40] sm:$0xff]
  %v1164 = vld [vmem:[%s2 + $0x48] sm:$0xff]
  %v1165 = vld [vmem:[%s2 + $0x50] sm:$0xff]
  %v1166 = vld [vmem:[%s2 + $0x58] sm:$0xff]
  %v1167 = vld [vmem:[%s2 + $0x60] sm:$0xff]
  %v1168 = vld [vmem:[%s2 + $0x68] sm:$0xff]
  %v1169 = vld [vmem:[%s2 + $0x70] sm:$0xff]
  %v1170 = vld [vmem:[%s2 + $0x78] sm:$0xff]
  %v1171 = vld [vmem:[%s2 + $0x80] sm:$0xff]
  %v1172 = vld [vmem:[%s2 + $0x88] sm:$0xff]
  %v1173 = vld [vmem:[%s2 + $0x90] sm:$0xff]
  %v1174 = vld [vmem:[%s2 + $0x98] sm:$0xff]
  %v1175 = vld [vmem:[%s2 + $0xa0] sm:$0xff]
  %v1176 = vld [vmem:[%s2 + $0xa8] sm:$0xff]
  %v1177 = vld [vmem:[%s2 + $0xb0] sm:$0xff]
  %v1178 = vld [vmem:[%s2 + $0xb8] sm:$0xff]
  %v1179 = vld [vmem:[%s2 + $0xc0] sm:$0xff]
  %v1180 = vld [vmem:[%s2 + $0xc8] sm:$0xff]
  %v1181 = vld [vmem:[%s2 + $0xd0] sm:$0xff]
  %v1182 = vld [vmem:[%s2 + $0xd8] sm:$0xff]
  %v1183 = vld [vmem:[%s2 + $0xe0] sm:$0xff]
  %v1184 = vld [vmem:[%s2 + $0xe8] sm:$0xff]
  %v1185 = vld [vmem:[%s2 + $0xf0] sm:$0xff]
  %v1186 = vld [vmem:[%s2 + $0xf8] sm:$0xff]
  %v1187 = vld [vmem:[%s2 + $0x100] sm:$0xff]
  %v1188 = vld [vmem:[%s2 + $0x108] sm:$0xff]
  %v1189 = vld [vmem:[%s2 + $0x110] sm:$0xff]
  %v1190 = vld [vmem:[%s2 + $0x118] sm:$0xff]
  %v1191 = vld [vmem:[%s2 + $0x120] sm:$0xff]
  %v1192 = vld [vmem:[%s2 + $0x128] sm:$0xff]
  %v1193 = vld [vmem:[%s2 + $0x130] sm:$0xff]
  %v1194 = vld [vmem:[%s2 + $0x138] sm:$0xff]
  %v1195 = vld [vmem:[%s2 + $0x140] sm:$0xff]
  %v1196 = vld [vmem:[%s2 + $0x148] sm:$0xff]
  %v1197 = vld [vmem:[%s2 + $0x150] sm:$0xff]
  %v1198 = vld [vmem:[%s2 + $0x158] sm:$0xff]
  %v1199 = vld [vmem:[%s2 + $0x160] sm:$0xff]
  %v1200 = vld [vmem:[%s2 + $0x168] sm:$0xff]
  %v1201 = vld [vmem:[%s2 + $0x170] sm:$0xff]
  %v1202 = vld [vmem:[%s2 + $0x178] sm:$0xff]
  %v1203 = vld [vmem:[%s2 + $0x180] sm:$0xff]
  %v1204 = vld [vmem:[%s2 + $0x188] sm:$0xff]
  %v1205 = vld [vmem:[%s2 + $0x190] sm:$0xff]
  %v1206 = vld [vmem:[%s2 + $0x198] sm:$0xff]
  %v1207 = vld [vmem:[%s2 + $0x1a0] sm:$0xff]
  %v1208 = vld [vmem:[%s2 + $0x1a8] sm:$0xff]
  %v1209 = vld [vmem:[%s2 + $0x1b0] sm:$0xff]
  %v1210 = vld [vmem:[%s2 + $0x1b8] sm:$0xff]
  %v1211 = vld [vmem:[%s2 + $0x1c0] sm:$0xff]
  %v1212 = vld [vmem:[%s2 + $0x1c8] sm:$0xff]
  %v1213 = vld [vmem:[%s2 + $0x1d0] sm:$0xff]
  %v1214 = vld [vmem:[%s2 + $0x1d8] sm:$0xff]
  %v1215 = vld [vmem:[%s2 + $0x1e0] sm:$0xff]
  %v1216 = vld [vmem:[%s2 + $0x1e8] sm:$0xff]
  %v1217 = vld [vmem:[%s2 + $0x1f0] sm:$0xff]
  %v1218 = vld [vmem:[%s2 + $0x1f8] sm:$0xff]
  %v1219 = vld [vmem:[%s3] sm:$0xf]
  %v1220 = vld [vmem:[%s3 + $0x4] sm:$0xf]
  %v1221 = vld [vmem:[%s3 + $0x8] sm:$0xf]
  %v1222 = vld [vmem:[%s3 + $0xc] sm:$0xf]
  %v1223 = vld [vmem:[%s3 + $0x10] sm:$0xf]
  %v1224 = vld [vmem:[%s3 + $0x14] sm:$0xf]
  %v1225 = vld [vmem:[%s3 + $0x18] sm:$0xf]
  %v1226 = vld [vmem:[%s3 + $0x1c] sm:$0xf]
  %v1227 = vld [vmem:[%s3 + $0x20] sm:$0xf]
  %v1228 = vld [vmem:[%s3 + $0x24] sm:$0xf]
  %v1229 = vld [vmem:[%s3 + $0x28] sm:$0xf]
  %v1230 = vld [vmem:[%s3 + $0x2c] sm:$0xf]
  %v1231 = vld [vmem:[%s3 + $0x30] sm:$0xf]
  %v1232 = vld [vmem:[%s3 + $0x34] sm:$0xf]
  %v1233 = vld [vmem:[%s3 + $0x38] sm:$0xf]
  %v1234 = vld [vmem:[%s3 + $0x3c] sm:$0xf]
  %v1235 = vld [vmem:[%s3 + $0x40] sm:$0xf]
  %v1236 = vld [vmem:[%s3 + $0x44] sm:$0xf]
  %v1301 = vunpack.c.l.b16 %v1155
  %v1302 = vunpack.c.h.b16 %v1155
  %v1303 = vunpack.c.l.b16 %v1156
  %v1304 = vunpack.c.h.b16 %v1156
  %v1305 = vunpack.c.l.b16 %v1157
  %v1306 = vunpack.c.h.b16 %v1157
  %v1307 = vunpack.c.l.b16 %v1158
  %v1308 = vunpack.c.h.b16 %v1158
  %v1309 = vunpack.c.l.b16 %v1159
  %v1310 = vunpack.c.h.b16 %v1159
  %v1311 = vunpack.c.l.b16 %v1160
  %v1312 = vunpack.c.h.b16 %v1160
  %v1313 = vunpack.c.l.b16 %v1161
  %v1314 = vunpack.c.h.b16 %v1161
  %v1315 = vunpack.c.l.b16 %v1162
  %v1316 = vunpack.c.h.b16 %v1162
  %v1317 = vunpack.c.l.b16 %v1163
  %v1318 = vunpack.c.h.b16 %v1163
  %v1319 = vunpack.c.l.b16 %v1164
  %v1320 = vunpack.c.h.b16 %v1164
  %v1321 = vunpack.c.l.b16 %v1165
  %v1322 = vunpack.c.h.b16 %v1165
  %v1323 = vunpack.c.l.b16 %v1166
  %v1324 = vunpack.c.h.b16 %v1166
  %v1325 = vunpack.c.l.b16 %v1167
  %v1326 = vunpack.c.h.b16 %v1167
  %v1327 = vunpack.c.l.b16 %v1168
  %v1328 = vunpack.c.h.b16 %v1168
  %v1329 = vunpack.c.l.b16 %v1169
  %v1330 = vunpack.c.h.b16 %v1169
  %v1331 = vunpack.c.l.b16 %v1170
  %v1332 = vunpack.c.h.b16 %v1170
  %v1333 = vunpack.c.l.b16 %v1171
  %v1334 = vunpack.c.h.b16 %v1171
  %v1335 = vunpack.c.l.b16 %v1172
  %v1336 = vunpack.c.h.b16 %v1172
  %v1337 = vunpack.c.l.b16 %v1173
  %v1338 = vunpack.c.h.b16 %v1173
  %v1339 = vunpack.c.l.b16 %v1174
  %v1340 = vunpack.c.h.b16 %v1174
  %v1341 = vunpack.c.l.b16 %v1175
  %v1342 = vunpack.c.h.b16 %v1175
  %v1343 = vunpack.c.l.b16 %v1176
  %v1344 = vunpack.c.h.b16 %v1176
  %v1345 = vunpack.c.l.b16 %v1177
  %v1346 = vunpack.c.h.b16 %v1177
  %v1347 = vunpack.c.l.b16 %v1178
  %v1348 = vunpack.c.h.b16 %v1178
  %v1349 = vunpack.c.l.b16 %v1179
  %v1350 = vunpack.c.h.b16 %v1179
  %v1351 = vunpack.c.l.b16 %v1180
  %v1352 = vunpack.c.h.b16 %v1180
  %v1353 = vunpack.c.l.b16 %v1181
  %v1354 = vunpack.c.h.b16 %v1181
  %v1355 = vunpack.c.l.b16 %v1182
  %v1356 = vunpack.c.h.b16 %v1182
  %v1357 = vunpack.c.l.b16 %v1183
  %v1358 = vunpack.c.h.b16 %v1183
  %v1359 = vunpack.c.l.b16 %v1184
  %v1360 = vunpack.c.h.b16 %v1184
  %v1361 = vunpack.c.l.b16 %v1185
  %v1362 = vunpack.c.h.b16 %v1185
  %v1363 = vunpack.c.l.b16 %v1186
  %v1364 = vunpack.c.h.b16 %v1186
  %v1365 = vunpack.c.l.b16 %v1187
  %v1366 = vunpack.c.h.b16 %v1187
  %v1367 = vunpack.c.l.b16 %v1188
  %v1368 = vunpack.c.h.b16 %v1188
  %v1369 = vunpack.c.l.b16 %v1189
  %v1370 = vunpack.c.h.b16 %v1189
  %v1371 = vunpack.c.l.b16 %v1190
  %v1372 = vunpack.c.h.b16 %v1190
  %v1373 = vunpack.c.l.b16 %v1191
  %v1374 = vunpack.c.h.b16 %v1191
  %v1375 = vunpack.c.l.b16 %v1192
  %v1376 = vunpack.c.h.b16 %v1192
  %v1377 = vunpack.c.l.b16 %v1193
  %v1378 = vunpack.c.h.b16 %v1193
  %v1379 = vunpack.c.l.b16 %v1194
  %v1380 = vunpack.c.h.b16 %v1194
  %v1381 = vunpack.c.l.b16 %v1195
  %v1382 = vunpack.c.h.b16 %v1195
  %v1383 = vunpack.c.l.b16 %v1196
  %v1384 = vunpack.c.h.b16 %v1196
  %v1385 = vunpack.c.l.b16 %v1197
  %v1386 = vunpack.c.h.b16 %v1197
  %v1387 = vunpack.c.l.b16 %v1198
  %v1388 = vunpack.c.h.b16 %v1198
  %v1389 = vunpack.c.l.b16 %v1199
  %v1390 = vunpack.c.h.b16 %v1199
  %v1391 = vunpack.c.l.b16 %v1200
  %v1392 = vunpack.c.h.b16 %v1200
  %v1393 = vunpack.c.l.b16 %v1201
  %v1394 = vunpack.c.h.b16 %v1201
  %v1395 = vunpack.c.l.b16 %v1202
  %v1396 = vunpack.c.h.b16 %v1202
  %v1397 = vunpack.c.l.b16 %v1203
  %v1398 = vunpack.c.h.b16 %v1203
  %v1399 = vunpack.c.l.b16 %v1204
  %v1400 = vunpack.c.h.b16 %v1204
  %v1401 = vunpack.c.l.b16 %v1205
  %v1402 = vunpack.c.h.b16 %v1205
  %v1403 = vunpack.c.l.b16 %v1206
  %v1404 = vunpack.c.h.b16 %v1206
  %v1405 = vunpack.c.l.b16 %v1207
  %v1406 = vunpack.c.h.b16 %v1207
  %v1407 = vunpack.c.l.b16 %v1208
  %v1408 = vunpack.c.h.b16 %v1208
  %v1409 = vunpack.c.l.b16 %v1209
  %v1410 = vunpack.c.h.b16 %v1209
  %v1411 = vunpack.c.l.b16 %v1210
  %v1412 = vunpack.c.h.b16 %v1210
  %v1413 = vunpack.c.l.b16 %v1211
  %v1414 = vunpack.c.h.b16 %v1211
  %v1415 = vunpack.c.l.b16 %v1212
  %v1416 = vunpack.c.h.b16 %v1212
  %v1417 = vunpack.c.l.b16 %v1213
  %v1418 = vunpack.c.h.b16 %v1213
  %v1419 = vunpack.c.l.b16 %v1214
  %v1420 = vunpack.c.h.b16 %v1214
  %v1421 = vunpack.c.l.b16 %v1215
  %v1422 = vunpack.c.h.b16 %v1215
  %v1423 = vunpack.c.l.b16 %v1216
  %v1424 = vunpack.c.h.b16 %v1216
  %v1425 = vunpack.c.l.b16 %v1217
  %v1426 = vunpack.c.h.b16 %v1217
  %v1427 = vunpack.c.l.b16 %v1218
  %v1428 = vunpack.c.h.b16 %v1218
  %v1429 = vpack.c.b16 %v1303, %v1301
  %v1430 = vpack.c.b16 %v1304, %v1302
  %v1431 = vpack.c.b16 %v1307, %v1305
  %v1432 = vpack.c.b16 %v1308, %v1306
  %v1433 = vpack.c.b16 %v1311, %v1309
  %v1434 = vpack.c.b16 %v1312, %v1310
  %v1435 = vpack.c.b16 %v1315, %v1313
  %v1436 = vpack.c.b16 %v1316, %v1314
  %v1437 = vpack.c.b16 %v1319, %v1317
  %v1438 = vpack.c.b16 %v1320, %v1318
  %v1439 = vpack.c.b16 %v1323, %v1321
  %v1440 = vpack.c.b16 %v1324, %v1322
  %v1441 = vpack.c.b16 %v1327, %v1325
  %v1442 = vpack.c.b16 %v1328, %v1326
  %v1443 = vpack.c.b16 %v1331, %v1329
  %v1444 = vpack.c.b16 %v1332, %v1330
  %v1445 = vpack.c.b16 %v1335, %v1333
  %v1446 = vpack.c.b16 %v1336, %v1334
  %v1447 = vpack.c.b16 %v1339, %v1337
  %v1448 = vpack.c.b16 %v1340, %v1338
  %v1449 = vpack.c.b16 %v1343, %v1341
  %v1450 = vpack.c.b16 %v1344, %v1342
  %v1451 = vpack.c.b16 %v1347, %v1345
  %v1452 = vpack.c.b16 %v1348, %v1346
  %v1453 = vpack.c.b16 %v1351, %v1349
  %v1454 = vpack.c.b16 %v1352, %v1350
  %v1455 = vpack.c.b16 %v1355, %v1353
  %v1456 = vpack.c.b16 %v1356, %v1354
  %v1457 = vpack.c.b16 %v1359, %v1357
  %v1458 = vpack.c.b16 %v1360, %v1358
  %v1459 = vpack.c.b16 %v1363, %v1361
  %v1460 = vpack.c.b16 %v1364, %v1362
  %v1461 = vpack.c.b16 %v1367, %v1365
  %v1462 = vpack.c.b16 %v1368, %v1366
  %v1463 = vpack.c.b16 %v1371, %v1369
  %v1464 = vpack.c.b16 %v1372, %v1370
  %v1465 = vpack.c.b16 %v1375, %v1373
  %v1466 = vpack.c.b16 %v1376, %v1374
  %v1467 = vpack.c.b16 %v1379, %v1377
  %v1468 = vpack.c.b16 %v1380, %v1378
  %v1469 = vpack.c.b16 %v1383, %v1381
  %v1470 = vpack.c.b16 %v1384, %v1382
  %v1471 = vpack.c.b16 %v1387, %v1385
  %v1472 = vpack.c.b16 %v1388, %v1386
  %v1473 = vpack.c.b16 %v1391, %v1389
  %v1474 = vpack.c.b16 %v1392, %v1390
  %v1475 = vpack.c.b16 %v1395, %v1393
  %v1476 = vpack.c.b16 %v1396, %v1394
  %v1477 = vpack.c.b16 %v1399, %v1397
  %v1478 = vpack.c.b16 %v1400, %v1398
  %v1479 = vpack.c.b16 %v1403, %v1401
  %v1480 = vpack.c.b16 %v1404, %v1402
  %v1481 = vpack.c.b16 %v1407, %v1405
  %v1482 = vpack.c.b16 %v1408, %v1406
  %v1483 = vpack.c.b16 %v1411, %v1409
  %v1484 = vpack.c.b16 %v1412, %v1410
  %v1485 = vpack.c.b16 %v1415, %v1413
  %v1486 = vpack.c.b16 %v1416, %v1414
  %v1487 = vpack.c.b16 %v1419, %v1417
  %v1488 = vpack.c.b16 %v1420, %v1418
  %v1489 = vpack.c.b16 %v1423, %v1421
  %v1490 = vpack.c.b16 %v1424, %v1422
  %v1491 = vpack.c.b16 %v1427, %v1425
  %v1492 = vpack.c.b16 %v1428, %v1426
  %v1543 = vunpack.c.l.b16 %v1219
  %v1544 = vunpack.c.l.b16 %v1220
  %v1545 = vunpack.c.l.b16 %v1221
  %v1546 = vunpack.c.l.b16 %v1222
  %v1547 = vunpack.c.l.b16 %v1223
  %v1548 = vunpack.c.l.b16 %v1224
  %v1549 = vunpack.c.l.b16 %v1225
  %v1550 = vunpack.c.l.b16 %v1226
  %v1551 = vunpack.c.l.b16 %v1227
  %v1552 = vunpack.c.l.b16 %v1228
  %v1553 = vunpack.c.l.b16 %v1229
  %v1554 = vunpack.c.l.b16 %v1230
  %v1555 = vunpack.c.l.b16 %v1231
  %v1556 = vunpack.c.l.b16 %v1232
  %v1557 = vunpack.c.l.b16 %v1233
  %v1558 = vunpack.c.l.b16 %v1234
  %v1559 = vunpack.c.l.b16 %v1235
  %v1560 = vunpack.c.l.b16 %v1236
  %v1561 = vpack.c.b16 %v1544, %v1543
  %v1562 = vpack.c.b16 %v1546, %v1545
  %v1563 = vpack.c.b16 %v1548, %v1547
  %v1564 = vpack.c.b16 %v1550, %v1549
  %v1565 = vpack.c.b16 %v1552, %v1551
  %v1566 = vpack.c.b16 %v1554, %v1553
  %v1567 = vpack.c.b16 %v1556, %v1555
  %v1568 = vpack.c.b16 %v1558, %v1557
  %v1569 = vpack.c.b16 %v1560, %v1559
  %v1580 = vsel %vm577, %v1430, 0
  %v1583 = vsel %vm577, %v1432, 0
  %v1586 = vsel %vm577, %v1434, 0
  %v1589 = vsel %vm577, %v1436, 0
  %v1592 = vsel %vm577, %v1438, 0
  %v1595 = vsel %vm577, %v1440, 0
  %v1598 = vsel %vm577, %v1442, 0
  %v1601 = vsel %vm577, %v1444, 0
  %v1604 = vsel %vm577, %v1446, 0
  %v1607 = vsel %vm577, %v1448, 0
  %v1610 = vsel %vm577, %v1450, 0
  %v1613 = vsel %vm577, %v1452, 0
  %v1616 = vsel %vm577, %v1454, 0
  %v1619 = vsel %vm577, %v1456, 0
  %v1622 = vsel %vm577, %v1458, 0
  %v1625 = vsel %vm577, %v1460, 0
  %v1628 = vsel %vm577, %v1462, 0
  %v1631 = vsel %vm577, %v1464, 0
  %v1634 = vsel %vm577, %v1466, 0
  %v1637 = vsel %vm577, %v1468, 0
  %v1640 = vsel %vm577, %v1470, 0
  %v1643 = vsel %vm577, %v1472, 0
  %v1646 = vsel %vm577, %v1474, 0
  %v1649 = vsel %vm577, %v1476, 0
  %v1652 = vsel %vm577, %v1478, 0
  %v1655 = vsel %vm577, %v1480, 0
  %v1658 = vsel %vm577, %v1482, 0
  %v1661 = vsel %vm577, %v1484, 0
  %v1664 = vsel %vm577, %v1486, 0
  %v1667 = vsel %vm577, %v1488, 0
  %v1670 = vsel %vm577, %v1490, 0
  %v1673 = vsel %vm577, %v1492, 0
  %1675 = vmatprep.subr.bf16.mxu0 0
  %1676 = vmatpush1.bf16.msra.mxu0 %v1568
  %1677 = vmatprep.subr.bf16.mxu0 0
  %1678 = vmatpush1.bf16.msra.mxu0 %v1567
  %1679 = vmatprep.subr.bf16.mxu0 0
  %1680 = vmatpush1.bf16.msra.mxu0 %v1566
  %1681 = vmatprep.subr.bf16.mxu0 0
  %1682 = vmatpush1.bf16.msra.mxu0 %v1565
  %1683 = vmatprep.subr.bf16.mxu0 0
  %1684 = vmatpush1.bf16.msra.mxu0 %v1564
  %1685 = vmatprep.subr.bf16.mxu0 0
  %1686 = vmatpush1.bf16.msra.mxu0 %v1563
  %1687 = vmatprep.subr.bf16.mxu0 0
  %1688 = vmatpush1.bf16.msra.mxu0 %v1562
  %1689 = vmatprep.subr.bf16.mxu0 0
  %1690 = vmatpush1.bf16.msra.mxu0 %v1561
  %1691 = vmatprep.subr.bf16.mxu0 0
  %1692 = vmatpush2.bf16.msra.mxu0 0
  %1693 = vmatprep.subr.bf16.mxu0 0
  %1694 = vmatpush2.bf16.msra.mxu0 0
  %1695 = vmatprep.subr.bf16.mxu0 0
  %1696 = vmatpush2.bf16.msra.mxu0 0
  %1697 = vmatprep.subr.bf16.mxu0 0
  %1698 = vmatpush2.bf16.msra.mxu0 0
  %1699 = vmatprep.subr.bf16.mxu0 0
  %1700 = vmatpush2.bf16.msra.mxu0 0
  %1701 = vmatprep.subr.bf16.mxu0 0
  %1702 = vmatpush2.bf16.msra.mxu0 0
  %1703 = vmatprep.subr.bf16.mxu0 0
  %1704 = vmatpush2.bf16.msra.mxu0 0
  %1705 = vmatprep.subr.bf16.mxu0 0
  %1706 = vmatpush2.bf16.msra.mxu0 %v1569
  %1707 = vmatprep.mubr.bf16.mxu0 %v1580
  %1708 = vmatmul.mubr.bf16.gmra.mxu0 %v1429
  %v1709 = vpop.f32.mrf.mxu0
  %v1710 = vadd.f32 0.0, %v1709
  %v1711 = vpop.f32.mrf.mxu0
  %v1712 = vpop.f32.mrf.mxu0
  %v1713 = vadd.f32 0.0, %v1712
  %v1714 = vpop.f32.mrf.mxu0
  %1715 = vmatprep.mubr.bf16.mxu0 %v1583
  %1716 = vmatmul.mubr.bf16.gmra.mxu0 %v1431
  %v1717 = vpop.f32.mrf.mxu0
  %v1718 = vadd.f32 0.0, %v1717
  %v1719 = vpop.f32.mrf.mxu0
  %v1720 = vpop.f32.mrf.mxu0
  %v1721 = vadd.f32 0.0, %v1720
  %v1722 = vpop.f32.mrf.mxu0
  %1723 = vmatprep.mubr.bf16.mxu0 %v1586
  %1724 = vmatmul.mubr.bf16.gmra.mxu0 %v1433
  %v1725 = vpop.f32.mrf.mxu0
  %v1726 = vadd.f32 0.0, %v1725
  %v1727 = vpop.f32.mrf.mxu0
  %v1728 = vpop.f32.mrf.mxu0
  %v1729 = vadd.f32 0.0, %v1728
  %v1730 = vpop.f32.mrf.mxu0
  %1731 = vmatprep.mubr.bf16.mxu0 %v1589
  %1732 = vmatmul.mubr.bf16.gmra.mxu0 %v1435
  %v1733 = vpop.f32.mrf.mxu0
  %v1734 = vadd.f32 0.0, %v1733
  %v1735 = vpop.f32.mrf.mxu0
  %v1736 = vpop.f32.mrf.mxu0
  %v1737 = vadd.f32 0.0, %v1736
  %v1738 = vpop.f32.mrf.mxu0
  %1739 = vmatprep.mubr.bf16.mxu0 %v1592
  %1740 = vmatmul.mubr.bf16.gmra.mxu0 %v1437
  %v1741 = vpop.f32.mrf.mxu0
  %v1742 = vadd.f32 0.0, %v1741
  %v1743 = vpop.f32.mrf.mxu0
  %v1744 = vpop.f32.mrf.mxu0
  %v1745 = vadd.f32 0.0, %v1744
  %v1746 = vpop.f32.mrf.mxu0
  %1747 = vmatprep.mubr.bf16.mxu0 %v1595
  %1748 = vmatmul.mubr.bf16.gmra.mxu0 %v1439
  %v1749 = vpop.f32.mrf.mxu0
  %v1750 = vadd.f32 0.0, %v1749
  %v1751 = vpop.f32.mrf.mxu0
  %v1752 = vpop.f32.mrf.mxu0
  %v1753 = vadd.f32 0.0, %v1752
  %v1754 = vpop.f32.mrf.mxu0
  %1755 = vmatprep.mubr.bf16.mxu0 %v1598
  %1756 = vmatmul.mubr.bf16.gmra.mxu0 %v1441
  %v1757 = vpop.f32.mrf.mxu0
  %v1758 = vadd.f32 0.0, %v1757
  %v1759 = vpop.f32.mrf.mxu0
  %v1760 = vpop.f32.mrf.mxu0
  %v1761 = vadd.f32 0.0, %v1760
  %v1762 = vpop.f32.mrf.mxu0
  %1763 = vmatprep.mubr.bf16.mxu0 %v1601
  %1764 = vmatmul.mubr.bf16.gmra.mxu0 %v1443
  %v1765 = vpop.f32.mrf.mxu0
  %v1766 = vadd.f32 0.0, %v1765
  %v1767 = vpop.f32.mrf.mxu0
  %v1768 = vpop.f32.mrf.mxu0
  %v1769 = vadd.f32 0.0, %v1768
  %v1770 = vpop.f32.mrf.mxu0
  %1771 = vmatprep.mubr.bf16.mxu0 %v1604
  %1772 = vmatmul.mubr.bf16.gmra.mxu0 %v1445
  %v1773 = vpop.f32.mrf.mxu0
  %v1774 = vadd.f32 0.0, %v1773
  %v1775 = vpop.f32.mrf.mxu0
  %v1776 = vpop.f32.mrf.mxu0
  %v1777 = vadd.f32 0.0, %v1776
  %v1778 = vpop.f32.mrf.mxu0
  %1779 = vmatprep.mubr.bf16.mxu0 %v1607
  %1780 = vmatmul.mubr.bf16.gmra.mxu0 %v1447
  %v1781 = vpop.f32.mrf.mxu0
  %v1782 = vadd.f32 0.0, %v1781
  %v1783 = vpop.f32.mrf.mxu0
  %v1784 = vpop.f32.mrf.mxu0
  %v1785 = vadd.f32 0.0, %v1784
  %v1786 = vpop.f32.mrf.mxu0
  %1787 = vmatprep.mubr.bf16.mxu0 %v1610
  %1788 = vmatmul.mubr.bf16.gmra.mxu0 %v1449
  %v1789 = vpop.f32.mrf.mxu0
  %v1790 = vadd.f32 0.0, %v1789
  %v1791 = vpop.f32.mrf.mxu0
  %v1792 = vpop.f32.mrf.mxu0
  %v1793 = vadd.f32 0.0, %v1792
  %v1794 = vpop.f32.mrf.mxu0
  %1795 = vmatprep.mubr.bf16.mxu0 %v1613
  %1796 = vmatmul.mubr.bf16.gmra.mxu0 %v1451
  %v1797 = vpop.f32.mrf.mxu0
  %v1798 = vadd.f32 0.0, %v1797
  %v1799 = vpop.f32.mrf.mxu0
  %v1800 = vpop.f32.mrf.mxu0
  %v1801 = vadd.f32 0.0, %v1800
  %v1802 = vpop.f32.mrf.mxu0
  %1803 = vmatprep.mubr.bf16.mxu0 %v1616
  %1804 = vmatmul.mubr.bf16.gmra.mxu0 %v1453
  %v1805 = vpop.f32.mrf.mxu0
  %v1806 = vadd.f32 0.0, %v1805
  %v1807 = vpop.f32.mrf.mxu0
  %v1808 = vpop.f32.mrf.mxu0
  %v1809 = vadd.f32 0.0, %v1808
  %v1810 = vpop.f32.mrf.mxu0
  %1811 = vmatprep.mubr.bf16.mxu0 %v1619
  %1812 = vmatmul.mubr.bf16.gmra.mxu0 %v1455
  %v1813 = vpop.f32.mrf.mxu0
  %v1814 = vadd.f32 0.0, %v1813
  %v1815 = vpop.f32.mrf.mxu0
  %v1816 = vpop.f32.mrf.mxu0
  %v1817 = vadd.f32 0.0, %v1816
  %v1818 = vpop.f32.mrf.mxu0
  %1819 = vmatprep.mubr.bf16.mxu0 %v1622
  %1820 = vmatmul.mubr.bf16.gmra.mxu0 %v1457
  %v1821 = vpop.f32.mrf.mxu0
  %v1822 = vadd.f32 0.0, %v1821
  %v1823 = vpop.f32.mrf.mxu0
  %v1824 = vpop.f32.mrf.mxu0
  %v1825 = vadd.f32 0.0, %v1824
  %v1826 = vpop.f32.mrf.mxu0
  %1827 = vmatprep.mubr.bf16.mxu0 %v1625
  %1828 = vmatmul.mubr.bf16.gmra.mxu0 %v1459
  %v1829 = vpop.f32.mrf.mxu0
  %v1830 = vadd.f32 0.0, %v1829
  %v1831 = vpop.f32.mrf.mxu0
  %v1832 = vpop.f32.mrf.mxu0
  %v1833 = vadd.f32 0.0, %v1832
  %v1834 = vpop.f32.mrf.mxu0
  %1835 = vmatprep.mubr.bf16.mxu0 %v1628
  %1836 = vmatmul.mubr.bf16.gmra.mxu0 %v1461
  %v1837 = vpop.f32.mrf.mxu0
  %v1838 = vadd.f32 0.0, %v1837
  %v1839 = vpop.f32.mrf.mxu0
  %v1840 = vpop.f32.mrf.mxu0
  %v1841 = vadd.f32 0.0, %v1840
  %v1842 = vpop.f32.mrf.mxu0
  %1843 = vmatprep.mubr.bf16.mxu0 %v1631
  %1844 = vmatmul.mubr.bf16.gmra.mxu0 %v1463
  %v1845 = vpop.f32.mrf.mxu0
  %v1846 = vadd.f32 0.0, %v1845
  %v1847 = vpop.f32.mrf.mxu0
  %v1848 = vpop.f32.mrf.mxu0
  %v1849 = vadd.f32 0.0, %v1848
  %v1850 = vpop.f32.mrf.mxu0
  %1851 = vmatprep.mubr.bf16.mxu0 %v1634
  %1852 = vmatmul.mubr.bf16.gmra.mxu0 %v1465
  %v1853 = vpop.f32.mrf.mxu0
  %v1854 = vadd.f32 0.0, %v1853
  %v1855 = vpop.f32.mrf.mxu0
  %v1856 = vpop.f32.mrf.mxu0
  %v1857 = vadd.f32 0.0, %v1856
  %v1858 = vpop.f32.mrf.mxu0
  %1859 = vmatprep.mubr.bf16.mxu0 %v1637
  %1860 = vmatmul.mubr.bf16.gmra.mxu0 %v1467
  %v1861 = vpop.f32.mrf.mxu0
  %v1862 = vadd.f32 0.0, %v1861
  %v1863 = vpop.f32.mrf.mxu0
  %v1864 = vpop.f32.mrf.mxu0
  %v1865 = vadd.f32 0.0, %v1864
  %v1866 = vpop.f32.mrf.mxu0
  %1867 = vmatprep.mubr.bf16.mxu0 %v1640
  %1868 = vmatmul.mubr.bf16.gmra.mxu0 %v1469
  %v1869 = vpop.f32.mrf.mxu0
  %v1870 = vadd.f32 0.0, %v1869
  %v1871 = vpop.f32.mrf.mxu0
  %v1872 = vpop.f32.mrf.mxu0
  %v1873 = vadd.f32 0.0, %v1872
  %v1874 = vpop.f32.mrf.mxu0
  %1875 = vmatprep.mubr.bf16.mxu0 %v1643
  %1876 = vmatmul.mubr.bf16.gmra.mxu0 %v1471
  %v1877 = vpop.f32.mrf.mxu0
  %v1878 = vadd.f32 0.0, %v1877
  %v1879 = vpop.f32.mrf.mxu0
  %v1880 = vpop.f32.mrf.mxu0
  %v1881 = vadd.f32 0.0, %v1880
  %v1882 = vpop.f32.mrf.mxu0
  %1883 = vmatprep.mubr.bf16.mxu0 %v1646
  %1884 = vmatmul.mubr.bf16.gmra.mxu0 %v1473
  %v1885 = vpop.f32.mrf.mxu0
  %v1886 = vadd.f32 0.0, %v1885
  %v1887 = vpop.f32.mrf.mxu0
  %v1888 = vpop.f32.mrf.mxu0
  %v1889 = vadd.f32 0.0, %v1888
  %v1890 = vpop.f32.mrf.mxu0
  %1891 = vmatprep.mubr.bf16.mxu0 %v1649
  %1892 = vmatmul.mubr.bf16.gmra.mxu0 %v1475
  %v1893 = vpop.f32.mrf.mxu0
  %v1894 = vadd.f32 0.0, %v1893
  %v1895 = vpop.f32.mrf.mxu0
  %v1896 = vpop.f32.mrf.mxu0
  %v1897 = vadd.f32 0.0, %v1896
  %v1898 = vpop.f32.mrf.mxu0
  %1899 = vmatprep.mubr.bf16.mxu0 %v1652
  %1900 = vmatmul.mubr.bf16.gmra.mxu0 %v1477
  %v1901 = vpop.f32.mrf.mxu0
  %v1902 = vadd.f32 0.0, %v1901
  %v1903 = vpop.f32.mrf.mxu0
  %v1904 = vpop.f32.mrf.mxu0
  %v1905 = vadd.f32 0.0, %v1904
  %v1906 = vpop.f32.mrf.mxu0
  %1907 = vmatprep.mubr.bf16.mxu0 %v1655
  %1908 = vmatmul.mubr.bf16.gmra.mxu0 %v1479
  %v1909 = vpop.f32.mrf.mxu0
  %v1910 = vadd.f32 0.0, %v1909
  %v1911 = vpop.f32.mrf.mxu0
  %v1912 = vpop.f32.mrf.mxu0
  %v1913 = vadd.f32 0.0, %v1912
  %v1914 = vpop.f32.mrf.mxu0
  %1915 = vmatprep.mubr.bf16.mxu0 %v1658
  %1916 = vmatmul.mubr.bf16.gmra.mxu0 %v1481
  %v1917 = vpop.f32.mrf.mxu0
  %v1918 = vadd.f32 0.0, %v1917
  %v1919 = vpop.f32.mrf.mxu0
  %v1920 = vpop.f32.mrf.mxu0
  %v1921 = vadd.f32 0.0, %v1920
  %v1922 = vpop.f32.mrf.mxu0
  %1923 = vmatprep.mubr.bf16.mxu0 %v1661
  %1924 = vmatmul.mubr.bf16.gmra.mxu0 %v1483
  %v1925 = vpop.f32.mrf.mxu0
  %v1926 = vadd.f32 0.0, %v1925
  %v1927 = vpop.f32.mrf.mxu0
  %v1928 = vpop.f32.mrf.mxu0
  %v1929 = vadd.f32 0.0, %v1928
  %v1930 = vpop.f32.mrf.mxu0
  %1931 = vmatprep.mubr.bf16.mxu0 %v1664
  %1932 = vmatmul.mubr.bf16.gmra.mxu0 %v1485
  %v1933 = vpop.f32.mrf.mxu0
  %v1934 = vadd.f32 0.0, %v1933
  %v1935 = vpop.f32.mrf.mxu0
  %v1936 = vpop.f32.mrf.mxu0
  %v1937 = vadd.f32 0.0, %v1936
  %v1938 = vpop.f32.mrf.mxu0
  %1939 = vmatprep.mubr.bf16.mxu0 %v1667
  %1940 = vmatmul.mubr.bf16.gmra.mxu0 %v1487
  %v1941 = vpop.f32.mrf.mxu0
  %v1942 = vadd.f32 0.0, %v1941
  %v1943 = vpop.f32.mrf.mxu0
  %v1944 = vpop.f32.mrf.mxu0
  %v1945 = vadd.f32 0.0, %v1944
  %v1946 = vpop.f32.mrf.mxu0
  %1947 = vmatprep.mubr.bf16.mxu0 %v1670
  %1948 = vmatmul.mubr.bf16.gmra.mxu0 %v1489
  %v1949 = vpop.f32.mrf.mxu0
  %v1950 = vadd.f32 0.0, %v1949
  %v1951 = vpop.f32.mrf.mxu0
  %v1952 = vpop.f32.mrf.mxu0
  %v1953 = vadd.f32 0.0, %v1952
  %v1954 = vpop.f32.mrf.mxu0
  %1955 = vmatprep.mubr.bf16.mxu0 %v1673
  %1956 = vmatmul.mubr.bf16.gmra.mxu0 %v1491
  %v1957 = vpop.f32.mrf.mxu0
  %v1958 = vadd.f32 0.0, %v1957
  %v1959 = vpop.f32.mrf.mxu0
  %v1960 = vpop.f32.mrf.mxu0
  %v1961 = vadd.f32 0.0, %v1960
  %v1962 = vpop.f32.mrf.mxu0
  %1963 = vdwg.mxu0
  %v1964 = vadd.f32 %v1091, %v1710
  %v1965 = vadd.f32 %v1092, %v1713
  %v1966 = vadd.f32 %v1093, %v1718
  %v1967 = vadd.f32 %v1094, %v1721
  %v1968 = vadd.f32 %v1095, %v1726
  %v1969 = vadd.f32 %v1096, %v1729
  %v1970 = vadd.f32 %v1097, %v1734
  %v1971 = vadd.f32 %v1098, %v1737
  %v1972 = vadd.f32 %v1099, %v1742
  %v1973 = vadd.f32 %v1100, %v1745
  %v1974 = vadd.f32 %v1101, %v1750
  %v1975 = vadd.f32 %v1102, %v1753
  %v1976 = vadd.f32 %v1103, %v1758
  %v1977 = vadd.f32 %v1104, %v1761
  %v1978 = vadd.f32 %v1105, %v1766
  %v1979 = vadd.f32 %v1106, %v1769
  %v1980 = vadd.f32 %v1107, %v1774
  %v1981 = vadd.f32 %v1108, %v1777
  %v1982 = vadd.f32 %v1109, %v1782
  %v1983 = vadd.f32 %v1110, %v1785
  %v1984 = vadd.f32 %v1111, %v1790
  %v1985 = vadd.f32 %v1112, %v1793
  %v1986 = vadd.f32 %v1113, %v1798
  %v1987 = vadd.f32 %v1114, %v1801
  %v1988 = vadd.f32 %v1115, %v1806
  %v1989 = vadd.f32 %v1116, %v1809
  %v1990 = vadd.f32 %v1117, %v1814
  %v1991 = vadd.f32 %v1118, %v1817
  %v1992 = vadd.f32 %v1119, %v1822
  %v1993 = vadd.f32 %v1120, %v1825
  %v1994 = vadd.f32 %v1121, %v1830
  %v1995 = vadd.f32 %v1122, %v1833
  %v1996 = vadd.f32 %v1123, %v1838
  %v1997 = vadd.f32 %v1124, %v1841
  %v1998 = vadd.f32 %v1125, %v1846
  %v1999 = vadd.f32 %v1126, %v1849
  %v2000 = vadd.f32 %v1127, %v1854
  %v2001 = vadd.f32 %v1128, %v1857
  %v2002 = vadd.f32 %v1129, %v1862
  %v2003 = vadd.f32 %v1130, %v1865
  %v2004 = vadd.f32 %v1131, %v1870
  %v2005 = vadd.f32 %v1132, %v1873
  %v2006 = vadd.f32 %v1133, %v1878
  %v2007 = vadd.f32 %v1134, %v1881
  %v2008 = vadd.f32 %v1135, %v1886
  %v2009 = vadd.f32 %v1136, %v1889
  %v2010 = vadd.f32 %v1137, %v1894
  %v2011 = vadd.f32 %v1138, %v1897
  %v2012 = vadd.f32 %v1139, %v1902
  %v2013 = vadd.f32 %v1140, %v1905
  %v2014 = vadd.f32 %v1141, %v1910
  %v2015 = vadd.f32 %v1142, %v1913
  %v2016 = vadd.f32 %v1143, %v1918
  %v2017 = vadd.f32 %v1144, %v1921
  %v2018 = vadd.f32 %v1145, %v1926
  %v2019 = vadd.f32 %v1146, %v1929
  %v2020 = vadd.f32 %v1147, %v1934
  %v2021 = vadd.f32 %v1148, %v1937
  %v2022 = vadd.f32 %v1149, %v1942
  %v2023 = vadd.f32 %v1150, %v1945
  %v2024 = vadd.f32 %v1151, %v1950
  %v2025 = vadd.f32 %v1152, %v1953
  %v2026 = vadd.f32 %v1153, %v1958
  %v2027 = vadd.f32 %v1154, %v1961
  %2028 = vst [vmem:[#allocation2] sm:$0xff] %v1964
  %2029 = vst [vmem:[#allocation2 + $0x8] sm:$0xff] %v1965
  %2030 = vst [vmem:[#allocation2 + $0x10] sm:$0xff] %v1966
  %2031 = vst [vmem:[#allocation2 + $0x18] sm:$0xff] %v1967
  %2032 = vst [vmem:[#allocation2 + $0x20] sm:$0xff] %v1968
  %2033 = vst [vmem:[#allocation2 + $0x28] sm:$0xff] %v1969
  %2034 = vst [vmem:[#allocation2 + $0x30] sm:$0xff] %v1970
  %2035 = vst [vmem:[#allocation2 + $0x38] sm:$0xff] %v1971
  %2036 = vst [vmem:[#allocation2 + $0x40] sm:$0xff] %v1972
  %2037 = vst [vmem:[#allocation2 + $0x48] sm:$0xff] %v1973
  %2038 = vst [vmem:[#allocation2 + $0x50] sm:$0xff] %v1974
  %2039 = vst [vmem:[#allocation2 + $0x58] sm:$0xff] %v1975
  %2040 = vst [vmem:[#allocation2 + $0x60] sm:$0xff] %v1976
  %2041 = vst [vmem:[#allocation2 + $0x68] sm:$0xff] %v1977
  %2042 = vst [vmem:[#allocation2 + $0x70] sm:$0xff] %v1978
  %2043 = vst [vmem:[#allocation2 + $0x78] sm:$0xff] %v1979
  %2044 = vst [vmem:[#allocation2 + $0x80] sm:$0xff] %v1980
  %2045 = vst [vmem:[#allocation2 + $0x88] sm:$0xff] %v1981
  %2046 = vst [vmem:[#allocation2 + $0x90] sm:$0xff] %v1982
  %2047 = vst [vmem:[#allocation2 + $0x98] sm:$0xff] %v1983
  %2048 = vst [vmem:[#allocation2 + $0xa0] sm:$0xff] %v1984
  %2049 = vst [vmem:[#allocation2 + $0xa8] sm:$0xff] %v1985
  %2050 = vst [vmem:[#allocation2 + $0xb0] sm:$0xff] %v1986
  %2051 = vst [vmem:[#allocation2 + $0xb8] sm:$0xff] %v1987
  %2052 = vst [vmem:[#allocation2 + $0xc0] sm:$0xff] %v1988
  %2053 = vst [vmem:[#allocation2 + $0xc8] sm:$0xff] %v1989
  %2054 = vst [vmem:[#allocation2 + $0xd0] sm:$0xff] %v1990
  %2055 = vst [vmem:[#allocation2 + $0xd8] sm:$0xff] %v1991
  %2056 = vst [vmem:[#allocation2 + $0xe0] sm:$0xff] %v1992
  %2057 = vst [vmem:[#allocation2 + $0xe8] sm:$0xff] %v1993
  %2058 = vst [vmem:[#allocation2 + $0xf0] sm:$0xff] %v1994
  %2059 = vst [vmem:[#allocation2 + $0xf8] sm:$0xff] %v1995
  %2060 = vst [vmem:[#allocation2 + $0x100] sm:$0xff] %v1996
  %2061 = vst [vmem:[#allocation2 + $0x108] sm:$0xff] %v1997
  %2062 = vst [vmem:[#allocation2 + $0x110] sm:$0xff] %v1998
  %2063 = vst [vmem:[#allocation2 + $0x118] sm:$0xff] %v1999
  %2064 = vst [vmem:[#allocation2 + $0x120] sm:$0xff] %v2000
  %2065 = vst [vmem:[#allocation2 + $0x128] sm:$0xff] %v2001
  %2066 = vst [vmem:[#allocation2 + $0x130] sm:$0xff] %v2002
  %2067 = vst [vmem:[#allocation2 + $0x138] sm:$0xff] %v2003
  %2068 = vst [vmem:[#allocation2 + $0x140] sm:$0xff] %v2004
  %2069 = vst [vmem:[#allocation2 + $0x148] sm:$0xff] %v2005
  %2070 = vst [vmem:[#allocation2 + $0x150] sm:$0xff] %v2006
  %2071 = vst [vmem:[#allocation2 + $0x158] sm:$0xff] %v2007
  %2072 = vst [vmem:[#allocation2 + $0x160] sm:$0xff] %v2008
  %2073 = vst [vmem:[#allocation2 + $0x168] sm:$0xff] %v2009
  %2074 = vst [vmem:[#allocation2 + $0x170] sm:$0xff] %v2010
  %2075 = vst [vmem:[#allocation2 + $0x178] sm:$0xff] %v2011
  %2076 = vst [vmem:[#allocation2 + $0x180] sm:$0xff] %v2012
  %2077 = vst [vmem:[#allocation2 + $0x188] sm:$0xff] %v2013
  %2078 = vst [vmem:[#allocation2 + $0x190] sm:$0xff] %v2014
  %2079 = vst [vmem:[#allocation2 + $0x198] sm:$0xff] %v2015
  %2080 = vst [vmem:[#allocation2 + $0x1a0] sm:$0xff] %v2016
  %2081 = vst [vmem:[#allocation2 + $0x1a8] sm:$0xff] %v2017
  %2082 = vst [vmem:[#allocation2 + $0x1b0] sm:$0xff] %v2018
  %2083 = vst [vmem:[#allocation2 + $0x1b8] sm:$0xff] %v2019
  %2084 = vst [vmem:[#allocation2 + $0x1c0] sm:$0xff] %v2020
  %2085 = vst [vmem:[#allocation2 + $0x1c8] sm:$0xff] %v2021
  %2086 = vst [vmem:[#allocation2 + $0x1d0] sm:$0xff] %v2022
  %2087 = vst [vmem:[#allocation2 + $0x1d8] sm:$0xff] %v2023
  %2088 = vst [vmem:[#allocation2 + $0x1e0] sm:$0xff] %v2024
  %2089 = vst [vmem:[#allocation2 + $0x1e8] sm:$0xff] %v2025
  %2090 = vst [vmem:[#allocation2 + $0x1f0] sm:$0xff] %v2026
  %2091 = vst [vmem:[#allocation2 + $0x1f8] sm:$0xff] %v2027
  // Predicated region
  $region26: #{unet_forward.23} parent=0 // pred_check
    %p2092 = pneg %p21
  $region27: #{unet_forward.23} parent=0 // pred_check_branch
    %2094 = sbr.rel (%p2092) target = $region29
  $region28: #{unet_forward.23} parent=0 // pred_region
    %v2095 = vld [vmem:[#allocation2] sm:$0xff]
    %v2096 = vld [vmem:[#allocation2 + $0x8] sm:$0xff]
    %v2097 = vld [vmem:[#allocation2 + $0x10] sm:$0xff]
    %v2098 = vld [vmem:[#allocation2 + $0x18] sm:$0xff]
    %v2099 = vld [vmem:[#allocation2 + $0x20] sm:$0xff]
    %v2100 = vld [vmem:[#allocation2 + $0x28] sm:$0xff]
    %v2101 = vld [vmem:[#allocation2 + $0x30] sm:$0xff]
    %v2102 = vld [vmem:[#allocation2 + $0x38] sm:$0xff]
    %v2103 = vld [vmem:[#allocation2 + $0x40] sm:$0xff]
    %v2104 = vld [vmem:[#allocation2 + $0x48] sm:$0xff]
    %v2105 = vld [vmem:[#allocation2 + $0x50] sm:$0xff]
    %v2106 = vld [vmem:[#allocation2 + $0x58] sm:$0xff]
    %v2107 = vld [vmem:[#allocation2 + $0x60] sm:$0xff]
    %v2108 = vld [vmem:[#allocation2 + $0x68] sm:$0xff]
    %v2109 = vld [vmem:[#allocation2 + $0x70] sm:$0xff]
    %v2110 = vld [vmem:[#allocation2 + $0x78] sm:$0xff]
    %v2111 = vld [vmem:[#allocation2 + $0x80] sm:$0xff]
    %v2112 = vld [vmem:[#allocation2 + $0x88] sm:$0xff]
    %v2113 = vld [vmem:[#allocation2 + $0x90] sm:$0xff]
    %v2114 = vld [vmem:[#allocation2 + $0x98] sm:$0xff]
    %v2115 = vld [vmem:[#allocation2 + $0xa0] sm:$0xff]
    %v2116 = vld [vmem:[#allocation2 + $0xa8] sm:$0xff]
    %v2117 = vld [vmem:[#allocation2 + $0xb0] sm:$0xff]
    %v2118 = vld [vmem:[#allocation2 + $0xb8] sm:$0xff]
    %v2119 = vld [vmem:[#allocation2 + $0xc0] sm:$0xff]
    %v2120 = vld [vmem:[#allocation2 + $0xc8] sm:$0xff]
    %v2121 = vld [vmem:[#allocation2 + $0xd0] sm:$0xff]
    %v2122 = vld [vmem:[#allocation2 + $0xd8] sm:$0xff]
    %v2123 = vld [vmem:[#allocation2 + $0xe0] sm:$0xff]
    %v2124 = vld [vmem:[#allocation2 + $0xe8] sm:$0xff]
    %v2125 = vld [vmem:[#allocation2 + $0xf0] sm:$0xff]
    %v2126 = vld [vmem:[#allocation2 + $0xf8] sm:$0xff]
    %v2127 = vld [vmem:[#allocation2 + $0x100] sm:$0xff]
    %v2128 = vld [vmem:[#allocation2 + $0x108] sm:$0xff]
    %v2129 = vld [vmem:[#allocation2 + $0x110] sm:$0xff]
    %v2130 = vld [vmem:[#allocation2 + $0x118] sm:$0xff]
    %v2131 = vld [vmem:[#allocation2 + $0x120] sm:$0xff]
    %v2132 = vld [vmem:[#allocation2 + $0x128] sm:$0xff]
    %v2133 = vld [vmem:[#allocation2 + $0x130] sm:$0xff]
    %v2134 = vld [vmem:[#allocation2 + $0x138] sm:$0xff]
    %v2135 = vld [vmem:[#allocation2 + $0x140] sm:$0xff]
    %v2136 = vld [vmem:[#allocation2 + $0x148] sm:$0xff]
    %v2137 = vld [vmem:[#allocation2 + $0x150] sm:$0xff]
    %v2138 = vld [vmem:[#allocation2 + $0x158] sm:$0xff]
    %v2139 = vld [vmem:[#allocation2 + $0x160] sm:$0xff]
    %v2140 = vld [vmem:[#allocation2 + $0x168] sm:$0xff]
    %v2141 = vld [vmem:[#allocation2 + $0x170] sm:$0xff]
    %v2142 = vld [vmem:[#allocation2 + $0x178] sm:$0xff]
    %v2143 = vld [vmem:[#allocation2 + $0x180] sm:$0xff]
    %v2144 = vld [vmem:[#allocation2 + $0x188] sm:$0xff]
    %v2145 = vld [vmem:[#allocation2 + $0x190] sm:$0xff]
    %v2146 = vld [vmem:[#allocation2 + $0x198] sm:$0xff]
    %v2147 = vld [vmem:[#allocation2 + $0x1a0] sm:$0xff]
    %v2148 = vld [vmem:[#allocation2 + $0x1a8] sm:$0xff]
    %v2149 = vld [vmem:[#allocation2 + $0x1b0] sm:$0xff]
    %v2150 = vld [vmem:[#allocation2 + $0x1b8] sm:$0xff]
    %v2151 = vld [vmem:[#allocation2 + $0x1c0] sm:$0xff]
    %v2152 = vld [vmem:[#allocation2 + $0x1c8] sm:$0xff]
    %v2153 = vld [vmem:[#allocation2 + $0x1d0] sm:$0xff]
    %v2154 = vld [vmem:[#allocation2 + $0x1d8] sm:$0xff]
    %v2155 = vld [vmem:[#allocation2 + $0x1e0] sm:$0xff]
    %v2156 = vld [vmem:[#allocation2 + $0x1e8] sm:$0xff]
    %v2157 = vld [vmem:[#allocation2 + $0x1f0] sm:$0xff]
    %v2158 = vld [vmem:[#allocation2 + $0x1f8] sm:$0xff]
    %v2159 = vld [vmem:[%s4] sm:$0x1]
    %v2161 = vlaneseq
    %v2162 = vshrl.u32 %v2161, 7
    %v2163 = vsub.s32 0, %v2162
    %v2164 = vrot.slane %v2159, %v2163
    %v2166 = vadd.f32 %v2095, %v2164
    %v2167 = vadd.f32 %v2096, %v2164
    %v2168 = vadd.f32 %v2097, %v2164
    %v2169 = vadd.f32 %v2098, %v2164
    %v2170 = vadd.f32 %v2099, %v2164
    %v2171 = vadd.f32 %v2100, %v2164
    %v2172 = vadd.f32 %v2101, %v2164
    %v2173 = vadd.f32 %v2102, %v2164
    %v2174 = vadd.f32 %v2103, %v2164
    %v2175 = vadd.f32 %v2104, %v2164
    %v2176 = vadd.f32 %v2105, %v2164
    %v2177 = vadd.f32 %v2106, %v2164
    %v2178 = vadd.f32 %v2107, %v2164
    %v2179 = vadd.f32 %v2108, %v2164
    %v2180 = vadd.f32 %v2109, %v2164
    %v2181 = vadd.f32 %v2110, %v2164
    %v2182 = vadd.f32 %v2111, %v2164
    %v2183 = vadd.f32 %v2112, %v2164
    %v2184 = vadd.f32 %v2113, %v2164
    %v2185 = vadd.f32 %v2114, %v2164
    %v2186 = vadd.f32 %v2115, %v2164
    %v2187 = vadd.f32 %v2116, %v2164
    %v2188 = vadd.f32 %v2117, %v2164
    %v2189 = vadd.f32 %v2118, %v2164
    %v2190 = vadd.f32 %v2119, %v2164
    %v2191 = vadd.f32 %v2120, %v2164
    %v2192 = vadd.f32 %v2121, %v2164
    %v2193 = vadd.f32 %v2122, %v2164
    %v2194 = vadd.f32 %v2123, %v2164
    %v2195 = vadd.f32 %v2124, %v2164
    %v2196 = vadd.f32 %v2125, %v2164
    %v2197 = vadd.f32 %v2126, %v2164
    %v2198 = vadd.f32 %v2127, %v2164
    %v2199 = vadd.f32 %v2128, %v2164
    %v2200 = vadd.f32 %v2129, %v2164
    %v2201 = vadd.f32 %v2130, %v2164
    %v2202 = vadd.f32 %v2131, %v2164
    %v2203 = vadd.f32 %v2132, %v2164
    %v2204 = vadd.f32 %v2133, %v2164
    %v2205 = vadd.f32 %v2134, %v2164
    %v2206 = vadd.f32 %v2135, %v2164
    %v2207 = vadd.f32 %v2136, %v2164
    %v2208 = vadd.f32 %v2137, %v2164
    %v2209 = vadd.f32 %v2138, %v2164
    %v2210 = vadd.f32 %v2139, %v2164
    %v2211 = vadd.f32 %v2140, %v2164
    %v2212 = vadd.f32 %v2141, %v2164
    %v2213 = vadd.f32 %v2142, %v2164
    %v2214 = vadd.f32 %v2143, %v2164
    %v2215 = vadd.f32 %v2144, %v2164
    %v2216 = vadd.f32 %v2145, %v2164
    %v2217 = vadd.f32 %v2146, %v2164
    %v2218 = vadd.f32 %v2147, %v2164
    %v2219 = vadd.f32 %v2148, %v2164
    %v2220 = vadd.f32 %v2149, %v2164
    %v2221 = vadd.f32 %v2150, %v2164
    %v2222 = vadd.f32 %v2151, %v2164
    %v2223 = vadd.f32 %v2152, %v2164
    %v2224 = vadd.f32 %v2153, %v2164
    %v2225 = vadd.f32 %v2154, %v2164
    %v2226 = vadd.f32 %v2155, %v2164
    %v2227 = vadd.f32 %v2156, %v2164
    %v2228 = vadd.f32 %v2157, %v2164
    %v2229 = vadd.f32 %v2158, %v2164
    %v2230 = vmax.f32 %v2166, 0.0
    %v2231 = vmax.f32 %v2167, 0.0
    %v2232 = vmax.f32 %v2168, 0.0
    %v2233 = vmax.f32 %v2169, 0.0
    %v2234 = vmax.f32 %v2170, 0.0
    %v2235 = vmax.f32 %v2171, 0.0
    %v2236 = vmax.f32 %v2172, 0.0
    %v2237 = vmax.f32 %v2173, 0.0
    %v2238 = vmax.f32 %v2174, 0.0
    %v2239 = vmax.f32 %v2175, 0.0
    %v2240 = vmax.f32 %v2176, 0.0
    %v2241 = vmax.f32 %v2177, 0.0
    %v2242 = vmax.f32 %v2178, 0.0
    %v2243 = vmax.f32 %v2179, 0.0
    %v2244 = vmax.f32 %v2180, 0.0
    %v2245 = vmax.f32 %v2181, 0.0
    %v2246 = vmax.f32 %v2182, 0.0
    %v2247 = vmax.f32 %v2183, 0.0
    %v2248 = vmax.f32 %v2184, 0.0
    %v2249 = vmax.f32 %v2185, 0.0
    %v2250 = vmax.f32 %v2186, 0.0
    %v2251 = vmax.f32 %v2187, 0.0
    %v2252 = vmax.f32 %v2188, 0.0
    %v2253 = vmax.f32 %v2189, 0.0
    %v2254 = vmax.f32 %v2190, 0.0
    %v2255 = vmax.f32 %v2191, 0.0
    %v2256 = vmax.f32 %v2192, 0.0
    %v2257 = vmax.f32 %v2193, 0.0
    %v2258 = vmax.f32 %v2194, 0.0
    %v2259 = vmax.f32 %v2195, 0.0
    %v2260 = vmax.f32 %v2196, 0.0
    %v2261 = vmax.f32 %v2197, 0.0
    %v2262 = vmax.f32 %v2198, 0.0
    %v2263 = vmax.f32 %v2199, 0.0
    %v2264 = vmax.f32 %v2200, 0.0
    %v2265 = vmax.f32 %v2201, 0.0
    %v2266 = vmax.f32 %v2202, 0.0
    %v2267 = vmax.f32 %v2203, 0.0
    %v2268 = vmax.f32 %v2204, 0.0
    %v2269 = vmax.f32 %v2205, 0.0
    %v2270 = vmax.f32 %v2206, 0.0
    %v2271 = vmax.f32 %v2207, 0.0
    %v2272 = vmax.f32 %v2208, 0.0
    %v2273 = vmax.f32 %v2209, 0.0
    %v2274 = vmax.f32 %v2210, 0.0
    %v2275 = vmax.f32 %v2211, 0.0
    %v2276 = vmax.f32 %v2212, 0.0
    %v2277 = vmax.f32 %v2213, 0.0
    %v2278 = vmax.f32 %v2214, 0.0
    %v2279 = vmax.f32 %v2215, 0.0
    %v2280 = vmax.f32 %v2216, 0.0
    %v2281 = vmax.f32 %v2217, 0.0
    %v2282 = vmax.f32 %v2218, 0.0
    %v2283 = vmax.f32 %v2219, 0.0
    %v2284 = vmax.f32 %v2220, 0.0
    %v2285 = vmax.f32 %v2221, 0.0
    %v2286 = vmax.f32 %v2222, 0.0
    %v2287 = vmax.f32 %v2223, 0.0
    %v2288 = vmax.f32 %v2224, 0.0
    %v2289 = vmax.f32 %v2225, 0.0
    %v2290 = vmax.f32 %v2226, 0.0
    %v2291 = vmax.f32 %v2227, 0.0
    %v2292 = vmax.f32 %v2228, 0.0
    %v2293 = vmax.f32 %v2229, 0.0
    %v2294 = vpack.c.bf16 %v2231, %v2230
    %v2295 = vpack.c.bf16 %v2233, %v2232
    %v2296 = vpack.c.bf16 %v2235, %v2234
    %v2297 = vpack.c.bf16 %v2237, %v2236
    %v2298 = vpack.c.bf16 %v2239, %v2238
    %v2299 = vpack.c.bf16 %v2241, %v2240
    %v2300 = vpack.c.bf16 %v2243, %v2242
    %v2301 = vpack.c.bf16 %v2245, %v2244
    %v2302 = vpack.c.bf16 %v2247, %v2246
    %v2303 = vpack.c.bf16 %v2249, %v2248
    %v2304 = vpack.c.bf16 %v2251, %v2250
    %v2305 = vpack.c.bf16 %v2253, %v2252
    %v2306 = vpack.c.bf16 %v2255, %v2254
    %v2307 = vpack.c.bf16 %v2257, %v2256
    %v2308 = vpack.c.bf16 %v2259, %v2258
    %v2309 = vpack.c.bf16 %v2261, %v2260
    %v2310 = vpack.c.bf16 %v2263, %v2262
    %v2311 = vpack.c.bf16 %v2265, %v2264
    %v2312 = vpack.c.bf16 %v2267, %v2266
    %v2313 = vpack.c.bf16 %v2269, %v2268
    %v2314 = vpack.c.bf16 %v2271, %v2270
    %v2315 = vpack.c.bf16 %v2273, %v2272
    %v2316 = vpack.c.bf16 %v2275, %v2274
    %v2317 = vpack.c.bf16 %v2277, %v2276
    %v2318 = vpack.c.bf16 %v2279, %v2278
    %v2319 = vpack.c.bf16 %v2281, %v2280
    %v2320 = vpack.c.bf16 %v2283, %v2282
    %v2321 = vpack.c.bf16 %v2285, %v2284
    %v2322 = vpack.c.bf16 %v2287, %v2286
    %v2323 = vpack.c.bf16 %v2289, %v2288
    %v2324 = vpack.c.bf16 %v2291, %v2290
    %v2325 = vpack.c.bf16 %v2293, %v2292
    %v2358 = vunpack.c.l.b16 %v2294
    %v2359 = vunpack.c.h.b16 %v2294
    %v2360 = vunpack.c.l.b16 %v2295
    %v2361 = vunpack.c.h.b16 %v2295
    %v2362 = vunpack.c.l.b16 %v2296
    %v2363 = vunpack.c.h.b16 %v2296
    %v2364 = vunpack.c.l.b16 %v2297
    %v2365 = vunpack.c.h.b16 %v2297
    %v2366 = vunpack.c.l.b16 %v2298
    %v2367 = vunpack.c.h.b16 %v2298
    %v2368 = vunpack.c.l.b16 %v2299
    %v2369 = vunpack.c.h.b16 %v2299
    %v2370 = vunpack.c.l.b16 %v2300
    %v2371 = vunpack.c.h.b16 %v2300
    %v2372 = vunpack.c.l.b16 %v2301
    %v2373 = vunpack.c.h.b16 %v2301
    %v2374 = vunpack.c.l.b16 %v2302
    %v2375 = vunpack.c.h.b16 %v2302
    %v2376 = vunpack.c.l.b16 %v2303
    %v2377 = vunpack.c.h.b16 %v2303
    %v2378 = vunpack.c.l.b16 %v2304
    %v2379 = vunpack.c.h.b16 %v2304
    %v2380 = vunpack.c.l.b16 %v2305
    %v2381 = vunpack.c.h.b16 %v2305
    %v2382 = vunpack.c.l.b16 %v2306
    %v2383 = vunpack.c.h.b16 %v2306
    %v2384 = vunpack.c.l.b16 %v2307
    %v2385 = vunpack.c.h.b16 %v2307
    %v2386 = vunpack.c.l.b16 %v2308
    %v2387 = vunpack.c.h.b16 %v2308
    %v2388 = vunpack.c.l.b16 %v2309
    %v2389 = vunpack.c.h.b16 %v2309
    %v2390 = vunpack.c.l.b16 %v2310
    %v2391 = vunpack.c.h.b16 %v2310
    %v2392 = vunpack.c.l.b16 %v2311
    %v2393 = vunpack.c.h.b16 %v2311
    %v2394 = vunpack.c.l.b16 %v2312
    %v2395 = vunpack.c.h.b16 %v2312
    %v2396 = vunpack.c.l.b16 %v2313
    %v2397 = vunpack.c.h.b16 %v2313
    %v2398 = vunpack.c.l.b16 %v2314
    %v2399 = vunpack.c.h.b16 %v2314
    %v2400 = vunpack.c.l.b16 %v2315
    %v2401 = vunpack.c.h.b16 %v2315
    %v2402 = vunpack.c.l.b16 %v2316
    %v2403 = vunpack.c.h.b16 %v2316
    %v2404 = vunpack.c.l.b16 %v2317
    %v2405 = vunpack.c.h.b16 %v2317
    %v2406 = vunpack.c.l.b16 %v2318
    %v2407 = vunpack.c.h.b16 %v2318
    %v2408 = vunpack.c.l.b16 %v2319
    %v2409 = vunpack.c.h.b16 %v2319
    %v2410 = vunpack.c.l.b16 %v2320
    %v2411 = vunpack.c.h.b16 %v2320
    %v2412 = vunpack.c.l.b16 %v2321
    %v2413 = vunpack.c.h.b16 %v2321
    %v2414 = vunpack.c.l.b16 %v2322
    %v2415 = vunpack.c.h.b16 %v2322
    %v2416 = vunpack.c.l.b16 %v2323
    %v2417 = vunpack.c.h.b16 %v2323
    %v2418 = vunpack.c.l.b16 %v2324
    %v2419 = vunpack.c.h.b16 %v2324
    %v2420 = vunpack.c.l.b16 %v2325
    %v2421 = vunpack.c.h.b16 %v2325
    %v2422 = vpack.c.b16 %v2358, %v2358
    %v2423 = vpack.c.b16 %v2359, %v2359
    %v2424 = vpack.c.b16 %v2360, %v2360
    %v2425 = vpack.c.b16 %v2361, %v2361
    %v2426 = vpack.c.b16 %v2362, %v2362
    %v2427 = vpack.c.b16 %v2363, %v2363
    %v2428 = vpack.c.b16 %v2364, %v2364
    %v2429 = vpack.c.b16 %v2365, %v2365
    %v2430 = vpack.c.b16 %v2366, %v2366
    %v2431 = vpack.c.b16 %v2367, %v2367
    %v2432 = vpack.c.b16 %v2368, %v2368
    %v2433 = vpack.c.b16 %v2369, %v2369
    %v2434 = vpack.c.b16 %v2370, %v2370
    %v2435 = vpack.c.b16 %v2371, %v2371
    %v2436 = vpack.c.b16 %v2372, %v2372
    %v2437 = vpack.c.b16 %v2373, %v2373
    %v2438 = vpack.c.b16 %v2374, %v2374
    %v2439 = vpack.c.b16 %v2375, %v2375
    %v2440 = vpack.c.b16 %v2376, %v2376
    %v2441 = vpack.c.b16 %v2377, %v2377
    %v2442 = vpack.c.b16 %v2378, %v2378
    %v2443 = vpack.c.b16 %v2379, %v2379
    %v2444 = vpack.c.b16 %v2380, %v2380
    %v2445 = vpack.c.b16 %v2381, %v2381
    %v2446 = vpack.c.b16 %v2382, %v2382
    %v2447 = vpack.c.b16 %v2383, %v2383
    %v2448 = vpack.c.b16 %v2384, %v2384
    %v2449 = vpack.c.b16 %v2385, %v2385
    %v2450 = vpack.c.b16 %v2386, %v2386
    %v2451 = vpack.c.b16 %v2387, %v2387
    %v2452 = vpack.c.b16 %v2388, %v2388
    %v2453 = vpack.c.b16 %v2389, %v2389
    %v2454 = vpack.c.b16 %v2390, %v2390
    %v2455 = vpack.c.b16 %v2391, %v2391
    %v2456 = vpack.c.b16 %v2392, %v2392
    %v2457 = vpack.c.b16 %v2393, %v2393
    %v2458 = vpack.c.b16 %v2394, %v2394
    %v2459 = vpack.c.b16 %v2395, %v2395
    %v2460 = vpack.c.b16 %v2396, %v2396
    %v2461 = vpack.c.b16 %v2397, %v2397
    %v2462 = vpack.c.b16 %v2398, %v2398
    %v2463 = vpack.c.b16 %v2399, %v2399
    %v2464 = vpack.c.b16 %v2400, %v2400
    %v2465 = vpack.c.b16 %v2401, %v2401
    %v2466 = vpack.c.b16 %v2402, %v2402
    %v2467 = vpack.c.b16 %v2403, %v2403
    %v2468 = vpack.c.b16 %v2404, %v2404
    %v2469 = vpack.c.b16 %v2405, %v2405
    %v2470 = vpack.c.b16 %v2406, %v2406
    %v2471 = vpack.c.b16 %v2407, %v2407
    %v2472 = vpack.c.b16 %v2408, %v2408
    %v2473 = vpack.c.b16 %v2409, %v2409
    %v2474 = vpack.c.b16 %v2410, %v2410
    %v2475 = vpack.c.b16 %v2411, %v2411
    %v2476 = vpack.c.b16 %v2412, %v2412
    %v2477 = vpack.c.b16 %v2413, %v2413
    %v2478 = vpack.c.b16 %v2414, %v2414
    %v2479 = vpack.c.b16 %v2415, %v2415
    %v2480 = vpack.c.b16 %v2416, %v2416
    %v2481 = vpack.c.b16 %v2417, %v2417
    %v2482 = vpack.c.b16 %v2418, %v2418
    %v2483 = vpack.c.b16 %v2419, %v2419
    %v2484 = vpack.c.b16 %v2420, %v2420
    %v2485 = vpack.c.b16 %v2421, %v2421
    %2550 = vst [vmem:[%s5] sm:$0xf] %v2422
    %2551 = vst [vmem:[%s5 + $0x4] sm:$0xf] %v2423
    %2552 = vst [vmem:[%s5 + $0x8] sm:$0xf] %v2424
    %2553 = vst [vmem:[%s5 + $0xc] sm:$0xf] %v2425
    %2554 = vst [vmem:[%s5 + $0x10] sm:$0xf] %v2426
    %2555 = vst [vmem:[%s5 + $0x14] sm:$0xf] %v2427
    %2556 = vst [vmem:[%s5 + $0x18] sm:$0xf] %v2428
    %2557 = vst [vmem:[%s5 + $0x1c] sm:$0xf] %v2429
    %2558 = vst [vmem:[%s5 + $0x20] sm:$0xf] %v2430
    %2559 = vst [vmem:[%s5 + $0x24] sm:$0xf] %v2431
    %2560 = vst [vmem:[%s5 + $0x28] sm:$0xf] %v2432
    %2561 = vst [vmem:[%s5 + $0x2c] sm:$0xf] %v2433
    %2562 = vst [vmem:[%s5 + $0x30] sm:$0xf] %v2434
    %2563 = vst [vmem:[%s5 + $0x34] sm:$0xf] %v2435
    %2564 = vst [vmem:[%s5 + $0x38] sm:$0xf] %v2436
    %2565 = vst [vmem:[%s5 + $0x3c] sm:$0xf] %v2437
    %2566 = vst [vmem:[%s5 + $0x40] sm:$0xf] %v2438
    %2567 = vst [vmem:[%s5 + $0x44] sm:$0xf] %v2439
    %2568 = vst [vmem:[%s5 + $0x48] sm:$0xf] %v2440
    %2569 = vst [vmem:[%s5 + $0x4c] sm:$0xf] %v2441
    %2570 = vst [vmem:[%s5 + $0x50] sm:$0xf] %v2442
    %2571 = vst [vmem:[%s5 + $0x54] sm:$0xf] %v2443
    %2572 = vst [vmem:[%s5 + $0x58] sm:$0xf] %v2444
    %2573 = vst [vmem:[%s5 + $0x5c] sm:$0xf] %v2445
    %2574 = vst [vmem:[%s5 + $0x60] sm:$0xf] %v2446
    %2575 = vst [vmem:[%s5 + $0x64] sm:$0xf] %v2447
    %2576 = vst [vmem:[%s5 + $0x68] sm:$0xf] %v2448
    %2577 = vst [vmem:[%s5 + $0x6c] sm:$0xf] %v2449
    %2578 = vst [vmem:[%s5 + $0x70] sm:$0xf] %v2450
    %2579 = vst [vmem:[%s5 + $0x74] sm:$0xf] %v2451
    %2580 = vst [vmem:[%s5 + $0x78] sm:$0xf] %v2452
    %2581 = vst [vmem:[%s5 + $0x7c] sm:$0xf] %v2453
    %2582 = vst [vmem:[%s5 + $0x80] sm:$0xf] %v2454
    %2583 = vst [vmem:[%s5 + $0x84] sm:$0xf] %v2455
    %2584 = vst [vmem:[%s5 + $0x88] sm:$0xf] %v2456
    %2585 = vst [vmem:[%s5 + $0x8c] sm:$0xf] %v2457
    %2586 = vst [vmem:[%s5 + $0x90] sm:$0xf] %v2458
    %2587 = vst [vmem:[%s5 + $0x94] sm:$0xf] %v2459
    %2588 = vst [vmem:[%s5 + $0x98] sm:$0xf] %v2460
    %2589 = vst [vmem:[%s5 + $0x9c] sm:$0xf] %v2461
    %2590 = vst [vmem:[%s5 + $0xa0] sm:$0xf] %v2462
    %2591 = vst [vmem:[%s5 + $0xa4] sm:$0xf] %v2463
    %2592 = vst [vmem:[%s5 + $0xa8] sm:$0xf] %v2464
    %2593 = vst [vmem:[%s5 + $0xac] sm:$0xf] %v2465
    %2594 = vst [vmem:[%s5 + $0xb0] sm:$0xf] %v2466
    %2595 = vst [vmem:[%s5 + $0xb4] sm:$0xf] %v2467
    %2596 = vst [vmem:[%s5 + $0xb8] sm:$0xf] %v2468
    %2597 = vst [vmem:[%s5 + $0xbc] sm:$0xf] %v2469
    %2598 = vst [vmem:[%s5 + $0xc0] sm:$0xf] %v2470
    %2599 = vst [vmem:[%s5 + $0xc4] sm:$0xf] %v2471
    %2600 = vst [vmem:[%s5 + $0xc8] sm:$0xf] %v2472
    %2601 = vst [vmem:[%s5 + $0xcc] sm:$0xf] %v2473
    %2602 = vst [vmem:[%s5 + $0xd0] sm:$0xf] %v2474
    %2603 = vst [vmem:[%s5 + $0xd4] sm:$0xf] %v2475
    %2604 = vst [vmem:[%s5 + $0xd8] sm:$0xf] %v2476
    %2605 = vst [vmem:[%s5 + $0xdc] sm:$0xf] %v2477
    %2606 = vst [vmem:[%s5 + $0xe0] sm:$0xf] %v2478
    %2607 = vst [vmem:[%s5 + $0xe4] sm:$0xf] %v2479
    %2608 = vst [vmem:[%s5 + $0xe8] sm:$0xf] %v2480
    %2609 = vst [vmem:[%s5 + $0xec] sm:$0xf] %v2481
    %2610 = vst [vmem:[%s5 + $0xf0] sm:$0xf] %v2482
    %2611 = vst [vmem:[%s5 + $0xf4] sm:$0xf] %v2483
    %2612 = vst [vmem:[%s5 + $0xf8] sm:$0xf] %v2484
    %2613 = vst [vmem:[%s5 + $0xfc] sm:$0xf] %v2485
  $region29: #{unet_forward.23} parent=0 // pred_fallthru
    _
  // Predicated region
  $region30: #{unet_forward.23} parent=0 // pred_check
    _
  $region31: #{unet_forward.23} parent=0 // pred_check_branch
    %2615 = sbr.rel (0) target = $region33
  $region32: #{unet_forward.23} parent=0 // pred_region
    _
  $region33: #{unet_forward.23} parent=0 // pred_fallthru
    _
  // Predicated region
  $region34: #{unet_forward.23} parent=0 // pred_check
    _
  $region35: #{unet_forward.23} parent=0 // pred_check_branch
    %2617 = sbr.rel (0) target = $region37
  $region36: #{unet_forward.23} parent=0 // pred_region
    _
  $region37: #{unet_forward.23} parent=0 // pred_fallthru
    _

</llo_original>
